<compile_context>
chip_gen: v7x
topology: tpu7x:2x2x1
jax: 0.10.0
libtpu: 0.0.40
codegen_flags: <defaults>
</compile_context>

<pallas_src>
import math
import jax
import jax.numpy as jnp
from jax.experimental import pallas as pl
from jax.experimental.pallas import tpu as pltpu

L = 28        # tube length (number of frontal slices)
M = 28        # hidden feature dim per slice
M_OUT = 10    # output feature dim per slice

F_IN = L * M            # 784  unfolded feature width of hidden layers
F_OUT = L * M_OUT       # 280  unfolded feature width of the last layer
F_IN_P = 896            # 7*128 lane-aligned padded feature width
F_OUT_P = 384           # 3*128 lane-aligned padded output width

BATCH_TILE = 512        # max batch tile per grid step (weights stay VMEM-resident)


def _round_up(x, n):
    return ((x + n - 1) // n) * n


def _cdiv(a, b):
    return -(-a // b)


def bcirc(W):
    """Block-circulant matrix of an (l, m, n) tensor -> (l*m, l*n).
    Block (k, j) == W[(k - j) mod l]  (matches torch_tensor_Bcirc)."""
    l, m, n = W.shape
    idx = (jnp.arange(l)[:, None] - jnp.arange(l)[None, :]) % l      # (l, l)
    return W[idx].transpose(0, 2, 1, 3).reshape(l * m, l * n)


def prepare_params(params):
    """One-time parameter glue — cache the result OUTSIDE the per-step forward.
      * transposed block-circulant weights (f32), zero-padded to lane-aligned
        widths: rows 784->896, cols 784->896 (hidden) / 280->384 (last layer)
      * lane-dense (1, features) f32 biases, zero-padded the same way.
    Zero padding keeps padded lanes exactly 0 through bias+ReLU in every layer."""
    (W1, B1), (W2, B2), (W3, B3), (W4, B4) = params

    def w(Wt, out_pad):
        Wc = bcirc(Wt).T.astype(jnp.float32)              # (l*n_in, l*m_out)
        return jnp.pad(Wc, ((0, F_IN_P - Wc.shape[0]), (0, out_pad - Wc.shape[1])))

    def b(Bt, out_pad):
        Bv = Bt.reshape(1, -1).astype(jnp.float32)        # (1, l*m_out)
        return jnp.pad(Bv, ((0, 0), (0, out_pad - Bv.shape[1])))

    return (w(W1, F_IN_P), b(B1, F_IN_P),
            w(W2, F_IN_P), b(B2, F_IN_P),
            w(W3, F_IN_P), b(B3, F_IN_P),
            w(W4, F_OUT_P), b(B4, F_OUT_P))


def _tnn_kernel(x_ref, w1_ref, b1_ref, w2_ref, b2_ref,
                w3_ref, b3_ref, w4_ref, b4_ref, o_ref):
    # Batch-major / lane-dense:
    #   x_ref : (TB, 896)  f32 activations (batch in sublanes, features in lanes)
    #   wK_ref: (896, out) f32 transposed block-circulant weights (VMEM-resident)
    #   bK_ref: (1, out)   f32 lane-dense biases
    #   o_ref : (TB, 384)  f32 lane-dense output tile
    def layer(h, w_ref, b_ref):
        acc = jnp.dot(h, w_ref[...], preferred_element_type=jnp.float32)
        return jnp.maximum(acc + b_ref[...], 0.0)         # bias + ReLU epilogue

    h = x_ref[...]
    h = layer(h, w1_ref, b1_ref)
    h = layer(h, w2_ref, b2_ref)
    h = layer(h, w3_ref, b3_ref)
    h = layer(h, w4_ref, b4_ref)                           # final layer keeps ReLU (per spec)
    o_ref[...] = h.astype(o_ref.dtype)


@jax.jit
def tnn_forward(x, prepared):
    """x: (L, M, batch) f32 -> (L, M_OUT, batch) f32."""
    cW1, b1, cW2, b2, cW3, b3, cW4, b4 = prepared
    l, m, batch = x.shape

    # batch-major unfold: row p, column k*M + a  <->  x[k, a, p]; pad features to 896.
    x2d = x.reshape(L * M, batch).T                        # (batch, 784)
    x2d = jnp.pad(x2d, ((0, 0), (0, F_IN_P - F_IN)))       # (batch, 896)

    # Pick tile count first, then the smallest 8-aligned tile — minimizes padding waste.
    nb = _cdiv(batch, BATCH_TILE)
    tb = _round_up(_cdiv(batch, nb), 8)
    bp = nb * tb
    if bp != batch:
        x2d = jnp.pad(x2d, ((0, bp - batch), (0, 0)))

    # Full-array VMEM specs: fetched once, single-buffered, resident across all tiles.
    resident = pl.BlockSpec(memory_space=pltpu.MemorySpace.VMEM)

    out2d = pl.pallas_call(
        _tnn_kernel,
        out_shape=jax.ShapeDtypeStruct((bp, F_OUT_P), jnp.float32),
        grid=(nb,),
        in_specs=[
            pl.BlockSpec((tb, F_IN_P), lambda i: (i, 0)),  # x tile (double-buffered)
            resident, resident,                            # W1, b1
            resident, resident,                            # W2, b2
            resident, resident,                            # W3, b3
            resident, resident,                            # W4, b4
        ],
        out_specs=pl.BlockSpec((tb, F_OUT_P), lambda i: (i, 0)),
        compiler_params=pltpu.CompilerParams(
            dimension_semantics=("parallel",),             # shards batch tiles across TCs (v7x)
            vmem_limit_bytes=40 << 20,
        ),
    )(x2d, cW1, b1, cW2, b2, cW3, b3, cW4, b4)

    out2d = out2d[:batch, :F_OUT]                          # drop batch + lane padding
    return out2d.T.reshape(L, M_OUT, batch)


def init_params(key):
    """Matches PyTorch kaiming_uniform_(a=sqrt(5)):
    fan_in = size(1) * size(2)  ->  bound = 1/sqrt(fan_in) for both W and B."""
    ks = jax.random.split(key, 8)

    def u(k, shape, bound):
        return jax.random.uniform(k, shape, jnp.float32, minval=-bound, maxval=bound)

    bh = 1.0 / math.sqrt(M * L)       # layers 1-3: fan_in = 28*28
    bo = 1.0 / math.sqrt(M_OUT * L)   # layer 4:   fan_in = 10*28

    W1 = u(ks[0], (L, M, M), bh);     B1 = u(ks[1], (L, M, 1), bh)
    W2 = u(ks[2], (L, M, M), bh);     B2 = u(ks[3], (L, M, 1), bh)
    W3 = u(ks[4], (L, M, M), bh);     B3 = u(ks[5], (L, M, 1), bh)
    W4 = u(ks[6], (L, M_OUT, M), bo); B4 = u(ks[7], (L, M_OUT, 1), bo)
    return ((W1, B1), (W2, B2), (W3, B3), (W4, B4))


def reference_forward(x, params):
    """Pure-JAX f32 reference of the PyTorch forward (per-slice t-product)."""
    def tprod(W, X):
        l = W.shape[0]
        idx = (jnp.arange(l)[:, None] - jnp.arange(l)[None, :]) % l
        Wg = W[idx]                                        # (l, l, m, n): Wg[k, j] = W[(k-j)%l]
        return jnp.einsum('kjmn,jnp->kmp', Wg, X,
                          precision=jax.lax.Precision.HIGHEST)

    h = x
    for (W, B) in params:
        h = jnp.maximum(tprod(W, h) + B, 0.0)
    return h


if __name__ == "__main__":
    key = jax.random.PRNGKey(0)
    pkey, xkey = jax.random.split(key)
    params = init_params(pkey)
    prepared = prepare_params(params)      # built ONCE, reused for every forward

    batch = 8
    x = jax.random.normal(xkey, (L, M, batch), dtype=jnp.float32)

    out = jax.block_until_ready(tnn_forward(x, prepared))
    assert out.shape == (L, M_OUT, batch), out.shape
    assert bool(jnp.all(jnp.isfinite(out)))

    ref = reference_forward(x, params)
    err = float(jnp.max(jnp.abs(out - ref)))
    assert err < 5e-2, f"reference mismatch: {err}"

    print("KERNEL_OK")
</pallas_src>

<mosaic_0001>
module attributes {stable_mosaic.version = 11 : i64} {
  func.func @_tnn_kernel(%arg0: i32, %arg1: memref<8x896xf32, #tpu.memory_space<vmem>>, %arg2: memref<896x896xf32, #tpu.memory_space<vmem>>, %arg3: memref<1x896xf32, #tpu.memory_space<vmem>>, %arg4: memref<896x896xf32, #tpu.memory_space<vmem>>, %arg5: memref<1x896xf32, #tpu.memory_space<vmem>>, %arg6: memref<896x896xf32, #tpu.memory_space<vmem>>, %arg7: memref<1x896xf32, #tpu.memory_space<vmem>>, %arg8: memref<896x384xf32, #tpu.memory_space<vmem>>, %arg9: memref<1x384xf32, #tpu.memory_space<vmem>>, %arg10: memref<8x384xf32, #tpu.memory_space<vmem>>) attributes {dimension_semantics = [#tpu.dimension_semantics<parallel>], iteration_bounds = array<i64: 1>, scalar_prefetch = 0 : i64, scratch_operands = 0 : i64, tpu.core_type = #tpu.core_type<tc>, window_params = [{transform_indices = @transform_0, window_bounds = array<i64: 8, 896>}, {pipeline_mode = #tpu.pipeline_mode<synchronous>, transform_indices = @transform_1, window_bounds = array<i64: 896, 896>}, {pipeline_mode = #tpu.pipeline_mode<synchronous>, transform_indices = @transform_2, window_bounds = array<i64: 1, 896>}, {pipeline_mode = #tpu.pipeline_mode<synchronous>, transform_indices = @transform_3, window_bounds = array<i64: 896, 896>}, {pipeline_mode = #tpu.pipeline_mode<synchronous>, transform_indices = @transform_4, window_bounds = array<i64: 1, 896>}, {pipeline_mode = #tpu.pipeline_mode<synchronous>, transform_indices = @transform_5, window_bounds = array<i64: 896, 896>}, {pipeline_mode = #tpu.pipeline_mode<synchronous>, transform_indices = @transform_6, window_bounds = array<i64: 1, 896>}, {pipeline_mode = #tpu.pipeline_mode<synchronous>, transform_indices = @transform_7, window_bounds = array<i64: 896, 384>}, {pipeline_mode = #tpu.pipeline_mode<synchronous>, transform_indices = @transform_8, window_bounds = array<i64: 1, 384>}, {transform_indices = @transform_9, window_bounds = array<i64: 8, 384>}]} {
    %c0 = arith.constant 0 : index
    %c0_0 = arith.constant 0 : index
    %0 = vector.load %arg1[%c0, %c0_0] : memref<8x896xf32, #tpu.memory_space<vmem>>, vector<8x896xf32>
    %c0_1 = arith.constant 0 : index
    %c0_2 = arith.constant 0 : index
    %1 = vector.load %arg2[%c0_1, %c0_2] : memref<896x896xf32, #tpu.memory_space<vmem>>, vector<896x896xf32>
    %cst = arith.constant dense<0.000000e+00> : vector<8x896xf32>
    %2 = tpu.matmul %0, %1, %cst {dimension_numbers = #tpu.dot_dimension_numbers<[1], [0], [0], [1], [0, 0, 1, 1], [], []>} : vector<8x896xf32>, vector<896x896xf32>, vector<8x896xf32> -> vector<8x896xf32>
    %c0_3 = arith.constant 0 : index
    %c0_4 = arith.constant 0 : index
    %3 = vector.load %arg3[%c0_3, %c0_4] : memref<1x896xf32, #tpu.memory_space<vmem>>, vector<1x896xf32>
    %4 = vector.broadcast %3 : vector<1x896xf32> to vector<8x896xf32>
    %5 = arith.addf %2, %4 : vector<8x896xf32>
    %cst_5 = arith.constant 0.000000e+00 : f32
    %6 = vector.broadcast %cst_5 : f32 to vector<8x896xf32>
    %7 = arith.maximumf %5, %6 : vector<8x896xf32>
    %c0_6 = arith.constant 0 : index
    %c0_7 = arith.constant 0 : index
    %8 = vector.load %arg4[%c0_6, %c0_7] : memref<896x896xf32, #tpu.memory_space<vmem>>, vector<896x896xf32>
    %cst_8 = arith.constant dense<0.000000e+00> : vector<8x896xf32>
    %9 = tpu.matmul %7, %8, %cst_8 {dimension_numbers = #tpu.dot_dimension_numbers<[1], [0], [0], [1], [0, 0, 1, 1], [], []>} : vector<8x896xf32>, vector<896x896xf32>, vector<8x896xf32> -> vector<8x896xf32>
    %c0_9 = arith.constant 0 : index
    %c0_10 = arith.constant 0 : index
    %10 = vector.load %arg5[%c0_9, %c0_10] : memref<1x896xf32, #tpu.memory_space<vmem>>, vector<1x896xf32>
    %11 = vector.broadcast %10 : vector<1x896xf32> to vector<8x896xf32>
    %12 = arith.addf %9, %11 : vector<8x896xf32>
    %cst_11 = arith.constant 0.000000e+00 : f32
    %13 = vector.broadcast %cst_11 : f32 to vector<8x896xf32>
    %14 = arith.maximumf %12, %13 : vector<8x896xf32>
    %c0_12 = arith.constant 0 : index
    %c0_13 = arith.constant 0 : index
    %15 = vector.load %arg6[%c0_12, %c0_13] : memref<896x896xf32, #tpu.memory_space<vmem>>, vector<896x896xf32>
    %cst_14 = arith.constant dense<0.000000e+00> : vector<8x896xf32>
    %16 = tpu.matmul %14, %15, %cst_14 {dimension_numbers = #tpu.dot_dimension_numbers<[1], [0], [0], [1], [0, 0, 1, 1], [], []>} : vector<8x896xf32>, vector<896x896xf32>, vector<8x896xf32> -> vector<8x896xf32>
    %c0_15 = arith.constant 0 : index
    %c0_16 = arith.constant 0 : index
    %17 = vector.load %arg7[%c0_15, %c0_16] : memref<1x896xf32, #tpu.memory_space<vmem>>, vector<1x896xf32>
    %18 = vector.broadcast %17 : vector<1x896xf32> to vector<8x896xf32>
    %19 = arith.addf %16, %18 : vector<8x896xf32>
    %cst_17 = arith.constant 0.000000e+00 : f32
    %20 = vector.broadcast %cst_17 : f32 to vector<8x896xf32>
    %21 = arith.maximumf %19, %20 : vector<8x896xf32>
    %c0_18 = arith.constant 0 : index
    %c0_19 = arith.constant 0 : index
    %22 = vector.load %arg8[%c0_18, %c0_19] : memref<896x384xf32, #tpu.memory_space<vmem>>, vector<896x384xf32>
    %cst_20 = arith.constant dense<0.000000e+00> : vector<8x384xf32>
    %23 = tpu.matmul %21, %22, %cst_20 {dimension_numbers = #tpu.dot_dimension_numbers<[1], [0], [0], [1], [0, 0, 1, 1], [], []>} : vector<8x896xf32>, vector<896x384xf32>, vector<8x384xf32> -> vector<8x384xf32>
    %c0_21 = arith.constant 0 : index
    %c0_22 = arith.constant 0 : index
    %24 = vector.load %arg9[%c0_21, %c0_22] : memref<1x384xf32, #tpu.memory_space<vmem>>, vector<1x384xf32>
    %25 = vector.broadcast %24 : vector<1x384xf32> to vector<8x384xf32>
    %26 = arith.addf %23, %25 : vector<8x384xf32>
    %cst_23 = arith.constant 0.000000e+00 : f32
    %27 = vector.broadcast %cst_23 : f32 to vector<8x384xf32>
    %28 = arith.maximumf %26, %27 : vector<8x384xf32>
    %c0_24 = arith.constant 0 : index
    %c0_25 = arith.constant 0 : index
    %29 = vector.load %arg10[%c0_24, %c0_25] : memref<8x384xf32, #tpu.memory_space<vmem>>, vector<8x384xf32>
    tpu.vector_store %arg10[%c0_24, %c0_25], %28 {strides = array<i32>} : memref<8x384xf32, #tpu.memory_space<vmem>>, vector<8x384xf32>,
    return
  }
  func.func @transform_0(%arg0: i32) -> (i32, i32) {
    %c0_i32 = arith.constant 0 : i32
    %c0_i32_0 = arith.constant 0 : i32
    return %arg0, %c0_i32 : i32, i32
  }
  func.func @transform_1(%arg0: i32) -> (i32, i32) {
    %c0_i32 = arith.constant 0 : i32
    %c0_i32_0 = arith.constant 0 : i32
    %c0_i32_1 = arith.constant 0 : i32
    return %c0_i32, %c0_i32_0 : i32, i32
  }
  func.func @transform_2(%arg0: i32) -> (i32, i32) {
    %c0_i32 = arith.constant 0 : i32
    %c0_i32_0 = arith.constant 0 : i32
    %c0_i32_1 = arith.constant 0 : i32
    return %c0_i32, %c0_i32_0 : i32, i32
  }
  func.func @transform_3(%arg0: i32) -> (i32, i32) {
    %c0_i32 = arith.constant 0 : i32
    %c0_i32_0 = arith.constant 0 : i32
    %c0_i32_1 = arith.constant 0 : i32
    return %c0_i32, %c0_i32_0 : i32, i32
  }
  func.func @transform_4(%arg0: i32) -> (i32, i32) {
    %c0_i32 = arith.constant 0 : i32
    %c0_i32_0 = arith.constant 0 : i32
    %c0_i32_1 = arith.constant 0 : i32
    return %c0_i32, %c0_i32_0 : i32, i32
  }
  func.func @transform_5(%arg0: i32) -> (i32, i32) {
    %c0_i32 = arith.constant 0 : i32
    %c0_i32_0 = arith.constant 0 : i32
    %c0_i32_1 = arith.constant 0 : i32
    return %c0_i32, %c0_i32_0 : i32, i32
  }
  func.func @transform_6(%arg0: i32) -> (i32, i32) {
    %c0_i32 = arith.constant 0 : i32
    %c0_i32_0 = arith.constant 0 : i32
    %c0_i32_1 = arith.constant 0 : i32
    return %c0_i32, %c0_i32_0 : i32, i32
  }
  func.func @transform_7(%arg0: i32) -> (i32, i32) {
    %c0_i32 = arith.constant 0 : i32
    %c0_i32_0 = arith.constant 0 : i32
    %c0_i32_1 = arith.constant 0 : i32
    return %c0_i32, %c0_i32_0 : i32, i32
  }
  func.func @transform_8(%arg0: i32) -> (i32, i32) {
    %c0_i32 = arith.constant 0 : i32
    %c0_i32_0 = arith.constant 0 : i32
    %c0_i32_1 = arith.constant 0 : i32
    return %c0_i32, %c0_i32_0 : i32, i32
  }
  func.func @transform_9(%arg0: i32) -> (i32, i32) {
    %c0_i32 = arith.constant 0 : i32
    %c0_i32_0 = arith.constant 0 : i32
    return %arg0, %c0_i32 : i32, i32
  }
}

</mosaic_0001>

<llo_original>
// kernel: tnn_forward.1
$region0: #{tnn_forward.1}
  #allocation0 [shape = 'u32[]', space=smem, size = 0x4, offset = 0x4, fixed_abs, tag = 'smem constant byte address 0x4 - core index']
  #allocation1 [shape = 'u32[144,128]{1,0:T(1,128)}', space=vmem, size = 0x12000, scoped, tag = 'internal scratch']
  %s0 = inlined_call_operand.vmem [shape: f32[8,896], index: 0, kind: input, shape index: {}]
  %s1 = inlined_call_operand.hbm [shape: f32[896,896], index: 1, kind: input, shape index: {}]
  %s2 = inlined_call_operand.hbm [shape: f32[1,896], index: 2, kind: input, shape index: {}]
  %s3 = inlined_call_operand.hbm [shape: f32[896,896], index: 3, kind: input, shape index: {}]
  %s4 = inlined_call_operand.hbm [shape: f32[1,896], index: 4, kind: input, shape index: {}]
  %s5 = inlined_call_operand.hbm [shape: f32[896,896], index: 5, kind: input, shape index: {}]
  %s6 = inlined_call_operand.hbm [shape: f32[1,896], index: 6, kind: input, shape index: {}]
  %s7 = inlined_call_operand.hbm [shape: f32[896,384], index: 7, kind: input, shape index: {}]
  %s8 = inlined_call_operand.hbm [shape: f32[1,384], index: 8, kind: input, shape index: {}]
  %s9 = inlined_call_operand.vmem [shape: f32[8,384], index: 9, kind: output, shape index: {}]
  %s10 = sld [smem:[#allocation0]]
  $region78: #{tnn_forward.1} parent=0
    _
  %s12 = ssub.s32 1, %s10
  %s13 = scalar_select 0, %s12, %s10
  $region1: #{tnn_forward.1} parent=0
    #allocation2 [shape = 'u8[3211264]{0}', space=vmem, size = 0x310000, scoped, tag = 'input window, operand 1, single buffered']
    #allocation3 [shape = 's32[1]{0}', space=sflag, size = 0x4, scoped, tag = 'scoped memory for tnn_forward.1']
    #allocation4 [shape = 'u8[3584]{0}', space=vmem, size = 0x1000, scoped, tag = 'input window, operand 2, single buffered']
    #allocation5 [shape = 's32[1]{0}', space=sflag, size = 0x4, scoped, tag = 'scoped memory for tnn_forward.1']
    #allocation6 [shape = 'u8[3211264]{0}', space=vmem, size = 0x310000, scoped, tag = 'input window, operand 3, single buffered']
    #allocation7 [shape = 'u8[3584]{0}', space=vmem, size = 0x1000, scoped, tag = 'input window, operand 4, single buffered']
    #allocation8 [shape = 's32[1]{0}', space=sflag, size = 0x4, scoped, tag = 'scoped memory for tnn_forward.1']
    #allocation9 [shape = 'u8[3211264]{0}', space=vmem, size = 0x310000, scoped, tag = 'input window, operand 5, single buffered']
    #allocation10 [shape = 'u8[3584]{0}', space=vmem, size = 0x1000, scoped, tag = 'input window, operand 6, single buffered']
    #allocation11 [shape = 's32[1]{0}', space=sflag, size = 0x4, scoped, tag = 'scoped memory for tnn_forward.1']
    #allocation12 [shape = 'u8[1376256]{0}', space=vmem, size = 0x150000, scoped, tag = 'input window, operand 7, single buffered']
    #allocation13 [shape = 'u8[1536]{0}', space=vmem, size = 0x800, scoped, tag = 'input window, operand 8, single buffered']
    #allocation14 [shape = 's32[1]{0}', space=sflag, size = 0x4, scoped, tag = 'scoped memory for tnn_forward.1']
    %14 = vsyncpa [#allocation3], 0
    %15 = vsyncpa [#allocation5], 0
    %16 = vsyncpa [#allocation8], 0
    %17 = vsyncpa [#allocation11], 0
    %18 = vsyncpa [#allocation14], 0
    // Predicated region
    $region2: #{tnn_forward.1} parent=1 // pred_check
      _
    $region3: #{tnn_forward.1} parent=1 // pred_check_branch
      %20 = sbr.rel (0) target = $region5
    $region4: #{tnn_forward.1} parent=1 // pred_region
      _
    $region5: #{tnn_forward.1} parent=1 // pred_fallthru
      _
    // Predicated region
    $region6: #{tnn_forward.1} parent=1 // pred_check
      _
    $region7: #{tnn_forward.1} parent=1 // pred_check_branch
      %22 = sbr.rel (0) target = $region9
    $region8: #{tnn_forward.1} parent=1 // pred_region
      %s24 = ssub.s32 100352, 100352
      %25 = vsyncadd [#allocation3], %s24
      %s26 = sshll.u32 [#allocation2], 4
      %s27 = int_to_ptr.vmem [resolvable:$true] %s26
      %32 = dma.hbm_to_vmem [thread:$0]  %s1, 100352, %s27, [#allocation3], 896, 896, 56
    $region9: #{tnn_forward.1} parent=1 // pred_fallthru
      _
    // Predicated region
    $region10: #{tnn_forward.1} parent=1 // pred_check
      _
    $region11: #{tnn_forward.1} parent=1 // pred_check_branch
      %34 = sbr.rel (0) target = $region13
    $region12: #{tnn_forward.1} parent=1 // pred_region
      %s36 = ssub.s32 112, 112
      %37 = vsyncadd [#allocation5], %s36
      %s39 = sshll.u32 [#allocation4], 4
      %s40 = int_to_ptr.vmem [resolvable:$true] %s39
      %42 = dma.hbm_to_vmem [thread:$0]  %s2, 112, %s40, [#allocation5]
    $region13: #{tnn_forward.1} parent=1 // pred_fallthru
      _
    // Predicated region
    $region14: #{tnn_forward.1} parent=1 // pred_check
      _
    $region15: #{tnn_forward.1} parent=1 // pred_check_branch
      %44 = sbr.rel (0) target = $region17
    $region16: #{tnn_forward.1} parent=1 // pred_region
      %s46 = ssub.s32 100352, 100352
      %47 = vsyncadd [#allocation5], %s46
      %s48 = sshll.u32 [#allocation6], 4
      %s49 = int_to_ptr.vmem [resolvable:$true] %s48
      %54 = dma.hbm_to_vmem [thread:$0]  %s3, 100352, %s49, [#allocation5], 896, 896, 56
    $region17: #{tnn_forward.1} parent=1 // pred_fallthru
      _
    // Predicated region
    $region18: #{tnn_forward.1} parent=1 // pred_check
      _
    $region19: #{tnn_forward.1} parent=1 // pred_check_branch
      %56 = sbr.rel (0) target = $region21
    $region20: #{tnn_forward.1} parent=1 // pred_region
      %s58 = ssub.s32 112, 112
      %59 = vsyncadd [#allocation8], %s58
      %s61 = sshll.u32 [#allocation7], 4
      %s62 = int_to_ptr.vmem [resolvable:$true] %s61
      %64 = dma.hbm_to_vmem [thread:$0]  %s4, 112, %s62, [#allocation8]
    $region21: #{tnn_forward.1} parent=1 // pred_fallthru
      _
    // Predicated region
    $region22: #{tnn_forward.1} parent=1 // pred_check
      _
    $region23: #{tnn_forward.1} parent=1 // pred_check_branch
      %66 = sbr.rel (0) target = $region25
    $region24: #{tnn_forward.1} parent=1 // pred_region
      %s68 = ssub.s32 100352, 100352
      %69 = vsyncadd [#allocation8], %s68
      %s70 = sshll.u32 [#allocation9], 4
      %s71 = int_to_ptr.vmem [resolvable:$true] %s70
      %76 = dma.hbm_to_vmem [thread:$0]  %s5, 100352, %s71, [#allocation8], 896, 896, 56
    $region25: #{tnn_forward.1} parent=1 // pred_fallthru
      _
    // Predicated region
    $region26: #{tnn_forward.1} parent=1 // pred_check
      _
    $region27: #{tnn_forward.1} parent=1 // pred_check_branch
      %78 = sbr.rel (0) target = $region29
    $region28: #{tnn_forward.1} parent=1 // pred_region
      %s80 = ssub.s32 112, 112
      %81 = vsyncadd [#allocation11], %s80
      %s83 = sshll.u32 [#allocation10], 4
      %s84 = int_to_ptr.vmem [resolvable:$true] %s83
      %86 = dma.hbm_to_vmem [thread:$0]  %s6, 112, %s84, [#allocation11]
    $region29: #{tnn_forward.1} parent=1 // pred_fallthru
      _
    // Predicated region
    $region30: #{tnn_forward.1} parent=1 // pred_check
      _
    $region31: #{tnn_forward.1} parent=1 // pred_check_branch
      %88 = sbr.rel (0) target = $region33
    $region32: #{tnn_forward.1} parent=1 // pred_region
      %s90 = ssub.s32 43008, 43008
      %91 = vsyncadd [#allocation11], %s90
      %s92 = sshll.u32 [#allocation12], 4
      %s93 = int_to_ptr.vmem [resolvable:$true] %s92
      %98 = dma.hbm_to_vmem [thread:$0]  %s7, 43008, %s93, [#allocation11], 384, 384, 24
    $region33: #{tnn_forward.1} parent=1 // pred_fallthru
      _
    // Predicated region
    $region34: #{tnn_forward.1} parent=1 // pred_check
      _
    $region35: #{tnn_forward.1} parent=1 // pred_check_branch
      %100 = sbr.rel (0) target = $region37
    $region36: #{tnn_forward.1} parent=1 // pred_region
      %s102 = ssub.s32 48, 48
      %103 = vsyncadd [#allocation14], %s102
      %s105 = sshll.u32 [#allocation13], 4
      %s106 = int_to_ptr.vmem [resolvable:$true] %s105
      %108 = dma.hbm_to_vmem [thread:$0]  %s8, 48, %s106, [#allocation14]
    $region37: #{tnn_forward.1} parent=1 // pred_fallthru
      _
    // Predicated region
    $region38: #{tnn_forward.1} parent=1 // pred_check
      _
    $region39: #{tnn_forward.1} parent=1 // pred_check_branch
      %110 = sbr.rel (0) target = $region41
    $region40: #{tnn_forward.1} parent=1 // pred_region
      %111 = dma.done [#allocation3], 100352
    $region41: #{tnn_forward.1} parent=1 // pred_fallthru
      _
    // Predicated region
    $region42: #{tnn_forward.1} parent=1 // pred_check
      _
    $region43: #{tnn_forward.1} parent=1 // pred_check_branch
      %113 = sbr.rel (0) target = $region45
    $region44: #{tnn_forward.1} parent=1 // pred_region
      %114 = dma.done [#allocation5], 112
    $region45: #{tnn_forward.1} parent=1 // pred_fallthru
      _
    // Predicated region
    $region46: #{tnn_forward.1} parent=1 // pred_check
      _
    $region47: #{tnn_forward.1} parent=1 // pred_check_branch
      %116 = sbr.rel (0) target = $region49
    $region48: #{tnn_forward.1} parent=1 // pred_region
      %117 = dma.done [#allocation5], 100352
    $region49: #{tnn_forward.1} parent=1 // pred_fallthru
      _
    // Predicated region
    $region50: #{tnn_forward.1} parent=1 // pred_check
      _
    $region51: #{tnn_forward.1} parent=1 // pred_check_branch
      %119 = sbr.rel (0) target = $region53
    $region52: #{tnn_forward.1} parent=1 // pred_region
      %120 = dma.done [#allocation8], 112
    $region53: #{tnn_forward.1} parent=1 // pred_fallthru
      _
    // Predicated region
    $region54: #{tnn_forward.1} parent=1 // pred_check
      _
    $region55: #{tnn_forward.1} parent=1 // pred_check_branch
      %122 = sbr.rel (0) target = $region57
    $region56: #{tnn_forward.1} parent=1 // pred_region
      %123 = dma.done [#allocation8], 100352
    $region57: #{tnn_forward.1} parent=1 // pred_fallthru
      _
    // Predicated region
    $region58: #{tnn_forward.1} parent=1 // pred_check
      _
    $region59: #{tnn_forward.1} parent=1 // pred_check_branch
      %125 = sbr.rel (0) target = $region61
    $region60: #{tnn_forward.1} parent=1 // pred_region
      %126 = dma.done [#allocation11], 112
    $region61: #{tnn_forward.1} parent=1 // pred_fallthru
      _
    // Predicated region
    $region62: #{tnn_forward.1} parent=1 // pred_check
      _
    $region63: #{tnn_forward.1} parent=1 // pred_check_branch
      %128 = sbr.rel (0) target = $region65
    $region64: #{tnn_forward.1} parent=1 // pred_region
      %129 = dma.done [#allocation11], 43008
    $region65: #{tnn_forward.1} parent=1 // pred_fallthru
      _
    // Predicated region
    $region66: #{tnn_forward.1} parent=1 // pred_check
      _
    $region67: #{tnn_forward.1} parent=1 // pred_check_branch
      %131 = sbr.rel (0) target = $region69
    $region68: #{tnn_forward.1} parent=1 // pred_region
      %132 = dma.done [#allocation14], 48
    $region69: #{tnn_forward.1} parent=1 // pred_fallthru
      _
    %v133 = vld [vmem:[%s0] sm:$0xff]
    %v134 = vld [vmem:[%s0 + $0x8] sm:$0xff]
    %v135 = vld [vmem:[%s0 + $0x10] sm:$0xff]
    %v136 = vld [vmem:[%s0 + $0x18] sm:$0xff]
    %v137 = vld [vmem:[%s0 + $0x20] sm:$0xff]
    %v138 = vld [vmem:[%s0 + $0x28] sm:$0xff]
    %v139 = vld [vmem:[%s0 + $0x30] sm:$0xff]
    %v140 = vld [vmem:[#allocation2] sm:$0xff]
    %v141 = vld [vmem:[#allocation2 + $0x8] sm:$0xff]
    %v142 = vld [vmem:[#allocation2 + $0x10] sm:$0xff]
    %v143 = vld [vmem:[#allocation2 + $0x18] sm:$0xff]
    %v144 = vld [vmem:[#allocation2 + $0x20] sm:$0xff]
    %v145 = vld [vmem:[#allocation2 + $0x28] sm:$0xff]
    %v146 = vld [vmem:[#allocation2 + $0x30] sm:$0xff]
    %v147 = vld [vmem:[#allocation2 + $0x38] sm:$0xff]
    %v148 = vld [vmem:[#allocation2 + $0x40] sm:$0xff]
    %v149 = vld [vmem:[#allocation2 + $0x48] sm:$0xff]
    %v150 = vld [vmem:[#allocation2 + $0x50] sm:$0xff]
    %v151 = vld [vmem:[#allocation2 + $0x58] sm:$0xff]
    %v152 = vld [vmem:[#allocation2 + $0x60] sm:$0xff]
    %v153 = vld [vmem:[#allocation2 + $0x68] sm:$0xff]
    %v154 = vld [vmem:[#allocation2 + $0x70] sm:$0xff]
    %v155 = vld [vmem:[#allocation2 + $0x78] sm:$0xff]
    %v156 = vld [vmem:[#allocation2 + $0x80] sm:$0xff]
    %v157 = vld [vmem:[#allocation2 + $0x88] sm:$0xff]
    %v158 = vld [vmem:[#allocation2 + $0x90] sm:$0xff]
    %v159 = vld [vmem:[#allocation2 + $0x98] sm:$0xff]
    %v160 = vld [vmem:[#allocation2 + $0xa0] sm:$0xff]
    %v161 = vld [vmem:[#allocation2 + $0xa8] sm:$0xff]
    %v162 = vld [vmem:[#allocation2 + $0xb0] sm:$0xff]
    %v163 = vld [vmem:[#allocation2 + $0xb8] sm:$0xff]
    %v164 = vld [vmem:[#allocation2 + $0xc0] sm:$0xff]
    %v165 = vld [vmem:[#allocation2 + $0xc8] sm:$0xff]
    %v166 = vld [vmem:[#allocation2 + $0xd0] sm:$0xff]
    %v167 = vld [vmem:[#allocation2 + $0xd8] sm:$0xff]
    %v168 = vld [vmem:[#allocation2 + $0xe0] sm:$0xff]
    %v169 = vld [vmem:[#allocation2 + $0xe8] sm:$0xff]
    %v170 = vld [vmem:[#allocation2 + $0xf0] sm:$0xff]
    %v171 = vld [vmem:[#allocation2 + $0xf8] sm:$0xff]
    %v172 = vld [vmem:[#allocation2 + $0x100] sm:$0xff]
    %v173 = vld [vmem:[#allocation2 + $0x108] sm:$0xff]
    %v174 = vld [vmem:[#allocation2 + $0x110] sm:$0xff]
    %v175 = vld [vmem:[#allocation2 + $0x118] sm:$0xff]
    %v176 = vld [vmem:[#allocation2 + $0x120] sm:$0xff]
    %v177 = vld [vmem:[#allocation2 + $0x128] sm:$0xff]
    %v178 = vld [vmem:[#allocation2 + $0x130] sm:$0xff]
    %v179 = vld [vmem:[#allocation2 + $0x138] sm:$0xff]
    %v180 = vld [vmem:[#allocation2 + $0x140] sm:$0xff]
    %v181 = vld [vmem:[#allocation2 + $0x148] sm:$0xff]
    %v182 = vld [vmem:[#allocation2 + $0x150] sm:$0xff]
    %v183 = vld [vmem:[#allocation2 + $0x158] sm:$0xff]
    %v184 = vld [vmem:[#allocation2 + $0x160] sm:$0xff]
    %v185 = vld [vmem:[#allocation2 + $0x168] sm:$0xff]
    %v186 = vld [vmem:[#allocation2 + $0x170] sm:$0xff]
    %v187 = vld [vmem:[#allocation2 + $0x178] sm:$0xff]
    %v188 = vld [vmem:[#allocation2 + $0x180] sm:$0xff]
    %v189 = vld [vmem:[#allocation2 + $0x188] sm:$0xff]
    %v190 = vld [vmem:[#allocation2 + $0x190] sm:$0xff]
    %v191 = vld [vmem:[#allocation2 + $0x198] sm:$0xff]
    %v192 = vld [vmem:[#allocation2 + $0x1a0] sm:$0xff]
    %v193 = vld [vmem:[#allocation2 + $0x1a8] sm:$0xff]
    %v194 = vld [vmem:[#allocation2 + $0x1b0] sm:$0xff]
    %v195 = vld [vmem:[#allocation2 + $0x1b8] sm:$0xff]
    %v196 = vld [vmem:[#allocation2 + $0x1c0] sm:$0xff]
    %v197 = vld [vmem:[#allocation2 + $0x1c8] sm:$0xff]
    %v198 = vld [vmem:[#allocation2 + $0x1d0] sm:$0xff]
    %v199 = vld [vmem:[#allocation2 + $0x1d8] sm:$0xff]
    %v200 = vld [vmem:[#allocation2 + $0x1e0] sm:$0xff]
    %v201 = vld [vmem:[#allocation2 + $0x1e8] sm:$0xff]
    %v202 = vld [vmem:[#allocation2 + $0x1f0] sm:$0xff]
    %v203 = vld [vmem:[#allocation2 + $0x1f8] sm:$0xff]
    %v204 = vld [vmem:[#allocation2 + $0x200] sm:$0xff]
    %v205 = vld [vmem:[#allocation2 + $0x208] sm:$0xff]
    %v206 = vld [vmem:[#allocation2 + $0x210] sm:$0xff]
    %v207 = vld [vmem:[#allocation2 + $0x218] sm:$0xff]
    %v208 = vld [vmem:[#allocation2 + $0x220] sm:$0xff]
    %v209 = vld [vmem:[#allocation2 + $0x228] sm:$0xff]
    %v210 = vld [vmem:[#allocation2 + $0x230] sm:$0xff]
    %v211 = vld [vmem:[#allocation2 + $0x238] sm:$0xff]
    %v212 = vld [vmem:[#allocation2 + $0x240] sm:$0xff]
    %v213 = vld [vmem:[#allocation2 + $0x248] sm:$0xff]
    %v214 = vld [vmem:[#allocation2 + $0x250] sm:$0xff]
    %v215 = vld [vmem:[#allocation2 + $0x258] sm:$0xff]
    %v216 = vld [vmem:[#allocation2 + $0x260] sm:$0xff]
    %v217 = vld [vmem:[#allocation2 + $0x268] sm:$0xff]
    %v218 = vld [vmem:[#allocation2 + $0x270] sm:$0xff]
    %v219 = vld [vmem:[#allocation2 + $0x278] sm:$0xff]
    %v220 = vld [vmem:[#allocation2 + $0x280] sm:$0xff]
    %v221 = vld [vmem:[#allocation2 + $0x288] sm:$0xff]
    %v222 = vld [vmem:[#allocation2 + $0x290] sm:$0xff]
    %v223 = vld [vmem:[#allocation2 + $0x298] sm:$0xff]
    %v224 = vld [vmem:[#allocation2 + $0x2a0] sm:$0xff]
    %v225 = vld [vmem:[#allocation2 + $0x2a8] sm:$0xff]
    %v226 = vld [vmem:[#allocation2 + $0x2b0] sm:$0xff]
    %v227 = vld [vmem:[#allocation2 + $0x2b8] sm:$0xff]
    %v228 = vld [vmem:[#allocation2 + $0x2c0] sm:$0xff]
    %v229 = vld [vmem:[#allocation2 + $0x2c8] sm:$0xff]
    %v230 = vld [vmem:[#allocation2 + $0x2d0] sm:$0xff]
    %v231 = vld [vmem:[#allocation2 + $0x2d8] sm:$0xff]
    %v232 = vld [vmem:[#allocation2 + $0x2e0] sm:$0xff]
    %v233 = vld [vmem:[#allocation2 + $0x2e8] sm:$0xff]
    %v234 = vld [vmem:[#allocation2 + $0x2f0] sm:$0xff]
    %v235 = vld [vmem:[#allocation2 + $0x2f8] sm:$0xff]
    %v236 = vld [vmem:[#allocation2 + $0x300] sm:$0xff]
    %v237 = vld [vmem:[#allocation2 + $0x308] sm:$0xff]
    %v238 = vld [vmem:[#allocation2 + $0x310] sm:$0xff]
    %v239 = vld [vmem:[#allocation2 + $0x318] sm:$0xff]
    %v240 = vld [vmem:[#allocation2 + $0x320] sm:$0xff]
    %v241 = vld [vmem:[#allocation2 + $0x328] sm:$0xff]
    %v242 = vld [vmem:[#allocation2 + $0x330] sm:$0xff]
    %v243 = vld [vmem:[#allocation2 + $0x338] sm:$0xff]
    %v244 = vld [vmem:[#allocation2 + $0x340] sm:$0xff]
    %v245 = vld [vmem:[#allocation2 + $0x348] sm:$0xff]
    %v246 = vld [vmem:[#allocation2 + $0x350] sm:$0xff]
    %v247 = vld [vmem:[#allocation2 + $0x358] sm:$0xff]
    %v248 = vld [vmem:[#allocation2 + $0x360] sm:$0xff]
    %v249 = vld [vmem:[#allocation2 + $0x368] sm:$0xff]
    %v250 = vld [vmem:[#allocation2 + $0x370] sm:$0xff]
    %v251 = vld [vmem:[#allocation2 + $0x378] sm:$0xff]
    %v252 = vld [vmem:[#allocation2 + $0x380] sm:$0xff]
    %v253 = vld [vmem:[#allocation2 + $0x388] sm:$0xff]
    %v254 = vld [vmem:[#allocation2 + $0x390] sm:$0xff]
    %v255 = vld [vmem:[#allocation2 + $0x398] sm:$0xff]
    %v256 = vld [vmem:[#allocation2 + $0x3a0] sm:$0xff]
    %v257 = vld [vmem:[#allocation2 + $0x3a8] sm:$0xff]
    %v258 = vld [vmem:[#allocation2 + $0x3b0] sm:$0xff]
    %v259 = vld [vmem:[#allocation2 + $0x3b8] sm:$0xff]
    %v260 = vld [vmem:[#allocation2 + $0x3c0] sm:$0xff]
    %v261 = vld [vmem:[#allocation2 + $0x3c8] sm:$0xff]
    %v262 = vld [vmem:[#allocation2 + $0x3d0] sm:$0xff]
    %v263 = vld [vmem:[#allocation2 + $0x3d8] sm:$0xff]
    %v264 = vld [vmem:[#allocation2 + $0x3e0] sm:$0xff]
    %v265 = vld [vmem:[#allocation2 + $0x3e8] sm:$0xff]
    %v266 = vld [vmem:[#allocation2 + $0x3f0] sm:$0xff]
    %v267 = vld [vmem:[#allocation2 + $0x3f8] sm:$0xff]
    %v268 = vld [vmem:[#allocation2 + $0x400] sm:$0xff]
    %v269 = vld [vmem:[#allocation2 + $0x408] sm:$0xff]
    %v270 = vld [vmem:[#allocation2 + $0x410] sm:$0xff]
    %v271 = vld [vmem:[#allocation2 + $0x418] sm:$0xff]
    %v272 = vld [vmem:[#allocation2 + $0x420] sm:$0xff]
    %v273 = vld [vmem:[#allocation2 + $0x428] sm:$0xff]
    %v274 = vld [vmem:[#allocation2 + $0x430] sm:$0xff]
    %v275 = vld [vmem:[#allocation2 + $0x438] sm:$0xff]
    %v276 = vld [vmem:[#allocation2 + $0x440] sm:$0xff]
    %v277 = vld [vmem:[#allocation2 + $0x448] sm:$0xff]
    %v278 = vld [vmem:[#allocation2 + $0x450] sm:$0xff]
    %v279 = vld [vmem:[#allocation2 + $0x458] sm:$0xff]
    %v280 = vld [vmem:[#allocation2 + $0x460] sm:$0xff]
    %v281 = vld [vmem:[#allocation2 + $0x468] sm:$0xff]
    %v282 = vld [vmem:[#allocation2 + $0x470] sm:$0xff]
    %v283 = vld [vmem:[#allocation2 + $0x478] sm:$0xff]
    %v284 = vld [vmem:[#allocation2 + $0x480] sm:$0xff]
    %v285 = vld [vmem:[#allocation2 + $0x488] sm:$0xff]
    %v286 = vld [vmem:[#allocation2 + $0x490] sm:$0xff]
    %v287 = vld [vmem:[#allocation2 + $0x498] sm:$0xff]
    %v288 = vld [vmem:[#allocation2 + $0x4a0] sm:$0xff]
    %v289 = vld [vmem:[#allocation2 + $0x4a8] sm:$0xff]
    %v290 = vld [vmem:[#allocation2 + $0x4b0] sm:$0xff]
    %v291 = vld [vmem:[#allocation2 + $0x4b8] sm:$0xff]
    %v292 = vld [vmem:[#allocation2 + $0x4c0] sm:$0xff]
    %v293 = vld [vmem:[#allocation2 + $0x4c8] sm:$0xff]
    %v294 = vld [vmem:[#allocation2 + $0x4d0] sm:$0xff]
    %v295 = vld [vmem:[#allocation2 + $0x4d8] sm:$0xff]
    %v296 = vld [vmem:[#allocation2 + $0x4e0] sm:$0xff]
    %v297 = vld [vmem:[#allocation2 + $0x4e8] sm:$0xff]
    %v298 = vld [vmem:[#allocation2 + $0x4f0] sm:$0xff]
    %v299 = vld [vmem:[#allocation2 + $0x4f8] sm:$0xff]
    %v300 = vld [vmem:[#allocation2 + $0x500] sm:$0xff]
    %v301 = vld [vmem:[#allocation2 + $0x508] sm:$0xff]
    %v302 = vld [vmem:[#allocation2 + $0x510] sm:$0xff]
    %v303 = vld [vmem:[#allocation2 + $0x518] sm:$0xff]
    %v304 = vld [vmem:[#allocation2 + $0x520] sm:$0xff]
    %v305 = vld [vmem:[#allocation2 + $0x528] sm:$0xff]
    %v306 = vld [vmem:[#allocation2 + $0x530] sm:$0xff]
    %v307 = vld [vmem:[#allocation2 + $0x538] sm:$0xff]
    %v308 = vld [vmem:[#allocation2 + $0x540] sm:$0xff]
    %v309 = vld [vmem:[#allocation2 + $0x548] sm:$0xff]
    %v310 = vld [vmem:[#allocation2 + $0x550] sm:$0xff]
    %v311 = vld [vmem:[#allocation2 + $0x558] sm:$0xff]
    %v312 = vld [vmem:[#allocation2 + $0x560] sm:$0xff]
    %v313 = vld [vmem:[#allocation2 + $0x568] sm:$0xff]
    %v314 = vld [vmem:[#allocation2 + $0x570] sm:$0xff]
    %v315 = vld [vmem:[#allocation2 + $0x578] sm:$0xff]
    %v316 = vld [vmem:[#allocation2 + $0x580] sm:$0xff]
    %v317 = vld [vmem:[#allocation2 + $0x588] sm:$0xff]
    %v318 = vld [vmem:[#allocation2 + $0x590] sm:$0xff]
    %v319 = vld [vmem:[#allocation2 + $0x598] sm:$0xff]
    %v320 = vld [vmem:[#allocation2 + $0x5a0] sm:$0xff]
    %v321 = vld [vmem:[#allocation2 + $0x5a8] sm:$0xff]
    %v322 = vld [vmem:[#allocation2 + $0x5b0] sm:$0xff]
    %v323 = vld [vmem:[#allocation2 + $0x5b8] sm:$0xff]
    %v324 = vld [vmem:[#allocation2 + $0x5c0] sm:$0xff]
    %v325 = vld [vmem:[#allocation2 + $0x5c8] sm:$0xff]
    %v326 = vld [vmem:[#allocation2 + $0x5d0] sm:$0xff]
    %v327 = vld [vmem:[#allocation2 + $0x5d8] sm:$0xff]
    %v328 = vld [vmem:[#allocation2 + $0x5e0] sm:$0xff]
    %v329 = vld [vmem:[#allocation2 + $0x5e8] sm:$0xff]
    %v330 = vld [vmem:[#allocation2 + $0x5f0] sm:$0xff]
    %v331 = vld [vmem:[#allocation2 + $0x5f8] sm:$0xff]
    %v332 = vld [vmem:[#allocation2 + $0x600] sm:$0xff]
    %v333 = vld [vmem:[#allocation2 + $0x608] sm:$0xff]
    %v334 = vld [vmem:[#allocation2 + $0x610] sm:$0xff]
    %v335 = vld [vmem:[#allocation2 + $0x618] sm:$0xff]
    %v336 = vld [vmem:[#allocation2 + $0x620] sm:$0xff]
    %v337 = vld [vmem:[#allocation2 + $0x628] sm:$0xff]
    %v338 = vld [vmem:[#allocation2 + $0x630] sm:$0xff]
    %v339 = vld [vmem:[#allocation2 + $0x638] sm:$0xff]
    %v340 = vld [vmem:[#allocation2 + $0x640] sm:$0xff]
    %v341 = vld [vmem:[#allocation2 + $0x648] sm:$0xff]
    %v342 = vld [vmem:[#allocation2 + $0x650] sm:$0xff]
    %v343 = vld [vmem:[#allocation2 + $0x658] sm:$0xff]
    %v344 = vld [vmem:[#allocation2 + $0x660] sm:$0xff]
    %v345 = vld [vmem:[#allocation2 + $0x668] sm:$0xff]
    %v346 = vld [vmem:[#allocation2 + $0x670] sm:$0xff]
    %v347 = vld [vmem:[#allocation2 + $0x678] sm:$0xff]
    %v348 = vld [vmem:[#allocation2 + $0x680] sm:$0xff]
    %v349 = vld [vmem:[#allocation2 + $0x688] sm:$0xff]
    %v350 = vld [vmem:[#allocation2 + $0x690] sm:$0xff]
    %v351 = vld [vmem:[#allocation2 + $0x698] sm:$0xff]
    %v352 = vld [vmem:[#allocation2 + $0x6a0] sm:$0xff]
    %v353 = vld [vmem:[#allocation2 + $0x6a8] sm:$0xff]
    %v354 = vld [vmem:[#allocation2 + $0x6b0] sm:$0xff]
    %v355 = vld [vmem:[#allocation2 + $0x6b8] sm:$0xff]
    %v356 = vld [vmem:[#allocation2 + $0x6c0] sm:$0xff]
    %v357 = vld [vmem:[#allocation2 + $0x6c8] sm:$0xff]
    %v358 = vld [vmem:[#allocation2 + $0x6d0] sm:$0xff]
    %v359 = vld [vmem:[#allocation2 + $0x6d8] sm:$0xff]
    %v360 = vld [vmem:[#allocation2 + $0x6e0] sm:$0xff]
    %v361 = vld [vmem:[#allocation2 + $0x6e8] sm:$0xff]
    %v362 = vld [vmem:[#allocation2 + $0x6f0] sm:$0xff]
    %v363 = vld [vmem:[#allocation2 + $0x6f8] sm:$0xff]
    %v364 = vld [vmem:[#allocation2 + $0x700] sm:$0xff]
    %v365 = vld [vmem:[#allocation2 + $0x708] sm:$0xff]
    %v366 = vld [vmem:[#allocation2 + $0x710] sm:$0xff]
    %v367 = vld [vmem:[#allocation2 + $0x718] sm:$0xff]
    %v368 = vld [vmem:[#allocation2 + $0x720] sm:$0xff]
    %v369 = vld [vmem:[#allocation2 + $0x728] sm:$0xff]
    %v370 = vld [vmem:[#allocation2 + $0x730] sm:$0xff]
    %v371 = vld [vmem:[#allocation2 + $0x738] sm:$0xff]
    %v372 = vld [vmem:[#allocation2 + $0x740] sm:$0xff]
    %v373 = vld [vmem:[#allocation2 + $0x748] sm:$0xff]
    %v374 = vld [vmem:[#allocation2 + $0x750] sm:$0xff]
    %v375 = vld [vmem:[#allocation2 + $0x758] sm:$0xff]
    %v376 = vld [vmem:[#allocation2 + $0x760] sm:$0xff]
    %v377 = vld [vmem:[#allocation2 + $0x768] sm:$0xff]
    %v378 = vld [vmem:[#allocation2 + $0x770] sm:$0xff]
    %v379 = vld [vmem:[#allocation2 + $0x778] sm:$0xff]
    %v380 = vld [vmem:[#allocation2 + $0x780] sm:$0xff]
    %v381 = vld [vmem:[#allocation2 + $0x788] sm:$0xff]
    %v382 = vld [vmem:[#allocation2 + $0x790] sm:$0xff]
    %v383 = vld [vmem:[#allocation2 + $0x798] sm:$0xff]
    %v384 = vld [vmem:[#allocation2 + $0x7a0] sm:$0xff]
    %v385 = vld [vmem:[#allocation2 + $0x7a8] sm:$0xff]
    %v386 = vld [vmem:[#allocation2 + $0x7b0] sm:$0xff]
    %v387 = vld [vmem:[#allocation2 + $0x7b8] sm:$0xff]
    %v388 = vld [vmem:[#allocation2 + $0x7c0] sm:$0xff]
    %v389 = vld [vmem:[#allocation2 + $0x7c8] sm:$0xff]
    %v390 = vld [vmem:[#allocation2 + $0x7d0] sm:$0xff]
    %v391 = vld [vmem:[#allocation2 + $0x7d8] sm:$0xff]
    %v392 = vld [vmem:[#allocation2 + $0x7e0] sm:$0xff]
    %v393 = vld [vmem:[#allocation2 + $0x7e8] sm:$0xff]
    %v394 = vld [vmem:[#allocation2 + $0x7f0] sm:$0xff]
    %v395 = vld [vmem:[#allocation2 + $0x7f8] sm:$0xff]
    %v396 = vld [vmem:[#allocation2 + $0x800] sm:$0xff]
    %v397 = vld [vmem:[#allocation2 + $0x808] sm:$0xff]
    %v398 = vld [vmem:[#allocation2 + $0x810] sm:$0xff]
    %v399 = vld [vmem:[#allocation2 + $0x818] sm:$0xff]
    %v400 = vld [vmem:[#allocation2 + $0x820] sm:$0xff]
    %v401 = vld [vmem:[#allocation2 + $0x828] sm:$0xff]
    %v402 = vld [vmem:[#allocation2 + $0x830] sm:$0xff]
    %v403 = vld [vmem:[#allocation2 + $0x838] sm:$0xff]
    %v404 = vld [vmem:[#allocation2 + $0x840] sm:$0xff]
    %v405 = vld [vmem:[#allocation2 + $0x848] sm:$0xff]
    %v406 = vld [vmem:[#allocation2 + $0x850] sm:$0xff]
    %v407 = vld [vmem:[#allocation2 + $0x858] sm:$0xff]
    %v408 = vld [vmem:[#allocation2 + $0x860] sm:$0xff]
    %v409 = vld [vmem:[#allocation2 + $0x868] sm:$0xff]
    %v410 = vld [vmem:[#allocation2 + $0x870] sm:$0xff]
    %v411 = vld [vmem:[#allocation2 + $0x878] sm:$0xff]
    %v412 = vld [vmem:[#allocation2 + $0x880] sm:$0xff]
    %v413 = vld [vmem:[#allocation2 + $0x888] sm:$0xff]
    %v414 = vld [vmem:[#allocation2 + $0x890] sm:$0xff]
    %v415 = vld [vmem:[#allocation2 + $0x898] sm:$0xff]
    %v416 = vld [vmem:[#allocation2 + $0x8a0] sm:$0xff]
    %v417 = vld [vmem:[#allocation2 + $0x8a8] sm:$0xff]
    %v418 = vld [vmem:[#allocation2 + $0x8b0] sm:$0xff]
    %v419 = vld [vmem:[#allocation2 + $0x8b8] sm:$0xff]
    %v420 = vld [vmem:[#allocation2 + $0x8c0] sm:$0xff]
    %v421 = vld [vmem:[#allocation2 + $0x8c8] sm:$0xff]
    %v422 = vld [vmem:[#allocation2 + $0x8d0] sm:$0xff]
    %v423 = vld [vmem:[#allocation2 + $0x8d8] sm:$0xff]
    %v424 = vld [vmem:[#allocation2 + $0x8e0] sm:$0xff]
    %v425 = vld [vmem:[#allocation2 + $0x8e8] sm:$0xff]
    %v426 = vld [vmem:[#allocation2 + $0x8f0] sm:$0xff]
    %v427 = vld [vmem:[#allocation2 + $0x8f8] sm:$0xff]
    %v428 = vld [vmem:[#allocation2 + $0x900] sm:$0xff]
    %v429 = vld [vmem:[#allocation2 + $0x908] sm:$0xff]
    %v430 = vld [vmem:[#allocation2 + $0x910] sm:$0xff]
    %v431 = vld [vmem:[#allocation2 + $0x918] sm:$0xff]
    %v432 = vld [vmem:[#allocation2 + $0x920] sm:$0xff]
    %v433 = vld [vmem:[#allocation2 + $0x928] sm:$0xff]
    %v434 = vld [vmem:[#allocation2 + $0x930] sm:$0xff]
    %v435 = vld [vmem:[#allocation2 + $0x938] sm:$0xff]
    %v436 = vld [vmem:[#allocation2 + $0x940] sm:$0xff]
    %v437 = vld [vmem:[#allocation2 + $0x948] sm:$0xff]
    %v438 = vld [vmem:[#allocation2 + $0x950] sm:$0xff]
    %v439 = vld [vmem:[#allocation2 + $0x958] sm:$0xff]
    %v440 = vld [vmem:[#allocation2 + $0x960] sm:$0xff]
    %v441 = vld [vmem:[#allocation2 + $0x968] sm:$0xff]
    %v442 = vld [vmem:[#allocation2 + $0x970] sm:$0xff]
    %v443 = vld [vmem:[#allocation2 + $0x978] sm:$0xff]
    %v444 = vld [vmem:[#allocation2 + $0x980] sm:$0xff]
    %v445 = vld [vmem:[#allocation2 + $0x988] sm:$0xff]
    %v446 = vld [vmem:[#allocation2 + $0x990] sm:$0xff]
    %v447 = vld [vmem:[#allocation2 + $0x998] sm:$0xff]
    %v448 = vld [vmem:[#allocation2 + $0x9a0] sm:$0xff]
    %v449 = vld [vmem:[#allocation2 + $0x9a8] sm:$0xff]
    %v450 = vld [vmem:[#allocation2 + $0x9b0] sm:$0xff]
    %v451 = vld [vmem:[#allocation2 + $0x9b8] sm:$0xff]
    %v452 = vld [vmem:[#allocation2 + $0x9c0] sm:$0xff]
    %v453 = vld [vmem:[#allocation2 + $0x9c8] sm:$0xff]
    %v454 = vld [vmem:[#allocation2 + $0x9d0] sm:$0xff]
    %v455 = vld [vmem:[#allocation2 + $0x9d8] sm:$0xff]
    %v456 = vld [vmem:[#allocation2 + $0x9e0] sm:$0xff]
    %v457 = vld [vmem:[#allocation2 + $0x9e8] sm:$0xff]
    %v458 = vld [vmem:[#allocation2 + $0x9f0] sm:$0xff]
    %v459 = vld [vmem:[#allocation2 + $0x9f8] sm:$0xff]
    %v460 = vld [vmem:[#allocation2 + $0xa00] sm:$0xff]
    %v461 = vld [vmem:[#allocation2 + $0xa08] sm:$0xff]
    %v462 = vld [vmem:[#allocation2 + $0xa10] sm:$0xff]
    %v463 = vld [vmem:[#allocation2 + $0xa18] sm:$0xff]
    %v464 = vld [vmem:[#allocation2 + $0xa20] sm:$0xff]
    %v465 = vld [vmem:[#allocation2 + $0xa28] sm:$0xff]
    %v466 = vld [vmem:[#allocation2 + $0xa30] sm:$0xff]
    %v467 = vld [vmem:[#allocation2 + $0xa38] sm:$0xff]
    %v468 = vld [vmem:[#allocation2 + $0xa40] sm:$0xff]
    %v469 = vld [vmem:[#allocation2 + $0xa48] sm:$0xff]
    %v470 = vld [vmem:[#allocation2 + $0xa50] sm:$0xff]
    %v471 = vld [vmem:[#allocation2 + $0xa58] sm:$0xff]
    %v472 = vld [vmem:[#allocation2 + $0xa60] sm:$0xff]
    %v473 = vld [vmem:[#allocation2 + $0xa68] sm:$0xff]
    %v474 = vld [vmem:[#allocation2 + $0xa70] sm:$0xff]
    %v475 = vld [vmem:[#allocation2 + $0xa78] sm:$0xff]
    %v476 = vld [vmem:[#allocation2 + $0xa80] sm:$0xff]
    %v477 = vld [vmem:[#allocation2 + $0xa88] sm:$0xff]
    %v478 = vld [vmem:[#allocation2 + $0xa90] sm:$0xff]
    %v479 = vld [vmem:[#allocation2 + $0xa98] sm:$0xff]
    %v480 = vld [vmem:[#allocation2 + $0xaa0] sm:$0xff]
    %v481 = vld [vmem:[#allocation2 + $0xaa8] sm:$0xff]
    %v482 = vld [vmem:[#allocation2 + $0xab0] sm:$0xff]
    %v483 = vld [vmem:[#allocation2 + $0xab8] sm:$0xff]
    %v484 = vld [vmem:[#allocation2 + $0xac0] sm:$0xff]
    %v485 = vld [vmem:[#allocation2 + $0xac8] sm:$0xff]
    %v486 = vld [vmem:[#allocation2 + $0xad0] sm:$0xff]
    %v487 = vld [vmem:[#allocation2 + $0xad8] sm:$0xff]
    %v488 = vld [vmem:[#allocation2 + $0xae0] sm:$0xff]
    %v489 = vld [vmem:[#allocation2 + $0xae8] sm:$0xff]
    %v490 = vld [vmem:[#allocation2 + $0xaf0] sm:$0xff]
    %v491 = vld [vmem:[#allocation2 + $0xaf8] sm:$0xff]
    %v492 = vld [vmem:[#allocation2 + $0xb00] sm:$0xff]
    %v493 = vld [vmem:[#allocation2 + $0xb08] sm:$0xff]
    %v494 = vld [vmem:[#allocation2 + $0xb10] sm:$0xff]
    %v495 = vld [vmem:[#allocation2 + $0xb18] sm:$0xff]
    %v496 = vld [vmem:[#allocation2 + $0xb20] sm:$0xff]
    %v497 = vld [vmem:[#allocation2 + $0xb28] sm:$0xff]
    %v498 = vld [vmem:[#allocation2 + $0xb30] sm:$0xff]
    %v499 = vld [vmem:[#allocation2 + $0xb38] sm:$0xff]
    %v500 = vld [vmem:[#allocation2 + $0xb40] sm:$0xff]
    %v501 = vld [vmem:[#allocation2 + $0xb48] sm:$0xff]
    %v502 = vld [vmem:[#allocation2 + $0xb50] sm:$0xff]
    %v503 = vld [vmem:[#allocation2 + $0xb58] sm:$0xff]
    %v504 = vld [vmem:[#allocation2 + $0xb60] sm:$0xff]
    %v505 = vld [vmem:[#allocation2 + $0xb68] sm:$0xff]
    %v506 = vld [vmem:[#allocation2 + $0xb70] sm:$0xff]
    %v507 = vld [vmem:[#allocation2 + $0xb78] sm:$0xff]
    %v508 = vld [vmem:[#allocation2 + $0xb80] sm:$0xff]
    %v509 = vld [vmem:[#allocation2 + $0xb88] sm:$0xff]
    %v510 = vld [vmem:[#allocation2 + $0xb90] sm:$0xff]
    %v511 = vld [vmem:[#allocation2 + $0xb98] sm:$0xff]
    %v512 = vld [vmem:[#allocation2 + $0xba0] sm:$0xff]
    %v513 = vld [vmem:[#allocation2 + $0xba8] sm:$0xff]
    %v514 = vld [vmem:[#allocation2 + $0xbb0] sm:$0xff]
    %v515 = vld [vmem:[#allocation2 + $0xbb8] sm:$0xff]
    %v516 = vld [vmem:[#allocation2 + $0xbc0] sm:$0xff]
    %v517 = vld [vmem:[#allocation2 + $0xbc8] sm:$0xff]
    %v518 = vld [vmem:[#allocation2 + $0xbd0] sm:$0xff]
    %v519 = vld [vmem:[#allocation2 + $0xbd8] sm:$0xff]
    %v520 = vld [vmem:[#allocation2 + $0xbe0] sm:$0xff]
    %v521 = vld [vmem:[#allocation2 + $0xbe8] sm:$0xff]
    %v522 = vld [vmem:[#allocation2 + $0xbf0] sm:$0xff]
    %v523 = vld [vmem:[#allocation2 + $0xbf8] sm:$0xff]
    %v524 = vld [vmem:[#allocation2 + $0xc00] sm:$0xff]
    %v525 = vld [vmem:[#allocation2 + $0xc08] sm:$0xff]
    %v526 = vld [vmem:[#allocation2 + $0xc10] sm:$0xff]
    %v527 = vld [vmem:[#allocation2 + $0xc18] sm:$0xff]
    %v528 = vld [vmem:[#allocation2 + $0xc20] sm:$0xff]
    %v529 = vld [vmem:[#allocation2 + $0xc28] sm:$0xff]
    %v530 = vld [vmem:[#allocation2 + $0xc30] sm:$0xff]
    %v531 = vld [vmem:[#allocation2 + $0xc38] sm:$0xff]
    %v532 = vld [vmem:[#allocation2 + $0xc40] sm:$0xff]
    %v533 = vld [vmem:[#allocation2 + $0xc48] sm:$0xff]
    %v534 = vld [vmem:[#allocation2 + $0xc50] sm:$0xff]
    %v535 = vld [vmem:[#allocation2 + $0xc58] sm:$0xff]
    %v536 = vld [vmem:[#allocation2 + $0xc60] sm:$0xff]
    %v537 = vld [vmem:[#allocation2 + $0xc68] sm:$0xff]
    %v538 = vld [vmem:[#allocation2 + $0xc70] sm:$0xff]
    %v539 = vld [vmem:[#allocation2 + $0xc78] sm:$0xff]
    %v540 = vld [vmem:[#allocation2 + $0xc80] sm:$0xff]
    %v541 = vld [vmem:[#allocation2 + $0xc88] sm:$0xff]
    %v542 = vld [vmem:[#allocation2 + $0xc90] sm:$0xff]
    %v543 = vld [vmem:[#allocation2 + $0xc98] sm:$0xff]
    %v544 = vld [vmem:[#allocation2 + $0xca0] sm:$0xff]
    %v545 = vld [vmem:[#allocation2 + $0xca8] sm:$0xff]
    %v546 = vld [vmem:[#allocation2 + $0xcb0] sm:$0xff]
    %v547 = vld [vmem:[#allocation2 + $0xcb8] sm:$0xff]
    %v548 = vld [vmem:[#allocation2 + $0xcc0] sm:$0xff]
    %v549 = vld [vmem:[#allocation2 + $0xcc8] sm:$0xff]
    %v550 = vld [vmem:[#allocation2 + $0xcd0] sm:$0xff]
    %v551 = vld [vmem:[#allocation2 + $0xcd8] sm:$0xff]
    %v552 = vld [vmem:[#allocation2 + $0xce0] sm:$0xff]
    %v553 = vld [vmem:[#allocation2 + $0xce8] sm:$0xff]
    %v554 = vld [vmem:[#allocation2 + $0xcf0] sm:$0xff]
    %v555 = vld [vmem:[#allocation2 + $0xcf8] sm:$0xff]
    %v556 = vld [vmem:[#allocation2 + $0xd00] sm:$0xff]
    %v557 = vld [vmem:[#allocation2 + $0xd08] sm:$0xff]
    %v558 = vld [vmem:[#allocation2 + $0xd10] sm:$0xff]
    %v559 = vld [vmem:[#allocation2 + $0xd18] sm:$0xff]
    %v560 = vld [vmem:[#allocation2 + $0xd20] sm:$0xff]
    %v561 = vld [vmem:[#allocation2 + $0xd28] sm:$0xff]
    %v562 = vld [vmem:[#allocation2 + $0xd30] sm:$0xff]
    %v563 = vld [vmem:[#allocation2 + $0xd38] sm:$0xff]
    %v564 = vld [vmem:[#allocation2 + $0xd40] sm:$0xff]
    %v565 = vld [vmem:[#allocation2 + $0xd48] sm:$0xff]
    %v566 = vld [vmem:[#allocation2 + $0xd50] sm:$0xff]
    %v567 = vld [vmem:[#allocation2 + $0xd58] sm:$0xff]
    %v568 = vld [vmem:[#allocation2 + $0xd60] sm:$0xff]
    %v569 = vld [vmem:[#allocation2 + $0xd68] sm:$0xff]
    %v570 = vld [vmem:[#allocation2 + $0xd70] sm:$0xff]
    %v571 = vld [vmem:[#allocation2 + $0xd78] sm:$0xff]
    %v572 = vld [vmem:[#allocation2 + $0xd80] sm:$0xff]
    %v573 = vld [vmem:[#allocation2 + $0xd88] sm:$0xff]
    %v574 = vld [vmem:[#allocation2 + $0xd90] sm:$0xff]
    %v575 = vld [vmem:[#allocation2 + $0xd98] sm:$0xff]
    %v576 = vld [vmem:[#allocation2 + $0xda0] sm:$0xff]
    %v577 = vld [vmem:[#allocation2 + $0xda8] sm:$0xff]
    %v578 = vld [vmem:[#allocation2 + $0xdb0] sm:$0xff]
    %v579 = vld [vmem:[#allocation2 + $0xdb8] sm:$0xff]
    %v580 = vld [vmem:[#allocation2 + $0xdc0] sm:$0xff]
    %v581 = vld [vmem:[#allocation2 + $0xdc8] sm:$0xff]
    %v582 = vld [vmem:[#allocation2 + $0xdd0] sm:$0xff]
    %v583 = vld [vmem:[#allocation2 + $0xdd8] sm:$0xff]
    %v584 = vld [vmem:[#allocation2 + $0xde0] sm:$0xff]
    %v585 = vld [vmem:[#allocation2 + $0xde8] sm:$0xff]
    %v586 = vld [vmem:[#allocation2 + $0xdf0] sm:$0xff]
    %v587 = vld [vmem:[#allocation2 + $0xdf8] sm:$0xff]
    %v588 = vld [vmem:[#allocation2 + $0xe00] sm:$0xff]
    %v589 = vld [vmem:[#allocation2 + $0xe08] sm:$0xff]
    %v590 = vld [vmem:[#allocation2 + $0xe10] sm:$0xff]
    %v591 = vld [vmem:[#allocation2 + $0xe18] sm:$0xff]
    %v592 = vld [vmem:[#allocation2 + $0xe20] sm:$0xff]
    %v593 = vld [vmem:[#allocation2 + $0xe28] sm:$0xff]
    %v594 = vld [vmem:[#allocation2 + $0xe30] sm:$0xff]
    %v595 = vld [vmem:[#allocation2 + $0xe38] sm:$0xff]
    %v596 = vld [vmem:[#allocation2 + $0xe40] sm:$0xff]
    %v597 = vld [vmem:[#allocation2 + $0xe48] sm:$0xff]
    %v598 = vld [vmem:[#allocation2 + $0xe50] sm:$0xff]
    %v599 = vld [vmem:[#allocation2 + $0xe58] sm:$0xff]
    %v600 = vld [vmem:[#allocation2 + $0xe60] sm:$0xff]
    %v601 = vld [vmem:[#allocation2 + $0xe68] sm:$0xff]
    %v602 = vld [vmem:[#allocation2 + $0xe70] sm:$0xff]
    %v603 = vld [vmem:[#allocation2 + $0xe78] sm:$0xff]
    %v604 = vld [vmem:[#allocation2 + $0xe80] sm:$0xff]
    %v605 = vld [vmem:[#allocation2 + $0xe88] sm:$0xff]
    %v606 = vld [vmem:[#allocation2 + $0xe90] sm:$0xff]
    %v607 = vld [vmem:[#allocation2 + $0xe98] sm:$0xff]
    %v608 = vld [vmem:[#allocation2 + $0xea0] sm:$0xff]
    %v609 = vld [vmem:[#allocation2 + $0xea8] sm:$0xff]
    %v610 = vld [vmem:[#allocation2 + $0xeb0] sm:$0xff]
    %v611 = vld [vmem:[#allocation2 + $0xeb8] sm:$0xff]
    %v612 = vld [vmem:[#allocation2 + $0xec0] sm:$0xff]
    %v613 = vld [vmem:[#allocation2 + $0xec8] sm:$0xff]
    %v614 = vld [vmem:[#allocation2 + $0xed0] sm:$0xff]
    %v615 = vld [vmem:[#allocation2 + $0xed8] sm:$0xff]
    %v616 = vld [vmem:[#allocation2 + $0xee0] sm:$0xff]
    %v617 = vld [vmem:[#allocation2 + $0xee8] sm:$0xff]
    %v618 = vld [vmem:[#allocation2 + $0xef0] sm:$0xff]
    %v619 = vld [vmem:[#allocation2 + $0xef8] sm:$0xff]
    %v620 = vld [vmem:[#allocation2 + $0xf00] sm:$0xff]
    %v621 = vld [vmem:[#allocation2 + $0xf08] sm:$0xff]
    %v622 = vld [vmem:[#allocation2 + $0xf10] sm:$0xff]
    %v623 = vld [vmem:[#allocation2 + $0xf18] sm:$0xff]
    %v624 = vld [vmem:[#allocation2 + $0xf20] sm:$0xff]
    %v625 = vld [vmem:[#allocation2 + $0xf28] sm:$0xff]
    %v626 = vld [vmem:[#allocation2 + $0xf30] sm:$0xff]
    %v627 = vld [vmem:[#allocation2 + $0xf38] sm:$0xff]
    %v628 = vld [vmem:[#allocation2 + $0xf40] sm:$0xff]
    %v629 = vld [vmem:[#allocation2 + $0xf48] sm:$0xff]
    %v630 = vld [vmem:[#allocation2 + $0xf50] sm:$0xff]
    %v631 = vld [vmem:[#allocation2 + $0xf58] sm:$0xff]
    %v632 = vld [vmem:[#allocation2 + $0xf60] sm:$0xff]
    %v633 = vld [vmem:[#allocation2 + $0xf68] sm:$0xff]
    %v634 = vld [vmem:[#allocation2 + $0xf70] sm:$0xff]
    %v635 = vld [vmem:[#allocation2 + $0xf78] sm:$0xff]
    %v636 = vld [vmem:[#allocation2 + $0xf80] sm:$0xff]
    %v637 = vld [vmem:[#allocation2 + $0xf88] sm:$0xff]
    %v638 = vld [vmem:[#allocation2 + $0xf90] sm:$0xff]
    %v639 = vld [vmem:[#allocation2 + $0xf98] sm:$0xff]
    %v640 = vld [vmem:[#allocation2 + $0xfa0] sm:$0xff]
    %v641 = vld [vmem:[#allocation2 + $0xfa8] sm:$0xff]
    %v642 = vld [vmem:[#allocation2 + $0xfb0] sm:$0xff]
    %v643 = vld [vmem:[#allocation2 + $0xfb8] sm:$0xff]
    %v644 = vld [vmem:[#allocation2 + $0xfc0] sm:$0xff]
    %v645 = vld [vmem:[#allocation2 + $0xfc8] sm:$0xff]
    %v646 = vld [vmem:[#allocation2 + $0xfd0] sm:$0xff]
    %v647 = vld [vmem:[#allocation2 + $0xfd8] sm:$0xff]
    %v648 = vld [vmem:[#allocation2 + $0xfe0] sm:$0xff]
    %v649 = vld [vmem:[#allocation2 + $0xfe8] sm:$0xff]
    %v650 = vld [vmem:[#allocation2 + $0xff0] sm:$0xff]
    %v651 = vld [vmem:[#allocation2 + $0xff8] sm:$0xff]
    %v652 = vld [vmem:[#allocation2 + $0x1000] sm:$0xff]
    %v653 = vld [vmem:[#allocation2 + $0x1008] sm:$0xff]
    %v654 = vld [vmem:[#allocation2 + $0x1010] sm:$0xff]
    %v655 = vld [vmem:[#allocation2 + $0x1018] sm:$0xff]
    %v656 = vld [vmem:[#allocation2 + $0x1020] sm:$0xff]
    %v657 = vld [vmem:[#allocation2 + $0x1028] sm:$0xff]
    %v658 = vld [vmem:[#allocation2 + $0x1030] sm:$0xff]
    %v659 = vld [vmem:[#allocation2 + $0x1038] sm:$0xff]
    %v660 = vld [vmem:[#allocation2 + $0x1040] sm:$0xff]
    %v661 = vld [vmem:[#allocation2 + $0x1048] sm:$0xff]
    %v662 = vld [vmem:[#allocation2 + $0x1050] sm:$0xff]
    %v663 = vld [vmem:[#allocation2 + $0x1058] sm:$0xff]
    %v664 = vld [vmem:[#allocation2 + $0x1060] sm:$0xff]
    %v665 = vld [vmem:[#allocation2 + $0x1068] sm:$0xff]
    %v666 = vld [vmem:[#allocation2 + $0x1070] sm:$0xff]
    %v667 = vld [vmem:[#allocation2 + $0x1078] sm:$0xff]
    %v668 = vld [vmem:[#allocation2 + $0x1080] sm:$0xff]
    %v669 = vld [vmem:[#allocation2 + $0x1088] sm:$0xff]
    %v670 = vld [vmem:[#allocation2 + $0x1090] sm:$0xff]
    %v671 = vld [vmem:[#allocation2 + $0x1098] sm:$0xff]
    %v672 = vld [vmem:[#allocation2 + $0x10a0] sm:$0xff]
    %v673 = vld [vmem:[#allocation2 + $0x10a8] sm:$0xff]
    %v674 = vld [vmem:[#allocation2 + $0x10b0] sm:$0xff]
    %v675 = vld [vmem:[#allocation2 + $0x10b8] sm:$0xff]
    %v676 = vld [vmem:[#allocation2 + $0x10c0] sm:$0xff]
    %v677 = vld [vmem:[#allocation2 + $0x10c8] sm:$0xff]
    %v678 = vld [vmem:[#allocation2 + $0x10d0] sm:$0xff]
    %v679 = vld [vmem:[#allocation2 + $0x10d8] sm:$0xff]
    %v680 = vld [vmem:[#allocation2 + $0x10e0] sm:$0xff]
    %v681 = vld [vmem:[#allocation2 + $0x10e8] sm:$0xff]
    %v682 = vld [vmem:[#allocation2 + $0x10f0] sm:$0xff]
    %v683 = vld [vmem:[#allocation2 + $0x10f8] sm:$0xff]
    %v684 = vld [vmem:[#allocation2 + $0x1100] sm:$0xff]
    %v685 = vld [vmem:[#allocation2 + $0x1108] sm:$0xff]
    %v686 = vld [vmem:[#allocation2 + $0x1110] sm:$0xff]
    %v687 = vld [vmem:[#allocation2 + $0x1118] sm:$0xff]
    %v688 = vld [vmem:[#allocation2 + $0x1120] sm:$0xff]
    %v689 = vld [vmem:[#allocation2 + $0x1128] sm:$0xff]
    %v690 = vld [vmem:[#allocation2 + $0x1130] sm:$0xff]
    %v691 = vld [vmem:[#allocation2 + $0x1138] sm:$0xff]
    %v692 = vld [vmem:[#allocation2 + $0x1140] sm:$0xff]
    %v693 = vld [vmem:[#allocation2 + $0x1148] sm:$0xff]
    %v694 = vld [vmem:[#allocation2 + $0x1150] sm:$0xff]
    %v695 = vld [vmem:[#allocation2 + $0x1158] sm:$0xff]
    %v696 = vld [vmem:[#allocation2 + $0x1160] sm:$0xff]
    %v697 = vld [vmem:[#allocation2 + $0x1168] sm:$0xff]
    %v698 = vld [vmem:[#allocation2 + $0x1170] sm:$0xff]
    %v699 = vld [vmem:[#allocation2 + $0x1178] sm:$0xff]
    %v700 = vld [vmem:[#allocation2 + $0x1180] sm:$0xff]
    %v701 = vld [vmem:[#allocation2 + $0x1188] sm:$0xff]
    %v702 = vld [vmem:[#allocation2 + $0x1190] sm:$0xff]
    %v703 = vld [vmem:[#allocation2 + $0x1198] sm:$0xff]
    %v704 = vld [vmem:[#allocation2 + $0x11a0] sm:$0xff]
    %v705 = vld [vmem:[#allocation2 + $0x11a8] sm:$0xff]
    %v706 = vld [vmem:[#allocation2 + $0x11b0] sm:$0xff]
    %v707 = vld [vmem:[#allocation2 + $0x11b8] sm:$0xff]
    %v708 = vld [vmem:[#allocation2 + $0x11c0] sm:$0xff]
    %v709 = vld [vmem:[#allocation2 + $0x11c8] sm:$0xff]
    %v710 = vld [vmem:[#allocation2 + $0x11d0] sm:$0xff]
    %v711 = vld [vmem:[#allocation2 + $0x11d8] sm:$0xff]
    %v712 = vld [vmem:[#allocation2 + $0x11e0] sm:$0xff]
    %v713 = vld [vmem:[#allocation2 + $0x11e8] sm:$0xff]
    %v714 = vld [vmem:[#allocation2 + $0x11f0] sm:$0xff]
    %v715 = vld [vmem:[#allocation2 + $0x11f8] sm:$0xff]
    %v716 = vld [vmem:[#allocation2 + $0x1200] sm:$0xff]
    %v717 = vld [vmem:[#allocation2 + $0x1208] sm:$0xff]
    %v718 = vld [vmem:[#allocation2 + $0x1210] sm:$0xff]
    %v719 = vld [vmem:[#allocation2 + $0x1218] sm:$0xff]
    %v720 = vld [vmem:[#allocation2 + $0x1220] sm:$0xff]
    %v721 = vld [vmem:[#allocation2 + $0x1228] sm:$0xff]
    %v722 = vld [vmem:[#allocation2 + $0x1230] sm:$0xff]
    %v723 = vld [vmem:[#allocation2 + $0x1238] sm:$0xff]
    %v724 = vld [vmem:[#allocation2 + $0x1240] sm:$0xff]
    %v725 = vld [vmem:[#allocation2 + $0x1248] sm:$0xff]
    %v726 = vld [vmem:[#allocation2 + $0x1250] sm:$0xff]
    %v727 = vld [vmem:[#allocation2 + $0x1258] sm:$0xff]
    %v728 = vld [vmem:[#allocation2 + $0x1260] sm:$0xff]
    %v729 = vld [vmem:[#allocation2 + $0x1268] sm:$0xff]
    %v730 = vld [vmem:[#allocation2 + $0x1270] sm:$0xff]
    %v731 = vld [vmem:[#allocation2 + $0x1278] sm:$0xff]
    %v732 = vld [vmem:[#allocation2 + $0x1280] sm:$0xff]
    %v733 = vld [vmem:[#allocation2 + $0x1288] sm:$0xff]
    %v734 = vld [vmem:[#allocation2 + $0x1290] sm:$0xff]
    %v735 = vld [vmem:[#allocation2 + $0x1298] sm:$0xff]
    %v736 = vld [vmem:[#allocation2 + $0x12a0] sm:$0xff]
    %v737 = vld [vmem:[#allocation2 + $0x12a8] sm:$0xff]
    %v738 = vld [vmem:[#allocation2 + $0x12b0] sm:$0xff]
    %v739 = vld [vmem:[#allocation2 + $0x12b8] sm:$0xff]
    %v740 = vld [vmem:[#allocation2 + $0x12c0] sm:$0xff]
    %v741 = vld [vmem:[#allocation2 + $0x12c8] sm:$0xff]
    %v742 = vld [vmem:[#allocation2 + $0x12d0] sm:$0xff]
    %v743 = vld [vmem:[#allocation2 + $0x12d8] sm:$0xff]
    %v744 = vld [vmem:[#allocation2 + $0x12e0] sm:$0xff]
    %v745 = vld [vmem:[#allocation2 + $0x12e8] sm:$0xff]
    %v746 = vld [vmem:[#allocation2 + $0x12f0] sm:$0xff]
    %v747 = vld [vmem:[#allocation2 + $0x12f8] sm:$0xff]
    %v748 = vld [vmem:[#allocation2 + $0x1300] sm:$0xff]
    %v749 = vld [vmem:[#allocation2 + $0x1308] sm:$0xff]
    %v750 = vld [vmem:[#allocation2 + $0x1310] sm:$0xff]
    %v751 = vld [vmem:[#allocation2 + $0x1318] sm:$0xff]
    %v752 = vld [vmem:[#allocation2 + $0x1320] sm:$0xff]
    %v753 = vld [vmem:[#allocation2 + $0x1328] sm:$0xff]
    %v754 = vld [vmem:[#allocation2 + $0x1330] sm:$0xff]
    %v755 = vld [vmem:[#allocation2 + $0x1338] sm:$0xff]
    %v756 = vld [vmem:[#allocation2 + $0x1340] sm:$0xff]
    %v757 = vld [vmem:[#allocation2 + $0x1348] sm:$0xff]
    %v758 = vld [vmem:[#allocation2 + $0x1350] sm:$0xff]
    %v759 = vld [vmem:[#allocation2 + $0x1358] sm:$0xff]
    %v760 = vld [vmem:[#allocation2 + $0x1360] sm:$0xff]
    %v761 = vld [vmem:[#allocation2 + $0x1368] sm:$0xff]
    %v762 = vld [vmem:[#allocation2 + $0x1370] sm:$0xff]
    %v763 = vld [vmem:[#allocation2 + $0x1378] sm:$0xff]
    %v764 = vld [vmem:[#allocation2 + $0x1380] sm:$0xff]
    %v765 = vld [vmem:[#allocation2 + $0x1388] sm:$0xff]
    %v766 = vld [vmem:[#allocation2 + $0x1390] sm:$0xff]
    %v767 = vld [vmem:[#allocation2 + $0x1398] sm:$0xff]
    %v768 = vld [vmem:[#allocation2 + $0x13a0] sm:$0xff]
    %v769 = vld [vmem:[#allocation2 + $0x13a8] sm:$0xff]
    %v770 = vld [vmem:[#allocation2 + $0x13b0] sm:$0xff]
    %v771 = vld [vmem:[#allocation2 + $0x13b8] sm:$0xff]
    %v772 = vld [vmem:[#allocation2 + $0x13c0] sm:$0xff]
    %v773 = vld [vmem:[#allocation2 + $0x13c8] sm:$0xff]
    %v774 = vld [vmem:[#allocation2 + $0x13d0] sm:$0xff]
    %v775 = vld [vmem:[#allocation2 + $0x13d8] sm:$0xff]
    %v776 = vld [vmem:[#allocation2 + $0x13e0] sm:$0xff]
    %v777 = vld [vmem:[#allocation2 + $0x13e8] sm:$0xff]
    %v778 = vld [vmem:[#allocation2 + $0x13f0] sm:$0xff]
    %v779 = vld [vmem:[#allocation2 + $0x13f8] sm:$0xff]
    %v780 = vld [vmem:[#allocation2 + $0x1400] sm:$0xff]
    %v781 = vld [vmem:[#allocation2 + $0x1408] sm:$0xff]
    %v782 = vld [vmem:[#allocation2 + $0x1410] sm:$0xff]
    %v783 = vld [vmem:[#allocation2 + $0x1418] sm:$0xff]
    %v784 = vld [vmem:[#allocation2 + $0x1420] sm:$0xff]
    %v785 = vld [vmem:[#allocation2 + $0x1428] sm:$0xff]
    %v786 = vld [vmem:[#allocation2 + $0x1430] sm:$0xff]
    %v787 = vld [vmem:[#allocation2 + $0x1438] sm:$0xff]
    %v788 = vld [vmem:[#allocation2 + $0x1440] sm:$0xff]
    %v789 = vld [vmem:[#allocation2 + $0x1448] sm:$0xff]
    %v790 = vld [vmem:[#allocation2 + $0x1450] sm:$0xff]
    %v791 = vld [vmem:[#allocation2 + $0x1458] sm:$0xff]
    %v792 = vld [vmem:[#allocation2 + $0x1460] sm:$0xff]
    %v793 = vld [vmem:[#allocation2 + $0x1468] sm:$0xff]
    %v794 = vld [vmem:[#allocation2 + $0x1470] sm:$0xff]
    %v795 = vld [vmem:[#allocation2 + $0x1478] sm:$0xff]
    %v796 = vld [vmem:[#allocation2 + $0x1480] sm:$0xff]
    %v797 = vld [vmem:[#allocation2 + $0x1488] sm:$0xff]
    %v798 = vld [vmem:[#allocation2 + $0x1490] sm:$0xff]
    %v799 = vld [vmem:[#allocation2 + $0x1498] sm:$0xff]
    %v800 = vld [vmem:[#allocation2 + $0x14a0] sm:$0xff]
    %v801 = vld [vmem:[#allocation2 + $0x14a8] sm:$0xff]
    %v802 = vld [vmem:[#allocation2 + $0x14b0] sm:$0xff]
    %v803 = vld [vmem:[#allocation2 + $0x14b8] sm:$0xff]
    %v804 = vld [vmem:[#allocation2 + $0x14c0] sm:$0xff]
    %v805 = vld [vmem:[#allocation2 + $0x14c8] sm:$0xff]
    %v806 = vld [vmem:[#allocation2 + $0x14d0] sm:$0xff]
    %v807 = vld [vmem:[#allocation2 + $0x14d8] sm:$0xff]
    %v808 = vld [vmem:[#allocation2 + $0x14e0] sm:$0xff]
    %v809 = vld [vmem:[#allocation2 + $0x14e8] sm:$0xff]
    %v810 = vld [vmem:[#allocation2 + $0x14f0] sm:$0xff]
    %v811 = vld [vmem:[#allocation2 + $0x14f8] sm:$0xff]
    %v812 = vld [vmem:[#allocation2 + $0x1500] sm:$0xff]
    %v813 = vld [vmem:[#allocation2 + $0x1508] sm:$0xff]
    %v814 = vld [vmem:[#allocation2 + $0x1510] sm:$0xff]
    %v815 = vld [vmem:[#allocation2 + $0x1518] sm:$0xff]
    %v816 = vld [vmem:[#allocation2 + $0x1520] sm:$0xff]
    %v817 = vld [vmem:[#allocation2 + $0x1528] sm:$0xff]
    %v818 = vld [vmem:[#allocation2 + $0x1530] sm:$0xff]
    %v819 = vld [vmem:[#allocation2 + $0x1538] sm:$0xff]
    %v820 = vld [vmem:[#allocation2 + $0x1540] sm:$0xff]
    %v821 = vld [vmem:[#allocation2 + $0x1548] sm:$0xff]
    %v822 = vld [vmem:[#allocation2 + $0x1550] sm:$0xff]
    %v823 = vld [vmem:[#allocation2 + $0x1558] sm:$0xff]
    %v824 = vld [vmem:[#allocation2 + $0x1560] sm:$0xff]
    %v825 = vld [vmem:[#allocation2 + $0x1568] sm:$0xff]
    %v826 = vld [vmem:[#allocation2 + $0x1570] sm:$0xff]
    %v827 = vld [vmem:[#allocation2 + $0x1578] sm:$0xff]
    %v828 = vld [vmem:[#allocation2 + $0x1580] sm:$0xff]
    %v829 = vld [vmem:[#allocation2 + $0x1588] sm:$0xff]
    %v830 = vld [vmem:[#allocation2 + $0x1590] sm:$0xff]
    %v831 = vld [vmem:[#allocation2 + $0x1598] sm:$0xff]
    %v832 = vld [vmem:[#allocation2 + $0x15a0] sm:$0xff]
    %v833 = vld [vmem:[#allocation2 + $0x15a8] sm:$0xff]
    %v834 = vld [vmem:[#allocation2 + $0x15b0] sm:$0xff]
    %v835 = vld [vmem:[#allocation2 + $0x15b8] sm:$0xff]
    %v836 = vld [vmem:[#allocation2 + $0x15c0] sm:$0xff]
    %v837 = vld [vmem:[#allocation2 + $0x15c8] sm:$0xff]
    %v838 = vld [vmem:[#allocation2 + $0x15d0] sm:$0xff]
    %v839 = vld [vmem:[#allocation2 + $0x15d8] sm:$0xff]
    %v840 = vld [vmem:[#allocation2 + $0x15e0] sm:$0xff]
    %v841 = vld [vmem:[#allocation2 + $0x15e8] sm:$0xff]
    %v842 = vld [vmem:[#allocation2 + $0x15f0] sm:$0xff]
    %v843 = vld [vmem:[#allocation2 + $0x15f8] sm:$0xff]
    %v844 = vld [vmem:[#allocation2 + $0x1600] sm:$0xff]
    %v845 = vld [vmem:[#allocation2 + $0x1608] sm:$0xff]
    %v846 = vld [vmem:[#allocation2 + $0x1610] sm:$0xff]
    %v847 = vld [vmem:[#allocation2 + $0x1618] sm:$0xff]
    %v848 = vld [vmem:[#allocation2 + $0x1620] sm:$0xff]
    %v849 = vld [vmem:[#allocation2 + $0x1628] sm:$0xff]
    %v850 = vld [vmem:[#allocation2 + $0x1630] sm:$0xff]
    %v851 = vld [vmem:[#allocation2 + $0x1638] sm:$0xff]
    %v852 = vld [vmem:[#allocation2 + $0x1640] sm:$0xff]
    %v853 = vld [vmem:[#allocation2 + $0x1648] sm:$0xff]
    %v854 = vld [vmem:[#allocation2 + $0x1650] sm:$0xff]
    %v855 = vld [vmem:[#allocation2 + $0x1658] sm:$0xff]
    %v856 = vld [vmem:[#allocation2 + $0x1660] sm:$0xff]
    %v857 = vld [vmem:[#allocation2 + $0x1668] sm:$0xff]
    %v858 = vld [vmem:[#allocation2 + $0x1670] sm:$0xff]
    %v859 = vld [vmem:[#allocation2 + $0x1678] sm:$0xff]
    %v860 = vld [vmem:[#allocation2 + $0x1680] sm:$0xff]
    %v861 = vld [vmem:[#allocation2 + $0x1688] sm:$0xff]
    %v862 = vld [vmem:[#allocation2 + $0x1690] sm:$0xff]
    %v863 = vld [vmem:[#allocation2 + $0x1698] sm:$0xff]
    %v864 = vld [vmem:[#allocation2 + $0x16a0] sm:$0xff]
    %v865 = vld [vmem:[#allocation2 + $0x16a8] sm:$0xff]
    %v866 = vld [vmem:[#allocation2 + $0x16b0] sm:$0xff]
    %v867 = vld [vmem:[#allocation2 + $0x16b8] sm:$0xff]
    %v868 = vld [vmem:[#allocation2 + $0x16c0] sm:$0xff]
    %v869 = vld [vmem:[#allocation2 + $0x16c8] sm:$0xff]
    %v870 = vld [vmem:[#allocation2 + $0x16d0] sm:$0xff]
    %v871 = vld [vmem:[#allocation2 + $0x16d8] sm:$0xff]
    %v872 = vld [vmem:[#allocation2 + $0x16e0] sm:$0xff]
    %v873 = vld [vmem:[#allocation2 + $0x16e8] sm:$0xff]
    %v874 = vld [vmem:[#allocation2 + $0x16f0] sm:$0xff]
    %v875 = vld [vmem:[#allocation2 + $0x16f8] sm:$0xff]
    %v876 = vld [vmem:[#allocation2 + $0x1700] sm:$0xff]
    %v877 = vld [vmem:[#allocation2 + $0x1708] sm:$0xff]
    %v878 = vld [vmem:[#allocation2 + $0x1710] sm:$0xff]
    %v879 = vld [vmem:[#allocation2 + $0x1718] sm:$0xff]
    %v880 = vld [vmem:[#allocation2 + $0x1720] sm:$0xff]
    %v881 = vld [vmem:[#allocation2 + $0x1728] sm:$0xff]
    %v882 = vld [vmem:[#allocation2 + $0x1730] sm:$0xff]
    %v883 = vld [vmem:[#allocation2 + $0x1738] sm:$0xff]
    %v884 = vld [vmem:[#allocation2 + $0x1740] sm:$0xff]
    %v885 = vld [vmem:[#allocation2 + $0x1748] sm:$0xff]
    %v886 = vld [vmem:[#allocation2 + $0x1750] sm:$0xff]
    %v887 = vld [vmem:[#allocation2 + $0x1758] sm:$0xff]
    %v888 = vld [vmem:[#allocation2 + $0x1760] sm:$0xff]
    %v889 = vld [vmem:[#allocation2 + $0x1768] sm:$0xff]
    %v890 = vld [vmem:[#allocation2 + $0x1770] sm:$0xff]
    %v891 = vld [vmem:[#allocation2 + $0x1778] sm:$0xff]
    %v892 = vld [vmem:[#allocation2 + $0x1780] sm:$0xff]
    %v893 = vld [vmem:[#allocation2 + $0x1788] sm:$0xff]
    %v894 = vld [vmem:[#allocation2 + $0x1790] sm:$0xff]
    %v895 = vld [vmem:[#allocation2 + $0x1798] sm:$0xff]
    %v896 = vld [vmem:[#allocation2 + $0x17a0] sm:$0xff]
    %v897 = vld [vmem:[#allocation2 + $0x17a8] sm:$0xff]
    %v898 = vld [vmem:[#allocation2 + $0x17b0] sm:$0xff]
    %v899 = vld [vmem:[#allocation2 + $0x17b8] sm:$0xff]
    %v900 = vld [vmem:[#allocation2 + $0x17c0] sm:$0xff]
    %v901 = vld [vmem:[#allocation2 + $0x17c8] sm:$0xff]
    %v902 = vld [vmem:[#allocation2 + $0x17d0] sm:$0xff]
    %v903 = vld [vmem:[#allocation2 + $0x17d8] sm:$0xff]
    %v904 = vld [vmem:[#allocation2 + $0x17e0] sm:$0xff]
    %v905 = vld [vmem:[#allocation2 + $0x17e8] sm:$0xff]
    %v906 = vld [vmem:[#allocation2 + $0x17f0] sm:$0xff]
    %v907 = vld [vmem:[#allocation2 + $0x17f8] sm:$0xff]
    %v908 = vld [vmem:[#allocation2 + $0x1800] sm:$0xff]
    %v909 = vld [vmem:[#allocation2 + $0x1808] sm:$0xff]
    %v910 = vld [vmem:[#allocation2 + $0x1810] sm:$0xff]
    %v911 = vld [vmem:[#allocation2 + $0x1818] sm:$0xff]
    %v912 = vld [vmem:[#allocation2 + $0x1820] sm:$0xff]
    %v913 = vld [vmem:[#allocation2 + $0x1828] sm:$0xff]
    %v914 = vld [vmem:[#allocation2 + $0x1830] sm:$0xff]
    %v915 = vld [vmem:[#allocation2 + $0x1838] sm:$0xff]
    %v916 = vld [vmem:[#allocation2 + $0x1840] sm:$0xff]
    %v917 = vld [vmem:[#allocation2 + $0x1848] sm:$0xff]
    %v918 = vld [vmem:[#allocation2 + $0x1850] sm:$0xff]
    %v919 = vld [vmem:[#allocation2 + $0x1858] sm:$0xff]
    %v920 = vld [vmem:[#allocation2 + $0x1860] sm:$0xff]
    %v921 = vld [vmem:[#allocation2 + $0x1868] sm:$0xff]
    %v922 = vld [vmem:[#allocation2 + $0x1870] sm:$0xff]
    %v923 = vld [vmem:[#allocation2 + $0x1878] sm:$0xff]
    %v924 = vld [vmem:[#allocation4] sm:$0xff]
    %v926 = vlaneseq
    %v927 = vshrl.u32 %v926, 7
    %v928 = vsub.s32 0, %v927
    %v929 = vrot.slane %v924, %v928
    %v930 = vlaneseq
    %v931 = vshrl.u32 %v930, 7
    %v932 = vsub.s32 1, %v931
    %v933 = vrot.slane %v924, %v932
    %v934 = vlaneseq
    %v935 = vshrl.u32 %v934, 7
    %v936 = vsub.s32 2, %v935
    %v937 = vrot.slane %v924, %v936
    %v938 = vlaneseq
    %v939 = vshrl.u32 %v938, 7
    %v940 = vsub.s32 3, %v939
    %v941 = vrot.slane %v924, %v940
    %v942 = vlaneseq
    %v943 = vshrl.u32 %v942, 7
    %v944 = vsub.s32 4, %v943
    %v945 = vrot.slane %v924, %v944
    %v946 = vlaneseq
    %v947 = vshrl.u32 %v946, 7
    %v948 = vsub.s32 5, %v947
    %v949 = vrot.slane %v924, %v948
    %v950 = vlaneseq
    %v951 = vshrl.u32 %v950, 7
    %v952 = vsub.s32 6, %v951
    %v953 = vrot.slane %v924, %v952
    %961 = vmatprep.subr.mxu0 %v141
    %962 = vmatpush1.msra.mxu0 %v140
    %963 = vmatprep.subr.mxu0 %v148
    %964 = vmatpush1.msra.mxu0 %v147
    %965 = vmatprep.subr.mxu0 %v155
    %966 = vmatpush1.msra.mxu0 %v154
    %967 = vmatprep.subr.mxu0 %v162
    %968 = vmatpush1.msra.mxu0 %v161
    %969 = vmatprep.subr.mxu0 %v169
    %970 = vmatpush1.msra.mxu0 %v168
    %971 = vmatprep.subr.mxu0 %v176
    %972 = vmatpush1.msra.mxu0 %v175
    %973 = vmatprep.subr.mxu0 %v183
    %974 = vmatpush1.msra.mxu0 %v182
    %975 = vmatprep.subr.mxu0 %v190
    %976 = vmatpush1.msra.mxu0 %v189
    %977 = vmatprep.subr.mxu0 %v197
    %978 = vmatpush1.msra.mxu0 %v196
    %979 = vmatprep.subr.mxu0 %v204
    %980 = vmatpush1.msra.mxu0 %v203
    %981 = vmatprep.subr.mxu0 %v211
    %982 = vmatpush1.msra.mxu0 %v210
    %983 = vmatprep.subr.mxu0 %v218
    %984 = vmatpush1.msra.mxu0 %v217
    %985 = vmatprep.subr.mxu0 %v225
    %986 = vmatpush1.msra.mxu0 %v224
    %987 = vmatprep.subr.mxu0 %v232
    %988 = vmatpush1.msra.mxu0 %v231
    %989 = vmatprep.subr.mxu0 %v239
    %990 = vmatpush1.msra.mxu0 %v238
    %991 = vmatprep.subr.mxu0 %v246
    %992 = vmatpush1.msra.mxu0 %v245
    %993 = vmatprep.subr.mxu0 %v253
    %994 = vmatpush1.msra.mxu0 %v252
    %995 = vmatprep.subr.mxu0 %v260
    %996 = vmatpush1.msra.mxu0 %v259
    %997 = vmatprep.subr.mxu0 %v267
    %998 = vmatpush1.msra.mxu0 %v266
    %999 = vmatprep.subr.mxu0 %v274
    %1000 = vmatpush1.msra.mxu0 %v273
    %1001 = vmatprep.subr.mxu0 %v281
    %1002 = vmatpush1.msra.mxu0 %v280
    %1003 = vmatprep.subr.mxu0 %v288
    %1004 = vmatpush1.msra.mxu0 %v287
    %1005 = vmatprep.subr.mxu0 %v295
    %1006 = vmatpush1.msra.mxu0 %v294
    %1007 = vmatprep.subr.mxu0 %v302
    %1008 = vmatpush1.msra.mxu0 %v301
    %1009 = vmatprep.subr.mxu0 %v309
    %1010 = vmatpush1.msra.mxu0 %v308
    %1011 = vmatprep.subr.mxu0 %v316
    %1012 = vmatpush1.msra.mxu0 %v315
    %1013 = vmatprep.subr.mxu0 %v323
    %1014 = vmatpush1.msra.mxu0 %v322
    %1015 = vmatprep.subr.mxu0 %v330
    %1016 = vmatpush1.msra.mxu0 %v329
    %1017 = vmatprep.subr.mxu0 %v337
    %1018 = vmatpush1.msra.mxu0 %v336
    %1019 = vmatprep.subr.mxu0 %v344
    %1020 = vmatpush1.msra.mxu0 %v343
    %1021 = vmatprep.subr.mxu0 %v351
    %1022 = vmatpush1.msra.mxu0 %v350
    %1023 = vmatprep.subr.mxu0 %v358
    %1024 = vmatpush1.msra.mxu0 %v357
    %1025 = vmatprep.mubr.f32.mxu0 %v134
    %1026 = vmatmul.mubr.f32.gmra.mrb[0].mxu0 %v133
    %v1027 = vpop.f32.mrb[0].mxu0
    %v1028 = vadd.f32 %v929, %v1027
    %v1029 = vpop.f32.mrb[0].mxu0
    %v1030 = vadd.f32 %v933, %v1029
    %1031 = vdwg.mxu0
    %1032 = vmatprep.subr.mxu0 %v365
    %1033 = vmatpush1.msra.mxu0 %v364
    %1034 = vmatprep.subr.mxu0 %v372
    %1035 = vmatpush1.msra.mxu0 %v371
    %1036 = vmatprep.subr.mxu0 %v379
    %1037 = vmatpush1.msra.mxu0 %v378
    %1038 = vmatprep.subr.mxu0 %v386
    %1039 = vmatpush1.msra.mxu0 %v385
    %1040 = vmatprep.subr.mxu0 %v393
    %1041 = vmatpush1.msra.mxu0 %v392
    %1042 = vmatprep.subr.mxu0 %v400
    %1043 = vmatpush1.msra.mxu0 %v399
    %1044 = vmatprep.subr.mxu0 %v407
    %1045 = vmatpush1.msra.mxu0 %v406
    %1046 = vmatprep.subr.mxu0 %v414
    %1047 = vmatpush1.msra.mxu0 %v413
    %1048 = vmatprep.subr.mxu0 %v421
    %1049 = vmatpush1.msra.mxu0 %v420
    %1050 = vmatprep.subr.mxu0 %v428
    %1051 = vmatpush1.msra.mxu0 %v427
    %1052 = vmatprep.subr.mxu0 %v435
    %1053 = vmatpush1.msra.mxu0 %v434
    %1054 = vmatprep.subr.mxu0 %v442
    %1055 = vmatpush1.msra.mxu0 %v441
    %1056 = vmatprep.subr.mxu0 %v449
    %1057 = vmatpush1.msra.mxu0 %v448
    %1058 = vmatprep.subr.mxu0 %v456
    %1059 = vmatpush1.msra.mxu0 %v455
    %1060 = vmatprep.subr.mxu0 %v463
    %1061 = vmatpush1.msra.mxu0 %v462
    %1062 = vmatprep.subr.mxu0 %v470
    %1063 = vmatpush1.msra.mxu0 %v469
    %1064 = vmatprep.subr.mxu0 %v477
    %1065 = vmatpush1.msra.mxu0 %v476
    %1066 = vmatprep.subr.mxu0 %v484
    %1067 = vmatpush1.msra.mxu0 %v483
    %1068 = vmatprep.subr.mxu0 %v491
    %1069 = vmatpush1.msra.mxu0 %v490
    %1070 = vmatprep.subr.mxu0 %v498
    %1071 = vmatpush1.msra.mxu0 %v497
    %1072 = vmatprep.subr.mxu0 %v505
    %1073 = vmatpush1.msra.mxu0 %v504
    %1074 = vmatprep.subr.mxu0 %v512
    %1075 = vmatpush1.msra.mxu0 %v511
    %1076 = vmatprep.subr.mxu0 %v519
    %1077 = vmatpush1.msra.mxu0 %v518
    %1078 = vmatprep.subr.mxu0 %v526
    %1079 = vmatpush1.msra.mxu0 %v525
    %1080 = vmatprep.subr.mxu0 %v533
    %1081 = vmatpush1.msra.mxu0 %v532
    %1082 = vmatprep.subr.mxu0 %v540
    %1083 = vmatpush1.msra.mxu0 %v539
    %1084 = vmatprep.subr.mxu0 %v547
    %1085 = vmatpush1.msra.mxu0 %v546
    %1086 = vmatprep.subr.mxu0 %v554
    %1087 = vmatpush1.msra.mxu0 %v553
    %1088 = vmatprep.subr.mxu0 %v561
    %1089 = vmatpush1.msra.mxu0 %v560
    %1090 = vmatprep.subr.mxu0 %v568
    %1091 = vmatpush1.msra.mxu0 %v567
    %1092 = vmatprep.subr.mxu0 %v575
    %1093 = vmatpush1.msra.mxu0 %v574
    %1094 = vmatprep.subr.mxu0 %v582
    %1095 = vmatpush1.msra.mxu0 %v581
    %1096 = vmatprep.mubr.f32.mxu0 %v136
    %1097 = vmatmul.mubr.f32.gmra.mrb[0].mxu0 %v135
    %v1098 = vpop.f32.mrb[0].mxu0
    %v1099 = vadd.f32 %v1028, %v1098
    %v1100 = vpop.f32.mrb[0].mxu0
    %v1101 = vadd.f32 %v1030, %v1100
    %1102 = vdwg.mxu0
    %1103 = vmatprep.subr.mxu0 %v589
    %1104 = vmatpush1.msra.mxu0 %v588
    %1105 = vmatprep.subr.mxu0 %v596
    %1106 = vmatpush1.msra.mxu0 %v595
    %1107 = vmatprep.subr.mxu0 %v603
    %1108 = vmatpush1.msra.mxu0 %v602
    %1109 = vmatprep.subr.mxu0 %v610
    %1110 = vmatpush1.msra.mxu0 %v609
    %1111 = vmatprep.subr.mxu0 %v617
    %1112 = vmatpush1.msra.mxu0 %v616
    %1113 = vmatprep.subr.mxu0 %v624
    %1114 = vmatpush1.msra.mxu0 %v623
    %1115 = vmatprep.subr.mxu0 %v631
    %1116 = vmatpush1.msra.mxu0 %v630
    %1117 = vmatprep.subr.mxu0 %v638
    %1118 = vmatpush1.msra.mxu0 %v637
    %1119 = vmatprep.subr.mxu0 %v645
    %1120 = vmatpush1.msra.mxu0 %v644
    %1121 = vmatprep.subr.mxu0 %v652
    %1122 = vmatpush1.msra.mxu0 %v651
    %1123 = vmatprep.subr.mxu0 %v659
    %1124 = vmatpush1.msra.mxu0 %v658
    %1125 = vmatprep.subr.mxu0 %v666
    %1126 = vmatpush1.msra.mxu0 %v665
    %1127 = vmatprep.subr.mxu0 %v673
    %1128 = vmatpush1.msra.mxu0 %v672
    %1129 = vmatprep.subr.mxu0 %v680
    %1130 = vmatpush1.msra.mxu0 %v679
    %1131 = vmatprep.subr.mxu0 %v687
    %1132 = vmatpush1.msra.mxu0 %v686
    %1133 = vmatprep.subr.mxu0 %v694
    %1134 = vmatpush1.msra.mxu0 %v693
    %1135 = vmatprep.subr.mxu0 %v701
    %1136 = vmatpush1.msra.mxu0 %v700
    %1137 = vmatprep.subr.mxu0 %v708
    %1138 = vmatpush1.msra.mxu0 %v707
    %1139 = vmatprep.subr.mxu0 %v715
    %1140 = vmatpush1.msra.mxu0 %v714
    %1141 = vmatprep.subr.mxu0 %v722
    %1142 = vmatpush1.msra.mxu0 %v721
    %1143 = vmatprep.subr.mxu0 %v729
    %1144 = vmatpush1.msra.mxu0 %v728
    %1145 = vmatprep.subr.mxu0 %v736
    %1146 = vmatpush1.msra.mxu0 %v735
    %1147 = vmatprep.subr.mxu0 %v743
    %1148 = vmatpush1.msra.mxu0 %v742
    %1149 = vmatprep.subr.mxu0 %v750
    %1150 = vmatpush1.msra.mxu0 %v749
    %1151 = vmatprep.subr.mxu0 %v757
    %1152 = vmatpush1.msra.mxu0 %v756
    %1153 = vmatprep.subr.mxu0 %v764
    %1154 = vmatpush1.msra.mxu0 %v763
    %1155 = vmatprep.subr.mxu0 %v771
    %1156 = vmatpush1.msra.mxu0 %v770
    %1157 = vmatprep.subr.mxu0 %v778
    %1158 = vmatpush1.msra.mxu0 %v777
    %1159 = vmatprep.subr.mxu0 %v785
    %1160 = vmatpush1.msra.mxu0 %v784
    %1161 = vmatprep.subr.mxu0 %v792
    %1162 = vmatpush1.msra.mxu0 %v791
    %1163 = vmatprep.subr.mxu0 %v799
    %1164 = vmatpush1.msra.mxu0 %v798
    %1165 = vmatprep.subr.mxu0 %v806
    %1166 = vmatpush1.msra.mxu0 %v805
    %1167 = vmatprep.mubr.f32.mxu0 %v138
    %1168 = vmatmul.mubr.f32.gmra.mrb[0].mxu0 %v137
    %v1169 = vpop.f32.mrb[0].mxu0
    %v1170 = vadd.f32 %v1099, %v1169
    %v1171 = vpop.f32.mrb[0].mxu0
    %v1172 = vadd.f32 %v1101, %v1171
    %1173 = vdwg.mxu0
    %1174 = vmatprep.subr.mxu0 %v813
    %1175 = vmatpush1.msra.mxu0 %v812
    %1176 = vmatprep.subr.mxu0 %v820
    %1177 = vmatpush1.msra.mxu0 %v819
    %1178 = vmatprep.subr.mxu0 %v827
    %1179 = vmatpush1.msra.mxu0 %v826
    %1180 = vmatprep.subr.mxu0 %v834
    %1181 = vmatpush1.msra.mxu0 %v833
    %1182 = vmatprep.subr.mxu0 %v841
    %1183 = vmatpush1.msra.mxu0 %v840
    %1184 = vmatprep.subr.mxu0 %v848
    %1185 = vmatpush1.msra.mxu0 %v847
    %1186 = vmatprep.subr.mxu0 %v855
    %1187 = vmatpush1.msra.mxu0 %v854
    %1188 = vmatprep.subr.mxu0 %v862
    %1189 = vmatpush1.msra.mxu0 %v861
    %1190 = vmatprep.subr.mxu0 %v869
    %1191 = vmatpush1.msra.mxu0 %v868
    %1192 = vmatprep.subr.mxu0 %v876
    %1193 = vmatpush1.msra.mxu0 %v875
    %1194 = vmatprep.subr.mxu0 %v883
    %1195 = vmatpush1.msra.mxu0 %v882
    %1196 = vmatprep.subr.mxu0 %v890
    %1197 = vmatpush1.msra.mxu0 %v889
    %1198 = vmatprep.subr.mxu0 %v897
    %1199 = vmatpush1.msra.mxu0 %v896
    %1200 = vmatprep.subr.mxu0 %v904
    %1201 = vmatpush1.msra.mxu0 %v903
    %1202 = vmatprep.subr.mxu0 %v911
    %1203 = vmatpush1.msra.mxu0 %v910
    %1204 = vmatprep.subr.mxu0 %v918
    %1205 = vmatpush1.msra.mxu0 %v917
    %1206 = vmatprep.subr.mxu0 0.0
    %1207 = vmatpush1.msra.mxu0 0.0
    %1208 = vmatprep.subr.mxu0 0.0
    %1209 = vmatpush1.msra.mxu0 0.0
    %1210 = vmatprep.subr.mxu0 0.0
    %1211 = vmatpush1.msra.mxu0 0.0
    %1212 = vmatprep.subr.mxu0 0.0
    %1213 = vmatpush1.msra.mxu0 0.0
    %1214 = vmatprep.subr.mxu0 0.0
    %1215 = vmatpush1.msra.mxu0 0.0
    %1216 = vmatprep.subr.mxu0 0.0
    %1217 = vmatpush1.msra.mxu0 0.0
    %1218 = vmatprep.subr.mxu0 0.0
    %1219 = vmatpush1.msra.mxu0 0.0
    %1220 = vmatprep.subr.mxu0 0.0
    %1221 = vmatpush1.msra.mxu0 0.0
    %1222 = vmatprep.subr.mxu0 0.0
    %1223 = vmatpush1.msra.mxu0 0.0
    %1224 = vmatprep.subr.mxu0 0.0
    %1225 = vmatpush1.msra.mxu0 0.0
    %1226 = vmatprep.subr.mxu0 0.0
    %1227 = vmatpush1.msra.mxu0 0.0
    %1228 = vmatprep.subr.mxu0 0.0
    %1229 = vmatpush1.msra.mxu0 0.0
    %1230 = vmatprep.subr.mxu0 0.0
    %1231 = vmatpush1.msra.mxu0 0.0
    %1232 = vmatprep.subr.mxu0 0.0
    %1233 = vmatpush1.msra.mxu0 0.0
    %1234 = vmatprep.subr.mxu0 0.0
    %1235 = vmatpush1.msra.mxu0 0.0
    %1236 = vmatprep.subr.mxu0 0.0
    %1237 = vmatpush1.msra.mxu0 0.0
    %1238 = vmatprep.mubr.f32.mxu0 0.0
    %1239 = vmatmul.mubr.f32.gmra.mrb[0].mxu0 %v139
    %v1240 = vpop.f32.mrb[0].mxu0
    %v1241 = vadd.f32 %v1170, %v1240
    %v1242 = vpop.f32.mrb[0].mxu0
    %v1243 = vadd.f32 %v1172, %v1242
    %1244 = vdwg.mxu0
    %1245 = vmatprep.subr.mxu0 %v143
    %1246 = vmatpush1.msra.mxu0 %v142
    %1247 = vmatprep.subr.mxu0 %v150
    %1248 = vmatpush1.msra.mxu0 %v149
    %1249 = vmatprep.subr.mxu0 %v157
    %1250 = vmatpush1.msra.mxu0 %v156
    %1251 = vmatprep.subr.mxu0 %v164
    %1252 = vmatpush1.msra.mxu0 %v163
    %1253 = vmatprep.subr.mxu0 %v171
    %1254 = vmatpush1.msra.mxu0 %v170
    %1255 = vmatprep.subr.mxu0 %v178
    %1256 = vmatpush1.msra.mxu0 %v177
    %1257 = vmatprep.subr.mxu0 %v185
    %1258 = vmatpush1.msra.mxu0 %v184
    %1259 = vmatprep.subr.mxu0 %v192
    %1260 = vmatpush1.msra.mxu0 %v191
    %1261 = vmatprep.subr.mxu0 %v199
    %1262 = vmatpush1.msra.mxu0 %v198
    %1263 = vmatprep.subr.mxu0 %v206
    %1264 = vmatpush1.msra.mxu0 %v205
    %1265 = vmatprep.subr.mxu0 %v213
    %1266 = vmatpush1.msra.mxu0 %v212
    %1267 = vmatprep.subr.mxu0 %v220
    %1268 = vmatpush1.msra.mxu0 %v219
    %1269 = vmatprep.subr.mxu0 %v227
    %1270 = vmatpush1.msra.mxu0 %v226
    %1271 = vmatprep.subr.mxu0 %v234
    %1272 = vmatpush1.msra.mxu0 %v233
    %1273 = vmatprep.subr.mxu0 %v241
    %1274 = vmatpush1.msra.mxu0 %v240
    %1275 = vmatprep.subr.mxu0 %v248
    %1276 = vmatpush1.msra.mxu0 %v247
    %1277 = vmatprep.subr.mxu0 %v255
    %1278 = vmatpush1.msra.mxu0 %v254
    %1279 = vmatprep.subr.mxu0 %v262
    %1280 = vmatpush1.msra.mxu0 %v261
    %1281 = vmatprep.subr.mxu0 %v269
    %1282 = vmatpush1.msra.mxu0 %v268
    %1283 = vmatprep.subr.mxu0 %v276
    %1284 = vmatpush1.msra.mxu0 %v275
    %1285 = vmatprep.subr.mxu0 %v283
    %1286 = vmatpush1.msra.mxu0 %v282
    %1287 = vmatprep.subr.mxu0 %v290
    %1288 = vmatpush1.msra.mxu0 %v289
    %1289 = vmatprep.subr.mxu0 %v297
    %1290 = vmatpush1.msra.mxu0 %v296
    %1291 = vmatprep.subr.mxu0 %v304
    %1292 = vmatpush1.msra.mxu0 %v303
    %1293 = vmatprep.subr.mxu0 %v311
    %1294 = vmatpush1.msra.mxu0 %v310
    %1295 = vmatprep.subr.mxu0 %v318
    %1296 = vmatpush1.msra.mxu0 %v317
    %1297 = vmatprep.subr.mxu0 %v325
    %1298 = vmatpush1.msra.mxu0 %v324
    %1299 = vmatprep.subr.mxu0 %v332
    %1300 = vmatpush1.msra.mxu0 %v331
    %1301 = vmatprep.subr.mxu0 %v339
    %1302 = vmatpush1.msra.mxu0 %v338
    %1303 = vmatprep.subr.mxu0 %v346
    %1304 = vmatpush1.msra.mxu0 %v345
    %1305 = vmatprep.subr.mxu0 %v353
    %1306 = vmatpush1.msra.mxu0 %v352
    %1307 = vmatprep.subr.mxu0 %v360
    %1308 = vmatpush1.msra.mxu0 %v359
    %1309 = vmatprep.mubr.f32.mxu0 %v134
    %1310 = vmatmul.mubr.f32.gmra.mrb[0].mxu0 %v133
    %v1311 = vpop.f32.mrb[0].mxu0
    %v1312 = vadd.f32 %v937, %v1311
    %v1313 = vpop.f32.mrb[0].mxu0
    %v1314 = vadd.f32 %v941, %v1313
    %1315 = vdwg.mxu0
    %1316 = vmatprep.subr.mxu0 %v367
    %1317 = vmatpush1.msra.mxu0 %v366
    %1318 = vmatprep.subr.mxu0 %v374
    %1319 = vmatpush1.msra.mxu0 %v373
    %1320 = vmatprep.subr.mxu0 %v381
    %1321 = vmatpush1.msra.mxu0 %v380
    %1322 = vmatprep.subr.mxu0 %v388
    %1323 = vmatpush1.msra.mxu0 %v387
    %1324 = vmatprep.subr.mxu0 %v395
    %1325 = vmatpush1.msra.mxu0 %v394
    %1326 = vmatprep.subr.mxu0 %v402
    %1327 = vmatpush1.msra.mxu0 %v401
    %1328 = vmatprep.subr.mxu0 %v409
    %1329 = vmatpush1.msra.mxu0 %v408
    %1330 = vmatprep.subr.mxu0 %v416
    %1331 = vmatpush1.msra.mxu0 %v415
    %1332 = vmatprep.subr.mxu0 %v423
    %1333 = vmatpush1.msra.mxu0 %v422
    %1334 = vmatprep.subr.mxu0 %v430
    %1335 = vmatpush1.msra.mxu0 %v429
    %1336 = vmatprep.subr.mxu0 %v437
    %1337 = vmatpush1.msra.mxu0 %v436
    %1338 = vmatprep.subr.mxu0 %v444
    %1339 = vmatpush1.msra.mxu0 %v443
    %1340 = vmatprep.subr.mxu0 %v451
    %1341 = vmatpush1.msra.mxu0 %v450
    %1342 = vmatprep.subr.mxu0 %v458
    %1343 = vmatpush1.msra.mxu0 %v457
    %1344 = vmatprep.subr.mxu0 %v465
    %1345 = vmatpush1.msra.mxu0 %v464
    %1346 = vmatprep.subr.mxu0 %v472
    %1347 = vmatpush1.msra.mxu0 %v471
    %1348 = vmatprep.subr.mxu0 %v479
    %1349 = vmatpush1.msra.mxu0 %v478
    %1350 = vmatprep.subr.mxu0 %v486
    %1351 = vmatpush1.msra.mxu0 %v485
    %1352 = vmatprep.subr.mxu0 %v493
    %1353 = vmatpush1.msra.mxu0 %v492
    %1354 = vmatprep.subr.mxu0 %v500
    %1355 = vmatpush1.msra.mxu0 %v499
    %1356 = vmatprep.subr.mxu0 %v507
    %1357 = vmatpush1.msra.mxu0 %v506
    %1358 = vmatprep.subr.mxu0 %v514
    %1359 = vmatpush1.msra.mxu0 %v513
    %1360 = vmatprep.subr.mxu0 %v521
    %1361 = vmatpush1.msra.mxu0 %v520
    %1362 = vmatprep.subr.mxu0 %v528
    %1363 = vmatpush1.msra.mxu0 %v527
    %1364 = vmatprep.subr.mxu0 %v535
    %1365 = vmatpush1.msra.mxu0 %v534
    %1366 = vmatprep.subr.mxu0 %v542
    %1367 = vmatpush1.msra.mxu0 %v541
    %1368 = vmatprep.subr.mxu0 %v549
    %1369 = vmatpush1.msra.mxu0 %v548
    %1370 = vmatprep.subr.mxu0 %v556
    %1371 = vmatpush1.msra.mxu0 %v555
    %1372 = vmatprep.subr.mxu0 %v563
    %1373 = vmatpush1.msra.mxu0 %v562
    %1374 = vmatprep.subr.mxu0 %v570
    %1375 = vmatpush1.msra.mxu0 %v569
    %1376 = vmatprep.subr.mxu0 %v577
    %1377 = vmatpush1.msra.mxu0 %v576
    %1378 = vmatprep.subr.mxu0 %v584
    %1379 = vmatpush1.msra.mxu0 %v583
    %1380 = vmatprep.mubr.f32.mxu0 %v136
    %1381 = vmatmul.mubr.f32.gmra.mrb[0].mxu0 %v135
    %v1382 = vpop.f32.mrb[0].mxu0
    %v1383 = vadd.f32 %v1312, %v1382
    %v1384 = vpop.f32.mrb[0].mxu0
    %v1385 = vadd.f32 %v1314, %v1384
    %1386 = vdwg.mxu0
    %1387 = vmatprep.subr.mxu0 %v591
    %1388 = vmatpush1.msra.mxu0 %v590
    %1389 = vmatprep.subr.mxu0 %v598
    %1390 = vmatpush1.msra.mxu0 %v597
    %1391 = vmatprep.subr.mxu0 %v605
    %1392 = vmatpush1.msra.mxu0 %v604
    %1393 = vmatprep.subr.mxu0 %v612
    %1394 = vmatpush1.msra.mxu0 %v611
    %1395 = vmatprep.subr.mxu0 %v619
    %1396 = vmatpush1.msra.mxu0 %v618
    %1397 = vmatprep.subr.mxu0 %v626
    %1398 = vmatpush1.msra.mxu0 %v625
    %1399 = vmatprep.subr.mxu0 %v633
    %1400 = vmatpush1.msra.mxu0 %v632
    %1401 = vmatprep.subr.mxu0 %v640
    %1402 = vmatpush1.msra.mxu0 %v639
    %1403 = vmatprep.subr.mxu0 %v647
    %1404 = vmatpush1.msra.mxu0 %v646
    %1405 = vmatprep.subr.mxu0 %v654
    %1406 = vmatpush1.msra.mxu0 %v653
    %1407 = vmatprep.subr.mxu0 %v661
    %1408 = vmatpush1.msra.mxu0 %v660
    %1409 = vmatprep.subr.mxu0 %v668
    %1410 = vmatpush1.msra.mxu0 %v667
    %1411 = vmatprep.subr.mxu0 %v675
    %1412 = vmatpush1.msra.mxu0 %v674
    %1413 = vmatprep.subr.mxu0 %v682
    %1414 = vmatpush1.msra.mxu0 %v681
    %1415 = vmatprep.subr.mxu0 %v689
    %1416 = vmatpush1.msra.mxu0 %v688
    %1417 = vmatprep.subr.mxu0 %v696
    %1418 = vmatpush1.msra.mxu0 %v695
    %1419 = vmatprep.subr.mxu0 %v703
    %1420 = vmatpush1.msra.mxu0 %v702
    %1421 = vmatprep.subr.mxu0 %v710
    %1422 = vmatpush1.msra.mxu0 %v709
    %1423 = vmatprep.subr.mxu0 %v717
    %1424 = vmatpush1.msra.mxu0 %v716
    %1425 = vmatprep.subr.mxu0 %v724
    %1426 = vmatpush1.msra.mxu0 %v723
    %1427 = vmatprep.subr.mxu0 %v731
    %1428 = vmatpush1.msra.mxu0 %v730
    %1429 = vmatprep.subr.mxu0 %v738
    %1430 = vmatpush1.msra.mxu0 %v737
    %1431 = vmatprep.subr.mxu0 %v745
    %1432 = vmatpush1.msra.mxu0 %v744
    %1433 = vmatprep.subr.mxu0 %v752
    %1434 = vmatpush1.msra.mxu0 %v751
    %1435 = vmatprep.subr.mxu0 %v759
    %1436 = vmatpush1.msra.mxu0 %v758
    %1437 = vmatprep.subr.mxu0 %v766
    %1438 = vmatpush1.msra.mxu0 %v765
    %1439 = vmatprep.subr.mxu0 %v773
    %1440 = vmatpush1.msra.mxu0 %v772
    %1441 = vmatprep.subr.mxu0 %v780
    %1442 = vmatpush1.msra.mxu0 %v779
    %1443 = vmatprep.subr.mxu0 %v787
    %1444 = vmatpush1.msra.mxu0 %v786
    %1445 = vmatprep.subr.mxu0 %v794
    %1446 = vmatpush1.msra.mxu0 %v793
    %1447 = vmatprep.subr.mxu0 %v801
    %1448 = vmatpush1.msra.mxu0 %v800
    %1449 = vmatprep.subr.mxu0 %v808
    %1450 = vmatpush1.msra.mxu0 %v807
    %1451 = vmatprep.mubr.f32.mxu0 %v138
    %1452 = vmatmul.mubr.f32.gmra.mrb[0].mxu0 %v137
    %v1453 = vpop.f32.mrb[0].mxu0
    %v1454 = vadd.f32 %v1383, %v1453
    %v1455 = vpop.f32.mrb[0].mxu0
    %v1456 = vadd.f32 %v1385, %v1455
    %1457 = vdwg.mxu0
    %1458 = vmatprep.subr.mxu0 %v815
    %1459 = vmatpush1.msra.mxu0 %v814
    %1460 = vmatprep.subr.mxu0 %v822
    %1461 = vmatpush1.msra.mxu0 %v821
    %1462 = vmatprep.subr.mxu0 %v829
    %1463 = vmatpush1.msra.mxu0 %v828
    %1464 = vmatprep.subr.mxu0 %v836
    %1465 = vmatpush1.msra.mxu0 %v835
    %1466 = vmatprep.subr.mxu0 %v843
    %1467 = vmatpush1.msra.mxu0 %v842
    %1468 = vmatprep.subr.mxu0 %v850
    %1469 = vmatpush1.msra.mxu0 %v849
    %1470 = vmatprep.subr.mxu0 %v857
    %1471 = vmatpush1.msra.mxu0 %v856
    %1472 = vmatprep.subr.mxu0 %v864
    %1473 = vmatpush1.msra.mxu0 %v863
    %1474 = vmatprep.subr.mxu0 %v871
    %1475 = vmatpush1.msra.mxu0 %v870
    %1476 = vmatprep.subr.mxu0 %v878
    %1477 = vmatpush1.msra.mxu0 %v877
    %1478 = vmatprep.subr.mxu0 %v885
    %1479 = vmatpush1.msra.mxu0 %v884
    %1480 = vmatprep.subr.mxu0 %v892
    %1481 = vmatpush1.msra.mxu0 %v891
    %1482 = vmatprep.subr.mxu0 %v899
    %1483 = vmatpush1.msra.mxu0 %v898
    %1484 = vmatprep.subr.mxu0 %v906
    %1485 = vmatpush1.msra.mxu0 %v905
    %1486 = vmatprep.subr.mxu0 %v913
    %1487 = vmatpush1.msra.mxu0 %v912
    %1488 = vmatprep.subr.mxu0 %v920
    %1489 = vmatpush1.msra.mxu0 %v919
    %1490 = vmatprep.subr.mxu0 0.0
    %1491 = vmatpush1.msra.mxu0 0.0
    %1492 = vmatprep.subr.mxu0 0.0
    %1493 = vmatpush1.msra.mxu0 0.0
    %1494 = vmatprep.subr.mxu0 0.0
    %1495 = vmatpush1.msra.mxu0 0.0
    %1496 = vmatprep.subr.mxu0 0.0
    %1497 = vmatpush1.msra.mxu0 0.0
    %1498 = vmatprep.subr.mxu0 0.0
    %1499 = vmatpush1.msra.mxu0 0.0
    %1500 = vmatprep.subr.mxu0 0.0
    %1501 = vmatpush1.msra.mxu0 0.0
    %1502 = vmatprep.subr.mxu0 0.0
    %1503 = vmatpush1.msra.mxu0 0.0
    %1504 = vmatprep.subr.mxu0 0.0
    %1505 = vmatpush1.msra.mxu0 0.0
    %1506 = vmatprep.subr.mxu0 0.0
    %1507 = vmatpush1.msra.mxu0 0.0
    %1508 = vmatprep.subr.mxu0 0.0
    %1509 = vmatpush1.msra.mxu0 0.0
    %1510 = vmatprep.subr.mxu0 0.0
    %1511 = vmatpush1.msra.mxu0 0.0
    %1512 = vmatprep.subr.mxu0 0.0
    %1513 = vmatpush1.msra.mxu0 0.0
    %1514 = vmatprep.subr.mxu0 0.0
    %1515 = vmatpush1.msra.mxu0 0.0
    %1516 = vmatprep.subr.mxu0 0.0
    %1517 = vmatpush1.msra.mxu0 0.0
    %1518 = vmatprep.subr.mxu0 0.0
    %1519 = vmatpush1.msra.mxu0 0.0
    %1520 = vmatprep.subr.mxu0 0.0
    %1521 = vmatpush1.msra.mxu0 0.0
    %1522 = vmatprep.mubr.f32.mxu0 0.0
    %1523 = vmatmul.mubr.f32.gmra.mrb[0].mxu0 %v139
    %v1524 = vpop.f32.mrb[0].mxu0
    %v1525 = vadd.f32 %v1454, %v1524
    %v1526 = vpop.f32.mrb[0].mxu0
    %v1527 = vadd.f32 %v1456, %v1526
    %1528 = vdwg.mxu0
    %1529 = vmatprep.subr.mxu0 %v145
    %1530 = vmatpush1.msra.mxu0 %v144
    %1531 = vmatprep.subr.mxu0 %v152
    %1532 = vmatpush1.msra.mxu0 %v151
    %1533 = vmatprep.subr.mxu0 %v159
    %1534 = vmatpush1.msra.mxu0 %v158
    %1535 = vmatprep.subr.mxu0 %v166
    %1536 = vmatpush1.msra.mxu0 %v165
    %1537 = vmatprep.subr.mxu0 %v173
    %1538 = vmatpush1.msra.mxu0 %v172
    %1539 = vmatprep.subr.mxu0 %v180
    %1540 = vmatpush1.msra.mxu0 %v179
    %1541 = vmatprep.subr.mxu0 %v187
    %1542 = vmatpush1.msra.mxu0 %v186
    %1543 = vmatprep.subr.mxu0 %v194
    %1544 = vmatpush1.msra.mxu0 %v193
    %1545 = vmatprep.subr.mxu0 %v201
    %1546 = vmatpush1.msra.mxu0 %v200
    %1547 = vmatprep.subr.mxu0 %v208
    %1548 = vmatpush1.msra.mxu0 %v207
    %1549 = vmatprep.subr.mxu0 %v215
    %1550 = vmatpush1.msra.mxu0 %v214
    %1551 = vmatprep.subr.mxu0 %v222
    %1552 = vmatpush1.msra.mxu0 %v221
    %1553 = vmatprep.subr.mxu0 %v229
    %1554 = vmatpush1.msra.mxu0 %v228
    %1555 = vmatprep.subr.mxu0 %v236
    %1556 = vmatpush1.msra.mxu0 %v235
    %1557 = vmatprep.subr.mxu0 %v243
    %1558 = vmatpush1.msra.mxu0 %v242
    %1559 = vmatprep.subr.mxu0 %v250
    %1560 = vmatpush1.msra.mxu0 %v249
    %1561 = vmatprep.subr.mxu0 %v257
    %1562 = vmatpush1.msra.mxu0 %v256
    %1563 = vmatprep.subr.mxu0 %v264
    %1564 = vmatpush1.msra.mxu0 %v263
    %1565 = vmatprep.subr.mxu0 %v271
    %1566 = vmatpush1.msra.mxu0 %v270
    %1567 = vmatprep.subr.mxu0 %v278
    %1568 = vmatpush1.msra.mxu0 %v277
    %1569 = vmatprep.subr.mxu0 %v285
    %1570 = vmatpush1.msra.mxu0 %v284
    %1571 = vmatprep.subr.mxu0 %v292
    %1572 = vmatpush1.msra.mxu0 %v291
    %1573 = vmatprep.subr.mxu0 %v299
    %1574 = vmatpush1.msra.mxu0 %v298
    %1575 = vmatprep.subr.mxu0 %v306
    %1576 = vmatpush1.msra.mxu0 %v305
    %1577 = vmatprep.subr.mxu0 %v313
    %1578 = vmatpush1.msra.mxu0 %v312
    %1579 = vmatprep.subr.mxu0 %v320
    %1580 = vmatpush1.msra.mxu0 %v319
    %1581 = vmatprep.subr.mxu0 %v327
    %1582 = vmatpush1.msra.mxu0 %v326
    %1583 = vmatprep.subr.mxu0 %v334
    %1584 = vmatpush1.msra.mxu0 %v333
    %1585 = vmatprep.subr.mxu0 %v341
    %1586 = vmatpush1.msra.mxu0 %v340
    %1587 = vmatprep.subr.mxu0 %v348
    %1588 = vmatpush1.msra.mxu0 %v347
    %1589 = vmatprep.subr.mxu0 %v355
    %1590 = vmatpush1.msra.mxu0 %v354
    %1591 = vmatprep.subr.mxu0 %v362
    %1592 = vmatpush1.msra.mxu0 %v361
    %1593 = vmatprep.mubr.f32.mxu0 %v134
    %1594 = vmatmul.mubr.f32.gmra.mrb[0].mxu0 %v133
    %v1595 = vpop.f32.mrb[0].mxu0
    %v1596 = vadd.f32 %v945, %v1595
    %v1597 = vpop.f32.mrb[0].mxu0
    %v1598 = vadd.f32 %v949, %v1597
    %1599 = vdwg.mxu0
    %1600 = vmatprep.subr.mxu0 %v369
    %1601 = vmatpush1.msra.mxu0 %v368
    %1602 = vmatprep.subr.mxu0 %v376
    %1603 = vmatpush1.msra.mxu0 %v375
    %1604 = vmatprep.subr.mxu0 %v383
    %1605 = vmatpush1.msra.mxu0 %v382
    %1606 = vmatprep.subr.mxu0 %v390
    %1607 = vmatpush1.msra.mxu0 %v389
    %1608 = vmatprep.subr.mxu0 %v397
    %1609 = vmatpush1.msra.mxu0 %v396
    %1610 = vmatprep.subr.mxu0 %v404
    %1611 = vmatpush1.msra.mxu0 %v403
    %1612 = vmatprep.subr.mxu0 %v411
    %1613 = vmatpush1.msra.mxu0 %v410
    %1614 = vmatprep.subr.mxu0 %v418
    %1615 = vmatpush1.msra.mxu0 %v417
    %1616 = vmatprep.subr.mxu0 %v425
    %1617 = vmatpush1.msra.mxu0 %v424
    %1618 = vmatprep.subr.mxu0 %v432
    %1619 = vmatpush1.msra.mxu0 %v431
    %1620 = vmatprep.subr.mxu0 %v439
    %1621 = vmatpush1.msra.mxu0 %v438
    %1622 = vmatprep.subr.mxu0 %v446
    %1623 = vmatpush1.msra.mxu0 %v445
    %1624 = vmatprep.subr.mxu0 %v453
    %1625 = vmatpush1.msra.mxu0 %v452
    %1626 = vmatprep.subr.mxu0 %v460
    %1627 = vmatpush1.msra.mxu0 %v459
    %1628 = vmatprep.subr.mxu0 %v467
    %1629 = vmatpush1.msra.mxu0 %v466
    %1630 = vmatprep.subr.mxu0 %v474
    %1631 = vmatpush1.msra.mxu0 %v473
    %1632 = vmatprep.subr.mxu0 %v481
    %1633 = vmatpush1.msra.mxu0 %v480
    %1634 = vmatprep.subr.mxu0 %v488
    %1635 = vmatpush1.msra.mxu0 %v487
    %1636 = vmatprep.subr.mxu0 %v495
    %1637 = vmatpush1.msra.mxu0 %v494
    %1638 = vmatprep.subr.mxu0 %v502
    %1639 = vmatpush1.msra.mxu0 %v501
    %1640 = vmatprep.subr.mxu0 %v509
    %1641 = vmatpush1.msra.mxu0 %v508
    %1642 = vmatprep.subr.mxu0 %v516
    %1643 = vmatpush1.msra.mxu0 %v515
    %1644 = vmatprep.subr.mxu0 %v523
    %1645 = vmatpush1.msra.mxu0 %v522
    %1646 = vmatprep.subr.mxu0 %v530
    %1647 = vmatpush1.msra.mxu0 %v529
    %1648 = vmatprep.subr.mxu0 %v537
    %1649 = vmatpush1.msra.mxu0 %v536
    %1650 = vmatprep.subr.mxu0 %v544
    %1651 = vmatpush1.msra.mxu0 %v543
    %1652 = vmatprep.subr.mxu0 %v551
    %1653 = vmatpush1.msra.mxu0 %v550
    %1654 = vmatprep.subr.mxu0 %v558
    %1655 = vmatpush1.msra.mxu0 %v557
    %1656 = vmatprep.subr.mxu0 %v565
    %1657 = vmatpush1.msra.mxu0 %v564
    %1658 = vmatprep.subr.mxu0 %v572
    %1659 = vmatpush1.msra.mxu0 %v571
    %1660 = vmatprep.subr.mxu0 %v579
    %1661 = vmatpush1.msra.mxu0 %v578
    %1662 = vmatprep.subr.mxu0 %v586
    %1663 = vmatpush1.msra.mxu0 %v585
    %1664 = vmatprep.mubr.f32.mxu0 %v136
    %1665 = vmatmul.mubr.f32.gmra.mrb[0].mxu0 %v135
    %v1666 = vpop.f32.mrb[0].mxu0
    %v1667 = vadd.f32 %v1596, %v1666
    %v1668 = vpop.f32.mrb[0].mxu0
    %v1669 = vadd.f32 %v1598, %v1668
    %1670 = vdwg.mxu0
    %1671 = vmatprep.subr.mxu0 %v593
    %1672 = vmatpush1.msra.mxu0 %v592
    %1673 = vmatprep.subr.mxu0 %v600
    %1674 = vmatpush1.msra.mxu0 %v599
    %1675 = vmatprep.subr.mxu0 %v607
    %1676 = vmatpush1.msra.mxu0 %v606
    %1677 = vmatprep.subr.mxu0 %v614
    %1678 = vmatpush1.msra.mxu0 %v613
    %1679 = vmatprep.subr.mxu0 %v621
    %1680 = vmatpush1.msra.mxu0 %v620
    %1681 = vmatprep.subr.mxu0 %v628
    %1682 = vmatpush1.msra.mxu0 %v627
    %1683 = vmatprep.subr.mxu0 %v635
    %1684 = vmatpush1.msra.mxu0 %v634
    %1685 = vmatprep.subr.mxu0 %v642
    %1686 = vmatpush1.msra.mxu0 %v641
    %1687 = vmatprep.subr.mxu0 %v649
    %1688 = vmatpush1.msra.mxu0 %v648
    %1689 = vmatprep.subr.mxu0 %v656
    %1690 = vmatpush1.msra.mxu0 %v655
    %1691 = vmatprep.subr.mxu0 %v663
    %1692 = vmatpush1.msra.mxu0 %v662
    %1693 = vmatprep.subr.mxu0 %v670
    %1694 = vmatpush1.msra.mxu0 %v669
    %1695 = vmatprep.subr.mxu0 %v677
    %1696 = vmatpush1.msra.mxu0 %v676
    %1697 = vmatprep.subr.mxu0 %v684
    %1698 = vmatpush1.msra.mxu0 %v683
    %1699 = vmatprep.subr.mxu0 %v691
    %1700 = vmatpush1.msra.mxu0 %v690
    %1701 = vmatprep.subr.mxu0 %v698
    %1702 = vmatpush1.msra.mxu0 %v697
    %1703 = vmatprep.subr.mxu0 %v705
    %1704 = vmatpush1.msra.mxu0 %v704
    %1705 = vmatprep.subr.mxu0 %v712
    %1706 = vmatpush1.msra.mxu0 %v711
    %1707 = vmatprep.subr.mxu0 %v719
    %1708 = vmatpush1.msra.mxu0 %v718
    %1709 = vmatprep.subr.mxu0 %v726
    %1710 = vmatpush1.msra.mxu0 %v725
    %1711 = vmatprep.subr.mxu0 %v733
    %1712 = vmatpush1.msra.mxu0 %v732
    %1713 = vmatprep.subr.mxu0 %v740
    %1714 = vmatpush1.msra.mxu0 %v739
    %1715 = vmatprep.subr.mxu0 %v747
    %1716 = vmatpush1.msra.mxu0 %v746
    %1717 = vmatprep.subr.mxu0 %v754
    %1718 = vmatpush1.msra.mxu0 %v753
    %1719 = vmatprep.subr.mxu0 %v761
    %1720 = vmatpush1.msra.mxu0 %v760
    %1721 = vmatprep.subr.mxu0 %v768
    %1722 = vmatpush1.msra.mxu0 %v767
    %1723 = vmatprep.subr.mxu0 %v775
    %1724 = vmatpush1.msra.mxu0 %v774
    %1725 = vmatprep.subr.mxu0 %v782
    %1726 = vmatpush1.msra.mxu0 %v781
    %1727 = vmatprep.subr.mxu0 %v789
    %1728 = vmatpush1.msra.mxu0 %v788
    %1729 = vmatprep.subr.mxu0 %v796
    %1730 = vmatpush1.msra.mxu0 %v795
    %1731 = vmatprep.subr.mxu0 %v803
    %1732 = vmatpush1.msra.mxu0 %v802
    %1733 = vmatprep.subr.mxu0 %v810
    %1734 = vmatpush1.msra.mxu0 %v809
    %1735 = vmatprep.mubr.f32.mxu0 %v138
    %1736 = vmatmul.mubr.f32.gmra.mrb[0].mxu0 %v137
    %v1737 = vpop.f32.mrb[0].mxu0
    %v1738 = vadd.f32 %v1667, %v1737
    %v1739 = vpop.f32.mrb[0].mxu0
    %v1740 = vadd.f32 %v1669, %v1739
    %1741 = vdwg.mxu0
    %1742 = vmatprep.subr.mxu0 %v817
    %1743 = vmatpush1.msra.mxu0 %v816
    %1744 = vmatprep.subr.mxu0 %v824
    %1745 = vmatpush1.msra.mxu0 %v823
    %1746 = vmatprep.subr.mxu0 %v831
    %1747 = vmatpush1.msra.mxu0 %v830
    %1748 = vmatprep.subr.mxu0 %v838
    %1749 = vmatpush1.msra.mxu0 %v837
    %1750 = vmatprep.subr.mxu0 %v845
    %1751 = vmatpush1.msra.mxu0 %v844
    %1752 = vmatprep.subr.mxu0 %v852
    %1753 = vmatpush1.msra.mxu0 %v851
    %1754 = vmatprep.subr.mxu0 %v859
    %1755 = vmatpush1.msra.mxu0 %v858
    %1756 = vmatprep.subr.mxu0 %v866
    %1757 = vmatpush1.msra.mxu0 %v865
    %1758 = vmatprep.subr.mxu0 %v873
    %1759 = vmatpush1.msra.mxu0 %v872
    %1760 = vmatprep.subr.mxu0 %v880
    %1761 = vmatpush1.msra.mxu0 %v879
    %1762 = vmatprep.subr.mxu0 %v887
    %1763 = vmatpush1.msra.mxu0 %v886
    %1764 = vmatprep.subr.mxu0 %v894
    %1765 = vmatpush1.msra.mxu0 %v893
    %1766 = vmatprep.subr.mxu0 %v901
    %1767 = vmatpush1.msra.mxu0 %v900
    %1768 = vmatprep.subr.mxu0 %v908
    %1769 = vmatpush1.msra.mxu0 %v907
    %1770 = vmatprep.subr.mxu0 %v915
    %1771 = vmatpush1.msra.mxu0 %v914
    %1772 = vmatprep.subr.mxu0 %v922
    %1773 = vmatpush1.msra.mxu0 %v921
    %1774 = vmatprep.subr.mxu0 0.0
    %1775 = vmatpush1.msra.mxu0 0.0
    %1776 = vmatprep.subr.mxu0 0.0
    %1777 = vmatpush1.msra.mxu0 0.0
    %1778 = vmatprep.subr.mxu0 0.0
    %1779 = vmatpush1.msra.mxu0 0.0
    %1780 = vmatprep.subr.mxu0 0.0
    %1781 = vmatpush1.msra.mxu0 0.0
    %1782 = vmatprep.subr.mxu0 0.0
    %1783 = vmatpush1.msra.mxu0 0.0
    %1784 = vmatprep.subr.mxu0 0.0
    %1785 = vmatpush1.msra.mxu0 0.0
    %1786 = vmatprep.subr.mxu0 0.0
    %1787 = vmatpush1.msra.mxu0 0.0
    %1788 = vmatprep.subr.mxu0 0.0
    %1789 = vmatpush1.msra.mxu0 0.0
    %1790 = vmatprep.subr.mxu0 0.0
    %1791 = vmatpush1.msra.mxu0 0.0
    %1792 = vmatprep.subr.mxu0 0.0
    %1793 = vmatpush1.msra.mxu0 0.0
    %1794 = vmatprep.subr.mxu0 0.0
    %1795 = vmatpush1.msra.mxu0 0.0
    %1796 = vmatprep.subr.mxu0 0.0
    %1797 = vmatpush1.msra.mxu0 0.0
    %1798 = vmatprep.subr.mxu0 0.0
    %1799 = vmatpush1.msra.mxu0 0.0
    %1800 = vmatprep.subr.mxu0 0.0
    %1801 = vmatpush1.msra.mxu0 0.0
    %1802 = vmatprep.subr.mxu0 0.0
    %1803 = vmatpush1.msra.mxu0 0.0
    %1804 = vmatprep.subr.mxu0 0.0
    %1805 = vmatpush1.msra.mxu0 0.0
    %1806 = vmatprep.mubr.f32.mxu0 0.0
    %1807 = vmatmul.mubr.f32.gmra.mrb[0].mxu0 %v139
    %v1808 = vpop.f32.mrb[0].mxu0
    %v1809 = vadd.f32 %v1738, %v1808
    %v1810 = vpop.f32.mrb[0].mxu0
    %v1811 = vadd.f32 %v1740, %v1810
    %1812 = vdwg.mxu0
    %1813 = vmatprep.subr.mxu0 0.0
    %1814 = vmatpush1.msra.mxu0 %v146
    %1815 = vmatprep.subr.mxu0 0.0
    %1816 = vmatpush1.msra.mxu0 %v153
    %1817 = vmatprep.subr.mxu0 0.0
    %1818 = vmatpush1.msra.mxu0 %v160
    %1819 = vmatprep.subr.mxu0 0.0
    %1820 = vmatpush1.msra.mxu0 %v167
    %1821 = vmatprep.subr.mxu0 0.0
    %1822 = vmatpush1.msra.mxu0 %v174
    %1823 = vmatprep.subr.mxu0 0.0
    %1824 = vmatpush1.msra.mxu0 %v181
    %1825 = vmatprep.subr.mxu0 0.0
    %1826 = vmatpush1.msra.mxu0 %v188
    %1827 = vmatprep.subr.mxu0 0.0
    %1828 = vmatpush1.msra.mxu0 %v195
    %1829 = vmatprep.subr.mxu0 0.0
    %1830 = vmatpush1.msra.mxu0 %v202
    %1831 = vmatprep.subr.mxu0 0.0
    %1832 = vmatpush1.msra.mxu0 %v209
    %1833 = vmatprep.subr.mxu0 0.0
    %1834 = vmatpush1.msra.mxu0 %v216
    %1835 = vmatprep.subr.mxu0 0.0
    %1836 = vmatpush1.msra.mxu0 %v223
    %1837 = vmatprep.subr.mxu0 0.0
    %1838 = vmatpush1.msra.mxu0 %v230
    %1839 = vmatprep.subr.mxu0 0.0
    %1840 = vmatpush1.msra.mxu0 %v237
    %1841 = vmatprep.subr.mxu0 0.0
    %1842 = vmatpush1.msra.mxu0 %v244
    %1843 = vmatprep.subr.mxu0 0.0
    %1844 = vmatpush1.msra.mxu0 %v251
    %1845 = vmatprep.subr.mxu0 0.0
    %1846 = vmatpush1.msra.mxu0 %v258
    %1847 = vmatprep.subr.mxu0 0.0
    %1848 = vmatpush1.msra.mxu0 %v265
    %1849 = vmatprep.subr.mxu0 0.0
    %1850 = vmatpush1.msra.mxu0 %v272
    %1851 = vmatprep.subr.mxu0 0.0
    %1852 = vmatpush1.msra.mxu0 %v279
    %1853 = vmatprep.subr.mxu0 0.0
    %1854 = vmatpush1.msra.mxu0 %v286
    %1855 = vmatprep.subr.mxu0 0.0
    %1856 = vmatpush1.msra.mxu0 %v293
    %1857 = vmatprep.subr.mxu0 0.0
    %1858 = vmatpush1.msra.mxu0 %v300
    %1859 = vmatprep.subr.mxu0 0.0
    %1860 = vmatpush1.msra.mxu0 %v307
    %1861 = vmatprep.subr.mxu0 0.0
    %1862 = vmatpush1.msra.mxu0 %v314
    %1863 = vmatprep.subr.mxu0 0.0
    %1864 = vmatpush1.msra.mxu0 %v321
    %1865 = vmatprep.subr.mxu0 0.0
    %1866 = vmatpush1.msra.mxu0 %v328
    %1867 = vmatprep.subr.mxu0 0.0
    %1868 = vmatpush1.msra.mxu0 %v335
    %1869 = vmatprep.subr.mxu0 0.0
    %1870 = vmatpush1.msra.mxu0 %v342
    %1871 = vmatprep.subr.mxu0 0.0
    %1872 = vmatpush1.msra.mxu0 %v349
    %1873 = vmatprep.subr.mxu0 0.0
    %1874 = vmatpush1.msra.mxu0 %v356
    %1875 = vmatprep.subr.mxu0 0.0
    %1876 = vmatpush1.msra.mxu0 %v363
    %1877 = vmatprep.mubr.f32.mxu0 %v134
    %1878 = vmatmul.mubr.f32.gmra.mrb[0].mxu0 %v133
    %v1879 = vpop.f32.mrb[0].mxu0
    %v1880 = vadd.f32 %v953, %v1879
    %v1881 = vpop.f32.mrb[0].mxu0
    %1882 = vdwg.mxu0
    %1883 = vmatprep.subr.mxu0 0.0
    %1884 = vmatpush1.msra.mxu0 %v370
    %1885 = vmatprep.subr.mxu0 0.0
    %1886 = vmatpush1.msra.mxu0 %v377
    %1887 = vmatprep.subr.mxu0 0.0
    %1888 = vmatpush1.msra.mxu0 %v384
    %1889 = vmatprep.subr.mxu0 0.0
    %1890 = vmatpush1.msra.mxu0 %v391
    %1891 = vmatprep.subr.mxu0 0.0
    %1892 = vmatpush1.msra.mxu0 %v398
    %1893 = vmatprep.subr.mxu0 0.0
    %1894 = vmatpush1.msra.mxu0 %v405
    %1895 = vmatprep.subr.mxu0 0.0
    %1896 = vmatpush1.msra.mxu0 %v412
    %1897 = vmatprep.subr.mxu0 0.0
    %1898 = vmatpush1.msra.mxu0 %v419
    %1899 = vmatprep.subr.mxu0 0.0
    %1900 = vmatpush1.msra.mxu0 %v426
    %1901 = vmatprep.subr.mxu0 0.0
    %1902 = vmatpush1.msra.mxu0 %v433
    %1903 = vmatprep.subr.mxu0 0.0
    %1904 = vmatpush1.msra.mxu0 %v440
    %1905 = vmatprep.subr.mxu0 0.0
    %1906 = vmatpush1.msra.mxu0 %v447
    %1907 = vmatprep.subr.mxu0 0.0
    %1908 = vmatpush1.msra.mxu0 %v454
    %1909 = vmatprep.subr.mxu0 0.0
    %1910 = vmatpush1.msra.mxu0 %v461
    %1911 = vmatprep.subr.mxu0 0.0
    %1912 = vmatpush1.msra.mxu0 %v468
    %1913 = vmatprep.subr.mxu0 0.0
    %1914 = vmatpush1.msra.mxu0 %v475
    %1915 = vmatprep.subr.mxu0 0.0
    %1916 = vmatpush1.msra.mxu0 %v482
    %1917 = vmatprep.subr.mxu0 0.0
    %1918 = vmatpush1.msra.mxu0 %v489
    %1919 = vmatprep.subr.mxu0 0.0
    %1920 = vmatpush1.msra.mxu0 %v496
    %1921 = vmatprep.subr.mxu0 0.0
    %1922 = vmatpush1.msra.mxu0 %v503
    %1923 = vmatprep.subr.mxu0 0.0
    %1924 = vmatpush1.msra.mxu0 %v510
    %1925 = vmatprep.subr.mxu0 0.0
    %1926 = vmatpush1.msra.mxu0 %v517
    %1927 = vmatprep.subr.mxu0 0.0
    %1928 = vmatpush1.msra.mxu0 %v524
    %1929 = vmatprep.subr.mxu0 0.0
    %1930 = vmatpush1.msra.mxu0 %v531
    %1931 = vmatprep.subr.mxu0 0.0
    %1932 = vmatpush1.msra.mxu0 %v538
    %1933 = vmatprep.subr.mxu0 0.0
    %1934 = vmatpush1.msra.mxu0 %v545
    %1935 = vmatprep.subr.mxu0 0.0
    %1936 = vmatpush1.msra.mxu0 %v552
    %1937 = vmatprep.subr.mxu0 0.0
    %1938 = vmatpush1.msra.mxu0 %v559
    %1939 = vmatprep.subr.mxu0 0.0
    %1940 = vmatpush1.msra.mxu0 %v566
    %1941 = vmatprep.subr.mxu0 0.0
    %1942 = vmatpush1.msra.mxu0 %v573
    %1943 = vmatprep.subr.mxu0 0.0
    %1944 = vmatpush1.msra.mxu0 %v580
    %1945 = vmatprep.subr.mxu0 0.0
    %1946 = vmatpush1.msra.mxu0 %v587
    %1947 = vmatprep.mubr.f32.mxu0 %v136
    %1948 = vmatmul.mubr.f32.gmra.mrb[0].mxu0 %v135
    %v1949 = vpop.f32.mrb[0].mxu0
    %v1950 = vadd.f32 %v1880, %v1949
    %v1951 = vpop.f32.mrb[0].mxu0
    %1952 = vdwg.mxu0
    %1953 = vmatprep.subr.mxu0 0.0
    %1954 = vmatpush1.msra.mxu0 %v594
    %1955 = vmatprep.subr.mxu0 0.0
    %1956 = vmatpush1.msra.mxu0 %v601
    %1957 = vmatprep.subr.mxu0 0.0
    %1958 = vmatpush1.msra.mxu0 %v608
    %1959 = vmatprep.subr.mxu0 0.0
    %1960 = vmatpush1.msra.mxu0 %v615
    %1961 = vmatprep.subr.mxu0 0.0
    %1962 = vmatpush1.msra.mxu0 %v622
    %1963 = vmatprep.subr.mxu0 0.0
    %1964 = vmatpush1.msra.mxu0 %v629
    %1965 = vmatprep.subr.mxu0 0.0
    %1966 = vmatpush1.msra.mxu0 %v636
    %1967 = vmatprep.subr.mxu0 0.0
    %1968 = vmatpush1.msra.mxu0 %v643
    %1969 = vmatprep.subr.mxu0 0.0
    %1970 = vmatpush1.msra.mxu0 %v650
    %1971 = vmatprep.subr.mxu0 0.0
    %1972 = vmatpush1.msra.mxu0 %v657
    %1973 = vmatprep.subr.mxu0 0.0
    %1974 = vmatpush1.msra.mxu0 %v664
    %1975 = vmatprep.subr.mxu0 0.0
    %1976 = vmatpush1.msra.mxu0 %v671
    %1977 = vmatprep.subr.mxu0 0.0
    %1978 = vmatpush1.msra.mxu0 %v678
    %1979 = vmatprep.subr.mxu0 0.0
    %1980 = vmatpush1.msra.mxu0 %v685
    %1981 = vmatprep.subr.mxu0 0.0
    %1982 = vmatpush1.msra.mxu0 %v692
    %1983 = vmatprep.subr.mxu0 0.0
    %1984 = vmatpush1.msra.mxu0 %v699
    %1985 = vmatprep.subr.mxu0 0.0
    %1986 = vmatpush1.msra.mxu0 %v706
    %1987 = vmatprep.subr.mxu0 0.0
    %1988 = vmatpush1.msra.mxu0 %v713
    %1989 = vmatprep.subr.mxu0 0.0
    %1990 = vmatpush1.msra.mxu0 %v720
    %1991 = vmatprep.subr.mxu0 0.0
    %1992 = vmatpush1.msra.mxu0 %v727
    %1993 = vmatprep.subr.mxu0 0.0
    %1994 = vmatpush1.msra.mxu0 %v734
    %1995 = vmatprep.subr.mxu0 0.0
    %1996 = vmatpush1.msra.mxu0 %v741
    %1997 = vmatprep.subr.mxu0 0.0
    %1998 = vmatpush1.msra.mxu0 %v748
    %1999 = vmatprep.subr.mxu0 0.0
    %2000 = vmatpush1.msra.mxu0 %v755
    %2001 = vmatprep.subr.mxu0 0.0
    %2002 = vmatpush1.msra.mxu0 %v762
    %2003 = vmatprep.subr.mxu0 0.0
    %2004 = vmatpush1.msra.mxu0 %v769
    %2005 = vmatprep.subr.mxu0 0.0
    %2006 = vmatpush1.msra.mxu0 %v776
    %2007 = vmatprep.subr.mxu0 0.0
    %2008 = vmatpush1.msra.mxu0 %v783
    %2009 = vmatprep.subr.mxu0 0.0
    %2010 = vmatpush1.msra.mxu0 %v790
    %2011 = vmatprep.subr.mxu0 0.0
    %2012 = vmatpush1.msra.mxu0 %v797
    %2013 = vmatprep.subr.mxu0 0.0
    %2014 = vmatpush1.msra.mxu0 %v804
    %2015 = vmatprep.subr.mxu0 0.0
    %2016 = vmatpush1.msra.mxu0 %v811
    %2017 = vmatprep.mubr.f32.mxu0 %v138
    %2018 = vmatmul.mubr.f32.gmra.mrb[0].mxu0 %v137
    %v2019 = vpop.f32.mrb[0].mxu0
    %v2020 = vadd.f32 %v1950, %v2019
    %v2021 = vpop.f32.mrb[0].mxu0
    %2022 = vdwg.mxu0
    %2023 = vmatprep.subr.mxu0 0.0
    %2024 = vmatpush1.msra.mxu0 %v818
    %2025 = vmatprep.subr.mxu0 0.0
    %2026 = vmatpush1.msra.mxu0 %v825
    %2027 = vmatprep.subr.mxu0 0.0
    %2028 = vmatpush1.msra.mxu0 %v832
    %2029 = vmatprep.subr.mxu0 0.0
    %2030 = vmatpush1.msra.mxu0 %v839
    %2031 = vmatprep.subr.mxu0 0.0
    %2032 = vmatpush1.msra.mxu0 %v846
    %2033 = vmatprep.subr.mxu0 0.0
    %2034 = vmatpush1.msra.mxu0 %v853
    %2035 = vmatprep.subr.mxu0 0.0
    %2036 = vmatpush1.msra.mxu0 %v860
    %2037 = vmatprep.subr.mxu0 0.0
    %2038 = vmatpush1.msra.mxu0 %v867
    %2039 = vmatprep.subr.mxu0 0.0
    %2040 = vmatpush1.msra.mxu0 %v874
    %2041 = vmatprep.subr.mxu0 0.0
    %2042 = vmatpush1.msra.mxu0 %v881
    %2043 = vmatprep.subr.mxu0 0.0
    %2044 = vmatpush1.msra.mxu0 %v888
    %2045 = vmatprep.subr.mxu0 0.0
    %2046 = vmatpush1.msra.mxu0 %v895
    %2047 = vmatprep.subr.mxu0 0.0
    %2048 = vmatpush1.msra.mxu0 %v902
    %2049 = vmatprep.subr.mxu0 0.0
    %2050 = vmatpush1.msra.mxu0 %v909
    %2051 = vmatprep.subr.mxu0 0.0
    %2052 = vmatpush1.msra.mxu0 %v916
    %2053 = vmatprep.subr.mxu0 0.0
    %2054 = vmatpush1.msra.mxu0 %v923
    %2055 = vmatprep.subr.mxu0 0.0
    %2056 = vmatpush1.msra.mxu0 0.0
    %2057 = vmatprep.subr.mxu0 0.0
    %2058 = vmatpush1.msra.mxu0 0.0
    %2059 = vmatprep.subr.mxu0 0.0
    %2060 = vmatpush1.msra.mxu0 0.0
    %2061 = vmatprep.subr.mxu0 0.0
    %2062 = vmatpush1.msra.mxu0 0.0
    %2063 = vmatprep.subr.mxu0 0.0
    %2064 = vmatpush1.msra.mxu0 0.0
    %2065 = vmatprep.subr.mxu0 0.0
    %2066 = vmatpush1.msra.mxu0 0.0
    %2067 = vmatprep.subr.mxu0 0.0
    %2068 = vmatpush1.msra.mxu0 0.0
    %2069 = vmatprep.subr.mxu0 0.0
    %2070 = vmatpush1.msra.mxu0 0.0
    %2071 = vmatprep.subr.mxu0 0.0
    %2072 = vmatpush1.msra.mxu0 0.0
    %2073 = vmatprep.subr.mxu0 0.0
    %2074 = vmatpush1.msra.mxu0 0.0
    %2075 = vmatprep.subr.mxu0 0.0
    %2076 = vmatpush1.msra.mxu0 0.0
    %2077 = vmatprep.subr.mxu0 0.0
    %2078 = vmatpush1.msra.mxu0 0.0
    %2079 = vmatprep.subr.mxu0 0.0
    %2080 = vmatpush1.msra.mxu0 0.0
    %2081 = vmatprep.subr.mxu0 0.0
    %2082 = vmatpush1.msra.mxu0 0.0
    %2083 = vmatprep.subr.mxu0 0.0
    %2084 = vmatpush1.msra.mxu0 0.0
    %2085 = vmatprep.subr.mxu0 0.0
    %2086 = vmatpush1.msra.mxu0 0.0
    %2087 = vmatprep.mubr.f32.mxu0 0.0
    %2088 = vmatmul.mubr.f32.gmra.mrb[0].mxu0 %v139
    %v2089 = vpop.f32.mrb[0].mxu0
    %v2090 = vadd.f32 %v2020, %v2089
    %v2091 = vpop.f32.mrb[0].mxu0
    %2092 = vdwg.mxu0
    %v2093 = vmax.f32 %v1241, 0.0
    %v2094 = vmax.f32 %v1243, 0.0
    %v2095 = vmax.f32 %v1525, 0.0
    %v2096 = vmax.f32 %v1527, 0.0
    %v2097 = vmax.f32 %v1809, 0.0
    %v2098 = vmax.f32 %v1811, 0.0
    %v2099 = vmax.f32 %v2090, 0.0
    %v2100 = vld [vmem:[#allocation6] sm:$0xff]
    %v2101 = vld [vmem:[#allocation6 + $0x8] sm:$0xff]
    %v2102 = vld [vmem:[#allocation6 + $0x10] sm:$0xff]
    %v2103 = vld [vmem:[#allocation6 + $0x18] sm:$0xff]
    %v2104 = vld [vmem:[#allocation6 + $0x20] sm:$0xff]
    %v2105 = vld [vmem:[#allocation6 + $0x28] sm:$0xff]
    %v2106 = vld [vmem:[#allocation6 + $0x30] sm:$0xff]
    %v2107 = vld [vmem:[#allocation6 + $0x38] sm:$0xff]
    %v2108 = vld [vmem:[#allocation6 + $0x40] sm:$0xff]
    %v2109 = vld [vmem:[#allocation6 + $0x48] sm:$0xff]
    %v2110 = vld [vmem:[#allocation6 + $0x50] sm:$0xff]
    %v2111 = vld [vmem:[#allocation6 + $0x58] sm:$0xff]
    %v2112 = vld [vmem:[#allocation6 + $0x60] sm:$0xff]
    %v2113 = vld [vmem:[#allocation6 + $0x68] sm:$0xff]
    %v2114 = vld [vmem:[#allocation6 + $0x70] sm:$0xff]
    %v2115 = vld [vmem:[#allocation6 + $0x78] sm:$0xff]
    %v2116 = vld [vmem:[#allocation6 + $0x80] sm:$0xff]
    %v2117 = vld [vmem:[#allocation6 + $0x88] sm:$0xff]
    %v2118 = vld [vmem:[#allocation6 + $0x90] sm:$0xff]
    %v2119 = vld [vmem:[#allocation6 + $0x98] sm:$0xff]
    %v2120 = vld [vmem:[#allocation6 + $0xa0] sm:$0xff]
    %v2121 = vld [vmem:[#allocation6 + $0xa8] sm:$0xff]
    %v2122 = vld [vmem:[#allocation6 + $0xb0] sm:$0xff]
    %v2123 = vld [vmem:[#allocation6 + $0xb8] sm:$0xff]
    %v2124 = vld [vmem:[#allocation6 + $0xc0] sm:$0xff]
    %v2125 = vld [vmem:[#allocation6 + $0xc8] sm:$0xff]
    %v2126 = vld [vmem:[#allocation6 + $0xd0] sm:$0xff]
    %v2127 = vld [vmem:[#allocation6 + $0xd8] sm:$0xff]
    %v2128 = vld [vmem:[#allocation6 + $0xe0] sm:$0xff]
    %v2129 = vld [vmem:[#allocation6 + $0xe8] sm:$0xff]
    %v2130 = vld [vmem:[#allocation6 + $0xf0] sm:$0xff]
    %v2131 = vld [vmem:[#allocation6 + $0xf8] sm:$0xff]
    %v2132 = vld [vmem:[#allocation6 + $0x100] sm:$0xff]
    %v2133 = vld [vmem:[#allocation6 + $0x108] sm:$0xff]
    %v2134 = vld [vmem:[#allocation6 + $0x110] sm:$0xff]
    %v2135 = vld [vmem:[#allocation6 + $0x118] sm:$0xff]
    %v2136 = vld [vmem:[#allocation6 + $0x120] sm:$0xff]
    %v2137 = vld [vmem:[#allocation6 + $0x128] sm:$0xff]
    %v2138 = vld [vmem:[#allocation6 + $0x130] sm:$0xff]
    %v2139 = vld [vmem:[#allocation6 + $0x138] sm:$0xff]
    %v2140 = vld [vmem:[#allocation6 + $0x140] sm:$0xff]
    %v2141 = vld [vmem:[#allocation6 + $0x148] sm:$0xff]
    %v2142 = vld [vmem:[#allocation6 + $0x150] sm:$0xff]
    %v2143 = vld [vmem:[#allocation6 + $0x158] sm:$0xff]
    %v2144 = vld [vmem:[#allocation6 + $0x160] sm:$0xff]
    %v2145 = vld [vmem:[#allocation6 + $0x168] sm:$0xff]
    %v2146 = vld [vmem:[#allocation6 + $0x170] sm:$0xff]
    %v2147 = vld [vmem:[#allocation6 + $0x178] sm:$0xff]
    %v2148 = vld [vmem:[#allocation6 + $0x180] sm:$0xff]
    %v2149 = vld [vmem:[#allocation6 + $0x188] sm:$0xff]
    %v2150 = vld [vmem:[#allocation6 + $0x190] sm:$0xff]
    %v2151 = vld [vmem:[#allocation6 + $0x198] sm:$0xff]
    %v2152 = vld [vmem:[#allocation6 + $0x1a0] sm:$0xff]
    %v2153 = vld [vmem:[#allocation6 + $0x1a8] sm:$0xff]
    %v2154 = vld [vmem:[#allocation6 + $0x1b0] sm:$0xff]
    %v2155 = vld [vmem:[#allocation6 + $0x1b8] sm:$0xff]
    %v2156 = vld [vmem:[#allocation6 + $0x1c0] sm:$0xff]
    %v2157 = vld [vmem:[#allocation6 + $0x1c8] sm:$0xff]
    %v2158 = vld [vmem:[#allocation6 + $0x1d0] sm:$0xff]
    %v2159 = vld [vmem:[#allocation6 + $0x1d8] sm:$0xff]
    %v2160 = vld [vmem:[#allocation6 + $0x1e0] sm:$0xff]
    %v2161 = vld [vmem:[#allocation6 + $0x1e8] sm:$0xff]
    %v2162 = vld [vmem:[#allocation6 + $0x1f0] sm:$0xff]
    %v2163 = vld [vmem:[#allocation6 + $0x1f8] sm:$0xff]
    %v2164 = vld [vmem:[#allocation6 + $0x200] sm:$0xff]
    %v2165 = vld [vmem:[#allocation6 + $0x208] sm:$0xff]
    %v2166 = vld [vmem:[#allocation6 + $0x210] sm:$0xff]
    %v2167 = vld [vmem:[#allocation6 + $0x218] sm:$0xff]
    %v2168 = vld [vmem:[#allocation6 + $0x220] sm:$0xff]
    %v2169 = vld [vmem:[#allocation6 + $0x228] sm:$0xff]
    %v2170 = vld [vmem:[#allocation6 + $0x230] sm:$0xff]
    %v2171 = vld [vmem:[#allocation6 + $0x238] sm:$0xff]
    %v2172 = vld [vmem:[#allocation6 + $0x240] sm:$0xff]
    %v2173 = vld [vmem:[#allocation6 + $0x248] sm:$0xff]
    %v2174 = vld [vmem:[#allocation6 + $0x250] sm:$0xff]
    %v2175 = vld [vmem:[#allocation6 + $0x258] sm:$0xff]
    %v2176 = vld [vmem:[#allocation6 + $0x260] sm:$0xff]
    %v2177 = vld [vmem:[#allocation6 + $0x268] sm:$0xff]
    %v2178 = vld [vmem:[#allocation6 + $0x270] sm:$0xff]
    %v2179 = vld [vmem:[#allocation6 + $0x278] sm:$0xff]
    %v2180 = vld [vmem:[#allocation6 + $0x280] sm:$0xff]
    %v2181 = vld [vmem:[#allocation6 + $0x288] sm:$0xff]
    %v2182 = vld [vmem:[#allocation6 + $0x290] sm:$0xff]
    %v2183 = vld [vmem:[#allocation6 + $0x298] sm:$0xff]
    %v2184 = vld [vmem:[#allocation6 + $0x2a0] sm:$0xff]
    %v2185 = vld [vmem:[#allocation6 + $0x2a8] sm:$0xff]
    %v2186 = vld [vmem:[#allocation6 + $0x2b0] sm:$0xff]
    %v2187 = vld [vmem:[#allocation6 + $0x2b8] sm:$0xff]
    %v2188 = vld [vmem:[#allocation6 + $0x2c0] sm:$0xff]
    %v2189 = vld [vmem:[#allocation6 + $0x2c8] sm:$0xff]
    %v2190 = vld [vmem:[#allocation6 + $0x2d0] sm:$0xff]
    %v2191 = vld [vmem:[#allocation6 + $0x2d8] sm:$0xff]
    %v2192 = vld [vmem:[#allocation6 + $0x2e0] sm:$0xff]
    %v2193 = vld [vmem:[#allocation6 + $0x2e8] sm:$0xff]
    %v2194 = vld [vmem:[#allocation6 + $0x2f0] sm:$0xff]
    %v2195 = vld [vmem:[#allocation6 + $0x2f8] sm:$0xff]
    %v2196 = vld [vmem:[#allocation6 + $0x300] sm:$0xff]
    %v2197 = vld [vmem:[#allocation6 + $0x308] sm:$0xff]
    %v2198 = vld [vmem:[#allocation6 + $0x310] sm:$0xff]
    %v2199 = vld [vmem:[#allocation6 + $0x318] sm:$0xff]
    %v2200 = vld [vmem:[#allocation6 + $0x320] sm:$0xff]
    %v2201 = vld [vmem:[#allocation6 + $0x328] sm:$0xff]
    %v2202 = vld [vmem:[#allocation6 + $0x330] sm:$0xff]
    %v2203 = vld [vmem:[#allocation6 + $0x338] sm:$0xff]
    %v2204 = vld [vmem:[#allocation6 + $0x340] sm:$0xff]
    %v2205 = vld [vmem:[#allocation6 + $0x348] sm:$0xff]
    %v2206 = vld [vmem:[#allocation6 + $0x350] sm:$0xff]
    %v2207 = vld [vmem:[#allocation6 + $0x358] sm:$0xff]
    %v2208 = vld [vmem:[#allocation6 + $0x360] sm:$0xff]
    %v2209 = vld [vmem:[#allocation6 + $0x368] sm:$0xff]
    %v2210 = vld [vmem:[#allocation6 + $0x370] sm:$0xff]
    %v2211 = vld [vmem:[#allocation6 + $0x378] sm:$0xff]
    %v2212 = vld [vmem:[#allocation6 + $0x380] sm:$0xff]
    %v2213 = vld [vmem:[#allocation6 + $0x388] sm:$0xff]
    %v2214 = vld [vmem:[#allocation6 + $0x390] sm:$0xff]
    %v2215 = vld [vmem:[#allocation6 + $0x398] sm:$0xff]
    %v2216 = vld [vmem:[#allocation6 + $0x3a0] sm:$0xff]
    %v2217 = vld [vmem:[#allocation6 + $0x3a8] sm:$0xff]
    %v2218 = vld [vmem:[#allocation6 + $0x3b0] sm:$0xff]
    %v2219 = vld [vmem:[#allocation6 + $0x3b8] sm:$0xff]
    %v2220 = vld [vmem:[#allocation6 + $0x3c0] sm:$0xff]
    %v2221 = vld [vmem:[#allocation6 + $0x3c8] sm:$0xff]
    %v2222 = vld [vmem:[#allocation6 + $0x3d0] sm:$0xff]
    %v2223 = vld [vmem:[#allocation6 + $0x3d8] sm:$0xff]
    %v2224 = vld [vmem:[#allocation6 + $0x3e0] sm:$0xff]
    %v2225 = vld [vmem:[#allocation6 + $0x3e8] sm:$0xff]
    %v2226 = vld [vmem:[#allocation6 + $0x3f0] sm:$0xff]
    %v2227 = vld [vmem:[#allocation6 + $0x3f8] sm:$0xff]
    %v2228 = vld [vmem:[#allocation6 + $0x400] sm:$0xff]
    %v2229 = vld [vmem:[#allocation6 + $0x408] sm:$0xff]
    %v2230 = vld [vmem:[#allocation6 + $0x410] sm:$0xff]
    %v2231 = vld [vmem:[#allocation6 + $0x418] sm:$0xff]
    %v2232 = vld [vmem:[#allocation6 + $0x420] sm:$0xff]
    %v2233 = vld [vmem:[#allocation6 + $0x428] sm:$0xff]
    %v2234 = vld [vmem:[#allocation6 + $0x430] sm:$0xff]
    %v2235 = vld [vmem:[#allocation6 + $0x438] sm:$0xff]
    %v2236 = vld [vmem:[#allocation6 + $0x440] sm:$0xff]
    %v2237 = vld [vmem:[#allocation6 + $0x448] sm:$0xff]
    %v2238 = vld [vmem:[#allocation6 + $0x450] sm:$0xff]
    %v2239 = vld [vmem:[#allocation6 + $0x458] sm:$0xff]
    %v2240 = vld [vmem:[#allocation6 + $0x460] sm:$0xff]
    %v2241 = vld [vmem:[#allocation6 + $0x468] sm:$0xff]
    %v2242 = vld [vmem:[#allocation6 + $0x470] sm:$0xff]
    %v2243 = vld [vmem:[#allocation6 + $0x478] sm:$0xff]
    %v2244 = vld [vmem:[#allocation6 + $0x480] sm:$0xff]
    %v2245 = vld [vmem:[#allocation6 + $0x488] sm:$0xff]
    %v2246 = vld [vmem:[#allocation6 + $0x490] sm:$0xff]
    %v2247 = vld [vmem:[#allocation6 + $0x498] sm:$0xff]
    %v2248 = vld [vmem:[#allocation6 + $0x4a0] sm:$0xff]
    %v2249 = vld [vmem:[#allocation6 + $0x4a8] sm:$0xff]
    %v2250 = vld [vmem:[#allocation6 + $0x4b0] sm:$0xff]
    %v2251 = vld [vmem:[#allocation6 + $0x4b8] sm:$0xff]
    %v2252 = vld [vmem:[#allocation6 + $0x4c0] sm:$0xff]
    %v2253 = vld [vmem:[#allocation6 + $0x4c8] sm:$0xff]
    %v2254 = vld [vmem:[#allocation6 + $0x4d0] sm:$0xff]
    %v2255 = vld [vmem:[#allocation6 + $0x4d8] sm:$0xff]
    %v2256 = vld [vmem:[#allocation6 + $0x4e0] sm:$0xff]
    %v2257 = vld [vmem:[#allocation6 + $0x4e8] sm:$0xff]
    %v2258 = vld [vmem:[#allocation6 + $0x4f0] sm:$0xff]
    %v2259 = vld [vmem:[#allocation6 + $0x4f8] sm:$0xff]
    %v2260 = vld [vmem:[#allocation6 + $0x500] sm:$0xff]
    %v2261 = vld [vmem:[#allocation6 + $0x508] sm:$0xff]
    %v2262 = vld [vmem:[#allocation6 + $0x510] sm:$0xff]
    %v2263 = vld [vmem:[#allocation6 + $0x518] sm:$0xff]
    %v2264 = vld [vmem:[#allocation6 + $0x520] sm:$0xff]
    %v2265 = vld [vmem:[#allocation6 + $0x528] sm:$0xff]
    %v2266 = vld [vmem:[#allocation6 + $0x530] sm:$0xff]
    %v2267 = vld [vmem:[#allocation6 + $0x538] sm:$0xff]
    %v2268 = vld [vmem:[#allocation6 + $0x540] sm:$0xff]
    %v2269 = vld [vmem:[#allocation6 + $0x548] sm:$0xff]
    %v2270 = vld [vmem:[#allocation6 + $0x550] sm:$0xff]
    %v2271 = vld [vmem:[#allocation6 + $0x558] sm:$0xff]
    %v2272 = vld [vmem:[#allocation6 + $0x560] sm:$0xff]
    %v2273 = vld [vmem:[#allocation6 + $0x568] sm:$0xff]
    %v2274 = vld [vmem:[#allocation6 + $0x570] sm:$0xff]
    %v2275 = vld [vmem:[#allocation6 + $0x578] sm:$0xff]
    %v2276 = vld [vmem:[#allocation6 + $0x580] sm:$0xff]
    %v2277 = vld [vmem:[#allocation6 + $0x588] sm:$0xff]
    %v2278 = vld [vmem:[#allocation6 + $0x590] sm:$0xff]
    %v2279 = vld [vmem:[#allocation6 + $0x598] sm:$0xff]
    %v2280 = vld [vmem:[#allocation6 + $0x5a0] sm:$0xff]
    %v2281 = vld [vmem:[#allocation6 + $0x5a8] sm:$0xff]
    %v2282 = vld [vmem:[#allocation6 + $0x5b0] sm:$0xff]
    %v2283 = vld [vmem:[#allocation6 + $0x5b8] sm:$0xff]
    %v2284 = vld [vmem:[#allocation6 + $0x5c0] sm:$0xff]
    %v2285 = vld [vmem:[#allocation6 + $0x5c8] sm:$0xff]
    %v2286 = vld [vmem:[#allocation6 + $0x5d0] sm:$0xff]
    %v2287 = vld [vmem:[#allocation6 + $0x5d8] sm:$0xff]
    %v2288 = vld [vmem:[#allocation6 + $0x5e0] sm:$0xff]
    %v2289 = vld [vmem:[#allocation6 + $0x5e8] sm:$0xff]
    %v2290 = vld [vmem:[#allocation6 + $0x5f0] sm:$0xff]
    %v2291 = vld [vmem:[#allocation6 + $0x5f8] sm:$0xff]
    %v2292 = vld [vmem:[#allocation6 + $0x600] sm:$0xff]
    %v2293 = vld [vmem:[#allocation6 + $0x608] sm:$0xff]
    %v2294 = vld [vmem:[#allocation6 + $0x610] sm:$0xff]
    %v2295 = vld [vmem:[#allocation6 + $0x618] sm:$0xff]
    %v2296 = vld [vmem:[#allocation6 + $0x620] sm:$0xff]
    %v2297 = vld [vmem:[#allocation6 + $0x628] sm:$0xff]
    %v2298 = vld [vmem:[#allocation6 + $0x630] sm:$0xff]
    %v2299 = vld [vmem:[#allocation6 + $0x638] sm:$0xff]
    %v2300 = vld [vmem:[#allocation6 + $0x640] sm:$0xff]
    %v2301 = vld [vmem:[#allocation6 + $0x648] sm:$0xff]
    %v2302 = vld [vmem:[#allocation6 + $0x650] sm:$0xff]
    %v2303 = vld [vmem:[#allocation6 + $0x658] sm:$0xff]
    %v2304 = vld [vmem:[#allocation6 + $0x660] sm:$0xff]
    %v2305 = vld [vmem:[#allocation6 + $0x668] sm:$0xff]
    %v2306 = vld [vmem:[#allocation6 + $0x670] sm:$0xff]
    %v2307 = vld [vmem:[#allocation6 + $0x678] sm:$0xff]
    %v2308 = vld [vmem:[#allocation6 + $0x680] sm:$0xff]
    %v2309 = vld [vmem:[#allocation6 + $0x688] sm:$0xff]
    %v2310 = vld [vmem:[#allocation6 + $0x690] sm:$0xff]
    %v2311 = vld [vmem:[#allocation6 + $0x698] sm:$0xff]
    %v2312 = vld [vmem:[#allocation6 + $0x6a0] sm:$0xff]
    %v2313 = vld [vmem:[#allocation6 + $0x6a8] sm:$0xff]
    %v2314 = vld [vmem:[#allocation6 + $0x6b0] sm:$0xff]
    %v2315 = vld [vmem:[#allocation6 + $0x6b8] sm:$0xff]
    %v2316 = vld [vmem:[#allocation6 + $0x6c0] sm:$0xff]
    %v2317 = vld [vmem:[#allocation6 + $0x6c8] sm:$0xff]
    %v2318 = vld [vmem:[#allocation6 + $0x6d0] sm:$0xff]
    %v2319 = vld [vmem:[#allocation6 + $0x6d8] sm:$0xff]
    %v2320 = vld [vmem:[#allocation6 + $0x6e0] sm:$0xff]
    %v2321 = vld [vmem:[#allocation6 + $0x6e8] sm:$0xff]
    %v2322 = vld [vmem:[#allocation6 + $0x6f0] sm:$0xff]
    %v2323 = vld [vmem:[#allocation6 + $0x6f8] sm:$0xff]
    %v2324 = vld [vmem:[#allocation6 + $0x700] sm:$0xff]
    %v2325 = vld [vmem:[#allocation6 + $0x708] sm:$0xff]
    %v2326 = vld [vmem:[#allocation6 + $0x710] sm:$0xff]
    %v2327 = vld [vmem:[#allocation6 + $0x718] sm:$0xff]
    %v2328 = vld [vmem:[#allocation6 + $0x720] sm:$0xff]
    %v2329 = vld [vmem:[#allocation6 + $0x728] sm:$0xff]
    %v2330 = vld [vmem:[#allocation6 + $0x730] sm:$0xff]
    %v2331 = vld [vmem:[#allocation6 + $0x738] sm:$0xff]
    %v2332 = vld [vmem:[#allocation6 + $0x740] sm:$0xff]
    %v2333 = vld [vmem:[#allocation6 + $0x748] sm:$0xff]
    %v2334 = vld [vmem:[#allocation6 + $0x750] sm:$0xff]
    %v2335 = vld [vmem:[#allocation6 + $0x758] sm:$0xff]
    %v2336 = vld [vmem:[#allocation6 + $0x760] sm:$0xff]
    %v2337 = vld [vmem:[#allocation6 + $0x768] sm:$0xff]
    %v2338 = vld [vmem:[#allocation6 + $0x770] sm:$0xff]
    %v2339 = vld [vmem:[#allocation6 + $0x778] sm:$0xff]
    %v2340 = vld [vmem:[#allocation6 + $0x780] sm:$0xff]
    %v2341 = vld [vmem:[#allocation6 + $0x788] sm:$0xff]
    %v2342 = vld [vmem:[#allocation6 + $0x790] sm:$0xff]
    %v2343 = vld [vmem:[#allocation6 + $0x798] sm:$0xff]
    %v2344 = vld [vmem:[#allocation6 + $0x7a0] sm:$0xff]
    %v2345 = vld [vmem:[#allocation6 + $0x7a8] sm:$0xff]
    %v2346 = vld [vmem:[#allocation6 + $0x7b0] sm:$0xff]
    %v2347 = vld [vmem:[#allocation6 + $0x7b8] sm:$0xff]
    %v2348 = vld [vmem:[#allocation6 + $0x7c0] sm:$0xff]
    %v2349 = vld [vmem:[#allocation6 + $0x7c8] sm:$0xff]
    %v2350 = vld [vmem:[#allocation6 + $0x7d0] sm:$0xff]
    %v2351 = vld [vmem:[#allocation6 + $0x7d8] sm:$0xff]
    %v2352 = vld [vmem:[#allocation6 + $0x7e0] sm:$0xff]
    %v2353 = vld [vmem:[#allocation6 + $0x7e8] sm:$0xff]
    %v2354 = vld [vmem:[#allocation6 + $0x7f0] sm:$0xff]
    %v2355 = vld [vmem:[#allocation6 + $0x7f8] sm:$0xff]
    %v2356 = vld [vmem:[#allocation6 + $0x800] sm:$0xff]
    %v2357 = vld [vmem:[#allocation6 + $0x808] sm:$0xff]
    %v2358 = vld [vmem:[#allocation6 + $0x810] sm:$0xff]
    %v2359 = vld [vmem:[#allocation6 + $0x818] sm:$0xff]
    %v2360 = vld [vmem:[#allocation6 + $0x820] sm:$0xff]
    %v2361 = vld [vmem:[#allocation6 + $0x828] sm:$0xff]
    %v2362 = vld [vmem:[#allocation6 + $0x830] sm:$0xff]
    %v2363 = vld [vmem:[#allocation6 + $0x838] sm:$0xff]
    %v2364 = vld [vmem:[#allocation6 + $0x840] sm:$0xff]
    %v2365 = vld [vmem:[#allocation6 + $0x848] sm:$0xff]
    %v2366 = vld [vmem:[#allocation6 + $0x850] sm:$0xff]
    %v2367 = vld [vmem:[#allocation6 + $0x858] sm:$0xff]
    %v2368 = vld [vmem:[#allocation6 + $0x860] sm:$0xff]
    %v2369 = vld [vmem:[#allocation6 + $0x868] sm:$0xff]
    %v2370 = vld [vmem:[#allocation6 + $0x870] sm:$0xff]
    %v2371 = vld [vmem:[#allocation6 + $0x878] sm:$0xff]
    %v2372 = vld [vmem:[#allocation6 + $0x880] sm:$0xff]
    %v2373 = vld [vmem:[#allocation6 + $0x888] sm:$0xff]
    %v2374 = vld [vmem:[#allocation6 + $0x890] sm:$0xff]
    %v2375 = vld [vmem:[#allocation6 + $0x898] sm:$0xff]
    %v2376 = vld [vmem:[#allocation6 + $0x8a0] sm:$0xff]
    %v2377 = vld [vmem:[#allocation6 + $0x8a8] sm:$0xff]
    %v2378 = vld [vmem:[#allocation6 + $0x8b0] sm:$0xff]
    %v2379 = vld [vmem:[#allocation6 + $0x8b8] sm:$0xff]
    %v2380 = vld [vmem:[#allocation6 + $0x8c0] sm:$0xff]
    %v2381 = vld [vmem:[#allocation6 + $0x8c8] sm:$0xff]
    %v2382 = vld [vmem:[#allocation6 + $0x8d0] sm:$0xff]
    %v2383 = vld [vmem:[#allocation6 + $0x8d8] sm:$0xff]
    %v2384 = vld [vmem:[#allocation6 + $0x8e0] sm:$0xff]
    %v2385 = vld [vmem:[#allocation6 + $0x8e8] sm:$0xff]
    %v2386 = vld [vmem:[#allocation6 + $0x8f0] sm:$0xff]
    %v2387 = vld [vmem:[#allocation6 + $0x8f8] sm:$0xff]
    %v2388 = vld [vmem:[#allocation6 + $0x900] sm:$0xff]
    %v2389 = vld [vmem:[#allocation6 + $0x908] sm:$0xff]
    %v2390 = vld [vmem:[#allocation6 + $0x910] sm:$0xff]
    %v2391 = vld [vmem:[#allocation6 + $0x918] sm:$0xff]
    %v2392 = vld [vmem:[#allocation6 + $0x920] sm:$0xff]
    %v2393 = vld [vmem:[#allocation6 + $0x928] sm:$0xff]
    %v2394 = vld [vmem:[#allocation6 + $0x930] sm:$0xff]
    %v2395 = vld [vmem:[#allocation6 + $0x938] sm:$0xff]
    %v2396 = vld [vmem:[#allocation6 + $0x940] sm:$0xff]
    %v2397 = vld [vmem:[#allocation6 + $0x948] sm:$0xff]
    %v2398 = vld [vmem:[#allocation6 + $0x950] sm:$0xff]
    %v2399 = vld [vmem:[#allocation6 + $0x958] sm:$0xff]
    %v2400 = vld [vmem:[#allocation6 + $0x960] sm:$0xff]
    %v2401 = vld [vmem:[#allocation6 + $0x968] sm:$0xff]
    %v2402 = vld [vmem:[#allocation6 + $0x970] sm:$0xff]
    %v2403 = vld [vmem:[#allocation6 + $0x978] sm:$0xff]
    %v2404 = vld [vmem:[#allocation6 + $0x980] sm:$0xff]
    %v2405 = vld [vmem:[#allocation6 + $0x988] sm:$0xff]
    %v2406 = vld [vmem:[#allocation6 + $0x990] sm:$0xff]
    %v2407 = vld [vmem:[#allocation6 + $0x998] sm:$0xff]
    %v2408 = vld [vmem:[#allocation6 + $0x9a0] sm:$0xff]
    %v2409 = vld [vmem:[#allocation6 + $0x9a8] sm:$0xff]
    %v2410 = vld [vmem:[#allocation6 + $0x9b0] sm:$0xff]
    %v2411 = vld [vmem:[#allocation6 + $0x9b8] sm:$0xff]
    %v2412 = vld [vmem:[#allocation6 + $0x9c0] sm:$0xff]
    %v2413 = vld [vmem:[#allocation6 + $0x9c8] sm:$0xff]
    %v2414 = vld [vmem:[#allocation6 + $0x9d0] sm:$0xff]
    %v2415 = vld [vmem:[#allocation6 + $0x9d8] sm:$0xff]
    %v2416 = vld [vmem:[#allocation6 + $0x9e0] sm:$0xff]
    %v2417 = vld [vmem:[#allocation6 + $0x9e8] sm:$0xff]
    %v2418 = vld [vmem:[#allocation6 + $0x9f0] sm:$0xff]
    %v2419 = vld [vmem:[#allocation6 + $0x9f8] sm:$0xff]
    %v2420 = vld [vmem:[#allocation6 + $0xa00] sm:$0xff]
    %v2421 = vld [vmem:[#allocation6 + $0xa08] sm:$0xff]
    %v2422 = vld [vmem:[#allocation6 + $0xa10] sm:$0xff]
    %v2423 = vld [vmem:[#allocation6 + $0xa18] sm:$0xff]
    %v2424 = vld [vmem:[#allocation6 + $0xa20] sm:$0xff]
    %v2425 = vld [vmem:[#allocation6 + $0xa28] sm:$0xff]
    %v2426 = vld [vmem:[#allocation6 + $0xa30] sm:$0xff]
    %v2427 = vld [vmem:[#allocation6 + $0xa38] sm:$0xff]
    %v2428 = vld [vmem:[#allocation6 + $0xa40] sm:$0xff]
    %v2429 = vld [vmem:[#allocation6 + $0xa48] sm:$0xff]
    %v2430 = vld [vmem:[#allocation6 + $0xa50] sm:$0xff]
    %v2431 = vld [vmem:[#allocation6 + $0xa58] sm:$0xff]
    %v2432 = vld [vmem:[#allocation6 + $0xa60] sm:$0xff]
    %v2433 = vld [vmem:[#allocation6 + $0xa68] sm:$0xff]
    %v2434 = vld [vmem:[#allocation6 + $0xa70] sm:$0xff]
    %v2435 = vld [vmem:[#allocation6 + $0xa78] sm:$0xff]
    %v2436 = vld [vmem:[#allocation6 + $0xa80] sm:$0xff]
    %v2437 = vld [vmem:[#allocation6 + $0xa88] sm:$0xff]
    %v2438 = vld [vmem:[#allocation6 + $0xa90] sm:$0xff]
    %v2439 = vld [vmem:[#allocation6 + $0xa98] sm:$0xff]
    %v2440 = vld [vmem:[#allocation6 + $0xaa0] sm:$0xff]
    %v2441 = vld [vmem:[#allocation6 + $0xaa8] sm:$0xff]
    %v2442 = vld [vmem:[#allocation6 + $0xab0] sm:$0xff]
    %v2443 = vld [vmem:[#allocation6 + $0xab8] sm:$0xff]
    %v2444 = vld [vmem:[#allocation6 + $0xac0] sm:$0xff]
    %v2445 = vld [vmem:[#allocation6 + $0xac8] sm:$0xff]
    %v2446 = vld [vmem:[#allocation6 + $0xad0] sm:$0xff]
    %v2447 = vld [vmem:[#allocation6 + $0xad8] sm:$0xff]
    %v2448 = vld [vmem:[#allocation6 + $0xae0] sm:$0xff]
    %v2449 = vld [vmem:[#allocation6 + $0xae8] sm:$0xff]
    %v2450 = vld [vmem:[#allocation6 + $0xaf0] sm:$0xff]
    %v2451 = vld [vmem:[#allocation6 + $0xaf8] sm:$0xff]
    %v2452 = vld [vmem:[#allocation6 + $0xb00] sm:$0xff]
    %v2453 = vld [vmem:[#allocation6 + $0xb08] sm:$0xff]
    %v2454 = vld [vmem:[#allocation6 + $0xb10] sm:$0xff]
    %v2455 = vld [vmem:[#allocation6 + $0xb18] sm:$0xff]
    %v2456 = vld [vmem:[#allocation6 + $0xb20] sm:$0xff]
    %v2457 = vld [vmem:[#allocation6 + $0xb28] sm:$0xff]
    %v2458 = vld [vmem:[#allocation6 + $0xb30] sm:$0xff]
    %v2459 = vld [vmem:[#allocation6 + $0xb38] sm:$0xff]
    %v2460 = vld [vmem:[#allocation6 + $0xb40] sm:$0xff]
    %v2461 = vld [vmem:[#allocation6 + $0xb48] sm:$0xff]
    %v2462 = vld [vmem:[#allocation6 + $0xb50] sm:$0xff]
    %v2463 = vld [vmem:[#allocation6 + $0xb58] sm:$0xff]
    %v2464 = vld [vmem:[#allocation6 + $0xb60] sm:$0xff]
    %v2465 = vld [vmem:[#allocation6 + $0xb68] sm:$0xff]
    %v2466 = vld [vmem:[#allocation6 + $0xb70] sm:$0xff]
    %v2467 = vld [vmem:[#allocation6 + $0xb78] sm:$0xff]
    %v2468 = vld [vmem:[#allocation6 + $0xb80] sm:$0xff]
    %v2469 = vld [vmem:[#allocation6 + $0xb88] sm:$0xff]
    %v2470 = vld [vmem:[#allocation6 + $0xb90] sm:$0xff]
    %v2471 = vld [vmem:[#allocation6 + $0xb98] sm:$0xff]
    %v2472 = vld [vmem:[#allocation6 + $0xba0] sm:$0xff]
    %v2473 = vld [vmem:[#allocation6 + $0xba8] sm:$0xff]
    %v2474 = vld [vmem:[#allocation6 + $0xbb0] sm:$0xff]
    %v2475 = vld [vmem:[#allocation6 + $0xbb8] sm:$0xff]
    %v2476 = vld [vmem:[#allocation6 + $0xbc0] sm:$0xff]
    %v2477 = vld [vmem:[#allocation6 + $0xbc8] sm:$0xff]
    %v2478 = vld [vmem:[#allocation6 + $0xbd0] sm:$0xff]
    %v2479 = vld [vmem:[#allocation6 + $0xbd8] sm:$0xff]
    %v2480 = vld [vmem:[#allocation6 + $0xbe0] sm:$0xff]
    %v2481 = vld [vmem:[#allocation6 + $0xbe8] sm:$0xff]
    %v2482 = vld [vmem:[#allocation6 + $0xbf0] sm:$0xff]
    %v2483 = vld [vmem:[#allocation6 + $0xbf8] sm:$0xff]
    %v2484 = vld [vmem:[#allocation6 + $0xc00] sm:$0xff]
    %v2485 = vld [vmem:[#allocation6 + $0xc08] sm:$0xff]
    %v2486 = vld [vmem:[#allocation6 + $0xc10] sm:$0xff]
    %v2487 = vld [vmem:[#allocation6 + $0xc18] sm:$0xff]
    %v2488 = vld [vmem:[#allocation6 + $0xc20] sm:$0xff]
    %v2489 = vld [vmem:[#allocation6 + $0xc28] sm:$0xff]
    %v2490 = vld [vmem:[#allocation6 + $0xc30] sm:$0xff]
    %v2491 = vld [vmem:[#allocation6 + $0xc38] sm:$0xff]
    %v2492 = vld [vmem:[#allocation6 + $0xc40] sm:$0xff]
    %v2493 = vld [vmem:[#allocation6 + $0xc48] sm:$0xff]
    %v2494 = vld [vmem:[#allocation6 + $0xc50] sm:$0xff]
    %v2495 = vld [vmem:[#allocation6 + $0xc58] sm:$0xff]
    %v2496 = vld [vmem:[#allocation6 + $0xc60] sm:$0xff]
    %v2497 = vld [vmem:[#allocation6 + $0xc68] sm:$0xff]
    %v2498 = vld [vmem:[#allocation6 + $0xc70] sm:$0xff]
    %v2499 = vld [vmem:[#allocation6 + $0xc78] sm:$0xff]
    %v2500 = vld [vmem:[#allocation6 + $0xc80] sm:$0xff]
    %v2501 = vld [vmem:[#allocation6 + $0xc88] sm:$0xff]
    %v2502 = vld [vmem:[#allocation6 + $0xc90] sm:$0xff]
    %v2503 = vld [vmem:[#allocation6 + $0xc98] sm:$0xff]
    %v2504 = vld [vmem:[#allocation6 + $0xca0] sm:$0xff]
    %v2505 = vld [vmem:[#allocation6 + $0xca8] sm:$0xff]
    %v2506 = vld [vmem:[#allocation6 + $0xcb0] sm:$0xff]
    %v2507 = vld [vmem:[#allocation6 + $0xcb8] sm:$0xff]
    %v2508 = vld [vmem:[#allocation6 + $0xcc0] sm:$0xff]
    %v2509 = vld [vmem:[#allocation6 + $0xcc8] sm:$0xff]
    %v2510 = vld [vmem:[#allocation6 + $0xcd0] sm:$0xff]
    %v2511 = vld [vmem:[#allocation6 + $0xcd8] sm:$0xff]
    %v2512 = vld [vmem:[#allocation6 + $0xce0] sm:$0xff]
    %v2513 = vld [vmem:[#allocation6 + $0xce8] sm:$0xff]
    %v2514 = vld [vmem:[#allocation6 + $0xcf0] sm:$0xff]
    %v2515 = vld [vmem:[#allocation6 + $0xcf8] sm:$0xff]
    %v2516 = vld [vmem:[#allocation6 + $0xd00] sm:$0xff]
    %v2517 = vld [vmem:[#allocation6 + $0xd08] sm:$0xff]
    %v2518 = vld [vmem:[#allocation6 + $0xd10] sm:$0xff]
    %v2519 = vld [vmem:[#allocation6 + $0xd18] sm:$0xff]
    %v2520 = vld [vmem:[#allocation6 + $0xd20] sm:$0xff]
    %v2521 = vld [vmem:[#allocation6 + $0xd28] sm:$0xff]
    %v2522 = vld [vmem:[#allocation6 + $0xd30] sm:$0xff]
    %v2523 = vld [vmem:[#allocation6 + $0xd38] sm:$0xff]
    %v2524 = vld [vmem:[#allocation6 + $0xd40] sm:$0xff]
    %v2525 = vld [vmem:[#allocation6 + $0xd48] sm:$0xff]
    %v2526 = vld [vmem:[#allocation6 + $0xd50] sm:$0xff]
    %v2527 = vld [vmem:[#allocation6 + $0xd58] sm:$0xff]
    %v2528 = vld [vmem:[#allocation6 + $0xd60] sm:$0xff]
    %v2529 = vld [vmem:[#allocation6 + $0xd68] sm:$0xff]
    %v2530 = vld [vmem:[#allocation6 + $0xd70] sm:$0xff]
    %v2531 = vld [vmem:[#allocation6 + $0xd78] sm:$0xff]
    %v2532 = vld [vmem:[#allocation6 + $0xd80] sm:$0xff]
    %v2533 = vld [vmem:[#allocation6 + $0xd88] sm:$0xff]
    %v2534 = vld [vmem:[#allocation6 + $0xd90] sm:$0xff]
    %v2535 = vld [vmem:[#allocation6 + $0xd98] sm:$0xff]
    %v2536 = vld [vmem:[#allocation6 + $0xda0] sm:$0xff]
    %v2537 = vld [vmem:[#allocation6 + $0xda8] sm:$0xff]
    %v2538 = vld [vmem:[#allocation6 + $0xdb0] sm:$0xff]
    %v2539 = vld [vmem:[#allocation6 + $0xdb8] sm:$0xff]
    %v2540 = vld [vmem:[#allocation6 + $0xdc0] sm:$0xff]
    %v2541 = vld [vmem:[#allocation6 + $0xdc8] sm:$0xff]
    %v2542 = vld [vmem:[#allocation6 + $0xdd0] sm:$0xff]
    %v2543 = vld [vmem:[#allocation6 + $0xdd8] sm:$0xff]
    %v2544 = vld [vmem:[#allocation6 + $0xde0] sm:$0xff]
    %v2545 = vld [vmem:[#allocation6 + $0xde8] sm:$0xff]
    %v2546 = vld [vmem:[#allocation6 + $0xdf0] sm:$0xff]
    %v2547 = vld [vmem:[#allocation6 + $0xdf8] sm:$0xff]
    %v2548 = vld [vmem:[#allocation6 + $0xe00] sm:$0xff]
    %v2549 = vld [vmem:[#allocation6 + $0xe08] sm:$0xff]
    %v2550 = vld [vmem:[#allocation6 + $0xe10] sm:$0xff]
    %v2551 = vld [vmem:[#allocation6 + $0xe18] sm:$0xff]
    %v2552 = vld [vmem:[#allocation6 + $0xe20] sm:$0xff]
    %v2553 = vld [vmem:[#allocation6 + $0xe28] sm:$0xff]
    %v2554 = vld [vmem:[#allocation6 + $0xe30] sm:$0xff]
    %v2555 = vld [vmem:[#allocation6 + $0xe38] sm:$0xff]
    %v2556 = vld [vmem:[#allocation6 + $0xe40] sm:$0xff]
    %v2557 = vld [vmem:[#allocation6 + $0xe48] sm:$0xff]
    %v2558 = vld [vmem:[#allocation6 + $0xe50] sm:$0xff]
    %v2559 = vld [vmem:[#allocation6 + $0xe58] sm:$0xff]
    %v2560 = vld [vmem:[#allocation6 + $0xe60] sm:$0xff]
    %v2561 = vld [vmem:[#allocation6 + $0xe68] sm:$0xff]
    %v2562 = vld [vmem:[#allocation6 + $0xe70] sm:$0xff]
    %v2563 = vld [vmem:[#allocation6 + $0xe78] sm:$0xff]
    %v2564 = vld [vmem:[#allocation6 + $0xe80] sm:$0xff]
    %v2565 = vld [vmem:[#allocation6 + $0xe88] sm:$0xff]
    %v2566 = vld [vmem:[#allocation6 + $0xe90] sm:$0xff]
    %v2567 = vld [vmem:[#allocation6 + $0xe98] sm:$0xff]
    %v2568 = vld [vmem:[#allocation6 + $0xea0] sm:$0xff]
    %v2569 = vld [vmem:[#allocation6 + $0xea8] sm:$0xff]
    %v2570 = vld [vmem:[#allocation6 + $0xeb0] sm:$0xff]
    %v2571 = vld [vmem:[#allocation6 + $0xeb8] sm:$0xff]
    %v2572 = vld [vmem:[#allocation6 + $0xec0] sm:$0xff]
    %v2573 = vld [vmem:[#allocation6 + $0xec8] sm:$0xff]
    %v2574 = vld [vmem:[#allocation6 + $0xed0] sm:$0xff]
    %v2575 = vld [vmem:[#allocation6 + $0xed8] sm:$0xff]
    %v2576 = vld [vmem:[#allocation6 + $0xee0] sm:$0xff]
    %v2577 = vld [vmem:[#allocation6 + $0xee8] sm:$0xff]
    %v2578 = vld [vmem:[#allocation6 + $0xef0] sm:$0xff]
    %v2579 = vld [vmem:[#allocation6 + $0xef8] sm:$0xff]
    %v2580 = vld [vmem:[#allocation6 + $0xf00] sm:$0xff]
    %v2581 = vld [vmem:[#allocation6 + $0xf08] sm:$0xff]
    %v2582 = vld [vmem:[#allocation6 + $0xf10] sm:$0xff]
    %v2583 = vld [vmem:[#allocation6 + $0xf18] sm:$0xff]
    %v2584 = vld [vmem:[#allocation6 + $0xf20] sm:$0xff]
    %v2585 = vld [vmem:[#allocation6 + $0xf28] sm:$0xff]
    %v2586 = vld [vmem:[#allocation6 + $0xf30] sm:$0xff]
    %v2587 = vld [vmem:[#allocation6 + $0xf38] sm:$0xff]
    %v2588 = vld [vmem:[#allocation6 + $0xf40] sm:$0xff]
    %v2589 = vld [vmem:[#allocation6 + $0xf48] sm:$0xff]
    %v2590 = vld [vmem:[#allocation6 + $0xf50] sm:$0xff]
    %v2591 = vld [vmem:[#allocation6 + $0xf58] sm:$0xff]
    %v2592 = vld [vmem:[#allocation6 + $0xf60] sm:$0xff]
    %v2593 = vld [vmem:[#allocation6 + $0xf68] sm:$0xff]
    %v2594 = vld [vmem:[#allocation6 + $0xf70] sm:$0xff]
    %v2595 = vld [vmem:[#allocation6 + $0xf78] sm:$0xff]
    %v2596 = vld [vmem:[#allocation6 + $0xf80] sm:$0xff]
    %v2597 = vld [vmem:[#allocation6 + $0xf88] sm:$0xff]
    %v2598 = vld [vmem:[#allocation6 + $0xf90] sm:$0xff]
    %v2599 = vld [vmem:[#allocation6 + $0xf98] sm:$0xff]
    %v2600 = vld [vmem:[#allocation6 + $0xfa0] sm:$0xff]
    %v2601 = vld [vmem:[#allocation6 + $0xfa8] sm:$0xff]
    %v2602 = vld [vmem:[#allocation6 + $0xfb0] sm:$0xff]
    %v2603 = vld [vmem:[#allocation6 + $0xfb8] sm:$0xff]
    %v2604 = vld [vmem:[#allocation6 + $0xfc0] sm:$0xff]
    %v2605 = vld [vmem:[#allocation6 + $0xfc8] sm:$0xff]
    %v2606 = vld [vmem:[#allocation6 + $0xfd0] sm:$0xff]
    %v2607 = vld [vmem:[#allocation6 + $0xfd8] sm:$0xff]
    %v2608 = vld [vmem:[#allocation6 + $0xfe0] sm:$0xff]
    %v2609 = vld [vmem:[#allocation6 + $0xfe8] sm:$0xff]
    %v2610 = vld [vmem:[#allocation6 + $0xff0] sm:$0xff]
    %v2611 = vld [vmem:[#allocation6 + $0xff8] sm:$0xff]
    %v2612 = vld [vmem:[#allocation6 + $0x1000] sm:$0xff]
    %v2613 = vld [vmem:[#allocation6 + $0x1008] sm:$0xff]
    %v2614 = vld [vmem:[#allocation6 + $0x1010] sm:$0xff]
    %v2615 = vld [vmem:[#allocation6 + $0x1018] sm:$0xff]
    %v2616 = vld [vmem:[#allocation6 + $0x1020] sm:$0xff]
    %v2617 = vld [vmem:[#allocation6 + $0x1028] sm:$0xff]
    %v2618 = vld [vmem:[#allocation6 + $0x1030] sm:$0xff]
    %v2619 = vld [vmem:[#allocation6 + $0x1038] sm:$0xff]
    %v2620 = vld [vmem:[#allocation6 + $0x1040] sm:$0xff]
    %v2621 = vld [vmem:[#allocation6 + $0x1048] sm:$0xff]
    %v2622 = vld [vmem:[#allocation6 + $0x1050] sm:$0xff]
    %v2623 = vld [vmem:[#allocation6 + $0x1058] sm:$0xff]
    %v2624 = vld [vmem:[#allocation6 + $0x1060] sm:$0xff]
    %v2625 = vld [vmem:[#allocation6 + $0x1068] sm:$0xff]
    %v2626 = vld [vmem:[#allocation6 + $0x1070] sm:$0xff]
    %v2627 = vld [vmem:[#allocation6 + $0x1078] sm:$0xff]
    %v2628 = vld [vmem:[#allocation6 + $0x1080] sm:$0xff]
    %v2629 = vld [vmem:[#allocation6 + $0x1088] sm:$0xff]
    %v2630 = vld [vmem:[#allocation6 + $0x1090] sm:$0xff]
    %v2631 = vld [vmem:[#allocation6 + $0x1098] sm:$0xff]
    %v2632 = vld [vmem:[#allocation6 + $0x10a0] sm:$0xff]
    %v2633 = vld [vmem:[#allocation6 + $0x10a8] sm:$0xff]
    %v2634 = vld [vmem:[#allocation6 + $0x10b0] sm:$0xff]
    %v2635 = vld [vmem:[#allocation6 + $0x10b8] sm:$0xff]
    %v2636 = vld [vmem:[#allocation6 + $0x10c0] sm:$0xff]
    %v2637 = vld [vmem:[#allocation6 + $0x10c8] sm:$0xff]
    %v2638 = vld [vmem:[#allocation6 + $0x10d0] sm:$0xff]
    %v2639 = vld [vmem:[#allocation6 + $0x10d8] sm:$0xff]
    %v2640 = vld [vmem:[#allocation6 + $0x10e0] sm:$0xff]
    %v2641 = vld [vmem:[#allocation6 + $0x10e8] sm:$0xff]
    %v2642 = vld [vmem:[#allocation6 + $0x10f0] sm:$0xff]
    %v2643 = vld [vmem:[#allocation6 + $0x10f8] sm:$0xff]
    %v2644 = vld [vmem:[#allocation6 + $0x1100] sm:$0xff]
    %v2645 = vld [vmem:[#allocation6 + $0x1108] sm:$0xff]
    %v2646 = vld [vmem:[#allocation6 + $0x1110] sm:$0xff]
    %v2647 = vld [vmem:[#allocation6 + $0x1118] sm:$0xff]
    %v2648 = vld [vmem:[#allocation6 + $0x1120] sm:$0xff]
    %v2649 = vld [vmem:[#allocation6 + $0x1128] sm:$0xff]
    %v2650 = vld [vmem:[#allocation6 + $0x1130] sm:$0xff]
    %v2651 = vld [vmem:[#allocation6 + $0x1138] sm:$0xff]
    %v2652 = vld [vmem:[#allocation6 + $0x1140] sm:$0xff]
    %v2653 = vld [vmem:[#allocation6 + $0x1148] sm:$0xff]
    %v2654 = vld [vmem:[#allocation6 + $0x1150] sm:$0xff]
    %v2655 = vld [vmem:[#allocation6 + $0x1158] sm:$0xff]
    %v2656 = vld [vmem:[#allocation6 + $0x1160] sm:$0xff]
    %v2657 = vld [vmem:[#allocation6 + $0x1168] sm:$0xff]
    %v2658 = vld [vmem:[#allocation6 + $0x1170] sm:$0xff]
    %v2659 = vld [vmem:[#allocation6 + $0x1178] sm:$0xff]
    %v2660 = vld [vmem:[#allocation6 + $0x1180] sm:$0xff]
    %v2661 = vld [vmem:[#allocation6 + $0x1188] sm:$0xff]
    %v2662 = vld [vmem:[#allocation6 + $0x1190] sm:$0xff]
    %v2663 = vld [vmem:[#allocation6 + $0x1198] sm:$0xff]
    %v2664 = vld [vmem:[#allocation6 + $0x11a0] sm:$0xff]
    %v2665 = vld [vmem:[#allocation6 + $0x11a8] sm:$0xff]
    %v2666 = vld [vmem:[#allocation6 + $0x11b0] sm:$0xff]
    %v2667 = vld [vmem:[#allocation6 + $0x11b8] sm:$0xff]
    %v2668 = vld [vmem:[#allocation6 + $0x11c0] sm:$0xff]
    %v2669 = vld [vmem:[#allocation6 + $0x11c8] sm:$0xff]
    %v2670 = vld [vmem:[#allocation6 + $0x11d0] sm:$0xff]
    %v2671 = vld [vmem:[#allocation6 + $0x11d8] sm:$0xff]
    %v2672 = vld [vmem:[#allocation6 + $0x11e0] sm:$0xff]
    %v2673 = vld [vmem:[#allocation6 + $0x11e8] sm:$0xff]
    %v2674 = vld [vmem:[#allocation6 + $0x11f0] sm:$0xff]
    %v2675 = vld [vmem:[#allocation6 + $0x11f8] sm:$0xff]
    %v2676 = vld [vmem:[#allocation6 + $0x1200] sm:$0xff]
    %v2677 = vld [vmem:[#allocation6 + $0x1208] sm:$0xff]
    %v2678 = vld [vmem:[#allocation6 + $0x1210] sm:$0xff]
    %v2679 = vld [vmem:[#allocation6 + $0x1218] sm:$0xff]
    %v2680 = vld [vmem:[#allocation6 + $0x1220] sm:$0xff]
    %v2681 = vld [vmem:[#allocation6 + $0x1228] sm:$0xff]
    %v2682 = vld [vmem:[#allocation6 + $0x1230] sm:$0xff]
    %v2683 = vld [vmem:[#allocation6 + $0x1238] sm:$0xff]
    %v2684 = vld [vmem:[#allocation6 + $0x1240] sm:$0xff]
    %v2685 = vld [vmem:[#allocation6 + $0x1248] sm:$0xff]
    %v2686 = vld [vmem:[#allocation6 + $0x1250] sm:$0xff]
    %v2687 = vld [vmem:[#allocation6 + $0x1258] sm:$0xff]
    %v2688 = vld [vmem:[#allocation6 + $0x1260] sm:$0xff]
    %v2689 = vld [vmem:[#allocation6 + $0x1268] sm:$0xff]
    %v2690 = vld [vmem:[#allocation6 + $0x1270] sm:$0xff]
    %v2691 = vld [vmem:[#allocation6 + $0x1278] sm:$0xff]
    %v2692 = vld [vmem:[#allocation6 + $0x1280] sm:$0xff]
    %v2693 = vld [vmem:[#allocation6 + $0x1288] sm:$0xff]
    %v2694 = vld [vmem:[#allocation6 + $0x1290] sm:$0xff]
    %v2695 = vld [vmem:[#allocation6 + $0x1298] sm:$0xff]
    %v2696 = vld [vmem:[#allocation6 + $0x12a0] sm:$0xff]
    %v2697 = vld [vmem:[#allocation6 + $0x12a8] sm:$0xff]
    %v2698 = vld [vmem:[#allocation6 + $0x12b0] sm:$0xff]
    %v2699 = vld [vmem:[#allocation6 + $0x12b8] sm:$0xff]
    %v2700 = vld [vmem:[#allocation6 + $0x12c0] sm:$0xff]
    %v2701 = vld [vmem:[#allocation6 + $0x12c8] sm:$0xff]
    %v2702 = vld [vmem:[#allocation6 + $0x12d0] sm:$0xff]
    %v2703 = vld [vmem:[#allocation6 + $0x12d8] sm:$0xff]
    %v2704 = vld [vmem:[#allocation6 + $0x12e0] sm:$0xff]
    %v2705 = vld [vmem:[#allocation6 + $0x12e8] sm:$0xff]
    %v2706 = vld [vmem:[#allocation6 + $0x12f0] sm:$0xff]
    %v2707 = vld [vmem:[#allocation6 + $0x12f8] sm:$0xff]
    %v2708 = vld [vmem:[#allocation6 + $0x1300] sm:$0xff]
    %v2709 = vld [vmem:[#allocation6 + $0x1308] sm:$0xff]
    %v2710 = vld [vmem:[#allocation6 + $0x1310] sm:$0xff]
    %v2711 = vld [vmem:[#allocation6 + $0x1318] sm:$0xff]
    %v2712 = vld [vmem:[#allocation6 + $0x1320] sm:$0xff]
    %v2713 = vld [vmem:[#allocation6 + $0x1328] sm:$0xff]
    %v2714 = vld [vmem:[#allocation6 + $0x1330] sm:$0xff]
    %v2715 = vld [vmem:[#allocation6 + $0x1338] sm:$0xff]
    %v2716 = vld [vmem:[#allocation6 + $0x1340] sm:$0xff]
    %v2717 = vld [vmem:[#allocation6 + $0x1348] sm:$0xff]
    %v2718 = vld [vmem:[#allocation6 + $0x1350] sm:$0xff]
    %v2719 = vld [vmem:[#allocation6 + $0x1358] sm:$0xff]
    %v2720 = vld [vmem:[#allocation6 + $0x1360] sm:$0xff]
    %v2721 = vld [vmem:[#allocation6 + $0x1368] sm:$0xff]
    %v2722 = vld [vmem:[#allocation6 + $0x1370] sm:$0xff]
    %v2723 = vld [vmem:[#allocation6 + $0x1378] sm:$0xff]
    %v2724 = vld [vmem:[#allocation6 + $0x1380] sm:$0xff]
    %v2725 = vld [vmem:[#allocation6 + $0x1388] sm:$0xff]
    %v2726 = vld [vmem:[#allocation6 + $0x1390] sm:$0xff]
    %v2727 = vld [vmem:[#allocation6 + $0x1398] sm:$0xff]
    %v2728 = vld [vmem:[#allocation6 + $0x13a0] sm:$0xff]
    %v2729 = vld [vmem:[#allocation6 + $0x13a8] sm:$0xff]
    %v2730 = vld [vmem:[#allocation6 + $0x13b0] sm:$0xff]
    %v2731 = vld [vmem:[#allocation6 + $0x13b8] sm:$0xff]
    %v2732 = vld [vmem:[#allocation6 + $0x13c0] sm:$0xff]
    %v2733 = vld [vmem:[#allocation6 + $0x13c8] sm:$0xff]
    %v2734 = vld [vmem:[#allocation6 + $0x13d0] sm:$0xff]
    %v2735 = vld [vmem:[#allocation6 + $0x13d8] sm:$0xff]
    %v2736 = vld [vmem:[#allocation6 + $0x13e0] sm:$0xff]
    %v2737 = vld [vmem:[#allocation6 + $0x13e8] sm:$0xff]
    %v2738 = vld [vmem:[#allocation6 + $0x13f0] sm:$0xff]
    %v2739 = vld [vmem:[#allocation6 + $0x13f8] sm:$0xff]
    %v2740 = vld [vmem:[#allocation6 + $0x1400] sm:$0xff]
    %v2741 = vld [vmem:[#allocation6 + $0x1408] sm:$0xff]
    %v2742 = vld [vmem:[#allocation6 + $0x1410] sm:$0xff]
    %v2743 = vld [vmem:[#allocation6 + $0x1418] sm:$0xff]
    %v2744 = vld [vmem:[#allocation6 + $0x1420] sm:$0xff]
    %v2745 = vld [vmem:[#allocation6 + $0x1428] sm:$0xff]
    %v2746 = vld [vmem:[#allocation6 + $0x1430] sm:$0xff]
    %v2747 = vld [vmem:[#allocation6 + $0x1438] sm:$0xff]
    %v2748 = vld [vmem:[#allocation6 + $0x1440] sm:$0xff]
    %v2749 = vld [vmem:[#allocation6 + $0x1448] sm:$0xff]
    %v2750 = vld [vmem:[#allocation6 + $0x1450] sm:$0xff]
    %v2751 = vld [vmem:[#allocation6 + $0x1458] sm:$0xff]
    %v2752 = vld [vmem:[#allocation6 + $0x1460] sm:$0xff]
    %v2753 = vld [vmem:[#allocation6 + $0x1468] sm:$0xff]
    %v2754 = vld [vmem:[#allocation6 + $0x1470] sm:$0xff]
    %v2755 = vld [vmem:[#allocation6 + $0x1478] sm:$0xff]
    %v2756 = vld [vmem:[#allocation6 + $0x1480] sm:$0xff]
    %v2757 = vld [vmem:[#allocation6 + $0x1488] sm:$0xff]
    %v2758 = vld [vmem:[#allocation6 + $0x1490] sm:$0xff]
    %v2759 = vld [vmem:[#allocation6 + $0x1498] sm:$0xff]
    %v2760 = vld [vmem:[#allocation6 + $0x14a0] sm:$0xff]
    %v2761 = vld [vmem:[#allocation6 + $0x14a8] sm:$0xff]
    %v2762 = vld [vmem:[#allocation6 + $0x14b0] sm:$0xff]
    %v2763 = vld [vmem:[#allocation6 + $0x14b8] sm:$0xff]
    %v2764 = vld [vmem:[#allocation6 + $0x14c0] sm:$0xff]
    %v2765 = vld [vmem:[#allocation6 + $0x14c8] sm:$0xff]
    %v2766 = vld [vmem:[#allocation6 + $0x14d0] sm:$0xff]
    %v2767 = vld [vmem:[#allocation6 + $0x14d8] sm:$0xff]
    %v2768 = vld [vmem:[#allocation6 + $0x14e0] sm:$0xff]
    %v2769 = vld [vmem:[#allocation6 + $0x14e8] sm:$0xff]
    %v2770 = vld [vmem:[#allocation6 + $0x14f0] sm:$0xff]
    %v2771 = vld [vmem:[#allocation6 + $0x14f8] sm:$0xff]
    %v2772 = vld [vmem:[#allocation6 + $0x1500] sm:$0xff]
    %v2773 = vld [vmem:[#allocation6 + $0x1508] sm:$0xff]
    %v2774 = vld [vmem:[#allocation6 + $0x1510] sm:$0xff]
    %v2775 = vld [vmem:[#allocation6 + $0x1518] sm:$0xff]
    %v2776 = vld [vmem:[#allocation6 + $0x1520] sm:$0xff]
    %v2777 = vld [vmem:[#allocation6 + $0x1528] sm:$0xff]
    %v2778 = vld [vmem:[#allocation6 + $0x1530] sm:$0xff]
    %v2779 = vld [vmem:[#allocation6 + $0x1538] sm:$0xff]
    %v2780 = vld [vmem:[#allocation6 + $0x1540] sm:$0xff]
    %v2781 = vld [vmem:[#allocation6 + $0x1548] sm:$0xff]
    %v2782 = vld [vmem:[#allocation6 + $0x1550] sm:$0xff]
    %v2783 = vld [vmem:[#allocation6 + $0x1558] sm:$0xff]
    %v2784 = vld [vmem:[#allocation6 + $0x1560] sm:$0xff]
    %v2785 = vld [vmem:[#allocation6 + $0x1568] sm:$0xff]
    %v2786 = vld [vmem:[#allocation6 + $0x1570] sm:$0xff]
    %v2787 = vld [vmem:[#allocation6 + $0x1578] sm:$0xff]
    %v2788 = vld [vmem:[#allocation6 + $0x1580] sm:$0xff]
    %v2789 = vld [vmem:[#allocation6 + $0x1588] sm:$0xff]
    %v2790 = vld [vmem:[#allocation6 + $0x1590] sm:$0xff]
    %v2791 = vld [vmem:[#allocation6 + $0x1598] sm:$0xff]
    %v2792 = vld [vmem:[#allocation6 + $0x15a0] sm:$0xff]
    %v2793 = vld [vmem:[#allocation6 + $0x15a8] sm:$0xff]
    %v2794 = vld [vmem:[#allocation6 + $0x15b0] sm:$0xff]
    %v2795 = vld [vmem:[#allocation6 + $0x15b8] sm:$0xff]
    %v2796 = vld [vmem:[#allocation6 + $0x15c0] sm:$0xff]
    %v2797 = vld [vmem:[#allocation6 + $0x15c8] sm:$0xff]
    %v2798 = vld [vmem:[#allocation6 + $0x15d0] sm:$0xff]
    %v2799 = vld [vmem:[#allocation6 + $0x15d8] sm:$0xff]
    %v2800 = vld [vmem:[#allocation6 + $0x15e0] sm:$0xff]
    %v2801 = vld [vmem:[#allocation6 + $0x15e8] sm:$0xff]
    %v2802 = vld [vmem:[#allocation6 + $0x15f0] sm:$0xff]
    %v2803 = vld [vmem:[#allocation6 + $0x15f8] sm:$0xff]
    %v2804 = vld [vmem:[#allocation6 + $0x1600] sm:$0xff]
    %v2805 = vld [vmem:[#allocation6 + $0x1608] sm:$0xff]
    %v2806 = vld [vmem:[#allocation6 + $0x1610] sm:$0xff]
    %v2807 = vld [vmem:[#allocation6 + $0x1618] sm:$0xff]
    %v2808 = vld [vmem:[#allocation6 + $0x1620] sm:$0xff]
    %v2809 = vld [vmem:[#allocation6 + $0x1628] sm:$0xff]
    %v2810 = vld [vmem:[#allocation6 + $0x1630] sm:$0xff]
    %v2811 = vld [vmem:[#allocation6 + $0x1638] sm:$0xff]
    %v2812 = vld [vmem:[#allocation6 + $0x1640] sm:$0xff]
    %v2813 = vld [vmem:[#allocation6 + $0x1648] sm:$0xff]
    %v2814 = vld [vmem:[#allocation6 + $0x1650] sm:$0xff]
    %v2815 = vld [vmem:[#allocation6 + $0x1658] sm:$0xff]
    %v2816 = vld [vmem:[#allocation6 + $0x1660] sm:$0xff]
    %v2817 = vld [vmem:[#allocation6 + $0x1668] sm:$0xff]
    %v2818 = vld [vmem:[#allocation6 + $0x1670] sm:$0xff]
    %v2819 = vld [vmem:[#allocation6 + $0x1678] sm:$0xff]
    %v2820 = vld [vmem:[#allocation6 + $0x1680] sm:$0xff]
    %v2821 = vld [vmem:[#allocation6 + $0x1688] sm:$0xff]
    %v2822 = vld [vmem:[#allocation6 + $0x1690] sm:$0xff]
    %v2823 = vld [vmem:[#allocation6 + $0x1698] sm:$0xff]
    %v2824 = vld [vmem:[#allocation6 + $0x16a0] sm:$0xff]
    %v2825 = vld [vmem:[#allocation6 + $0x16a8] sm:$0xff]
    %v2826 = vld [vmem:[#allocation6 + $0x16b0] sm:$0xff]
    %v2827 = vld [vmem:[#allocation6 + $0x16b8] sm:$0xff]
    %v2828 = vld [vmem:[#allocation6 + $0x16c0] sm:$0xff]
    %v2829 = vld [vmem:[#allocation6 + $0x16c8] sm:$0xff]
    %v2830 = vld [vmem:[#allocation6 + $0x16d0] sm:$0xff]
    %v2831 = vld [vmem:[#allocation6 + $0x16d8] sm:$0xff]
    %v2832 = vld [vmem:[#allocation6 + $0x16e0] sm:$0xff]
    %v2833 = vld [vmem:[#allocation6 + $0x16e8] sm:$0xff]
    %v2834 = vld [vmem:[#allocation6 + $0x16f0] sm:$0xff]
    %v2835 = vld [vmem:[#allocation6 + $0x16f8] sm:$0xff]
    %v2836 = vld [vmem:[#allocation6 + $0x1700] sm:$0xff]
    %v2837 = vld [vmem:[#allocation6 + $0x1708] sm:$0xff]
    %v2838 = vld [vmem:[#allocation6 + $0x1710] sm:$0xff]
    %v2839 = vld [vmem:[#allocation6 + $0x1718] sm:$0xff]
    %v2840 = vld [vmem:[#allocation6 + $0x1720] sm:$0xff]
    %v2841 = vld [vmem:[#allocation6 + $0x1728] sm:$0xff]
    %v2842 = vld [vmem:[#allocation6 + $0x1730] sm:$0xff]
    %v2843 = vld [vmem:[#allocation6 + $0x1738] sm:$0xff]
    %v2844 = vld [vmem:[#allocation6 + $0x1740] sm:$0xff]
    %v2845 = vld [vmem:[#allocation6 + $0x1748] sm:$0xff]
    %v2846 = vld [vmem:[#allocation6 + $0x1750] sm:$0xff]
    %v2847 = vld [vmem:[#allocation6 + $0x1758] sm:$0xff]
    %v2848 = vld [vmem:[#allocation6 + $0x1760] sm:$0xff]
    %v2849 = vld [vmem:[#allocation6 + $0x1768] sm:$0xff]
    %v2850 = vld [vmem:[#allocation6 + $0x1770] sm:$0xff]
    %v2851 = vld [vmem:[#allocation6 + $0x1778] sm:$0xff]
    %v2852 = vld [vmem:[#allocation6 + $0x1780] sm:$0xff]
    %v2853 = vld [vmem:[#allocation6 + $0x1788] sm:$0xff]
    %v2854 = vld [vmem:[#allocation6 + $0x1790] sm:$0xff]
    %v2855 = vld [vmem:[#allocation6 + $0x1798] sm:$0xff]
    %v2856 = vld [vmem:[#allocation6 + $0x17a0] sm:$0xff]
    %v2857 = vld [vmem:[#allocation6 + $0x17a8] sm:$0xff]
    %v2858 = vld [vmem:[#allocation6 + $0x17b0] sm:$0xff]
    %v2859 = vld [vmem:[#allocation6 + $0x17b8] sm:$0xff]
    %v2860 = vld [vmem:[#allocation6 + $0x17c0] sm:$0xff]
    %v2861 = vld [vmem:[#allocation6 + $0x17c8] sm:$0xff]
    %v2862 = vld [vmem:[#allocation6 + $0x17d0] sm:$0xff]
    %v2863 = vld [vmem:[#allocation6 + $0x17d8] sm:$0xff]
    %v2864 = vld [vmem:[#allocation6 + $0x17e0] sm:$0xff]
    %v2865 = vld [vmem:[#allocation6 + $0x17e8] sm:$0xff]
    %v2866 = vld [vmem:[#allocation6 + $0x17f0] sm:$0xff]
    %v2867 = vld [vmem:[#allocation6 + $0x17f8] sm:$0xff]
    %v2868 = vld [vmem:[#allocation6 + $0x1800] sm:$0xff]
    %v2869 = vld [vmem:[#allocation6 + $0x1808] sm:$0xff]
    %v2870 = vld [vmem:[#allocation6 + $0x1810] sm:$0xff]
    %v2871 = vld [vmem:[#allocation6 + $0x1818] sm:$0xff]
    %v2872 = vld [vmem:[#allocation6 + $0x1820] sm:$0xff]
    %v2873 = vld [vmem:[#allocation6 + $0x1828] sm:$0xff]
    %v2874 = vld [vmem:[#allocation6 + $0x1830] sm:$0xff]
    %v2875 = vld [vmem:[#allocation6 + $0x1838] sm:$0xff]
    %v2876 = vld [vmem:[#allocation6 + $0x1840] sm:$0xff]
    %v2877 = vld [vmem:[#allocation6 + $0x1848] sm:$0xff]
    %v2878 = vld [vmem:[#allocation6 + $0x1850] sm:$0xff]
    %v2879 = vld [vmem:[#allocation6 + $0x1858] sm:$0xff]
    %v2880 = vld [vmem:[#allocation6 + $0x1860] sm:$0xff]
    %v2881 = vld [vmem:[#allocation6 + $0x1868] sm:$0xff]
    %v2882 = vld [vmem:[#allocation6 + $0x1870] sm:$0xff]
    %v2883 = vld [vmem:[#allocation6 + $0x1878] sm:$0xff]
    %v2884 = vld [vmem:[#allocation7] sm:$0xff]
    %v2886 = vlaneseq
    %v2887 = vshrl.u32 %v2886, 7
    %v2888 = vsub.s32 0, %v2887
    %v2889 = vrot.slane %v2884, %v2888
    %v2890 = vlaneseq
    %v2891 = vshrl.u32 %v2890, 7
    %v2892 = vsub.s32 1, %v2891
    %v2893 = vrot.slane %v2884, %v2892
    %v2894 = vlaneseq
    %v2895 = vshrl.u32 %v2894, 7
    %v2896 = vsub.s32 2, %v2895
    %v2897 = vrot.slane %v2884, %v2896
    %v2898 = vlaneseq
    %v2899 = vshrl.u32 %v2898, 7
    %v2900 = vsub.s32 3, %v2899
    %v2901 = vrot.slane %v2884, %v2900
    %v2902 = vlaneseq
    %v2903 = vshrl.u32 %v2902, 7
    %v2904 = vsub.s32 4, %v2903
    %v2905 = vrot.slane %v2884, %v2904
    %v2906 = vlaneseq
    %v2907 = vshrl.u32 %v2906, 7
    %v2908 = vsub.s32 5, %v2907
    %v2909 = vrot.slane %v2884, %v2908
    %v2910 = vlaneseq
    %v2911 = vshrl.u32 %v2910, 7
    %v2912 = vsub.s32 6, %v2911
    %v2913 = vrot.slane %v2884, %v2912
    %2921 = vmatprep.subr.mxu0 %v2101
    %2922 = vmatpush1.msra.mxu0 %v2100
    %2923 = vmatprep.subr.mxu0 %v2108
    %2924 = vmatpush1.msra.mxu0 %v2107
    %2925 = vmatprep.subr.mxu0 %v2115
    %2926 = vmatpush1.msra.mxu0 %v2114
    %2927 = vmatprep.subr.mxu0 %v2122
    %2928 = vmatpush1.msra.mxu0 %v2121
    %2929 = vmatprep.subr.mxu0 %v2129
    %2930 = vmatpush1.msra.mxu0 %v2128
    %2931 = vmatprep.subr.mxu0 %v2136
    %2932 = vmatpush1.msra.mxu0 %v2135
    %2933 = vmatprep.subr.mxu0 %v2143
    %2934 = vmatpush1.msra.mxu0 %v2142
    %2935 = vmatprep.subr.mxu0 %v2150
    %2936 = vmatpush1.msra.mxu0 %v2149
    %2937 = vmatprep.subr.mxu0 %v2157
    %2938 = vmatpush1.msra.mxu0 %v2156
    %2939 = vmatprep.subr.mxu0 %v2164
    %2940 = vmatpush1.msra.mxu0 %v2163
    %2941 = vmatprep.subr.mxu0 %v2171
    %2942 = vmatpush1.msra.mxu0 %v2170
    %2943 = vmatprep.subr.mxu0 %v2178
    %2944 = vmatpush1.msra.mxu0 %v2177
    %2945 = vmatprep.subr.mxu0 %v2185
    %2946 = vmatpush1.msra.mxu0 %v2184
    %2947 = vmatprep.subr.mxu0 %v2192
    %2948 = vmatpush1.msra.mxu0 %v2191
    %2949 = vmatprep.subr.mxu0 %v2199
    %2950 = vmatpush1.msra.mxu0 %v2198
    %2951 = vmatprep.subr.mxu0 %v2206
    %2952 = vmatpush1.msra.mxu0 %v2205
    %2953 = vmatprep.subr.mxu0 %v2213
    %2954 = vmatpush1.msra.mxu0 %v2212
    %2955 = vmatprep.subr.mxu0 %v2220
    %2956 = vmatpush1.msra.mxu0 %v2219
    %2957 = vmatprep.subr.mxu0 %v2227
    %2958 = vmatpush1.msra.mxu0 %v2226
    %2959 = vmatprep.subr.mxu0 %v2234
    %2960 = vmatpush1.msra.mxu0 %v2233
    %2961 = vmatprep.subr.mxu0 %v2241
    %2962 = vmatpush1.msra.mxu0 %v2240
    %2963 = vmatprep.subr.mxu0 %v2248
    %2964 = vmatpush1.msra.mxu0 %v2247
    %2965 = vmatprep.subr.mxu0 %v2255
    %2966 = vmatpush1.msra.mxu0 %v2254
    %2967 = vmatprep.subr.mxu0 %v2262
    %2968 = vmatpush1.msra.mxu0 %v2261
    %2969 = vmatprep.subr.mxu0 %v2269
    %2970 = vmatpush1.msra.mxu0 %v2268
    %2971 = vmatprep.subr.mxu0 %v2276
    %2972 = vmatpush1.msra.mxu0 %v2275
    %2973 = vmatprep.subr.mxu0 %v2283
    %2974 = vmatpush1.msra.mxu0 %v2282
    %2975 = vmatprep.subr.mxu0 %v2290
    %2976 = vmatpush1.msra.mxu0 %v2289
    %2977 = vmatprep.subr.mxu0 %v2297
    %2978 = vmatpush1.msra.mxu0 %v2296
    %2979 = vmatprep.subr.mxu0 %v2304
    %2980 = vmatpush1.msra.mxu0 %v2303
    %2981 = vmatprep.subr.mxu0 %v2311
    %2982 = vmatpush1.msra.mxu0 %v2310
    %2983 = vmatprep.subr.mxu0 %v2318
    %2984 = vmatpush1.msra.mxu0 %v2317
    %2985 = vmatprep.mubr.f32.mxu0 %v2094
    %2986 = vmatmul.mubr.f32.gmra.mrb[0].mxu0 %v2093
    %v2987 = vpop.f32.mrb[0].mxu0
    %v2988 = vadd.f32 %v2889, %v2987
    %v2989 = vpop.f32.mrb[0].mxu0
    %v2990 = vadd.f32 %v2893, %v2989
    %2991 = vdwg.mxu0
    %2992 = vmatprep.subr.mxu0 %v2325
    %2993 = vmatpush1.msra.mxu0 %v2324
    %2994 = vmatprep.subr.mxu0 %v2332
    %2995 = vmatpush1.msra.mxu0 %v2331
    %2996 = vmatprep.subr.mxu0 %v2339
    %2997 = vmatpush1.msra.mxu0 %v2338
    %2998 = vmatprep.subr.mxu0 %v2346
    %2999 = vmatpush1.msra.mxu0 %v2345
    %3000 = vmatprep.subr.mxu0 %v2353
    %3001 = vmatpush1.msra.mxu0 %v2352
    %3002 = vmatprep.subr.mxu0 %v2360
    %3003 = vmatpush1.msra.mxu0 %v2359
    %3004 = vmatprep.subr.mxu0 %v2367
    %3005 = vmatpush1.msra.mxu0 %v2366
    %3006 = vmatprep.subr.mxu0 %v2374
    %3007 = vmatpush1.msra.mxu0 %v2373
    %3008 = vmatprep.subr.mxu0 %v2381
    %3009 = vmatpush1.msra.mxu0 %v2380
    %3010 = vmatprep.subr.mxu0 %v2388
    %3011 = vmatpush1.msra.mxu0 %v2387
    %3012 = vmatprep.subr.mxu0 %v2395
    %3013 = vmatpush1.msra.mxu0 %v2394
    %3014 = vmatprep.subr.mxu0 %v2402
    %3015 = vmatpush1.msra.mxu0 %v2401
    %3016 = vmatprep.subr.mxu0 %v2409
    %3017 = vmatpush1.msra.mxu0 %v2408
    %3018 = vmatprep.subr.mxu0 %v2416
    %3019 = vmatpush1.msra.mxu0 %v2415
    %3020 = vmatprep.subr.mxu0 %v2423
    %3021 = vmatpush1.msra.mxu0 %v2422
    %3022 = vmatprep.subr.mxu0 %v2430
    %3023 = vmatpush1.msra.mxu0 %v2429
    %3024 = vmatprep.subr.mxu0 %v2437
    %3025 = vmatpush1.msra.mxu0 %v2436
    %3026 = vmatprep.subr.mxu0 %v2444
    %3027 = vmatpush1.msra.mxu0 %v2443
    %3028 = vmatprep.subr.mxu0 %v2451
    %3029 = vmatpush1.msra.mxu0 %v2450
    %3030 = vmatprep.subr.mxu0 %v2458
    %3031 = vmatpush1.msra.mxu0 %v2457
    %3032 = vmatprep.subr.mxu0 %v2465
    %3033 = vmatpush1.msra.mxu0 %v2464
    %3034 = vmatprep.subr.mxu0 %v2472
    %3035 = vmatpush1.msra.mxu0 %v2471
    %3036 = vmatprep.subr.mxu0 %v2479
    %3037 = vmatpush1.msra.mxu0 %v2478
    %3038 = vmatprep.subr.mxu0 %v2486
    %3039 = vmatpush1.msra.mxu0 %v2485
    %3040 = vmatprep.subr.mxu0 %v2493
    %3041 = vmatpush1.msra.mxu0 %v2492
    %3042 = vmatprep.subr.mxu0 %v2500
    %3043 = vmatpush1.msra.mxu0 %v2499
    %3044 = vmatprep.subr.mxu0 %v2507
    %3045 = vmatpush1.msra.mxu0 %v2506
    %3046 = vmatprep.subr.mxu0 %v2514
    %3047 = vmatpush1.msra.mxu0 %v2513
    %3048 = vmatprep.subr.mxu0 %v2521
    %3049 = vmatpush1.msra.mxu0 %v2520
    %3050 = vmatprep.subr.mxu0 %v2528
    %3051 = vmatpush1.msra.mxu0 %v2527
    %3052 = vmatprep.subr.mxu0 %v2535
    %3053 = vmatpush1.msra.mxu0 %v2534
    %3054 = vmatprep.subr.mxu0 %v2542
    %3055 = vmatpush1.msra.mxu0 %v2541
    %3056 = vmatprep.mubr.f32.mxu0 %v2096
    %3057 = vmatmul.mubr.f32.gmra.mrb[0].mxu0 %v2095
    %v3058 = vpop.f32.mrb[0].mxu0
    %v3059 = vadd.f32 %v2988, %v3058
    %v3060 = vpop.f32.mrb[0].mxu0
    %v3061 = vadd.f32 %v2990, %v3060
    %3062 = vdwg.mxu0
    %3063 = vmatprep.subr.mxu0 %v2549
    %3064 = vmatpush1.msra.mxu0 %v2548
    %3065 = vmatprep.subr.mxu0 %v2556
    %3066 = vmatpush1.msra.mxu0 %v2555
    %3067 = vmatprep.subr.mxu0 %v2563
    %3068 = vmatpush1.msra.mxu0 %v2562
    %3069 = vmatprep.subr.mxu0 %v2570
    %3070 = vmatpush1.msra.mxu0 %v2569
    %3071 = vmatprep.subr.mxu0 %v2577
    %3072 = vmatpush1.msra.mxu0 %v2576
    %3073 = vmatprep.subr.mxu0 %v2584
    %3074 = vmatpush1.msra.mxu0 %v2583
    %3075 = vmatprep.subr.mxu0 %v2591
    %3076 = vmatpush1.msra.mxu0 %v2590
    %3077 = vmatprep.subr.mxu0 %v2598
    %3078 = vmatpush1.msra.mxu0 %v2597
    %3079 = vmatprep.subr.mxu0 %v2605
    %3080 = vmatpush1.msra.mxu0 %v2604
    %3081 = vmatprep.subr.mxu0 %v2612
    %3082 = vmatpush1.msra.mxu0 %v2611
    %3083 = vmatprep.subr.mxu0 %v2619
    %3084 = vmatpush1.msra.mxu0 %v2618
    %3085 = vmatprep.subr.mxu0 %v2626
    %3086 = vmatpush1.msra.mxu0 %v2625
    %3087 = vmatprep.subr.mxu0 %v2633
    %3088 = vmatpush1.msra.mxu0 %v2632
    %3089 = vmatprep.subr.mxu0 %v2640
    %3090 = vmatpush1.msra.mxu0 %v2639
    %3091 = vmatprep.subr.mxu0 %v2647
    %3092 = vmatpush1.msra.mxu0 %v2646
    %3093 = vmatprep.subr.mxu0 %v2654
    %3094 = vmatpush1.msra.mxu0 %v2653
    %3095 = vmatprep.subr.mxu0 %v2661
    %3096 = vmatpush1.msra.mxu0 %v2660
    %3097 = vmatprep.subr.mxu0 %v2668
    %3098 = vmatpush1.msra.mxu0 %v2667
    %3099 = vmatprep.subr.mxu0 %v2675
    %3100 = vmatpush1.msra.mxu0 %v2674
    %3101 = vmatprep.subr.mxu0 %v2682
    %3102 = vmatpush1.msra.mxu0 %v2681
    %3103 = vmatprep.subr.mxu0 %v2689
    %3104 = vmatpush1.msra.mxu0 %v2688
    %3105 = vmatprep.subr.mxu0 %v2696
    %3106 = vmatpush1.msra.mxu0 %v2695
    %3107 = vmatprep.subr.mxu0 %v2703
    %3108 = vmatpush1.msra.mxu0 %v2702
    %3109 = vmatprep.subr.mxu0 %v2710
    %3110 = vmatpush1.msra.mxu0 %v2709
    %3111 = vmatprep.subr.mxu0 %v2717
    %3112 = vmatpush1.msra.mxu0 %v2716
    %3113 = vmatprep.subr.mxu0 %v2724
    %3114 = vmatpush1.msra.mxu0 %v2723
    %3115 = vmatprep.subr.mxu0 %v2731
    %3116 = vmatpush1.msra.mxu0 %v2730
    %3117 = vmatprep.subr.mxu0 %v2738
    %3118 = vmatpush1.msra.mxu0 %v2737
    %3119 = vmatprep.subr.mxu0 %v2745
    %3120 = vmatpush1.msra.mxu0 %v2744
    %3121 = vmatprep.subr.mxu0 %v2752
    %3122 = vmatpush1.msra.mxu0 %v2751
    %3123 = vmatprep.subr.mxu0 %v2759
    %3124 = vmatpush1.msra.mxu0 %v2758
    %3125 = vmatprep.subr.mxu0 %v2766
    %3126 = vmatpush1.msra.mxu0 %v2765
    %3127 = vmatprep.mubr.f32.mxu0 %v2098
    %3128 = vmatmul.mubr.f32.gmra.mrb[0].mxu0 %v2097
    %v3129 = vpop.f32.mrb[0].mxu0
    %v3130 = vadd.f32 %v3059, %v3129
    %v3131 = vpop.f32.mrb[0].mxu0
    %v3132 = vadd.f32 %v3061, %v3131
    %3133 = vdwg.mxu0
    %3134 = vmatprep.subr.mxu0 %v2773
    %3135 = vmatpush1.msra.mxu0 %v2772
    %3136 = vmatprep.subr.mxu0 %v2780
    %3137 = vmatpush1.msra.mxu0 %v2779
    %3138 = vmatprep.subr.mxu0 %v2787
    %3139 = vmatpush1.msra.mxu0 %v2786
    %3140 = vmatprep.subr.mxu0 %v2794
    %3141 = vmatpush1.msra.mxu0 %v2793
    %3142 = vmatprep.subr.mxu0 %v2801
    %3143 = vmatpush1.msra.mxu0 %v2800
    %3144 = vmatprep.subr.mxu0 %v2808
    %3145 = vmatpush1.msra.mxu0 %v2807
    %3146 = vmatprep.subr.mxu0 %v2815
    %3147 = vmatpush1.msra.mxu0 %v2814
    %3148 = vmatprep.subr.mxu0 %v2822
    %3149 = vmatpush1.msra.mxu0 %v2821
    %3150 = vmatprep.subr.mxu0 %v2829
    %3151 = vmatpush1.msra.mxu0 %v2828
    %3152 = vmatprep.subr.mxu0 %v2836
    %3153 = vmatpush1.msra.mxu0 %v2835
    %3154 = vmatprep.subr.mxu0 %v2843
    %3155 = vmatpush1.msra.mxu0 %v2842
    %3156 = vmatprep.subr.mxu0 %v2850
    %3157 = vmatpush1.msra.mxu0 %v2849
    %3158 = vmatprep.subr.mxu0 %v2857
    %3159 = vmatpush1.msra.mxu0 %v2856
    %3160 = vmatprep.subr.mxu0 %v2864
    %3161 = vmatpush1.msra.mxu0 %v2863
    %3162 = vmatprep.subr.mxu0 %v2871
    %3163 = vmatpush1.msra.mxu0 %v2870
    %3164 = vmatprep.subr.mxu0 %v2878
    %3165 = vmatpush1.msra.mxu0 %v2877
    %3166 = vmatprep.subr.mxu0 0.0
    %3167 = vmatpush1.msra.mxu0 0.0
    %3168 = vmatprep.subr.mxu0 0.0
    %3169 = vmatpush1.msra.mxu0 0.0
    %3170 = vmatprep.subr.mxu0 0.0
    %3171 = vmatpush1.msra.mxu0 0.0
    %3172 = vmatprep.subr.mxu0 0.0
    %3173 = vmatpush1.msra.mxu0 0.0
    %3174 = vmatprep.subr.mxu0 0.0
    %3175 = vmatpush1.msra.mxu0 0.0
    %3176 = vmatprep.subr.mxu0 0.0
    %3177 = vmatpush1.msra.mxu0 0.0
    %3178 = vmatprep.subr.mxu0 0.0
    %3179 = vmatpush1.msra.mxu0 0.0
    %3180 = vmatprep.subr.mxu0 0.0
    %3181 = vmatpush1.msra.mxu0 0.0
    %3182 = vmatprep.subr.mxu0 0.0
    %3183 = vmatpush1.msra.mxu0 0.0
    %3184 = vmatprep.subr.mxu0 0.0
    %3185 = vmatpush1.msra.mxu0 0.0
    %3186 = vmatprep.subr.mxu0 0.0
    %3187 = vmatpush1.msra.mxu0 0.0
    %3188 = vmatprep.subr.mxu0 0.0
    %3189 = vmatpush1.msra.mxu0 0.0
    %3190 = vmatprep.subr.mxu0 0.0
    %3191 = vmatpush1.msra.mxu0 0.0
    %3192 = vmatprep.subr.mxu0 0.0
    %3193 = vmatpush1.msra.mxu0 0.0
    %3194 = vmatprep.subr.mxu0 0.0
    %3195 = vmatpush1.msra.mxu0 0.0
    %3196 = vmatprep.subr.mxu0 0.0
    %3197 = vmatpush1.msra.mxu0 0.0
    %3198 = vmatprep.mubr.f32.mxu0 0.0
    %3199 = vmatmul.mubr.f32.gmra.mrb[0].mxu0 %v2099
    %v3200 = vpop.f32.mrb[0].mxu0
    %v3201 = vadd.f32 %v3130, %v3200
    %v3202 = vpop.f32.mrb[0].mxu0
    %v3203 = vadd.f32 %v3132, %v3202
    %3204 = vdwg.mxu0
    %3205 = vmatprep.subr.mxu0 %v2103
    %3206 = vmatpush1.msra.mxu0 %v2102
    %3207 = vmatprep.subr.mxu0 %v2110
    %3208 = vmatpush1.msra.mxu0 %v2109
    %3209 = vmatprep.subr.mxu0 %v2117
    %3210 = vmatpush1.msra.mxu0 %v2116
    %3211 = vmatprep.subr.mxu0 %v2124
    %3212 = vmatpush1.msra.mxu0 %v2123
    %3213 = vmatprep.subr.mxu0 %v2131
    %3214 = vmatpush1.msra.mxu0 %v2130
    %3215 = vmatprep.subr.mxu0 %v2138
    %3216 = vmatpush1.msra.mxu0 %v2137
    %3217 = vmatprep.subr.mxu0 %v2145
    %3218 = vmatpush1.msra.mxu0 %v2144
    %3219 = vmatprep.subr.mxu0 %v2152
    %3220 = vmatpush1.msra.mxu0 %v2151
    %3221 = vmatprep.subr.mxu0 %v2159
    %3222 = vmatpush1.msra.mxu0 %v2158
    %3223 = vmatprep.subr.mxu0 %v2166
    %3224 = vmatpush1.msra.mxu0 %v2165
    %3225 = vmatprep.subr.mxu0 %v2173
    %3226 = vmatpush1.msra.mxu0 %v2172
    %3227 = vmatprep.subr.mxu0 %v2180
    %3228 = vmatpush1.msra.mxu0 %v2179
    %3229 = vmatprep.subr.mxu0 %v2187
    %3230 = vmatpush1.msra.mxu0 %v2186
    %3231 = vmatprep.subr.mxu0 %v2194
    %3232 = vmatpush1.msra.mxu0 %v2193
    %3233 = vmatprep.subr.mxu0 %v2201
    %3234 = vmatpush1.msra.mxu0 %v2200
    %3235 = vmatprep.subr.mxu0 %v2208
    %3236 = vmatpush1.msra.mxu0 %v2207
    %3237 = vmatprep.subr.mxu0 %v2215
    %3238 = vmatpush1.msra.mxu0 %v2214
    %3239 = vmatprep.subr.mxu0 %v2222
    %3240 = vmatpush1.msra.mxu0 %v2221
    %3241 = vmatprep.subr.mxu0 %v2229
    %3242 = vmatpush1.msra.mxu0 %v2228
    %3243 = vmatprep.subr.mxu0 %v2236
    %3244 = vmatpush1.msra.mxu0 %v2235
    %3245 = vmatprep.subr.mxu0 %v2243
    %3246 = vmatpush1.msra.mxu0 %v2242
    %3247 = vmatprep.subr.mxu0 %v2250
    %3248 = vmatpush1.msra.mxu0 %v2249
    %3249 = vmatprep.subr.mxu0 %v2257
    %3250 = vmatpush1.msra.mxu0 %v2256
    %3251 = vmatprep.subr.mxu0 %v2264
    %3252 = vmatpush1.msra.mxu0 %v2263
    %3253 = vmatprep.subr.mxu0 %v2271
    %3254 = vmatpush1.msra.mxu0 %v2270
    %3255 = vmatprep.subr.mxu0 %v2278
    %3256 = vmatpush1.msra.mxu0 %v2277
    %3257 = vmatprep.subr.mxu0 %v2285
    %3258 = vmatpush1.msra.mxu0 %v2284
    %3259 = vmatprep.subr.mxu0 %v2292
    %3260 = vmatpush1.msra.mxu0 %v2291
    %3261 = vmatprep.subr.mxu0 %v2299
    %3262 = vmatpush1.msra.mxu0 %v2298
    %3263 = vmatprep.subr.mxu0 %v2306
    %3264 = vmatpush1.msra.mxu0 %v2305
    %3265 = vmatprep.subr.mxu0 %v2313
    %3266 = vmatpush1.msra.mxu0 %v2312
    %3267 = vmatprep.subr.mxu0 %v2320
    %3268 = vmatpush1.msra.mxu0 %v2319
    %3269 = vmatprep.mubr.f32.mxu0 %v2094
    %3270 = vmatmul.mubr.f32.gmra.mrb[0].mxu0 %v2093
    %v3271 = vpop.f32.mrb[0].mxu0
    %v3272 = vadd.f32 %v2897, %v3271
    %v3273 = vpop.f32.mrb[0].mxu0
    %v3274 = vadd.f32 %v2901, %v3273
    %3275 = vdwg.mxu0
    %3276 = vmatprep.subr.mxu0 %v2327
    %3277 = vmatpush1.msra.mxu0 %v2326
    %3278 = vmatprep.subr.mxu0 %v2334
    %3279 = vmatpush1.msra.mxu0 %v2333
    %3280 = vmatprep.subr.mxu0 %v2341
    %3281 = vmatpush1.msra.mxu0 %v2340
    %3282 = vmatprep.subr.mxu0 %v2348
    %3283 = vmatpush1.msra.mxu0 %v2347
    %3284 = vmatprep.subr.mxu0 %v2355
    %3285 = vmatpush1.msra.mxu0 %v2354
    %3286 = vmatprep.subr.mxu0 %v2362
    %3287 = vmatpush1.msra.mxu0 %v2361
    %3288 = vmatprep.subr.mxu0 %v2369
    %3289 = vmatpush1.msra.mxu0 %v2368
    %3290 = vmatprep.subr.mxu0 %v2376
    %3291 = vmatpush1.msra.mxu0 %v2375
    %3292 = vmatprep.subr.mxu0 %v2383
    %3293 = vmatpush1.msra.mxu0 %v2382
    %3294 = vmatprep.subr.mxu0 %v2390
    %3295 = vmatpush1.msra.mxu0 %v2389
    %3296 = vmatprep.subr.mxu0 %v2397
    %3297 = vmatpush1.msra.mxu0 %v2396
    %3298 = vmatprep.subr.mxu0 %v2404
    %3299 = vmatpush1.msra.mxu0 %v2403
    %3300 = vmatprep.subr.mxu0 %v2411
    %3301 = vmatpush1.msra.mxu0 %v2410
    %3302 = vmatprep.subr.mxu0 %v2418
    %3303 = vmatpush1.msra.mxu0 %v2417
    %3304 = vmatprep.subr.mxu0 %v2425
    %3305 = vmatpush1.msra.mxu0 %v2424
    %3306 = vmatprep.subr.mxu0 %v2432
    %3307 = vmatpush1.msra.mxu0 %v2431
    %3308 = vmatprep.subr.mxu0 %v2439
    %3309 = vmatpush1.msra.mxu0 %v2438
    %3310 = vmatprep.subr.mxu0 %v2446
    %3311 = vmatpush1.msra.mxu0 %v2445
    %3312 = vmatprep.subr.mxu0 %v2453
    %3313 = vmatpush1.msra.mxu0 %v2452
    %3314 = vmatprep.subr.mxu0 %v2460
    %3315 = vmatpush1.msra.mxu0 %v2459
    %3316 = vmatprep.subr.mxu0 %v2467
    %3317 = vmatpush1.msra.mxu0 %v2466
    %3318 = vmatprep.subr.mxu0 %v2474
    %3319 = vmatpush1.msra.mxu0 %v2473
    %3320 = vmatprep.subr.mxu0 %v2481
    %3321 = vmatpush1.msra.mxu0 %v2480
    %3322 = vmatprep.subr.mxu0 %v2488
    %3323 = vmatpush1.msra.mxu0 %v2487
    %3324 = vmatprep.subr.mxu0 %v2495
    %3325 = vmatpush1.msra.mxu0 %v2494
    %3326 = vmatprep.subr.mxu0 %v2502
    %3327 = vmatpush1.msra.mxu0 %v2501
    %3328 = vmatprep.subr.mxu0 %v2509
    %3329 = vmatpush1.msra.mxu0 %v2508
    %3330 = vmatprep.subr.mxu0 %v2516
    %3331 = vmatpush1.msra.mxu0 %v2515
    %3332 = vmatprep.subr.mxu0 %v2523
    %3333 = vmatpush1.msra.mxu0 %v2522
    %3334 = vmatprep.subr.mxu0 %v2530
    %3335 = vmatpush1.msra.mxu0 %v2529
    %3336 = vmatprep.subr.mxu0 %v2537
    %3337 = vmatpush1.msra.mxu0 %v2536
    %3338 = vmatprep.subr.mxu0 %v2544
    %3339 = vmatpush1.msra.mxu0 %v2543
    %3340 = vmatprep.mubr.f32.mxu0 %v2096
    %3341 = vmatmul.mubr.f32.gmra.mrb[0].mxu0 %v2095
    %v3342 = vpop.f32.mrb[0].mxu0
    %v3343 = vadd.f32 %v3272, %v3342
    %v3344 = vpop.f32.mrb[0].mxu0
    %v3345 = vadd.f32 %v3274, %v3344
    %3346 = vdwg.mxu0
    %3347 = vmatprep.subr.mxu0 %v2551
    %3348 = vmatpush1.msra.mxu0 %v2550
    %3349 = vmatprep.subr.mxu0 %v2558
    %3350 = vmatpush1.msra.mxu0 %v2557
    %3351 = vmatprep.subr.mxu0 %v2565
    %3352 = vmatpush1.msra.mxu0 %v2564
    %3353 = vmatprep.subr.mxu0 %v2572
    %3354 = vmatpush1.msra.mxu0 %v2571
    %3355 = vmatprep.subr.mxu0 %v2579
    %3356 = vmatpush1.msra.mxu0 %v2578
    %3357 = vmatprep.subr.mxu0 %v2586
    %3358 = vmatpush1.msra.mxu0 %v2585
    %3359 = vmatprep.subr.mxu0 %v2593
    %3360 = vmatpush1.msra.mxu0 %v2592
    %3361 = vmatprep.subr.mxu0 %v2600
    %3362 = vmatpush1.msra.mxu0 %v2599
    %3363 = vmatprep.subr.mxu0 %v2607
    %3364 = vmatpush1.msra.mxu0 %v2606
    %3365 = vmatprep.subr.mxu0 %v2614
    %3366 = vmatpush1.msra.mxu0 %v2613
    %3367 = vmatprep.subr.mxu0 %v2621
    %3368 = vmatpush1.msra.mxu0 %v2620
    %3369 = vmatprep.subr.mxu0 %v2628
    %3370 = vmatpush1.msra.mxu0 %v2627
    %3371 = vmatprep.subr.mxu0 %v2635
    %3372 = vmatpush1.msra.mxu0 %v2634
    %3373 = vmatprep.subr.mxu0 %v2642
    %3374 = vmatpush1.msra.mxu0 %v2641
    %3375 = vmatprep.subr.mxu0 %v2649
    %3376 = vmatpush1.msra.mxu0 %v2648
    %3377 = vmatprep.subr.mxu0 %v2656
    %3378 = vmatpush1.msra.mxu0 %v2655
    %3379 = vmatprep.subr.mxu0 %v2663
    %3380 = vmatpush1.msra.mxu0 %v2662
    %3381 = vmatprep.subr.mxu0 %v2670
    %3382 = vmatpush1.msra.mxu0 %v2669
    %3383 = vmatprep.subr.mxu0 %v2677
    %3384 = vmatpush1.msra.mxu0 %v2676
    %3385 = vmatprep.subr.mxu0 %v2684
    %3386 = vmatpush1.msra.mxu0 %v2683
    %3387 = vmatprep.subr.mxu0 %v2691
    %3388 = vmatpush1.msra.mxu0 %v2690
    %3389 = vmatprep.subr.mxu0 %v2698
    %3390 = vmatpush1.msra.mxu0 %v2697
    %3391 = vmatprep.subr.mxu0 %v2705
    %3392 = vmatpush1.msra.mxu0 %v2704
    %3393 = vmatprep.subr.mxu0 %v2712
    %3394 = vmatpush1.msra.mxu0 %v2711
    %3395 = vmatprep.subr.mxu0 %v2719
    %3396 = vmatpush1.msra.mxu0 %v2718
    %3397 = vmatprep.subr.mxu0 %v2726
    %3398 = vmatpush1.msra.mxu0 %v2725
    %3399 = vmatprep.subr.mxu0 %v2733
    %3400 = vmatpush1.msra.mxu0 %v2732
    %3401 = vmatprep.subr.mxu0 %v2740
    %3402 = vmatpush1.msra.mxu0 %v2739
    %3403 = vmatprep.subr.mxu0 %v2747
    %3404 = vmatpush1.msra.mxu0 %v2746
    %3405 = vmatprep.subr.mxu0 %v2754
    %3406 = vmatpush1.msra.mxu0 %v2753
    %3407 = vmatprep.subr.mxu0 %v2761
    %3408 = vmatpush1.msra.mxu0 %v2760
    %3409 = vmatprep.subr.mxu0 %v2768
    %3410 = vmatpush1.msra.mxu0 %v2767
    %3411 = vmatprep.mubr.f32.mxu0 %v2098
    %3412 = vmatmul.mubr.f32.gmra.mrb[0].mxu0 %v2097
    %v3413 = vpop.f32.mrb[0].mxu0
    %v3414 = vadd.f32 %v3343, %v3413
    %v3415 = vpop.f32.mrb[0].mxu0
    %v3416 = vadd.f32 %v3345, %v3415
    %3417 = vdwg.mxu0
    %3418 = vmatprep.subr.mxu0 %v2775
    %3419 = vmatpush1.msra.mxu0 %v2774
    %3420 = vmatprep.subr.mxu0 %v2782
    %3421 = vmatpush1.msra.mxu0 %v2781
    %3422 = vmatprep.subr.mxu0 %v2789
    %3423 = vmatpush1.msra.mxu0 %v2788
    %3424 = vmatprep.subr.mxu0 %v2796
    %3425 = vmatpush1.msra.mxu0 %v2795
    %3426 = vmatprep.subr.mxu0 %v2803
    %3427 = vmatpush1.msra.mxu0 %v2802
    %3428 = vmatprep.subr.mxu0 %v2810
    %3429 = vmatpush1.msra.mxu0 %v2809
    %3430 = vmatprep.subr.mxu0 %v2817
    %3431 = vmatpush1.msra.mxu0 %v2816
    %3432 = vmatprep.subr.mxu0 %v2824
    %3433 = vmatpush1.msra.mxu0 %v2823
    %3434 = vmatprep.subr.mxu0 %v2831
    %3435 = vmatpush1.msra.mxu0 %v2830
    %3436 = vmatprep.subr.mxu0 %v2838
    %3437 = vmatpush1.msra.mxu0 %v2837
    %3438 = vmatprep.subr.mxu0 %v2845
    %3439 = vmatpush1.msra.mxu0 %v2844
    %3440 = vmatprep.subr.mxu0 %v2852
    %3441 = vmatpush1.msra.mxu0 %v2851
    %3442 = vmatprep.subr.mxu0 %v2859
    %3443 = vmatpush1.msra.mxu0 %v2858
    %3444 = vmatprep.subr.mxu0 %v2866
    %3445 = vmatpush1.msra.mxu0 %v2865
    %3446 = vmatprep.subr.mxu0 %v2873
    %3447 = vmatpush1.msra.mxu0 %v2872
    %3448 = vmatprep.subr.mxu0 %v2880
    %3449 = vmatpush1.msra.mxu0 %v2879
    %3450 = vmatprep.subr.mxu0 0.0
    %3451 = vmatpush1.msra.mxu0 0.0
    %3452 = vmatprep.subr.mxu0 0.0
    %3453 = vmatpush1.msra.mxu0 0.0
    %3454 = vmatprep.subr.mxu0 0.0
    %3455 = vmatpush1.msra.mxu0 0.0
    %3456 = vmatprep.subr.mxu0 0.0
    %3457 = vmatpush1.msra.mxu0 0.0
    %3458 = vmatprep.subr.mxu0 0.0
    %3459 = vmatpush1.msra.mxu0 0.0
    %3460 = vmatprep.subr.mxu0 0.0
    %3461 = vmatpush1.msra.mxu0 0.0
    %3462 = vmatprep.subr.mxu0 0.0
    %3463 = vmatpush1.msra.mxu0 0.0
    %3464 = vmatprep.subr.mxu0 0.0
    %3465 = vmatpush1.msra.mxu0 0.0
    %3466 = vmatprep.subr.mxu0 0.0
    %3467 = vmatpush1.msra.mxu0 0.0
    %3468 = vmatprep.subr.mxu0 0.0
    %3469 = vmatpush1.msra.mxu0 0.0
    %3470 = vmatprep.subr.mxu0 0.0
    %3471 = vmatpush1.msra.mxu0 0.0
    %3472 = vmatprep.subr.mxu0 0.0
    %3473 = vmatpush1.msra.mxu0 0.0
    %3474 = vmatprep.subr.mxu0 0.0
    %3475 = vmatpush1.msra.mxu0 0.0
    %3476 = vmatprep.subr.mxu0 0.0
    %3477 = vmatpush1.msra.mxu0 0.0
    %3478 = vmatprep.subr.mxu0 0.0
    %3479 = vmatpush1.msra.mxu0 0.0
    %3480 = vmatprep.subr.mxu0 0.0
    %3481 = vmatpush1.msra.mxu0 0.0
    %3482 = vmatprep.mubr.f32.mxu0 0.0
    %3483 = vmatmul.mubr.f32.gmra.mrb[0].mxu0 %v2099
    %v3484 = vpop.f32.mrb[0].mxu0
    %v3485 = vadd.f32 %v3414, %v3484
    %v3486 = vpop.f32.mrb[0].mxu0
    %v3487 = vadd.f32 %v3416, %v3486
    %3488 = vdwg.mxu0
    %3489 = vmatprep.subr.mxu0 %v2105
    %3490 = vmatpush1.msra.mxu0 %v2104
    %3491 = vmatprep.subr.mxu0 %v2112
    %3492 = vmatpush1.msra.mxu0 %v2111
    %3493 = vmatprep.subr.mxu0 %v2119
    %3494 = vmatpush1.msra.mxu0 %v2118
    %3495 = vmatprep.subr.mxu0 %v2126
    %3496 = vmatpush1.msra.mxu0 %v2125
    %3497 = vmatprep.subr.mxu0 %v2133
    %3498 = vmatpush1.msra.mxu0 %v2132
    %3499 = vmatprep.subr.mxu0 %v2140
    %3500 = vmatpush1.msra.mxu0 %v2139
    %3501 = vmatprep.subr.mxu0 %v2147
    %3502 = vmatpush1.msra.mxu0 %v2146
    %3503 = vmatprep.subr.mxu0 %v2154
    %3504 = vmatpush1.msra.mxu0 %v2153
    %3505 = vmatprep.subr.mxu0 %v2161
    %3506 = vmatpush1.msra.mxu0 %v2160
    %3507 = vmatprep.subr.mxu0 %v2168
    %3508 = vmatpush1.msra.mxu0 %v2167
    %3509 = vmatprep.subr.mxu0 %v2175
    %3510 = vmatpush1.msra.mxu0 %v2174
    %3511 = vmatprep.subr.mxu0 %v2182
    %3512 = vmatpush1.msra.mxu0 %v2181
    %3513 = vmatprep.subr.mxu0 %v2189
    %3514 = vmatpush1.msra.mxu0 %v2188
    %3515 = vmatprep.subr.mxu0 %v2196
    %3516 = vmatpush1.msra.mxu0 %v2195
    %3517 = vmatprep.subr.mxu0 %v2203
    %3518 = vmatpush1.msra.mxu0 %v2202
    %3519 = vmatprep.subr.mxu0 %v2210
    %3520 = vmatpush1.msra.mxu0 %v2209
    %3521 = vmatprep.subr.mxu0 %v2217
    %3522 = vmatpush1.msra.mxu0 %v2216
    %3523 = vmatprep.subr.mxu0 %v2224
    %3524 = vmatpush1.msra.mxu0 %v2223
    %3525 = vmatprep.subr.mxu0 %v2231
    %3526 = vmatpush1.msra.mxu0 %v2230
    %3527 = vmatprep.subr.mxu0 %v2238
    %3528 = vmatpush1.msra.mxu0 %v2237
    %3529 = vmatprep.subr.mxu0 %v2245
    %3530 = vmatpush1.msra.mxu0 %v2244
    %3531 = vmatprep.subr.mxu0 %v2252
    %3532 = vmatpush1.msra.mxu0 %v2251
    %3533 = vmatprep.subr.mxu0 %v2259
    %3534 = vmatpush1.msra.mxu0 %v2258
    %3535 = vmatprep.subr.mxu0 %v2266
    %3536 = vmatpush1.msra.mxu0 %v2265
    %3537 = vmatprep.subr.mxu0 %v2273
    %3538 = vmatpush1.msra.mxu0 %v2272
    %3539 = vmatprep.subr.mxu0 %v2280
    %3540 = vmatpush1.msra.mxu0 %v2279
    %3541 = vmatprep.subr.mxu0 %v2287
    %3542 = vmatpush1.msra.mxu0 %v2286
    %3543 = vmatprep.subr.mxu0 %v2294
    %3544 = vmatpush1.msra.mxu0 %v2293
    %3545 = vmatprep.subr.mxu0 %v2301
    %3546 = vmatpush1.msra.mxu0 %v2300
    %3547 = vmatprep.subr.mxu0 %v2308
    %3548 = vmatpush1.msra.mxu0 %v2307
    %3549 = vmatprep.subr.mxu0 %v2315
    %3550 = vmatpush1.msra.mxu0 %v2314
    %3551 = vmatprep.subr.mxu0 %v2322
    %3552 = vmatpush1.msra.mxu0 %v2321
    %3553 = vmatprep.mubr.f32.mxu0 %v2094
    %3554 = vmatmul.mubr.f32.gmra.mrb[0].mxu0 %v2093
    %v3555 = vpop.f32.mrb[0].mxu0
    %v3556 = vadd.f32 %v2905, %v3555
    %v3557 = vpop.f32.mrb[0].mxu0
    %v3558 = vadd.f32 %v2909, %v3557
    %3559 = vdwg.mxu0
    %3560 = vmatprep.subr.mxu0 %v2329
    %3561 = vmatpush1.msra.mxu0 %v2328
    %3562 = vmatprep.subr.mxu0 %v2336
    %3563 = vmatpush1.msra.mxu0 %v2335
    %3564 = vmatprep.subr.mxu0 %v2343
    %3565 = vmatpush1.msra.mxu0 %v2342
    %3566 = vmatprep.subr.mxu0 %v2350
    %3567 = vmatpush1.msra.mxu0 %v2349
    %3568 = vmatprep.subr.mxu0 %v2357
    %3569 = vmatpush1.msra.mxu0 %v2356
    %3570 = vmatprep.subr.mxu0 %v2364
    %3571 = vmatpush1.msra.mxu0 %v2363
    %3572 = vmatprep.subr.mxu0 %v2371
    %3573 = vmatpush1.msra.mxu0 %v2370
    %3574 = vmatprep.subr.mxu0 %v2378
    %3575 = vmatpush1.msra.mxu0 %v2377
    %3576 = vmatprep.subr.mxu0 %v2385
    %3577 = vmatpush1.msra.mxu0 %v2384
    %3578 = vmatprep.subr.mxu0 %v2392
    %3579 = vmatpush1.msra.mxu0 %v2391
    %3580 = vmatprep.subr.mxu0 %v2399
    %3581 = vmatpush1.msra.mxu0 %v2398
    %3582 = vmatprep.subr.mxu0 %v2406
    %3583 = vmatpush1.msra.mxu0 %v2405
    %3584 = vmatprep.subr.mxu0 %v2413
    %3585 = vmatpush1.msra.mxu0 %v2412
    %3586 = vmatprep.subr.mxu0 %v2420
    %3587 = vmatpush1.msra.mxu0 %v2419
    %3588 = vmatprep.subr.mxu0 %v2427
    %3589 = vmatpush1.msra.mxu0 %v2426
    %3590 = vmatprep.subr.mxu0 %v2434
    %3591 = vmatpush1.msra.mxu0 %v2433
    %3592 = vmatprep.subr.mxu0 %v2441
    %3593 = vmatpush1.msra.mxu0 %v2440
    %3594 = vmatprep.subr.mxu0 %v2448
    %3595 = vmatpush1.msra.mxu0 %v2447
    %3596 = vmatprep.subr.mxu0 %v2455
    %3597 = vmatpush1.msra.mxu0 %v2454
    %3598 = vmatprep.subr.mxu0 %v2462
    %3599 = vmatpush1.msra.mxu0 %v2461
    %3600 = vmatprep.subr.mxu0 %v2469
    %3601 = vmatpush1.msra.mxu0 %v2468
    %3602 = vmatprep.subr.mxu0 %v2476
    %3603 = vmatpush1.msra.mxu0 %v2475
    %3604 = vmatprep.subr.mxu0 %v2483
    %3605 = vmatpush1.msra.mxu0 %v2482
    %3606 = vmatprep.subr.mxu0 %v2490
    %3607 = vmatpush1.msra.mxu0 %v2489
    %3608 = vmatprep.subr.mxu0 %v2497
    %3609 = vmatpush1.msra.mxu0 %v2496
    %3610 = vmatprep.subr.mxu0 %v2504
    %3611 = vmatpush1.msra.mxu0 %v2503
    %3612 = vmatprep.subr.mxu0 %v2511
    %3613 = vmatpush1.msra.mxu0 %v2510
    %3614 = vmatprep.subr.mxu0 %v2518
    %3615 = vmatpush1.msra.mxu0 %v2517
    %3616 = vmatprep.subr.mxu0 %v2525
    %3617 = vmatpush1.msra.mxu0 %v2524
    %3618 = vmatprep.subr.mxu0 %v2532
    %3619 = vmatpush1.msra.mxu0 %v2531
    %3620 = vmatprep.subr.mxu0 %v2539
    %3621 = vmatpush1.msra.mxu0 %v2538
    %3622 = vmatprep.subr.mxu0 %v2546
    %3623 = vmatpush1.msra.mxu0 %v2545
    %3624 = vmatprep.mubr.f32.mxu0 %v2096
    %3625 = vmatmul.mubr.f32.gmra.mrb[0].mxu0 %v2095
    %v3626 = vpop.f32.mrb[0].mxu0
    %v3627 = vadd.f32 %v3556, %v3626
    %v3628 = vpop.f32.mrb[0].mxu0
    %v3629 = vadd.f32 %v3558, %v3628
    %3630 = vdwg.mxu0
    %3631 = vmatprep.subr.mxu0 %v2553
    %3632 = vmatpush1.msra.mxu0 %v2552
    %3633 = vmatprep.subr.mxu0 %v2560
    %3634 = vmatpush1.msra.mxu0 %v2559
    %3635 = vmatprep.subr.mxu0 %v2567
    %3636 = vmatpush1.msra.mxu0 %v2566
    %3637 = vmatprep.subr.mxu0 %v2574
    %3638 = vmatpush1.msra.mxu0 %v2573
    %3639 = vmatprep.subr.mxu0 %v2581
    %3640 = vmatpush1.msra.mxu0 %v2580
    %3641 = vmatprep.subr.mxu0 %v2588
    %3642 = vmatpush1.msra.mxu0 %v2587
    %3643 = vmatprep.subr.mxu0 %v2595
    %3644 = vmatpush1.msra.mxu0 %v2594
    %3645 = vmatprep.subr.mxu0 %v2602
    %3646 = vmatpush1.msra.mxu0 %v2601
    %3647 = vmatprep.subr.mxu0 %v2609
    %3648 = vmatpush1.msra.mxu0 %v2608
    %3649 = vmatprep.subr.mxu0 %v2616
    %3650 = vmatpush1.msra.mxu0 %v2615
    %3651 = vmatprep.subr.mxu0 %v2623
    %3652 = vmatpush1.msra.mxu0 %v2622
    %3653 = vmatprep.subr.mxu0 %v2630
    %3654 = vmatpush1.msra.mxu0 %v2629
    %3655 = vmatprep.subr.mxu0 %v2637
    %3656 = vmatpush1.msra.mxu0 %v2636
    %3657 = vmatprep.subr.mxu0 %v2644
    %3658 = vmatpush1.msra.mxu0 %v2643
    %3659 = vmatprep.subr.mxu0 %v2651
    %3660 = vmatpush1.msra.mxu0 %v2650
    %3661 = vmatprep.subr.mxu0 %v2658
    %3662 = vmatpush1.msra.mxu0 %v2657
    %3663 = vmatprep.subr.mxu0 %v2665
    %3664 = vmatpush1.msra.mxu0 %v2664
    %3665 = vmatprep.subr.mxu0 %v2672
    %3666 = vmatpush1.msra.mxu0 %v2671
    %3667 = vmatprep.subr.mxu0 %v2679
    %3668 = vmatpush1.msra.mxu0 %v2678
    %3669 = vmatprep.subr.mxu0 %v2686
    %3670 = vmatpush1.msra.mxu0 %v2685
    %3671 = vmatprep.subr.mxu0 %v2693
    %3672 = vmatpush1.msra.mxu0 %v2692
    %3673 = vmatprep.subr.mxu0 %v2700
    %3674 = vmatpush1.msra.mxu0 %v2699
    %3675 = vmatprep.subr.mxu0 %v2707
    %3676 = vmatpush1.msra.mxu0 %v2706
    %3677 = vmatprep.subr.mxu0 %v2714
    %3678 = vmatpush1.msra.mxu0 %v2713
    %3679 = vmatprep.subr.mxu0 %v2721
    %3680 = vmatpush1.msra.mxu0 %v2720
    %3681 = vmatprep.subr.mxu0 %v2728
    %3682 = vmatpush1.msra.mxu0 %v2727
    %3683 = vmatprep.subr.mxu0 %v2735
    %3684 = vmatpush1.msra.mxu0 %v2734
    %3685 = vmatprep.subr.mxu0 %v2742
    %3686 = vmatpush1.msra.mxu0 %v2741
    %3687 = vmatprep.subr.mxu0 %v2749
    %3688 = vmatpush1.msra.mxu0 %v2748
    %3689 = vmatprep.subr.mxu0 %v2756
    %3690 = vmatpush1.msra.mxu0 %v2755
    %3691 = vmatprep.subr.mxu0 %v2763
    %3692 = vmatpush1.msra.mxu0 %v2762
    %3693 = vmatprep.subr.mxu0 %v2770
    %3694 = vmatpush1.msra.mxu0 %v2769
    %3695 = vmatprep.mubr.f32.mxu0 %v2098
    %3696 = vmatmul.mubr.f32.gmra.mrb[0].mxu0 %v2097
    %v3697 = vpop.f32.mrb[0].mxu0
    %v3698 = vadd.f32 %v3627, %v3697
    %v3699 = vpop.f32.mrb[0].mxu0
    %v3700 = vadd.f32 %v3629, %v3699
    %3701 = vdwg.mxu0
    %3702 = vmatprep.subr.mxu0 %v2777
    %3703 = vmatpush1.msra.mxu0 %v2776
    %3704 = vmatprep.subr.mxu0 %v2784
    %3705 = vmatpush1.msra.mxu0 %v2783
    %3706 = vmatprep.subr.mxu0 %v2791
    %3707 = vmatpush1.msra.mxu0 %v2790
    %3708 = vmatprep.subr.mxu0 %v2798
    %3709 = vmatpush1.msra.mxu0 %v2797
    %3710 = vmatprep.subr.mxu0 %v2805
    %3711 = vmatpush1.msra.mxu0 %v2804
    %3712 = vmatprep.subr.mxu0 %v2812
    %3713 = vmatpush1.msra.mxu0 %v2811
    %3714 = vmatprep.subr.mxu0 %v2819
    %3715 = vmatpush1.msra.mxu0 %v2818
    %3716 = vmatprep.subr.mxu0 %v2826
    %3717 = vmatpush1.msra.mxu0 %v2825
    %3718 = vmatprep.subr.mxu0 %v2833
    %3719 = vmatpush1.msra.mxu0 %v2832
    %3720 = vmatprep.subr.mxu0 %v2840
    %3721 = vmatpush1.msra.mxu0 %v2839
    %3722 = vmatprep.subr.mxu0 %v2847
    %3723 = vmatpush1.msra.mxu0 %v2846
    %3724 = vmatprep.subr.mxu0 %v2854
    %3725 = vmatpush1.msra.mxu0 %v2853
    %3726 = vmatprep.subr.mxu0 %v2861
    %3727 = vmatpush1.msra.mxu0 %v2860
    %3728 = vmatprep.subr.mxu0 %v2868
    %3729 = vmatpush1.msra.mxu0 %v2867
    %3730 = vmatprep.subr.mxu0 %v2875
    %3731 = vmatpush1.msra.mxu0 %v2874
    %3732 = vmatprep.subr.mxu0 %v2882
    %3733 = vmatpush1.msra.mxu0 %v2881
    %3734 = vmatprep.subr.mxu0 0.0
    %3735 = vmatpush1.msra.mxu0 0.0
    %3736 = vmatprep.subr.mxu0 0.0
    %3737 = vmatpush1.msra.mxu0 0.0
    %3738 = vmatprep.subr.mxu0 0.0
    %3739 = vmatpush1.msra.mxu0 0.0
    %3740 = vmatprep.subr.mxu0 0.0
    %3741 = vmatpush1.msra.mxu0 0.0
    %3742 = vmatprep.subr.mxu0 0.0
    %3743 = vmatpush1.msra.mxu0 0.0
    %3744 = vmatprep.subr.mxu0 0.0
    %3745 = vmatpush1.msra.mxu0 0.0
    %3746 = vmatprep.subr.mxu0 0.0
    %3747 = vmatpush1.msra.mxu0 0.0
    %3748 = vmatprep.subr.mxu0 0.0
    %3749 = vmatpush1.msra.mxu0 0.0
    %3750 = vmatprep.subr.mxu0 0.0
    %3751 = vmatpush1.msra.mxu0 0.0
    %3752 = vmatprep.subr.mxu0 0.0
    %3753 = vmatpush1.msra.mxu0 0.0
    %3754 = vmatprep.subr.mxu0 0.0
    %3755 = vmatpush1.msra.mxu0 0.0
    %3756 = vmatprep.subr.mxu0 0.0
    %3757 = vmatpush1.msra.mxu0 0.0
    %3758 = vmatprep.subr.mxu0 0.0
    %3759 = vmatpush1.msra.mxu0 0.0
    %3760 = vmatprep.subr.mxu0 0.0
    %3761 = vmatpush1.msra.mxu0 0.0
    %3762 = vmatprep.subr.mxu0 0.0
    %3763 = vmatpush1.msra.mxu0 0.0
    %3764 = vmatprep.subr.mxu0 0.0
    %3765 = vmatpush1.msra.mxu0 0.0
    %3766 = vmatprep.mubr.f32.mxu0 0.0
    %3767 = vmatmul.mubr.f32.gmra.mrb[0].mxu0 %v2099
    %v3768 = vpop.f32.mrb[0].mxu0
    %v3769 = vadd.f32 %v3698, %v3768
    %v3770 = vpop.f32.mrb[0].mxu0
    %v3771 = vadd.f32 %v3700, %v3770
    %3772 = vdwg.mxu0
    %3773 = vmatprep.subr.mxu0 0.0
    %3774 = vmatpush1.msra.mxu0 %v2106
    %3775 = vmatprep.subr.mxu0 0.0
    %3776 = vmatpush1.msra.mxu0 %v2113
    %3777 = vmatprep.subr.mxu0 0.0
    %3778 = vmatpush1.msra.mxu0 %v2120
    %3779 = vmatprep.subr.mxu0 0.0
    %3780 = vmatpush1.msra.mxu0 %v2127
    %3781 = vmatprep.subr.mxu0 0.0
    %3782 = vmatpush1.msra.mxu0 %v2134
    %3783 = vmatprep.subr.mxu0 0.0
    %3784 = vmatpush1.msra.mxu0 %v2141
    %3785 = vmatprep.subr.mxu0 0.0
    %3786 = vmatpush1.msra.mxu0 %v2148
    %3787 = vmatprep.subr.mxu0 0.0
    %3788 = vmatpush1.msra.mxu0 %v2155
    %3789 = vmatprep.subr.mxu0 0.0
    %3790 = vmatpush1.msra.mxu0 %v2162
    %3791 = vmatprep.subr.mxu0 0.0
    %3792 = vmatpush1.msra.mxu0 %v2169
    %3793 = vmatprep.subr.mxu0 0.0
    %3794 = vmatpush1.msra.mxu0 %v2176
    %3795 = vmatprep.subr.mxu0 0.0
    %3796 = vmatpush1.msra.mxu0 %v2183
    %3797 = vmatprep.subr.mxu0 0.0
    %3798 = vmatpush1.msra.mxu0 %v2190
    %3799 = vmatprep.subr.mxu0 0.0
    %3800 = vmatpush1.msra.mxu0 %v2197
    %3801 = vmatprep.subr.mxu0 0.0
    %3802 = vmatpush1.msra.mxu0 %v2204
    %3803 = vmatprep.subr.mxu0 0.0
    %3804 = vmatpush1.msra.mxu0 %v2211
    %3805 = vmatprep.subr.mxu0 0.0
    %3806 = vmatpush1.msra.mxu0 %v2218
    %3807 = vmatprep.subr.mxu0 0.0
    %3808 = vmatpush1.msra.mxu0 %v2225
    %3809 = vmatprep.subr.mxu0 0.0
    %3810 = vmatpush1.msra.mxu0 %v2232
    %3811 = vmatprep.subr.mxu0 0.0
    %3812 = vmatpush1.msra.mxu0 %v2239
    %3813 = vmatprep.subr.mxu0 0.0
    %3814 = vmatpush1.msra.mxu0 %v2246
    %3815 = vmatprep.subr.mxu0 0.0
    %3816 = vmatpush1.msra.mxu0 %v2253
    %3817 = vmatprep.subr.mxu0 0.0
    %3818 = vmatpush1.msra.mxu0 %v2260
    %3819 = vmatprep.subr.mxu0 0.0
    %3820 = vmatpush1.msra.mxu0 %v2267
    %3821 = vmatprep.subr.mxu0 0.0
    %3822 = vmatpush1.msra.mxu0 %v2274
    %3823 = vmatprep.subr.mxu0 0.0
    %3824 = vmatpush1.msra.mxu0 %v2281
    %3825 = vmatprep.subr.mxu0 0.0
    %3826 = vmatpush1.msra.mxu0 %v2288
    %3827 = vmatprep.subr.mxu0 0.0
    %3828 = vmatpush1.msra.mxu0 %v2295
    %3829 = vmatprep.subr.mxu0 0.0
    %3830 = vmatpush1.msra.mxu0 %v2302
    %3831 = vmatprep.subr.mxu0 0.0
    %3832 = vmatpush1.msra.mxu0 %v2309
    %3833 = vmatprep.subr.mxu0 0.0
    %3834 = vmatpush1.msra.mxu0 %v2316
    %3835 = vmatprep.subr.mxu0 0.0
    %3836 = vmatpush1.msra.mxu0 %v2323
    %3837 = vmatprep.mubr.f32.mxu0 %v2094
    %3838 = vmatmul.mubr.f32.gmra.mrb[0].mxu0 %v2093
    %v3839 = vpop.f32.mrb[0].mxu0
    %v3840 = vadd.f32 %v2913, %v3839
    %v3841 = vpop.f32.mrb[0].mxu0
    %3842 = vdwg.mxu0
    %3843 = vmatprep.subr.mxu0 0.0
    %3844 = vmatpush1.msra.mxu0 %v2330
    %3845 = vmatprep.subr.mxu0 0.0
    %3846 = vmatpush1.msra.mxu0 %v2337
    %3847 = vmatprep.subr.mxu0 0.0
    %3848 = vmatpush1.msra.mxu0 %v2344
    %3849 = vmatprep.subr.mxu0 0.0
    %3850 = vmatpush1.msra.mxu0 %v2351
    %3851 = vmatprep.subr.mxu0 0.0
    %3852 = vmatpush1.msra.mxu0 %v2358
    %3853 = vmatprep.subr.mxu0 0.0
    %3854 = vmatpush1.msra.mxu0 %v2365
    %3855 = vmatprep.subr.mxu0 0.0
    %3856 = vmatpush1.msra.mxu0 %v2372
    %3857 = vmatprep.subr.mxu0 0.0
    %3858 = vmatpush1.msra.mxu0 %v2379
    %3859 = vmatprep.subr.mxu0 0.0
    %3860 = vmatpush1.msra.mxu0 %v2386
    %3861 = vmatprep.subr.mxu0 0.0
    %3862 = vmatpush1.msra.mxu0 %v2393
    %3863 = vmatprep.subr.mxu0 0.0
    %3864 = vmatpush1.msra.mxu0 %v2400
    %3865 = vmatprep.subr.mxu0 0.0
    %3866 = vmatpush1.msra.mxu0 %v2407
    %3867 = vmatprep.subr.mxu0 0.0
    %3868 = vmatpush1.msra.mxu0 %v2414
    %3869 = vmatprep.subr.mxu0 0.0
    %3870 = vmatpush1.msra.mxu0 %v2421
    %3871 = vmatprep.subr.mxu0 0.0
    %3872 = vmatpush1.msra.mxu0 %v2428
    %3873 = vmatprep.subr.mxu0 0.0
    %3874 = vmatpush1.msra.mxu0 %v2435
    %3875 = vmatprep.subr.mxu0 0.0
    %3876 = vmatpush1.msra.mxu0 %v2442
    %3877 = vmatprep.subr.mxu0 0.0
    %3878 = vmatpush1.msra.mxu0 %v2449
    %3879 = vmatprep.subr.mxu0 0.0
    %3880 = vmatpush1.msra.mxu0 %v2456
    %3881 = vmatprep.subr.mxu0 0.0
    %3882 = vmatpush1.msra.mxu0 %v2463
    %3883 = vmatprep.subr.mxu0 0.0
    %3884 = vmatpush1.msra.mxu0 %v2470
    %3885 = vmatprep.subr.mxu0 0.0
    %3886 = vmatpush1.msra.mxu0 %v2477
    %3887 = vmatprep.subr.mxu0 0.0
    %3888 = vmatpush1.msra.mxu0 %v2484
    %3889 = vmatprep.subr.mxu0 0.0
    %3890 = vmatpush1.msra.mxu0 %v2491
    %3891 = vmatprep.subr.mxu0 0.0
    %3892 = vmatpush1.msra.mxu0 %v2498
    %3893 = vmatprep.subr.mxu0 0.0
    %3894 = vmatpush1.msra.mxu0 %v2505
    %3895 = vmatprep.subr.mxu0 0.0
    %3896 = vmatpush1.msra.mxu0 %v2512
    %3897 = vmatprep.subr.mxu0 0.0
    %3898 = vmatpush1.msra.mxu0 %v2519
    %3899 = vmatprep.subr.mxu0 0.0
    %3900 = vmatpush1.msra.mxu0 %v2526
    %3901 = vmatprep.subr.mxu0 0.0
    %3902 = vmatpush1.msra.mxu0 %v2533
    %3903 = vmatprep.subr.mxu0 0.0
    %3904 = vmatpush1.msra.mxu0 %v2540
    %3905 = vmatprep.subr.mxu0 0.0
    %3906 = vmatpush1.msra.mxu0 %v2547
    %3907 = vmatprep.mubr.f32.mxu0 %v2096
    %3908 = vmatmul.mubr.f32.gmra.mrb[0].mxu0 %v2095
    %v3909 = vpop.f32.mrb[0].mxu0
    %v3910 = vadd.f32 %v3840, %v3909
    %v3911 = vpop.f32.mrb[0].mxu0
    %3912 = vdwg.mxu0
    %3913 = vmatprep.subr.mxu0 0.0
    %3914 = vmatpush1.msra.mxu0 %v2554
    %3915 = vmatprep.subr.mxu0 0.0
    %3916 = vmatpush1.msra.mxu0 %v2561
    %3917 = vmatprep.subr.mxu0 0.0
    %3918 = vmatpush1.msra.mxu0 %v2568
    %3919 = vmatprep.subr.mxu0 0.0
    %3920 = vmatpush1.msra.mxu0 %v2575
    %3921 = vmatprep.subr.mxu0 0.0
    %3922 = vmatpush1.msra.mxu0 %v2582
    %3923 = vmatprep.subr.mxu0 0.0
    %3924 = vmatpush1.msra.mxu0 %v2589
    %3925 = vmatprep.subr.mxu0 0.0
    %3926 = vmatpush1.msra.mxu0 %v2596
    %3927 = vmatprep.subr.mxu0 0.0
    %3928 = vmatpush1.msra.mxu0 %v2603
    %3929 = vmatprep.subr.mxu0 0.0
    %3930 = vmatpush1.msra.mxu0 %v2610
    %3931 = vmatprep.subr.mxu0 0.0
    %3932 = vmatpush1.msra.mxu0 %v2617
    %3933 = vmatprep.subr.mxu0 0.0
    %3934 = vmatpush1.msra.mxu0 %v2624
    %3935 = vmatprep.subr.mxu0 0.0
    %3936 = vmatpush1.msra.mxu0 %v2631
    %3937 = vmatprep.subr.mxu0 0.0
    %3938 = vmatpush1.msra.mxu0 %v2638
    %3939 = vmatprep.subr.mxu0 0.0
    %3940 = vmatpush1.msra.mxu0 %v2645
    %3941 = vmatprep.subr.mxu0 0.0
    %3942 = vmatpush1.msra.mxu0 %v2652
    %3943 = vmatprep.subr.mxu0 0.0
    %3944 = vmatpush1.msra.mxu0 %v2659
    %3945 = vmatprep.subr.mxu0 0.0
    %3946 = vmatpush1.msra.mxu0 %v2666
    %3947 = vmatprep.subr.mxu0 0.0
    %3948 = vmatpush1.msra.mxu0 %v2673
    %3949 = vmatprep.subr.mxu0 0.0
    %3950 = vmatpush1.msra.mxu0 %v2680
    %3951 = vmatprep.subr.mxu0 0.0
    %3952 = vmatpush1.msra.mxu0 %v2687
    %3953 = vmatprep.subr.mxu0 0.0
    %3954 = vmatpush1.msra.mxu0 %v2694
    %3955 = vmatprep.subr.mxu0 0.0
    %3956 = vmatpush1.msra.mxu0 %v2701
    %3957 = vmatprep.subr.mxu0 0.0
    %3958 = vmatpush1.msra.mxu0 %v2708
    %3959 = vmatprep.subr.mxu0 0.0
    %3960 = vmatpush1.msra.mxu0 %v2715
    %3961 = vmatprep.subr.mxu0 0.0
    %3962 = vmatpush1.msra.mxu0 %v2722
    %3963 = vmatprep.subr.mxu0 0.0
    %3964 = vmatpush1.msra.mxu0 %v2729
    %3965 = vmatprep.subr.mxu0 0.0
    %3966 = vmatpush1.msra.mxu0 %v2736
    %3967 = vmatprep.subr.mxu0 0.0
    %3968 = vmatpush1.msra.mxu0 %v2743
    %3969 = vmatprep.subr.mxu0 0.0
    %3970 = vmatpush1.msra.mxu0 %v2750
    %3971 = vmatprep.subr.mxu0 0.0
    %3972 = vmatpush1.msra.mxu0 %v2757
    %3973 = vmatprep.subr.mxu0 0.0
    %3974 = vmatpush1.msra.mxu0 %v2764
    %3975 = vmatprep.subr.mxu0 0.0
    %3976 = vmatpush1.msra.mxu0 %v2771
    %3977 = vmatprep.mubr.f32.mxu0 %v2098
    %3978 = vmatmul.mubr.f32.gmra.mrb[0].mxu0 %v2097
    %v3979 = vpop.f32.mrb[0].mxu0
    %v3980 = vadd.f32 %v3910, %v3979
    %v3981 = vpop.f32.mrb[0].mxu0
    %3982 = vdwg.mxu0
    %3983 = vmatprep.subr.mxu0 0.0
    %3984 = vmatpush1.msra.mxu0 %v2778
    %3985 = vmatprep.subr.mxu0 0.0
    %3986 = vmatpush1.msra.mxu0 %v2785
    %3987 = vmatprep.subr.mxu0 0.0
    %3988 = vmatpush1.msra.mxu0 %v2792
    %3989 = vmatprep.subr.mxu0 0.0
    %3990 = vmatpush1.msra.mxu0 %v2799
    %3991 = vmatprep.subr.mxu0 0.0
    %3992 = vmatpush1.msra.mxu0 %v2806
    %3993 = vmatprep.subr.mxu0 0.0
    %3994 = vmatpush1.msra.mxu0 %v2813
    %3995 = vmatprep.subr.mxu0 0.0
    %3996 = vmatpush1.msra.mxu0 %v2820
    %3997 = vmatprep.subr.mxu0 0.0
    %3998 = vmatpush1.msra.mxu0 %v2827
    %3999 = vmatprep.subr.mxu0 0.0
    %4000 = vmatpush1.msra.mxu0 %v2834
    %4001 = vmatprep.subr.mxu0 0.0
    %4002 = vmatpush1.msra.mxu0 %v2841
    %4003 = vmatprep.subr.mxu0 0.0
    %4004 = vmatpush1.msra.mxu0 %v2848
    %4005 = vmatprep.subr.mxu0 0.0
    %4006 = vmatpush1.msra.mxu0 %v2855
    %4007 = vmatprep.subr.mxu0 0.0
    %4008 = vmatpush1.msra.mxu0 %v2862
    %4009 = vmatprep.subr.mxu0 0.0
    %4010 = vmatpush1.msra.mxu0 %v2869
    %4011 = vmatprep.subr.mxu0 0.0
    %4012 = vmatpush1.msra.mxu0 %v2876
    %4013 = vmatprep.subr.mxu0 0.0
    %4014 = vmatpush1.msra.mxu0 %v2883
    %4015 = vmatprep.subr.mxu0 0.0
    %4016 = vmatpush1.msra.mxu0 0.0
    %4017 = vmatprep.subr.mxu0 0.0
    %4018 = vmatpush1.msra.mxu0 0.0
    %4019 = vmatprep.subr.mxu0 0.0
    %4020 = vmatpush1.msra.mxu0 0.0
    %4021 = vmatprep.subr.mxu0 0.0
    %4022 = vmatpush1.msra.mxu0 0.0
    %4023 = vmatprep.subr.mxu0 0.0
    %4024 = vmatpush1.msra.mxu0 0.0
    %4025 = vmatprep.subr.mxu0 0.0
    %4026 = vmatpush1.msra.mxu0 0.0
    %4027 = vmatprep.subr.mxu0 0.0
    %4028 = vmatpush1.msra.mxu0 0.0
    %4029 = vmatprep.subr.mxu0 0.0
    %4030 = vmatpush1.msra.mxu0 0.0
    %4031 = vmatprep.subr.mxu0 0.0
    %4032 = vmatpush1.msra.mxu0 0.0
    %4033 = vmatprep.subr.mxu0 0.0
    %4034 = vmatpush1.msra.mxu0 0.0
    %4035 = vmatprep.subr.mxu0 0.0
    %4036 = vmatpush1.msra.mxu0 0.0
    %4037 = vmatprep.subr.mxu0 0.0
    %4038 = vmatpush1.msra.mxu0 0.0
    %4039 = vmatprep.subr.mxu0 0.0
    %4040 = vmatpush1.msra.mxu0 0.0
    %4041 = vmatprep.subr.mxu0 0.0
    %4042 = vmatpush1.msra.mxu0 0.0
    %4043 = vmatprep.subr.mxu0 0.0
    %4044 = vmatpush1.msra.mxu0 0.0
    %4045 = vmatprep.subr.mxu0 0.0
    %4046 = vmatpush1.msra.mxu0 0.0
    %4047 = vmatprep.mubr.f32.mxu0 0.0
    %4048 = vmatmul.mubr.f32.gmra.mrb[0].mxu0 %v2099
    %v4049 = vpop.f32.mrb[0].mxu0
    %v4050 = vadd.f32 %v3980, %v4049
    %v4051 = vpop.f32.mrb[0].mxu0
    %4052 = vdwg.mxu0
    %v4053 = vmax.f32 %v3201, 0.0
    %v4054 = vmax.f32 %v3203, 0.0
    %v4055 = vmax.f32 %v3485, 0.0
    %v4056 = vmax.f32 %v3487, 0.0
    %v4057 = vmax.f32 %v3769, 0.0
    %v4058 = vmax.f32 %v3771, 0.0
    %v4059 = vmax.f32 %v4050, 0.0
    %v4060 = vld [vmem:[#allocation9] sm:$0xff]
    %v4061 = vld [vmem:[#allocation9 + $0x8] sm:$0xff]
    %v4062 = vld [vmem:[#allocation9 + $0x10] sm:$0xff]
    %v4063 = vld [vmem:[#allocation9 + $0x18] sm:$0xff]
    %v4064 = vld [vmem:[#allocation9 + $0x20] sm:$0xff]
    %v4065 = vld [vmem:[#allocation9 + $0x28] sm:$0xff]
    %v4066 = vld [vmem:[#allocation9 + $0x30] sm:$0xff]
    %v4067 = vld [vmem:[#allocation9 + $0x38] sm:$0xff]
    %v4068 = vld [vmem:[#allocation9 + $0x40] sm:$0xff]
    %v4069 = vld [vmem:[#allocation9 + $0x48] sm:$0xff]
    %v4070 = vld [vmem:[#allocation9 + $0x50] sm:$0xff]
    %v4071 = vld [vmem:[#allocation9 + $0x58] sm:$0xff]
    %v4072 = vld [vmem:[#allocation9 + $0x60] sm:$0xff]
    %v4073 = vld [vmem:[#allocation9 + $0x68] sm:$0xff]
    %v4074 = vld [vmem:[#allocation9 + $0x70] sm:$0xff]
    %v4075 = vld [vmem:[#allocation9 + $0x78] sm:$0xff]
    %v4076 = vld [vmem:[#allocation9 + $0x80] sm:$0xff]
    %v4077 = vld [vmem:[#allocation9 + $0x88] sm:$0xff]
    %v4078 = vld [vmem:[#allocation9 + $0x90] sm:$0xff]
    %v4079 = vld [vmem:[#allocation9 + $0x98] sm:$0xff]
    %v4080 = vld [vmem:[#allocation9 + $0xa0] sm:$0xff]
    %v4081 = vld [vmem:[#allocation9 + $0xa8] sm:$0xff]
    %v4082 = vld [vmem:[#allocation9 + $0xb0] sm:$0xff]
    %v4083 = vld [vmem:[#allocation9 + $0xb8] sm:$0xff]
    %v4084 = vld [vmem:[#allocation9 + $0xc0] sm:$0xff]
    %v4085 = vld [vmem:[#allocation9 + $0xc8] sm:$0xff]
    %v4086 = vld [vmem:[#allocation9 + $0xd0] sm:$0xff]
    %v4087 = vld [vmem:[#allocation9 + $0xd8] sm:$0xff]
    %v4088 = vld [vmem:[#allocation9 + $0xe0] sm:$0xff]
    %v4089 = vld [vmem:[#allocation9 + $0xe8] sm:$0xff]
    %v4090 = vld [vmem:[#allocation9 + $0xf0] sm:$0xff]
    %v4091 = vld [vmem:[#allocation9 + $0xf8] sm:$0xff]
    %v4092 = vld [vmem:[#allocation9 + $0x100] sm:$0xff]
    %v4093 = vld [vmem:[#allocation9 + $0x108] sm:$0xff]
    %v4094 = vld [vmem:[#allocation9 + $0x110] sm:$0xff]
    %v4095 = vld [vmem:[#allocation9 + $0x118] sm:$0xff]
    %v4096 = vld [vmem:[#allocation9 + $0x120] sm:$0xff]
    %v4097 = vld [vmem:[#allocation9 + $0x128] sm:$0xff]
    %v4098 = vld [vmem:[#allocation9 + $0x130] sm:$0xff]
    %v4099 = vld [vmem:[#allocation9 + $0x138] sm:$0xff]
    %v4100 = vld [vmem:[#allocation9 + $0x140] sm:$0xff]
    %v4101 = vld [vmem:[#allocation9 + $0x148] sm:$0xff]
    %v4102 = vld [vmem:[#allocation9 + $0x150] sm:$0xff]
    %v4103 = vld [vmem:[#allocation9 + $0x158] sm:$0xff]
    %v4104 = vld [vmem:[#allocation9 + $0x160] sm:$0xff]
    %v4105 = vld [vmem:[#allocation9 + $0x168] sm:$0xff]
    %v4106 = vld [vmem:[#allocation9 + $0x170] sm:$0xff]
    %v4107 = vld [vmem:[#allocation9 + $0x178] sm:$0xff]
    %v4108 = vld [vmem:[#allocation9 + $0x180] sm:$0xff]
    %v4109 = vld [vmem:[#allocation9 + $0x188] sm:$0xff]
    %v4110 = vld [vmem:[#allocation9 + $0x190] sm:$0xff]
    %v4111 = vld [vmem:[#allocation9 + $0x198] sm:$0xff]
    %v4112 = vld [vmem:[#allocation9 + $0x1a0] sm:$0xff]
    %v4113 = vld [vmem:[#allocation9 + $0x1a8] sm:$0xff]
    %v4114 = vld [vmem:[#allocation9 + $0x1b0] sm:$0xff]
    %v4115 = vld [vmem:[#allocation9 + $0x1b8] sm:$0xff]
    %v4116 = vld [vmem:[#allocation9 + $0x1c0] sm:$0xff]
    %v4117 = vld [vmem:[#allocation9 + $0x1c8] sm:$0xff]
    %v4118 = vld [vmem:[#allocation9 + $0x1d0] sm:$0xff]
    %v4119 = vld [vmem:[#allocation9 + $0x1d8] sm:$0xff]
    %v4120 = vld [vmem:[#allocation9 + $0x1e0] sm:$0xff]
    %v4121 = vld [vmem:[#allocation9 + $0x1e8] sm:$0xff]
    %v4122 = vld [vmem:[#allocation9 + $0x1f0] sm:$0xff]
    %v4123 = vld [vmem:[#allocation9 + $0x1f8] sm:$0xff]
    %v4124 = vld [vmem:[#allocation9 + $0x200] sm:$0xff]
    %v4125 = vld [vmem:[#allocation9 + $0x208] sm:$0xff]
    %v4126 = vld [vmem:[#allocation9 + $0x210] sm:$0xff]
    %v4127 = vld [vmem:[#allocation9 + $0x218] sm:$0xff]
    %v4128 = vld [vmem:[#allocation9 + $0x220] sm:$0xff]
    %v4129 = vld [vmem:[#allocation9 + $0x228] sm:$0xff]
    %v4130 = vld [vmem:[#allocation9 + $0x230] sm:$0xff]
    %v4131 = vld [vmem:[#allocation9 + $0x238] sm:$0xff]
    %v4132 = vld [vmem:[#allocation9 + $0x240] sm:$0xff]
    %v4133 = vld [vmem:[#allocation9 + $0x248] sm:$0xff]
    %v4134 = vld [vmem:[#allocation9 + $0x250] sm:$0xff]
    %v4135 = vld [vmem:[#allocation9 + $0x258] sm:$0xff]
    %v4136 = vld [vmem:[#allocation9 + $0x260] sm:$0xff]
    %v4137 = vld [vmem:[#allocation9 + $0x268] sm:$0xff]
    %v4138 = vld [vmem:[#allocation9 + $0x270] sm:$0xff]
    %v4139 = vld [vmem:[#allocation9 + $0x278] sm:$0xff]
    %v4140 = vld [vmem:[#allocation9 + $0x280] sm:$0xff]
    %v4141 = vld [vmem:[#allocation9 + $0x288] sm:$0xff]
    %v4142 = vld [vmem:[#allocation9 + $0x290] sm:$0xff]
    %v4143 = vld [vmem:[#allocation9 + $0x298] sm:$0xff]
    %v4144 = vld [vmem:[#allocation9 + $0x2a0] sm:$0xff]
    %v4145 = vld [vmem:[#allocation9 + $0x2a8] sm:$0xff]
    %v4146 = vld [vmem:[#allocation9 + $0x2b0] sm:$0xff]
    %v4147 = vld [vmem:[#allocation9 + $0x2b8] sm:$0xff]
    %v4148 = vld [vmem:[#allocation9 + $0x2c0] sm:$0xff]
    %v4149 = vld [vmem:[#allocation9 + $0x2c8] sm:$0xff]
    %v4150 = vld [vmem:[#allocation9 + $0x2d0] sm:$0xff]
    %v4151 = vld [vmem:[#allocation9 + $0x2d8] sm:$0xff]
    %v4152 = vld [vmem:[#allocation9 + $0x2e0] sm:$0xff]
    %v4153 = vld [vmem:[#allocation9 + $0x2e8] sm:$0xff]
    %v4154 = vld [vmem:[#allocation9 + $0x2f0] sm:$0xff]
    %v4155 = vld [vmem:[#allocation9 + $0x2f8] sm:$0xff]
    %v4156 = vld [vmem:[#allocation9 + $0x300] sm:$0xff]
    %v4157 = vld [vmem:[#allocation9 + $0x308] sm:$0xff]
    %v4158 = vld [vmem:[#allocation9 + $0x310] sm:$0xff]
    %v4159 = vld [vmem:[#allocation9 + $0x318] sm:$0xff]
    %v4160 = vld [vmem:[#allocation9 + $0x320] sm:$0xff]
    %v4161 = vld [vmem:[#allocation9 + $0x328] sm:$0xff]
    %v4162 = vld [vmem:[#allocation9 + $0x330] sm:$0xff]
    %v4163 = vld [vmem:[#allocation9 + $0x338] sm:$0xff]
    %v4164 = vld [vmem:[#allocation9 + $0x340] sm:$0xff]
    %v4165 = vld [vmem:[#allocation9 + $0x348] sm:$0xff]
    %v4166 = vld [vmem:[#allocation9 + $0x350] sm:$0xff]
    %v4167 = vld [vmem:[#allocation9 + $0x358] sm:$0xff]
    %v4168 = vld [vmem:[#allocation9 + $0x360] sm:$0xff]
    %v4169 = vld [vmem:[#allocation9 + $0x368] sm:$0xff]
    %v4170 = vld [vmem:[#allocation9 + $0x370] sm:$0xff]
    %v4171 = vld [vmem:[#allocation9 + $0x378] sm:$0xff]
    %v4172 = vld [vmem:[#allocation9 + $0x380] sm:$0xff]
    %v4173 = vld [vmem:[#allocation9 + $0x388] sm:$0xff]
    %v4174 = vld [vmem:[#allocation9 + $0x390] sm:$0xff]
    %v4175 = vld [vmem:[#allocation9 + $0x398] sm:$0xff]
    %v4176 = vld [vmem:[#allocation9 + $0x3a0] sm:$0xff]
    %v4177 = vld [vmem:[#allocation9 + $0x3a8] sm:$0xff]
    %v4178 = vld [vmem:[#allocation9 + $0x3b0] sm:$0xff]
    %v4179 = vld [vmem:[#allocation9 + $0x3b8] sm:$0xff]
    %v4180 = vld [vmem:[#allocation9 + $0x3c0] sm:$0xff]
    %v4181 = vld [vmem:[#allocation9 + $0x3c8] sm:$0xff]
    %v4182 = vld [vmem:[#allocation9 + $0x3d0] sm:$0xff]
    %v4183 = vld [vmem:[#allocation9 + $0x3d8] sm:$0xff]
    %v4184 = vld [vmem:[#allocation9 + $0x3e0] sm:$0xff]
    %v4185 = vld [vmem:[#allocation9 + $0x3e8] sm:$0xff]
    %v4186 = vld [vmem:[#allocation9 + $0x3f0] sm:$0xff]
    %v4187 = vld [vmem:[#allocation9 + $0x3f8] sm:$0xff]
    %v4188 = vld [vmem:[#allocation9 + $0x400] sm:$0xff]
    %v4189 = vld [vmem:[#allocation9 + $0x408] sm:$0xff]
    %v4190 = vld [vmem:[#allocation9 + $0x410] sm:$0xff]
    %v4191 = vld [vmem:[#allocation9 + $0x418] sm:$0xff]
    %v4192 = vld [vmem:[#allocation9 + $0x420] sm:$0xff]
    %v4193 = vld [vmem:[#allocation9 + $0x428] sm:$0xff]
    %v4194 = vld [vmem:[#allocation9 + $0x430] sm:$0xff]
    %v4195 = vld [vmem:[#allocation9 + $0x438] sm:$0xff]
    %v4196 = vld [vmem:[#allocation9 + $0x440] sm:$0xff]
    %v4197 = vld [vmem:[#allocation9 + $0x448] sm:$0xff]
    %v4198 = vld [vmem:[#allocation9 + $0x450] sm:$0xff]
    %v4199 = vld [vmem:[#allocation9 + $0x458] sm:$0xff]
    %v4200 = vld [vmem:[#allocation9 + $0x460] sm:$0xff]
    %v4201 = vld [vmem:[#allocation9 + $0x468] sm:$0xff]
    %v4202 = vld [vmem:[#allocation9 + $0x470] sm:$0xff]
    %v4203 = vld [vmem:[#allocation9 + $0x478] sm:$0xff]
    %v4204 = vld [vmem:[#allocation9 + $0x480] sm:$0xff]
    %v4205 = vld [vmem:[#allocation9 + $0x488] sm:$0xff]
    %v4206 = vld [vmem:[#allocation9 + $0x490] sm:$0xff]
    %v4207 = vld [vmem:[#allocation9 + $0x498] sm:$0xff]
    %v4208 = vld [vmem:[#allocation9 + $0x4a0] sm:$0xff]
    %v4209 = vld [vmem:[#allocation9 + $0x4a8] sm:$0xff]
    %v4210 = vld [vmem:[#allocation9 + $0x4b0] sm:$0xff]
    %v4211 = vld [vmem:[#allocation9 + $0x4b8] sm:$0xff]
    %v4212 = vld [vmem:[#allocation9 + $0x4c0] sm:$0xff]
    %v4213 = vld [vmem:[#allocation9 + $0x4c8] sm:$0xff]
    %v4214 = vld [vmem:[#allocation9 + $0x4d0] sm:$0xff]
    %v4215 = vld [vmem:[#allocation9 + $0x4d8] sm:$0xff]
    %v4216 = vld [vmem:[#allocation9 + $0x4e0] sm:$0xff]
    %v4217 = vld [vmem:[#allocation9 + $0x4e8] sm:$0xff]
    %v4218 = vld [vmem:[#allocation9 + $0x4f0] sm:$0xff]
    %v4219 = vld [vmem:[#allocation9 + $0x4f8] sm:$0xff]
    %v4220 = vld [vmem:[#allocation9 + $0x500] sm:$0xff]
    %v4221 = vld [vmem:[#allocation9 + $0x508] sm:$0xff]
    %v4222 = vld [vmem:[#allocation9 + $0x510] sm:$0xff]
    %v4223 = vld [vmem:[#allocation9 + $0x518] sm:$0xff]
    %v4224 = vld [vmem:[#allocation9 + $0x520] sm:$0xff]
    %v4225 = vld [vmem:[#allocation9 + $0x528] sm:$0xff]
    %v4226 = vld [vmem:[#allocation9 + $0x530] sm:$0xff]
    %v4227 = vld [vmem:[#allocation9 + $0x538] sm:$0xff]
    %v4228 = vld [vmem:[#allocation9 + $0x540] sm:$0xff]
    %v4229 = vld [vmem:[#allocation9 + $0x548] sm:$0xff]
    %v4230 = vld [vmem:[#allocation9 + $0x550] sm:$0xff]
    %v4231 = vld [vmem:[#allocation9 + $0x558] sm:$0xff]
    %v4232 = vld [vmem:[#allocation9 + $0x560] sm:$0xff]
    %v4233 = vld [vmem:[#allocation9 + $0x568] sm:$0xff]
    %v4234 = vld [vmem:[#allocation9 + $0x570] sm:$0xff]
    %v4235 = vld [vmem:[#allocation9 + $0x578] sm:$0xff]
    %v4236 = vld [vmem:[#allocation9 + $0x580] sm:$0xff]
    %v4237 = vld [vmem:[#allocation9 + $0x588] sm:$0xff]
    %v4238 = vld [vmem:[#allocation9 + $0x590] sm:$0xff]
    %v4239 = vld [vmem:[#allocation9 + $0x598] sm:$0xff]
    %v4240 = vld [vmem:[#allocation9 + $0x5a0] sm:$0xff]
    %v4241 = vld [vmem:[#allocation9 + $0x5a8] sm:$0xff]
    %v4242 = vld [vmem:[#allocation9 + $0x5b0] sm:$0xff]
    %v4243 = vld [vmem:[#allocation9 + $0x5b8] sm:$0xff]
    %v4244 = vld [vmem:[#allocation9 + $0x5c0] sm:$0xff]
    %v4245 = vld [vmem:[#allocation9 + $0x5c8] sm:$0xff]
    %v4246 = vld [vmem:[#allocation9 + $0x5d0] sm:$0xff]
    %v4247 = vld [vmem:[#allocation9 + $0x5d8] sm:$0xff]
    %v4248 = vld [vmem:[#allocation9 + $0x5e0] sm:$0xff]
    %v4249 = vld [vmem:[#allocation9 + $0x5e8] sm:$0xff]
    %v4250 = vld [vmem:[#allocation9 + $0x5f0] sm:$0xff]
    %v4251 = vld [vmem:[#allocation9 + $0x5f8] sm:$0xff]
    %v4252 = vld [vmem:[#allocation9 + $0x600] sm:$0xff]
    %v4253 = vld [vmem:[#allocation9 + $0x608] sm:$0xff]
    %v4254 = vld [vmem:[#allocation9 + $0x610] sm:$0xff]
    %v4255 = vld [vmem:[#allocation9 + $0x618] sm:$0xff]
    %v4256 = vld [vmem:[#allocation9 + $0x620] sm:$0xff]
    %v4257 = vld [vmem:[#allocation9 + $0x628] sm:$0xff]
    %v4258 = vld [vmem:[#allocation9 + $0x630] sm:$0xff]
    %v4259 = vld [vmem:[#allocation9 + $0x638] sm:$0xff]
    %v4260 = vld [vmem:[#allocation9 + $0x640] sm:$0xff]
    %v4261 = vld [vmem:[#allocation9 + $0x648] sm:$0xff]
    %v4262 = vld [vmem:[#allocation9 + $0x650] sm:$0xff]
    %v4263 = vld [vmem:[#allocation9 + $0x658] sm:$0xff]
    %v4264 = vld [vmem:[#allocation9 + $0x660] sm:$0xff]
    %v4265 = vld [vmem:[#allocation9 + $0x668] sm:$0xff]
    %v4266 = vld [vmem:[#allocation9 + $0x670] sm:$0xff]
    %v4267 = vld [vmem:[#allocation9 + $0x678] sm:$0xff]
    %v4268 = vld [vmem:[#allocation9 + $0x680] sm:$0xff]
    %v4269 = vld [vmem:[#allocation9 + $0x688] sm:$0xff]
    %v4270 = vld [vmem:[#allocation9 + $0x690] sm:$0xff]
    %v4271 = vld [vmem:[#allocation9 + $0x698] sm:$0xff]
    %v4272 = vld [vmem:[#allocation9 + $0x6a0] sm:$0xff]
    %v4273 = vld [vmem:[#allocation9 + $0x6a8] sm:$0xff]
    %v4274 = vld [vmem:[#allocation9 + $0x6b0] sm:$0xff]
    %v4275 = vld [vmem:[#allocation9 + $0x6b8] sm:$0xff]
    %v4276 = vld [vmem:[#allocation9 + $0x6c0] sm:$0xff]
    %v4277 = vld [vmem:[#allocation9 + $0x6c8] sm:$0xff]
    %v4278 = vld [vmem:[#allocation9 + $0x6d0] sm:$0xff]
    %v4279 = vld [vmem:[#allocation9 + $0x6d8] sm:$0xff]
    %v4280 = vld [vmem:[#allocation9 + $0x6e0] sm:$0xff]
    %v4281 = vld [vmem:[#allocation9 + $0x6e8] sm:$0xff]
    %v4282 = vld [vmem:[#allocation9 + $0x6f0] sm:$0xff]
    %v4283 = vld [vmem:[#allocation9 + $0x6f8] sm:$0xff]
    %v4284 = vld [vmem:[#allocation9 + $0x700] sm:$0xff]
    %v4285 = vld [vmem:[#allocation9 + $0x708] sm:$0xff]
    %v4286 = vld [vmem:[#allocation9 + $0x710] sm:$0xff]
    %v4287 = vld [vmem:[#allocation9 + $0x718] sm:$0xff]
    %v4288 = vld [vmem:[#allocation9 + $0x720] sm:$0xff]
    %v4289 = vld [vmem:[#allocation9 + $0x728] sm:$0xff]
    %v4290 = vld [vmem:[#allocation9 + $0x730] sm:$0xff]
    %v4291 = vld [vmem:[#allocation9 + $0x738] sm:$0xff]
    %v4292 = vld [vmem:[#allocation9 + $0x740] sm:$0xff]
    %v4293 = vld [vmem:[#allocation9 + $0x748] sm:$0xff]
    %v4294 = vld [vmem:[#allocation9 + $0x750] sm:$0xff]
    %v4295 = vld [vmem:[#allocation9 + $0x758] sm:$0xff]
    %v4296 = vld [vmem:[#allocation9 + $0x760] sm:$0xff]
    %v4297 = vld [vmem:[#allocation9 + $0x768] sm:$0xff]
    %v4298 = vld [vmem:[#allocation9 + $0x770] sm:$0xff]
    %v4299 = vld [vmem:[#allocation9 + $0x778] sm:$0xff]
    %v4300 = vld [vmem:[#allocation9 + $0x780] sm:$0xff]
    %v4301 = vld [vmem:[#allocation9 + $0x788] sm:$0xff]
    %v4302 = vld [vmem:[#allocation9 + $0x790] sm:$0xff]
    %v4303 = vld [vmem:[#allocation9 + $0x798] sm:$0xff]
    %v4304 = vld [vmem:[#allocation9 + $0x7a0] sm:$0xff]
    %v4305 = vld [vmem:[#allocation9 + $0x7a8] sm:$0xff]
    %v4306 = vld [vmem:[#allocation9 + $0x7b0] sm:$0xff]
    %v4307 = vld [vmem:[#allocation9 + $0x7b8] sm:$0xff]
    %v4308 = vld [vmem:[#allocation9 + $0x7c0] sm:$0xff]
    %v4309 = vld [vmem:[#allocation9 + $0x7c8] sm:$0xff]
    %v4310 = vld [vmem:[#allocation9 + $0x7d0] sm:$0xff]
    %v4311 = vld [vmem:[#allocation9 + $0x7d8] sm:$0xff]
    %v4312 = vld [vmem:[#allocation9 + $0x7e0] sm:$0xff]
    %v4313 = vld [vmem:[#allocation9 + $0x7e8] sm:$0xff]
    %v4314 = vld [vmem:[#allocation9 + $0x7f0] sm:$0xff]
    %v4315 = vld [vmem:[#allocation9 + $0x7f8] sm:$0xff]
    %v4316 = vld [vmem:[#allocation9 + $0x800] sm:$0xff]
    %v4317 = vld [vmem:[#allocation9 + $0x808] sm:$0xff]
    %v4318 = vld [vmem:[#allocation9 + $0x810] sm:$0xff]
    %v4319 = vld [vmem:[#allocation9 + $0x818] sm:$0xff]
    %v4320 = vld [vmem:[#allocation9 + $0x820] sm:$0xff]
    %v4321 = vld [vmem:[#allocation9 + $0x828] sm:$0xff]
    %v4322 = vld [vmem:[#allocation9 + $0x830] sm:$0xff]
    %v4323 = vld [vmem:[#allocation9 + $0x838] sm:$0xff]
    %v4324 = vld [vmem:[#allocation9 + $0x840] sm:$0xff]
    %v4325 = vld [vmem:[#allocation9 + $0x848] sm:$0xff]
    %v4326 = vld [vmem:[#allocation9 + $0x850] sm:$0xff]
    %v4327 = vld [vmem:[#allocation9 + $0x858] sm:$0xff]
    %v4328 = vld [vmem:[#allocation9 + $0x860] sm:$0xff]
    %v4329 = vld [vmem:[#allocation9 + $0x868] sm:$0xff]
    %v4330 = vld [vmem:[#allocation9 + $0x870] sm:$0xff]
    %v4331 = vld [vmem:[#allocation9 + $0x878] sm:$0xff]
    %v4332 = vld [vmem:[#allocation9 + $0x880] sm:$0xff]
    %v4333 = vld [vmem:[#allocation9 + $0x888] sm:$0xff]
    %v4334 = vld [vmem:[#allocation9 + $0x890] sm:$0xff]
    %v4335 = vld [vmem:[#allocation9 + $0x898] sm:$0xff]
    %v4336 = vld [vmem:[#allocation9 + $0x8a0] sm:$0xff]
    %v4337 = vld [vmem:[#allocation9 + $0x8a8] sm:$0xff]
    %v4338 = vld [vmem:[#allocation9 + $0x8b0] sm:$0xff]
    %v4339 = vld [vmem:[#allocation9 + $0x8b8] sm:$0xff]
    %v4340 = vld [vmem:[#allocation9 + $0x8c0] sm:$0xff]
    %v4341 = vld [vmem:[#allocation9 + $0x8c8] sm:$0xff]
    %v4342 = vld [vmem:[#allocation9 + $0x8d0] sm:$0xff]
    %v4343 = vld [vmem:[#allocation9 + $0x8d8] sm:$0xff]
    %v4344 = vld [vmem:[#allocation9 + $0x8e0] sm:$0xff]
    %v4345 = vld [vmem:[#allocation9 + $0x8e8] sm:$0xff]
    %v4346 = vld [vmem:[#allocation9 + $0x8f0] sm:$0xff]
    %v4347 = vld [vmem:[#allocation9 + $0x8f8] sm:$0xff]
    %v4348 = vld [vmem:[#allocation9 + $0x900] sm:$0xff]
    %v4349 = vld [vmem:[#allocation9 + $0x908] sm:$0xff]
    %v4350 = vld [vmem:[#allocation9 + $0x910] sm:$0xff]
    %v4351 = vld [vmem:[#allocation9 + $0x918] sm:$0xff]
    %v4352 = vld [vmem:[#allocation9 + $0x920] sm:$0xff]
    %v4353 = vld [vmem:[#allocation9 + $0x928] sm:$0xff]
    %v4354 = vld [vmem:[#allocation9 + $0x930] sm:$0xff]
    %v4355 = vld [vmem:[#allocation9 + $0x938] sm:$0xff]
    %v4356 = vld [vmem:[#allocation9 + $0x940] sm:$0xff]
    %v4357 = vld [vmem:[#allocation9 + $0x948] sm:$0xff]
    %v4358 = vld [vmem:[#allocation9 + $0x950] sm:$0xff]
    %v4359 = vld [vmem:[#allocation9 + $0x958] sm:$0xff]
    %v4360 = vld [vmem:[#allocation9 + $0x960] sm:$0xff]
    %v4361 = vld [vmem:[#allocation9 + $0x968] sm:$0xff]
    %v4362 = vld [vmem:[#allocation9 + $0x970] sm:$0xff]
    %v4363 = vld [vmem:[#allocation9 + $0x978] sm:$0xff]
    %v4364 = vld [vmem:[#allocation9 + $0x980] sm:$0xff]
    %v4365 = vld [vmem:[#allocation9 + $0x988] sm:$0xff]
    %v4366 = vld [vmem:[#allocation9 + $0x990] sm:$0xff]
    %v4367 = vld [vmem:[#allocation9 + $0x998] sm:$0xff]
    %v4368 = vld [vmem:[#allocation9 + $0x9a0] sm:$0xff]
    %v4369 = vld [vmem:[#allocation9 + $0x9a8] sm:$0xff]
    %v4370 = vld [vmem:[#allocation9 + $0x9b0] sm:$0xff]
    %v4371 = vld [vmem:[#allocation9 + $0x9b8] sm:$0xff]
    %v4372 = vld [vmem:[#allocation9 + $0x9c0] sm:$0xff]
    %v4373 = vld [vmem:[#allocation9 + $0x9c8] sm:$0xff]
    %v4374 = vld [vmem:[#allocation9 + $0x9d0] sm:$0xff]
    %v4375 = vld [vmem:[#allocation9 + $0x9d8] sm:$0xff]
    %v4376 = vld [vmem:[#allocation9 + $0x9e0] sm:$0xff]
    %v4377 = vld [vmem:[#allocation9 + $0x9e8] sm:$0xff]
    %v4378 = vld [vmem:[#allocation9 + $0x9f0] sm:$0xff]
    %v4379 = vld [vmem:[#allocation9 + $0x9f8] sm:$0xff]
    %v4380 = vld [vmem:[#allocation9 + $0xa00] sm:$0xff]
    %v4381 = vld [vmem:[#allocation9 + $0xa08] sm:$0xff]
    %v4382 = vld [vmem:[#allocation9 + $0xa10] sm:$0xff]
    %v4383 = vld [vmem:[#allocation9 + $0xa18] sm:$0xff]
    %v4384 = vld [vmem:[#allocation9 + $0xa20] sm:$0xff]
    %v4385 = vld [vmem:[#allocation9 + $0xa28] sm:$0xff]
    %v4386 = vld [vmem:[#allocation9 + $0xa30] sm:$0xff]
    %v4387 = vld [vmem:[#allocation9 + $0xa38] sm:$0xff]
    %v4388 = vld [vmem:[#allocation9 + $0xa40] sm:$0xff]
    %v4389 = vld [vmem:[#allocation9 + $0xa48] sm:$0xff]
    %v4390 = vld [vmem:[#allocation9 + $0xa50] sm:$0xff]
    %v4391 = vld [vmem:[#allocation9 + $0xa58] sm:$0xff]
    %v4392 = vld [vmem:[#allocation9 + $0xa60] sm:$0xff]
    %v4393 = vld [vmem:[#allocation9 + $0xa68] sm:$0xff]
    %v4394 = vld [vmem:[#allocation9 + $0xa70] sm:$0xff]
    %v4395 = vld [vmem:[#allocation9 + $0xa78] sm:$0xff]
    %v4396 = vld [vmem:[#allocation9 + $0xa80] sm:$0xff]
    %v4397 = vld [vmem:[#allocation9 + $0xa88] sm:$0xff]
    %v4398 = vld [vmem:[#allocation9 + $0xa90] sm:$0xff]
    %v4399 = vld [vmem:[#allocation9 + $0xa98] sm:$0xff]
    %v4400 = vld [vmem:[#allocation9 + $0xaa0] sm:$0xff]
    %v4401 = vld [vmem:[#allocation9 + $0xaa8] sm:$0xff]
    %v4402 = vld [vmem:[#allocation9 + $0xab0] sm:$0xff]
    %v4403 = vld [vmem:[#allocation9 + $0xab8] sm:$0xff]
    %v4404 = vld [vmem:[#allocation9 + $0xac0] sm:$0xff]
    %v4405 = vld [vmem:[#allocation9 + $0xac8] sm:$0xff]
    %v4406 = vld [vmem:[#allocation9 + $0xad0] sm:$0xff]
    %v4407 = vld [vmem:[#allocation9 + $0xad8] sm:$0xff]
    %v4408 = vld [vmem:[#allocation9 + $0xae0] sm:$0xff]
    %v4409 = vld [vmem:[#allocation9 + $0xae8] sm:$0xff]
    %v4410 = vld [vmem:[#allocation9 + $0xaf0] sm:$0xff]
    %v4411 = vld [vmem:[#allocation9 + $0xaf8] sm:$0xff]
    %v4412 = vld [vmem:[#allocation9 + $0xb00] sm:$0xff]
    %v4413 = vld [vmem:[#allocation9 + $0xb08] sm:$0xff]
    %v4414 = vld [vmem:[#allocation9 + $0xb10] sm:$0xff]
    %v4415 = vld [vmem:[#allocation9 + $0xb18] sm:$0xff]
    %v4416 = vld [vmem:[#allocation9 + $0xb20] sm:$0xff]
    %v4417 = vld [vmem:[#allocation9 + $0xb28] sm:$0xff]
    %v4418 = vld [vmem:[#allocation9 + $0xb30] sm:$0xff]
    %v4419 = vld [vmem:[#allocation9 + $0xb38] sm:$0xff]
    %v4420 = vld [vmem:[#allocation9 + $0xb40] sm:$0xff]
    %v4421 = vld [vmem:[#allocation9 + $0xb48] sm:$0xff]
    %v4422 = vld [vmem:[#allocation9 + $0xb50] sm:$0xff]
    %v4423 = vld [vmem:[#allocation9 + $0xb58] sm:$0xff]
    %v4424 = vld [vmem:[#allocation9 + $0xb60] sm:$0xff]
    %v4425 = vld [vmem:[#allocation9 + $0xb68] sm:$0xff]
    %v4426 = vld [vmem:[#allocation9 + $0xb70] sm:$0xff]
    %v4427 = vld [vmem:[#allocation9 + $0xb78] sm:$0xff]
    %v4428 = vld [vmem:[#allocation9 + $0xb80] sm:$0xff]
    %v4429 = vld [vmem:[#allocation9 + $0xb88] sm:$0xff]
    %v4430 = vld [vmem:[#allocation9 + $0xb90] sm:$0xff]
    %v4431 = vld [vmem:[#allocation9 + $0xb98] sm:$0xff]
    %v4432 = vld [vmem:[#allocation9 + $0xba0] sm:$0xff]
    %v4433 = vld [vmem:[#allocation9 + $0xba8] sm:$0xff]
    %v4434 = vld [vmem:[#allocation9 + $0xbb0] sm:$0xff]
    %v4435 = vld [vmem:[#allocation9 + $0xbb8] sm:$0xff]
    %v4436 = vld [vmem:[#allocation9 + $0xbc0] sm:$0xff]
    %v4437 = vld [vmem:[#allocation9 + $0xbc8] sm:$0xff]
    %v4438 = vld [vmem:[#allocation9 + $0xbd0] sm:$0xff]
    %v4439 = vld [vmem:[#allocation9 + $0xbd8] sm:$0xff]
    %v4440 = vld [vmem:[#allocation9 + $0xbe0] sm:$0xff]
    %v4441 = vld [vmem:[#allocation9 + $0xbe8] sm:$0xff]
    %v4442 = vld [vmem:[#allocation9 + $0xbf0] sm:$0xff]
    %v4443 = vld [vmem:[#allocation9 + $0xbf8] sm:$0xff]
    %v4444 = vld [vmem:[#allocation9 + $0xc00] sm:$0xff]
    %v4445 = vld [vmem:[#allocation9 + $0xc08] sm:$0xff]
    %v4446 = vld [vmem:[#allocation9 + $0xc10] sm:$0xff]
    %v4447 = vld [vmem:[#allocation9 + $0xc18] sm:$0xff]
    %v4448 = vld [vmem:[#allocation9 + $0xc20] sm:$0xff]
    %v4449 = vld [vmem:[#allocation9 + $0xc28] sm:$0xff]
    %v4450 = vld [vmem:[#allocation9 + $0xc30] sm:$0xff]
    %v4451 = vld [vmem:[#allocation9 + $0xc38] sm:$0xff]
    %v4452 = vld [vmem:[#allocation9 + $0xc40] sm:$0xff]
    %v4453 = vld [vmem:[#allocation9 + $0xc48] sm:$0xff]
    %v4454 = vld [vmem:[#allocation9 + $0xc50] sm:$0xff]
    %v4455 = vld [vmem:[#allocation9 + $0xc58] sm:$0xff]
    %v4456 = vld [vmem:[#allocation9 + $0xc60] sm:$0xff]
    %v4457 = vld [vmem:[#allocation9 + $0xc68] sm:$0xff]
    %v4458 = vld [vmem:[#allocation9 + $0xc70] sm:$0xff]
    %v4459 = vld [vmem:[#allocation9 + $0xc78] sm:$0xff]
    %v4460 = vld [vmem:[#allocation9 + $0xc80] sm:$0xff]
    %v4461 = vld [vmem:[#allocation9 + $0xc88] sm:$0xff]
    %v4462 = vld [vmem:[#allocation9 + $0xc90] sm:$0xff]
    %v4463 = vld [vmem:[#allocation9 + $0xc98] sm:$0xff]
    %v4464 = vld [vmem:[#allocation9 + $0xca0] sm:$0xff]
    %v4465 = vld [vmem:[#allocation9 + $0xca8] sm:$0xff]
    %v4466 = vld [vmem:[#allocation9 + $0xcb0] sm:$0xff]
    %v4467 = vld [vmem:[#allocation9 + $0xcb8] sm:$0xff]
    %v4468 = vld [vmem:[#allocation9 + $0xcc0] sm:$0xff]
    %v4469 = vld [vmem:[#allocation9 + $0xcc8] sm:$0xff]
    %v4470 = vld [vmem:[#allocation9 + $0xcd0] sm:$0xff]
    %v4471 = vld [vmem:[#allocation9 + $0xcd8] sm:$0xff]
    %v4472 = vld [vmem:[#allocation9 + $0xce0] sm:$0xff]
    %v4473 = vld [vmem:[#allocation9 + $0xce8] sm:$0xff]
    %v4474 = vld [vmem:[#allocation9 + $0xcf0] sm:$0xff]
    %v4475 = vld [vmem:[#allocation9 + $0xcf8] sm:$0xff]
    %v4476 = vld [vmem:[#allocation9 + $0xd00] sm:$0xff]
    %v4477 = vld [vmem:[#allocation9 + $0xd08] sm:$0xff]
    %v4478 = vld [vmem:[#allocation9 + $0xd10] sm:$0xff]
    %v4479 = vld [vmem:[#allocation9 + $0xd18] sm:$0xff]
    %v4480 = vld [vmem:[#allocation9 + $0xd20] sm:$0xff]
    %v4481 = vld [vmem:[#allocation9 + $0xd28] sm:$0xff]
    %v4482 = vld [vmem:[#allocation9 + $0xd30] sm:$0xff]
    %v4483 = vld [vmem:[#allocation9 + $0xd38] sm:$0xff]
    %v4484 = vld [vmem:[#allocation9 + $0xd40] sm:$0xff]
    %v4485 = vld [vmem:[#allocation9 + $0xd48] sm:$0xff]
    %v4486 = vld [vmem:[#allocation9 + $0xd50] sm:$0xff]
    %v4487 = vld [vmem:[#allocation9 + $0xd58] sm:$0xff]
    %v4488 = vld [vmem:[#allocation9 + $0xd60] sm:$0xff]
    %v4489 = vld [vmem:[#allocation9 + $0xd68] sm:$0xff]
    %v4490 = vld [vmem:[#allocation9 + $0xd70] sm:$0xff]
    %v4491 = vld [vmem:[#allocation9 + $0xd78] sm:$0xff]
    %v4492 = vld [vmem:[#allocation9 + $0xd80] sm:$0xff]
    %v4493 = vld [vmem:[#allocation9 + $0xd88] sm:$0xff]
    %v4494 = vld [vmem:[#allocation9 + $0xd90] sm:$0xff]
    %v4495 = vld [vmem:[#allocation9 + $0xd98] sm:$0xff]
    %v4496 = vld [vmem:[#allocation9 + $0xda0] sm:$0xff]
    %v4497 = vld [vmem:[#allocation9 + $0xda8] sm:$0xff]
    %v4498 = vld [vmem:[#allocation9 + $0xdb0] sm:$0xff]
    %v4499 = vld [vmem:[#allocation9 + $0xdb8] sm:$0xff]
    %v4500 = vld [vmem:[#allocation9 + $0xdc0] sm:$0xff]
    %v4501 = vld [vmem:[#allocation9 + $0xdc8] sm:$0xff]
    %v4502 = vld [vmem:[#allocation9 + $0xdd0] sm:$0xff]
    %v4503 = vld [vmem:[#allocation9 + $0xdd8] sm:$0xff]
    %v4504 = vld [vmem:[#allocation9 + $0xde0] sm:$0xff]
    %v4505 = vld [vmem:[#allocation9 + $0xde8] sm:$0xff]
    %v4506 = vld [vmem:[#allocation9 + $0xdf0] sm:$0xff]
    %v4507 = vld [vmem:[#allocation9 + $0xdf8] sm:$0xff]
    %v4508 = vld [vmem:[#allocation9 + $0xe00] sm:$0xff]
    %v4509 = vld [vmem:[#allocation9 + $0xe08] sm:$0xff]
    %v4510 = vld [vmem:[#allocation9 + $0xe10] sm:$0xff]
    %v4511 = vld [vmem:[#allocation9 + $0xe18] sm:$0xff]
    %v4512 = vld [vmem:[#allocation9 + $0xe20] sm:$0xff]
    %v4513 = vld [vmem:[#allocation9 + $0xe28] sm:$0xff]
    %v4514 = vld [vmem:[#allocation9 + $0xe30] sm:$0xff]
    %v4515 = vld [vmem:[#allocation9 + $0xe38] sm:$0xff]
    %v4516 = vld [vmem:[#allocation9 + $0xe40] sm:$0xff]
    %v4517 = vld [vmem:[#allocation9 + $0xe48] sm:$0xff]
    %v4518 = vld [vmem:[#allocation9 + $0xe50] sm:$0xff]
    %v4519 = vld [vmem:[#allocation9 + $0xe58] sm:$0xff]
    %v4520 = vld [vmem:[#allocation9 + $0xe60] sm:$0xff]
    %v4521 = vld [vmem:[#allocation9 + $0xe68] sm:$0xff]
    %v4522 = vld [vmem:[#allocation9 + $0xe70] sm:$0xff]
    %v4523 = vld [vmem:[#allocation9 + $0xe78] sm:$0xff]
    %v4524 = vld [vmem:[#allocation9 + $0xe80] sm:$0xff]
    %v4525 = vld [vmem:[#allocation9 + $0xe88] sm:$0xff]
    %v4526 = vld [vmem:[#allocation9 + $0xe90] sm:$0xff]
    %v4527 = vld [vmem:[#allocation9 + $0xe98] sm:$0xff]
    %v4528 = vld [vmem:[#allocation9 + $0xea0] sm:$0xff]
    %v4529 = vld [vmem:[#allocation9 + $0xea8] sm:$0xff]
    %v4530 = vld [vmem:[#allocation9 + $0xeb0] sm:$0xff]
    %v4531 = vld [vmem:[#allocation9 + $0xeb8] sm:$0xff]
    %v4532 = vld [vmem:[#allocation9 + $0xec0] sm:$0xff]
    %v4533 = vld [vmem:[#allocation9 + $0xec8] sm:$0xff]
    %v4534 = vld [vmem:[#allocation9 + $0xed0] sm:$0xff]
    %v4535 = vld [vmem:[#allocation9 + $0xed8] sm:$0xff]
    %v4536 = vld [vmem:[#allocation9 + $0xee0] sm:$0xff]
    %v4537 = vld [vmem:[#allocation9 + $0xee8] sm:$0xff]
    %v4538 = vld [vmem:[#allocation9 + $0xef0] sm:$0xff]
    %v4539 = vld [vmem:[#allocation9 + $0xef8] sm:$0xff]
    %v4540 = vld [vmem:[#allocation9 + $0xf00] sm:$0xff]
    %v4541 = vld [vmem:[#allocation9 + $0xf08] sm:$0xff]
    %v4542 = vld [vmem:[#allocation9 + $0xf10] sm:$0xff]
    %v4543 = vld [vmem:[#allocation9 + $0xf18] sm:$0xff]
    %v4544 = vld [vmem:[#allocation9 + $0xf20] sm:$0xff]
    %v4545 = vld [vmem:[#allocation9 + $0xf28] sm:$0xff]
    %v4546 = vld [vmem:[#allocation9 + $0xf30] sm:$0xff]
    %v4547 = vld [vmem:[#allocation9 + $0xf38] sm:$0xff]
    %v4548 = vld [vmem:[#allocation9 + $0xf40] sm:$0xff]
    %v4549 = vld [vmem:[#allocation9 + $0xf48] sm:$0xff]
    %v4550 = vld [vmem:[#allocation9 + $0xf50] sm:$0xff]
    %v4551 = vld [vmem:[#allocation9 + $0xf58] sm:$0xff]
    %v4552 = vld [vmem:[#allocation9 + $0xf60] sm:$0xff]
    %v4553 = vld [vmem:[#allocation9 + $0xf68] sm:$0xff]
    %v4554 = vld [vmem:[#allocation9 + $0xf70] sm:$0xff]
    %v4555 = vld [vmem:[#allocation9 + $0xf78] sm:$0xff]
    %v4556 = vld [vmem:[#allocation9 + $0xf80] sm:$0xff]
    %v4557 = vld [vmem:[#allocation9 + $0xf88] sm:$0xff]
    %v4558 = vld [vmem:[#allocation9 + $0xf90] sm:$0xff]
    %v4559 = vld [vmem:[#allocation9 + $0xf98] sm:$0xff]
    %v4560 = vld [vmem:[#allocation9 + $0xfa0] sm:$0xff]
    %v4561 = vld [vmem:[#allocation9 + $0xfa8] sm:$0xff]
    %v4562 = vld [vmem:[#allocation9 + $0xfb0] sm:$0xff]
    %v4563 = vld [vmem:[#allocation9 + $0xfb8] sm:$0xff]
    %v4564 = vld [vmem:[#allocation9 + $0xfc0] sm:$0xff]
    %v4565 = vld [vmem:[#allocation9 + $0xfc8] sm:$0xff]
    %v4566 = vld [vmem:[#allocation9 + $0xfd0] sm:$0xff]
    %v4567 = vld [vmem:[#allocation9 + $0xfd8] sm:$0xff]
    %v4568 = vld [vmem:[#allocation9 + $0xfe0] sm:$0xff]
    %v4569 = vld [vmem:[#allocation9 + $0xfe8] sm:$0xff]
    %v4570 = vld [vmem:[#allocation9 + $0xff0] sm:$0xff]
    %v4571 = vld [vmem:[#allocation9 + $0xff8] sm:$0xff]
    %v4572 = vld [vmem:[#allocation9 + $0x1000] sm:$0xff]
    %v4573 = vld [vmem:[#allocation9 + $0x1008] sm:$0xff]
    %v4574 = vld [vmem:[#allocation9 + $0x1010] sm:$0xff]
    %v4575 = vld [vmem:[#allocation9 + $0x1018] sm:$0xff]
    %v4576 = vld [vmem:[#allocation9 + $0x1020] sm:$0xff]
    %v4577 = vld [vmem:[#allocation9 + $0x1028] sm:$0xff]
    %v4578 = vld [vmem:[#allocation9 + $0x1030] sm:$0xff]
    %v4579 = vld [vmem:[#allocation9 + $0x1038] sm:$0xff]
    %v4580 = vld [vmem:[#allocation9 + $0x1040] sm:$0xff]
    %v4581 = vld [vmem:[#allocation9 + $0x1048] sm:$0xff]
    %v4582 = vld [vmem:[#allocation9 + $0x1050] sm:$0xff]
    %v4583 = vld [vmem:[#allocation9 + $0x1058] sm:$0xff]
    %v4584 = vld [vmem:[#allocation9 + $0x1060] sm:$0xff]
    %v4585 = vld [vmem:[#allocation9 + $0x1068] sm:$0xff]
    %v4586 = vld [vmem:[#allocation9 + $0x1070] sm:$0xff]
    %v4587 = vld [vmem:[#allocation9 + $0x1078] sm:$0xff]
    %v4588 = vld [vmem:[#allocation9 + $0x1080] sm:$0xff]
    %v4589 = vld [vmem:[#allocation9 + $0x1088] sm:$0xff]
    %v4590 = vld [vmem:[#allocation9 + $0x1090] sm:$0xff]
    %v4591 = vld [vmem:[#allocation9 + $0x1098] sm:$0xff]
    %v4592 = vld [vmem:[#allocation9 + $0x10a0] sm:$0xff]
    %v4593 = vld [vmem:[#allocation9 + $0x10a8] sm:$0xff]
    %v4594 = vld [vmem:[#allocation9 + $0x10b0] sm:$0xff]
    %v4595 = vld [vmem:[#allocation9 + $0x10b8] sm:$0xff]
    %v4596 = vld [vmem:[#allocation9 + $0x10c0] sm:$0xff]
    %v4597 = vld [vmem:[#allocation9 + $0x10c8] sm:$0xff]
    %v4598 = vld [vmem:[#allocation9 + $0x10d0] sm:$0xff]
    %v4599 = vld [vmem:[#allocation9 + $0x10d8] sm:$0xff]
    %v4600 = vld [vmem:[#allocation9 + $0x10e0] sm:$0xff]
    %v4601 = vld [vmem:[#allocation9 + $0x10e8] sm:$0xff]
    %v4602 = vld [vmem:[#allocation9 + $0x10f0] sm:$0xff]
    %v4603 = vld [vmem:[#allocation9 + $0x10f8] sm:$0xff]
    %v4604 = vld [vmem:[#allocation9 + $0x1100] sm:$0xff]
    %v4605 = vld [vmem:[#allocation9 + $0x1108] sm:$0xff]
    %v4606 = vld [vmem:[#allocation9 + $0x1110] sm:$0xff]
    %v4607 = vld [vmem:[#allocation9 + $0x1118] sm:$0xff]
    %v4608 = vld [vmem:[#allocation9 + $0x1120] sm:$0xff]
    %v4609 = vld [vmem:[#allocation9 + $0x1128] sm:$0xff]
    %v4610 = vld [vmem:[#allocation9 + $0x1130] sm:$0xff]
    %v4611 = vld [vmem:[#allocation9 + $0x1138] sm:$0xff]
    %v4612 = vld [vmem:[#allocation9 + $0x1140] sm:$0xff]
    %v4613 = vld [vmem:[#allocation9 + $0x1148] sm:$0xff]
    %v4614 = vld [vmem:[#allocation9 + $0x1150] sm:$0xff]
    %v4615 = vld [vmem:[#allocation9 + $0x1158] sm:$0xff]
    %v4616 = vld [vmem:[#allocation9 + $0x1160] sm:$0xff]
    %v4617 = vld [vmem:[#allocation9 + $0x1168] sm:$0xff]
    %v4618 = vld [vmem:[#allocation9 + $0x1170] sm:$0xff]
    %v4619 = vld [vmem:[#allocation9 + $0x1178] sm:$0xff]
    %v4620 = vld [vmem:[#allocation9 + $0x1180] sm:$0xff]
    %v4621 = vld [vmem:[#allocation9 + $0x1188] sm:$0xff]
    %v4622 = vld [vmem:[#allocation9 + $0x1190] sm:$0xff]
    %v4623 = vld [vmem:[#allocation9 + $0x1198] sm:$0xff]
    %v4624 = vld [vmem:[#allocation9 + $0x11a0] sm:$0xff]
    %v4625 = vld [vmem:[#allocation9 + $0x11a8] sm:$0xff]
    %v4626 = vld [vmem:[#allocation9 + $0x11b0] sm:$0xff]
    %v4627 = vld [vmem:[#allocation9 + $0x11b8] sm:$0xff]
    %v4628 = vld [vmem:[#allocation9 + $0x11c0] sm:$0xff]
    %v4629 = vld [vmem:[#allocation9 + $0x11c8] sm:$0xff]
    %v4630 = vld [vmem:[#allocation9 + $0x11d0] sm:$0xff]
    %v4631 = vld [vmem:[#allocation9 + $0x11d8] sm:$0xff]
    %v4632 = vld [vmem:[#allocation9 + $0x11e0] sm:$0xff]
    %v4633 = vld [vmem:[#allocation9 + $0x11e8] sm:$0xff]
    %v4634 = vld [vmem:[#allocation9 + $0x11f0] sm:$0xff]
    %v4635 = vld [vmem:[#allocation9 + $0x11f8] sm:$0xff]
    %v4636 = vld [vmem:[#allocation9 + $0x1200] sm:$0xff]
    %v4637 = vld [vmem:[#allocation9 + $0x1208] sm:$0xff]
    %v4638 = vld [vmem:[#allocation9 + $0x1210] sm:$0xff]
    %v4639 = vld [vmem:[#allocation9 + $0x1218] sm:$0xff]
    %v4640 = vld [vmem:[#allocation9 + $0x1220] sm:$0xff]
    %v4641 = vld [vmem:[#allocation9 + $0x1228] sm:$0xff]
    %v4642 = vld [vmem:[#allocation9 + $0x1230] sm:$0xff]
    %v4643 = vld [vmem:[#allocation9 + $0x1238] sm:$0xff]
    %v4644 = vld [vmem:[#allocation9 + $0x1240] sm:$0xff]
    %v4645 = vld [vmem:[#allocation9 + $0x1248] sm:$0xff]
    %v4646 = vld [vmem:[#allocation9 + $0x1250] sm:$0xff]
    %v4647 = vld [vmem:[#allocation9 + $0x1258] sm:$0xff]
    %v4648 = vld [vmem:[#allocation9 + $0x1260] sm:$0xff]
    %v4649 = vld [vmem:[#allocation9 + $0x1268] sm:$0xff]
    %v4650 = vld [vmem:[#allocation9 + $0x1270] sm:$0xff]
    %v4651 = vld [vmem:[#allocation9 + $0x1278] sm:$0xff]
    %v4652 = vld [vmem:[#allocation9 + $0x1280] sm:$0xff]
    %v4653 = vld [vmem:[#allocation9 + $0x1288] sm:$0xff]
    %v4654 = vld [vmem:[#allocation9 + $0x1290] sm:$0xff]
    %v4655 = vld [vmem:[#allocation9 + $0x1298] sm:$0xff]
    %v4656 = vld [vmem:[#allocation9 + $0x12a0] sm:$0xff]
    %v4657 = vld [vmem:[#allocation9 + $0x12a8] sm:$0xff]
    %v4658 = vld [vmem:[#allocation9 + $0x12b0] sm:$0xff]
    %v4659 = vld [vmem:[#allocation9 + $0x12b8] sm:$0xff]
    %v4660 = vld [vmem:[#allocation9 + $0x12c0] sm:$0xff]
    %v4661 = vld [vmem:[#allocation9 + $0x12c8] sm:$0xff]
    %v4662 = vld [vmem:[#allocation9 + $0x12d0] sm:$0xff]
    %v4663 = vld [vmem:[#allocation9 + $0x12d8] sm:$0xff]
    %v4664 = vld [vmem:[#allocation9 + $0x12e0] sm:$0xff]
    %v4665 = vld [vmem:[#allocation9 + $0x12e8] sm:$0xff]
    %v4666 = vld [vmem:[#allocation9 + $0x12f0] sm:$0xff]
    %v4667 = vld [vmem:[#allocation9 + $0x12f8] sm:$0xff]
    %v4668 = vld [vmem:[#allocation9 + $0x1300] sm:$0xff]
    %v4669 = vld [vmem:[#allocation9 + $0x1308] sm:$0xff]
    %v4670 = vld [vmem:[#allocation9 + $0x1310] sm:$0xff]
    %v4671 = vld [vmem:[#allocation9 + $0x1318] sm:$0xff]
    %v4672 = vld [vmem:[#allocation9 + $0x1320] sm:$0xff]
    %v4673 = vld [vmem:[#allocation9 + $0x1328] sm:$0xff]
    %v4674 = vld [vmem:[#allocation9 + $0x1330] sm:$0xff]
    %v4675 = vld [vmem:[#allocation9 + $0x1338] sm:$0xff]
    %v4676 = vld [vmem:[#allocation9 + $0x1340] sm:$0xff]
    %v4677 = vld [vmem:[#allocation9 + $0x1348] sm:$0xff]
    %v4678 = vld [vmem:[#allocation9 + $0x1350] sm:$0xff]
    %v4679 = vld [vmem:[#allocation9 + $0x1358] sm:$0xff]
    %v4680 = vld [vmem:[#allocation9 + $0x1360] sm:$0xff]
    %v4681 = vld [vmem:[#allocation9 + $0x1368] sm:$0xff]
    %v4682 = vld [vmem:[#allocation9 + $0x1370] sm:$0xff]
    %v4683 = vld [vmem:[#allocation9 + $0x1378] sm:$0xff]
    %v4684 = vld [vmem:[#allocation9 + $0x1380] sm:$0xff]
    %v4685 = vld [vmem:[#allocation9 + $0x1388] sm:$0xff]
    %v4686 = vld [vmem:[#allocation9 + $0x1390] sm:$0xff]
    %v4687 = vld [vmem:[#allocation9 + $0x1398] sm:$0xff]
    %v4688 = vld [vmem:[#allocation9 + $0x13a0] sm:$0xff]
    %v4689 = vld [vmem:[#allocation9 + $0x13a8] sm:$0xff]
    %v4690 = vld [vmem:[#allocation9 + $0x13b0] sm:$0xff]
    %v4691 = vld [vmem:[#allocation9 + $0x13b8] sm:$0xff]
    %v4692 = vld [vmem:[#allocation9 + $0x13c0] sm:$0xff]
    %v4693 = vld [vmem:[#allocation9 + $0x13c8] sm:$0xff]
    %v4694 = vld [vmem:[#allocation9 + $0x13d0] sm:$0xff]
    %v4695 = vld [vmem:[#allocation9 + $0x13d8] sm:$0xff]
    %v4696 = vld [vmem:[#allocation9 + $0x13e0] sm:$0xff]
    %v4697 = vld [vmem:[#allocation9 + $0x13e8] sm:$0xff]
    %v4698 = vld [vmem:[#allocation9 + $0x13f0] sm:$0xff]
    %v4699 = vld [vmem:[#allocation9 + $0x13f8] sm:$0xff]
    %v4700 = vld [vmem:[#allocation9 + $0x1400] sm:$0xff]
    %v4701 = vld [vmem:[#allocation9 + $0x1408] sm:$0xff]
    %v4702 = vld [vmem:[#allocation9 + $0x1410] sm:$0xff]
    %v4703 = vld [vmem:[#allocation9 + $0x1418] sm:$0xff]
    %v4704 = vld [vmem:[#allocation9 + $0x1420] sm:$0xff]
    %v4705 = vld [vmem:[#allocation9 + $0x1428] sm:$0xff]
    %v4706 = vld [vmem:[#allocation9 + $0x1430] sm:$0xff]
    %v4707 = vld [vmem:[#allocation9 + $0x1438] sm:$0xff]
    %v4708 = vld [vmem:[#allocation9 + $0x1440] sm:$0xff]
    %v4709 = vld [vmem:[#allocation9 + $0x1448] sm:$0xff]
    %v4710 = vld [vmem:[#allocation9 + $0x1450] sm:$0xff]
    %v4711 = vld [vmem:[#allocation9 + $0x1458] sm:$0xff]
    %v4712 = vld [vmem:[#allocation9 + $0x1460] sm:$0xff]
    %v4713 = vld [vmem:[#allocation9 + $0x1468] sm:$0xff]
    %v4714 = vld [vmem:[#allocation9 + $0x1470] sm:$0xff]
    %v4715 = vld [vmem:[#allocation9 + $0x1478] sm:$0xff]
    %v4716 = vld [vmem:[#allocation9 + $0x1480] sm:$0xff]
    %v4717 = vld [vmem:[#allocation9 + $0x1488] sm:$0xff]
    %v4718 = vld [vmem:[#allocation9 + $0x1490] sm:$0xff]
    %v4719 = vld [vmem:[#allocation9 + $0x1498] sm:$0xff]
    %v4720 = vld [vmem:[#allocation9 + $0x14a0] sm:$0xff]
    %v4721 = vld [vmem:[#allocation9 + $0x14a8] sm:$0xff]
    %v4722 = vld [vmem:[#allocation9 + $0x14b0] sm:$0xff]
    %v4723 = vld [vmem:[#allocation9 + $0x14b8] sm:$0xff]
    %v4724 = vld [vmem:[#allocation9 + $0x14c0] sm:$0xff]
    %v4725 = vld [vmem:[#allocation9 + $0x14c8] sm:$0xff]
    %v4726 = vld [vmem:[#allocation9 + $0x14d0] sm:$0xff]
    %v4727 = vld [vmem:[#allocation9 + $0x14d8] sm:$0xff]
    %v4728 = vld [vmem:[#allocation9 + $0x14e0] sm:$0xff]
    %v4729 = vld [vmem:[#allocation9 + $0x14e8] sm:$0xff]
    %v4730 = vld [vmem:[#allocation9 + $0x14f0] sm:$0xff]
    %v4731 = vld [vmem:[#allocation9 + $0x14f8] sm:$0xff]
    %v4732 = vld [vmem:[#allocation9 + $0x1500] sm:$0xff]
    %v4733 = vld [vmem:[#allocation9 + $0x1508] sm:$0xff]
    %v4734 = vld [vmem:[#allocation9 + $0x1510] sm:$0xff]
    %v4735 = vld [vmem:[#allocation9 + $0x1518] sm:$0xff]
    %v4736 = vld [vmem:[#allocation9 + $0x1520] sm:$0xff]
    %v4737 = vld [vmem:[#allocation9 + $0x1528] sm:$0xff]
    %v4738 = vld [vmem:[#allocation9 + $0x1530] sm:$0xff]
    %v4739 = vld [vmem:[#allocation9 + $0x1538] sm:$0xff]
    %v4740 = vld [vmem:[#allocation9 + $0x1540] sm:$0xff]
    %v4741 = vld [vmem:[#allocation9 + $0x1548] sm:$0xff]
    %v4742 = vld [vmem:[#allocation9 + $0x1550] sm:$0xff]
    %v4743 = vld [vmem:[#allocation9 + $0x1558] sm:$0xff]
    %v4744 = vld [vmem:[#allocation9 + $0x1560] sm:$0xff]
    %v4745 = vld [vmem:[#allocation9 + $0x1568] sm:$0xff]
    %v4746 = vld [vmem:[#allocation9 + $0x1570] sm:$0xff]
    %v4747 = vld [vmem:[#allocation9 + $0x1578] sm:$0xff]
    %v4748 = vld [vmem:[#allocation9 + $0x1580] sm:$0xff]
    %v4749 = vld [vmem:[#allocation9 + $0x1588] sm:$0xff]
    %v4750 = vld [vmem:[#allocation9 + $0x1590] sm:$0xff]
    %v4751 = vld [vmem:[#allocation9 + $0x1598] sm:$0xff]
    %v4752 = vld [vmem:[#allocation9 + $0x15a0] sm:$0xff]
    %v4753 = vld [vmem:[#allocation9 + $0x15a8] sm:$0xff]
    %v4754 = vld [vmem:[#allocation9 + $0x15b0] sm:$0xff]
    %v4755 = vld [vmem:[#allocation9 + $0x15b8] sm:$0xff]
    %v4756 = vld [vmem:[#allocation9 + $0x15c0] sm:$0xff]
    %v4757 = vld [vmem:[#allocation9 + $0x15c8] sm:$0xff]
    %v4758 = vld [vmem:[#allocation9 + $0x15d0] sm:$0xff]
    %v4759 = vld [vmem:[#allocation9 + $0x15d8] sm:$0xff]
    %v4760 = vld [vmem:[#allocation9 + $0x15e0] sm:$0xff]
    %v4761 = vld [vmem:[#allocation9 + $0x15e8] sm:$0xff]
    %v4762 = vld [vmem:[#allocation9 + $0x15f0] sm:$0xff]
    %v4763 = vld [vmem:[#allocation9 + $0x15f8] sm:$0xff]
    %v4764 = vld [vmem:[#allocation9 + $0x1600] sm:$0xff]
    %v4765 = vld [vmem:[#allocation9 + $0x1608] sm:$0xff]
    %v4766 = vld [vmem:[#allocation9 + $0x1610] sm:$0xff]
    %v4767 = vld [vmem:[#allocation9 + $0x1618] sm:$0xff]
    %v4768 = vld [vmem:[#allocation9 + $0x1620] sm:$0xff]
    %v4769 = vld [vmem:[#allocation9 + $0x1628] sm:$0xff]
    %v4770 = vld [vmem:[#allocation9 + $0x1630] sm:$0xff]
    %v4771 = vld [vmem:[#allocation9 + $0x1638] sm:$0xff]
    %v4772 = vld [vmem:[#allocation9 + $0x1640] sm:$0xff]
    %v4773 = vld [vmem:[#allocation9 + $0x1648] sm:$0xff]
    %v4774 = vld [vmem:[#allocation9 + $0x1650] sm:$0xff]
    %v4775 = vld [vmem:[#allocation9 + $0x1658] sm:$0xff]
    %v4776 = vld [vmem:[#allocation9 + $0x1660] sm:$0xff]
    %v4777 = vld [vmem:[#allocation9 + $0x1668] sm:$0xff]
    %v4778 = vld [vmem:[#allocation9 + $0x1670] sm:$0xff]
    %v4779 = vld [vmem:[#allocation9 + $0x1678] sm:$0xff]
    %v4780 = vld [vmem:[#allocation9 + $0x1680] sm:$0xff]
    %v4781 = vld [vmem:[#allocation9 + $0x1688] sm:$0xff]
    %v4782 = vld [vmem:[#allocation9 + $0x1690] sm:$0xff]
    %v4783 = vld [vmem:[#allocation9 + $0x1698] sm:$0xff]
    %v4784 = vld [vmem:[#allocation9 + $0x16a0] sm:$0xff]
    %v4785 = vld [vmem:[#allocation9 + $0x16a8] sm:$0xff]
    %v4786 = vld [vmem:[#allocation9 + $0x16b0] sm:$0xff]
    %v4787 = vld [vmem:[#allocation9 + $0x16b8] sm:$0xff]
    %v4788 = vld [vmem:[#allocation9 + $0x16c0] sm:$0xff]
    %v4789 = vld [vmem:[#allocation9 + $0x16c8] sm:$0xff]
    %v4790 = vld [vmem:[#allocation9 + $0x16d0] sm:$0xff]
    %v4791 = vld [vmem:[#allocation9 + $0x16d8] sm:$0xff]
    %v4792 = vld [vmem:[#allocation9 + $0x16e0] sm:$0xff]
    %v4793 = vld [vmem:[#allocation9 + $0x16e8] sm:$0xff]
    %v4794 = vld [vmem:[#allocation9 + $0x16f0] sm:$0xff]
    %v4795 = vld [vmem:[#allocation9 + $0x16f8] sm:$0xff]
    %v4796 = vld [vmem:[#allocation9 + $0x1700] sm:$0xff]
    %v4797 = vld [vmem:[#allocation9 + $0x1708] sm:$0xff]
    %v4798 = vld [vmem:[#allocation9 + $0x1710] sm:$0xff]
    %v4799 = vld [vmem:[#allocation9 + $0x1718] sm:$0xff]
    %v4800 = vld [vmem:[#allocation9 + $0x1720] sm:$0xff]
    %v4801 = vld [vmem:[#allocation9 + $0x1728] sm:$0xff]
    %v4802 = vld [vmem:[#allocation9 + $0x1730] sm:$0xff]
    %v4803 = vld [vmem:[#allocation9 + $0x1738] sm:$0xff]
    %v4804 = vld [vmem:[#allocation9 + $0x1740] sm:$0xff]
    %v4805 = vld [vmem:[#allocation9 + $0x1748] sm:$0xff]
    %v4806 = vld [vmem:[#allocation9 + $0x1750] sm:$0xff]
    %v4807 = vld [vmem:[#allocation9 + $0x1758] sm:$0xff]
    %v4808 = vld [vmem:[#allocation9 + $0x1760] sm:$0xff]
    %v4809 = vld [vmem:[#allocation9 + $0x1768] sm:$0xff]
    %v4810 = vld [vmem:[#allocation9 + $0x1770] sm:$0xff]
    %v4811 = vld [vmem:[#allocation9 + $0x1778] sm:$0xff]
    %v4812 = vld [vmem:[#allocation9 + $0x1780] sm:$0xff]
    %v4813 = vld [vmem:[#allocation9 + $0x1788] sm:$0xff]
    %v4814 = vld [vmem:[#allocation9 + $0x1790] sm:$0xff]
    %v4815 = vld [vmem:[#allocation9 + $0x1798] sm:$0xff]
    %v4816 = vld [vmem:[#allocation9 + $0x17a0] sm:$0xff]
    %v4817 = vld [vmem:[#allocation9 + $0x17a8] sm:$0xff]
    %v4818 = vld [vmem:[#allocation9 + $0x17b0] sm:$0xff]
    %v4819 = vld [vmem:[#allocation9 + $0x17b8] sm:$0xff]
    %v4820 = vld [vmem:[#allocation9 + $0x17c0] sm:$0xff]
    %v4821 = vld [vmem:[#allocation9 + $0x17c8] sm:$0xff]
    %v4822 = vld [vmem:[#allocation9 + $0x17d0] sm:$0xff]
    %v4823 = vld [vmem:[#allocation9 + $0x17d8] sm:$0xff]
    %v4824 = vld [vmem:[#allocation9 + $0x17e0] sm:$0xff]
    %v4825 = vld [vmem:[#allocation9 + $0x17e8] sm:$0xff]
    %v4826 = vld [vmem:[#allocation9 + $0x17f0] sm:$0xff]
    %v4827 = vld [vmem:[#allocation9 + $0x17f8] sm:$0xff]
    %v4828 = vld [vmem:[#allocation9 + $0x1800] sm:$0xff]
    %v4829 = vld [vmem:[#allocation9 + $0x1808] sm:$0xff]
    %v4830 = vld [vmem:[#allocation9 + $0x1810] sm:$0xff]
    %v4831 = vld [vmem:[#allocation9 + $0x1818] sm:$0xff]
    %v4832 = vld [vmem:[#allocation9 + $0x1820] sm:$0xff]
    %v4833 = vld [vmem:[#allocation9 + $0x1828] sm:$0xff]
    %v4834 = vld [vmem:[#allocation9 + $0x1830] sm:$0xff]
    %v4835 = vld [vmem:[#allocation9 + $0x1838] sm:$0xff]
    %v4836 = vld [vmem:[#allocation9 + $0x1840] sm:$0xff]
    %v4837 = vld [vmem:[#allocation9 + $0x1848] sm:$0xff]
    %v4838 = vld [vmem:[#allocation9 + $0x1850] sm:$0xff]
    %v4839 = vld [vmem:[#allocation9 + $0x1858] sm:$0xff]
    %v4840 = vld [vmem:[#allocation9 + $0x1860] sm:$0xff]
    %v4841 = vld [vmem:[#allocation9 + $0x1868] sm:$0xff]
    %v4842 = vld [vmem:[#allocation9 + $0x1870] sm:$0xff]
    %v4843 = vld [vmem:[#allocation9 + $0x1878] sm:$0xff]
    %v4844 = vld [vmem:[#allocation10] sm:$0xff]
    %v4846 = vlaneseq
    %v4847 = vshrl.u32 %v4846, 7
    %v4848 = vsub.s32 0, %v4847
    %v4849 = vrot.slane %v4844, %v4848
    %v4850 = vlaneseq
    %v4851 = vshrl.u32 %v4850, 7
    %v4852 = vsub.s32 1, %v4851
    %v4853 = vrot.slane %v4844, %v4852
    %v4854 = vlaneseq
    %v4855 = vshrl.u32 %v4854, 7
    %v4856 = vsub.s32 2, %v4855
    %v4857 = vrot.slane %v4844, %v4856
    %v4858 = vlaneseq
    %v4859 = vshrl.u32 %v4858, 7
    %v4860 = vsub.s32 3, %v4859
    %v4861 = vrot.slane %v4844, %v4860
    %v4862 = vlaneseq
    %v4863 = vshrl.u32 %v4862, 7
    %v4864 = vsub.s32 4, %v4863
    %v4865 = vrot.slane %v4844, %v4864
    %v4866 = vlaneseq
    %v4867 = vshrl.u32 %v4866, 7
    %v4868 = vsub.s32 5, %v4867
    %v4869 = vrot.slane %v4844, %v4868
    %v4870 = vlaneseq
    %v4871 = vshrl.u32 %v4870, 7
    %v4872 = vsub.s32 6, %v4871
    %v4873 = vrot.slane %v4844, %v4872
    %4881 = vmatprep.subr.mxu0 %v4061
    %4882 = vmatpush1.msra.mxu0 %v4060
    %4883 = vmatprep.subr.mxu0 %v4068
    %4884 = vmatpush1.msra.mxu0 %v4067
    %4885 = vmatprep.subr.mxu0 %v4075
    %4886 = vmatpush1.msra.mxu0 %v4074
    %4887 = vmatprep.subr.mxu0 %v4082
    %4888 = vmatpush1.msra.mxu0 %v4081
    %4889 = vmatprep.subr.mxu0 %v4089
    %4890 = vmatpush1.msra.mxu0 %v4088
    %4891 = vmatprep.subr.mxu0 %v4096
    %4892 = vmatpush1.msra.mxu0 %v4095
    %4893 = vmatprep.subr.mxu0 %v4103
    %4894 = vmatpush1.msra.mxu0 %v4102
    %4895 = vmatprep.subr.mxu0 %v4110
    %4896 = vmatpush1.msra.mxu0 %v4109
    %4897 = vmatprep.subr.mxu0 %v4117
    %4898 = vmatpush1.msra.mxu0 %v4116
    %4899 = vmatprep.subr.mxu0 %v4124
    %4900 = vmatpush1.msra.mxu0 %v4123
    %4901 = vmatprep.subr.mxu0 %v4131
    %4902 = vmatpush1.msra.mxu0 %v4130
    %4903 = vmatprep.subr.mxu0 %v4138
    %4904 = vmatpush1.msra.mxu0 %v4137
    %4905 = vmatprep.subr.mxu0 %v4145
    %4906 = vmatpush1.msra.mxu0 %v4144
    %4907 = vmatprep.subr.mxu0 %v4152
    %4908 = vmatpush1.msra.mxu0 %v4151
    %4909 = vmatprep.subr.mxu0 %v4159
    %4910 = vmatpush1.msra.mxu0 %v4158
    %4911 = vmatprep.subr.mxu0 %v4166
    %4912 = vmatpush1.msra.mxu0 %v4165
    %4913 = vmatprep.subr.mxu0 %v4173
    %4914 = vmatpush1.msra.mxu0 %v4172
    %4915 = vmatprep.subr.mxu0 %v4180
    %4916 = vmatpush1.msra.mxu0 %v4179
    %4917 = vmatprep.subr.mxu0 %v4187
    %4918 = vmatpush1.msra.mxu0 %v4186
    %4919 = vmatprep.subr.mxu0 %v4194
    %4920 = vmatpush1.msra.mxu0 %v4193
    %4921 = vmatprep.subr.mxu0 %v4201
    %4922 = vmatpush1.msra.mxu0 %v4200
    %4923 = vmatprep.subr.mxu0 %v4208
    %4924 = vmatpush1.msra.mxu0 %v4207
    %4925 = vmatprep.subr.mxu0 %v4215
    %4926 = vmatpush1.msra.mxu0 %v4214
    %4927 = vmatprep.subr.mxu0 %v4222
    %4928 = vmatpush1.msra.mxu0 %v4221
    %4929 = vmatprep.subr.mxu0 %v4229
    %4930 = vmatpush1.msra.mxu0 %v4228
    %4931 = vmatprep.subr.mxu0 %v4236
    %4932 = vmatpush1.msra.mxu0 %v4235
    %4933 = vmatprep.subr.mxu0 %v4243
    %4934 = vmatpush1.msra.mxu0 %v4242
    %4935 = vmatprep.subr.mxu0 %v4250
    %4936 = vmatpush1.msra.mxu0 %v4249
    %4937 = vmatprep.subr.mxu0 %v4257
    %4938 = vmatpush1.msra.mxu0 %v4256
    %4939 = vmatprep.subr.mxu0 %v4264
    %4940 = vmatpush1.msra.mxu0 %v4263
    %4941 = vmatprep.subr.mxu0 %v4271
    %4942 = vmatpush1.msra.mxu0 %v4270
    %4943 = vmatprep.subr.mxu0 %v4278
    %4944 = vmatpush1.msra.mxu0 %v4277
    %4945 = vmatprep.mubr.f32.mxu0 %v4054
    %4946 = vmatmul.mubr.f32.gmra.mrb[0].mxu0 %v4053
    %v4947 = vpop.f32.mrb[0].mxu0
    %v4948 = vadd.f32 %v4849, %v4947
    %v4949 = vpop.f32.mrb[0].mxu0
    %v4950 = vadd.f32 %v4853, %v4949
    %4951 = vdwg.mxu0
    %4952 = vmatprep.subr.mxu0 %v4285
    %4953 = vmatpush1.msra.mxu0 %v4284
    %4954 = vmatprep.subr.mxu0 %v4292
    %4955 = vmatpush1.msra.mxu0 %v4291
    %4956 = vmatprep.subr.mxu0 %v4299
    %4957 = vmatpush1.msra.mxu0 %v4298
    %4958 = vmatprep.subr.mxu0 %v4306
    %4959 = vmatpush1.msra.mxu0 %v4305
    %4960 = vmatprep.subr.mxu0 %v4313
    %4961 = vmatpush1.msra.mxu0 %v4312
    %4962 = vmatprep.subr.mxu0 %v4320
    %4963 = vmatpush1.msra.mxu0 %v4319
    %4964 = vmatprep.subr.mxu0 %v4327
    %4965 = vmatpush1.msra.mxu0 %v4326
    %4966 = vmatprep.subr.mxu0 %v4334
    %4967 = vmatpush1.msra.mxu0 %v4333
    %4968 = vmatprep.subr.mxu0 %v4341
    %4969 = vmatpush1.msra.mxu0 %v4340
    %4970 = vmatprep.subr.mxu0 %v4348
    %4971 = vmatpush1.msra.mxu0 %v4347
    %4972 = vmatprep.subr.mxu0 %v4355
    %4973 = vmatpush1.msra.mxu0 %v4354
    %4974 = vmatprep.subr.mxu0 %v4362
    %4975 = vmatpush1.msra.mxu0 %v4361
    %4976 = vmatprep.subr.mxu0 %v4369
    %4977 = vmatpush1.msra.mxu0 %v4368
    %4978 = vmatprep.subr.mxu0 %v4376
    %4979 = vmatpush1.msra.mxu0 %v4375
    %4980 = vmatprep.subr.mxu0 %v4383
    %4981 = vmatpush1.msra.mxu0 %v4382
    %4982 = vmatprep.subr.mxu0 %v4390
    %4983 = vmatpush1.msra.mxu0 %v4389
    %4984 = vmatprep.subr.mxu0 %v4397
    %4985 = vmatpush1.msra.mxu0 %v4396
    %4986 = vmatprep.subr.mxu0 %v4404
    %4987 = vmatpush1.msra.mxu0 %v4403
    %4988 = vmatprep.subr.mxu0 %v4411
    %4989 = vmatpush1.msra.mxu0 %v4410
    %4990 = vmatprep.subr.mxu0 %v4418
    %4991 = vmatpush1.msra.mxu0 %v4417
    %4992 = vmatprep.subr.mxu0 %v4425
    %4993 = vmatpush1.msra.mxu0 %v4424
    %4994 = vmatprep.subr.mxu0 %v4432
    %4995 = vmatpush1.msra.mxu0 %v4431
    %4996 = vmatprep.subr.mxu0 %v4439
    %4997 = vmatpush1.msra.mxu0 %v4438
    %4998 = vmatprep.subr.mxu0 %v4446
    %4999 = vmatpush1.msra.mxu0 %v4445
    %5000 = vmatprep.subr.mxu0 %v4453
    %5001 = vmatpush1.msra.mxu0 %v4452
    %5002 = vmatprep.subr.mxu0 %v4460
    %5003 = vmatpush1.msra.mxu0 %v4459
    %5004 = vmatprep.subr.mxu0 %v4467
    %5005 = vmatpush1.msra.mxu0 %v4466
    %5006 = vmatprep.subr.mxu0 %v4474
    %5007 = vmatpush1.msra.mxu0 %v4473
    %5008 = vmatprep.subr.mxu0 %v4481
    %5009 = vmatpush1.msra.mxu0 %v4480
    %5010 = vmatprep.subr.mxu0 %v4488
    %5011 = vmatpush1.msra.mxu0 %v4487
    %5012 = vmatprep.subr.mxu0 %v4495
    %5013 = vmatpush1.msra.mxu0 %v4494
    %5014 = vmatprep.subr.mxu0 %v4502
    %5015 = vmatpush1.msra.mxu0 %v4501
    %5016 = vmatprep.mubr.f32.mxu0 %v4056
    %5017 = vmatmul.mubr.f32.gmra.mrb[0].mxu0 %v4055
    %v5018 = vpop.f32.mrb[0].mxu0
    %v5019 = vadd.f32 %v4948, %v5018
    %v5020 = vpop.f32.mrb[0].mxu0
    %v5021 = vadd.f32 %v4950, %v5020
    %5022 = vdwg.mxu0
    %5023 = vmatprep.subr.mxu0 %v4509
    %5024 = vmatpush1.msra.mxu0 %v4508
    %5025 = vmatprep.subr.mxu0 %v4516
    %5026 = vmatpush1.msra.mxu0 %v4515
    %5027 = vmatprep.subr.mxu0 %v4523
    %5028 = vmatpush1.msra.mxu0 %v4522
    %5029 = vmatprep.subr.mxu0 %v4530
    %5030 = vmatpush1.msra.mxu0 %v4529
    %5031 = vmatprep.subr.mxu0 %v4537
    %5032 = vmatpush1.msra.mxu0 %v4536
    %5033 = vmatprep.subr.mxu0 %v4544
    %5034 = vmatpush1.msra.mxu0 %v4543
    %5035 = vmatprep.subr.mxu0 %v4551
    %5036 = vmatpush1.msra.mxu0 %v4550
    %5037 = vmatprep.subr.mxu0 %v4558
    %5038 = vmatpush1.msra.mxu0 %v4557
    %5039 = vmatprep.subr.mxu0 %v4565
    %5040 = vmatpush1.msra.mxu0 %v4564
    %5041 = vmatprep.subr.mxu0 %v4572
    %5042 = vmatpush1.msra.mxu0 %v4571
    %5043 = vmatprep.subr.mxu0 %v4579
    %5044 = vmatpush1.msra.mxu0 %v4578
    %5045 = vmatprep.subr.mxu0 %v4586
    %5046 = vmatpush1.msra.mxu0 %v4585
    %5047 = vmatprep.subr.mxu0 %v4593
    %5048 = vmatpush1.msra.mxu0 %v4592
    %5049 = vmatprep.subr.mxu0 %v4600
    %5050 = vmatpush1.msra.mxu0 %v4599
    %5051 = vmatprep.subr.mxu0 %v4607
    %5052 = vmatpush1.msra.mxu0 %v4606
    %5053 = vmatprep.subr.mxu0 %v4614
    %5054 = vmatpush1.msra.mxu0 %v4613
    %5055 = vmatprep.subr.mxu0 %v4621
    %5056 = vmatpush1.msra.mxu0 %v4620
    %5057 = vmatprep.subr.mxu0 %v4628
    %5058 = vmatpush1.msra.mxu0 %v4627
    %5059 = vmatprep.subr.mxu0 %v4635
    %5060 = vmatpush1.msra.mxu0 %v4634
    %5061 = vmatprep.subr.mxu0 %v4642
    %5062 = vmatpush1.msra.mxu0 %v4641
    %5063 = vmatprep.subr.mxu0 %v4649
    %5064 = vmatpush1.msra.mxu0 %v4648
    %5065 = vmatprep.subr.mxu0 %v4656
    %5066 = vmatpush1.msra.mxu0 %v4655
    %5067 = vmatprep.subr.mxu0 %v4663
    %5068 = vmatpush1.msra.mxu0 %v4662
    %5069 = vmatprep.subr.mxu0 %v4670
    %5070 = vmatpush1.msra.mxu0 %v4669
    %5071 = vmatprep.subr.mxu0 %v4677
    %5072 = vmatpush1.msra.mxu0 %v4676
    %5073 = vmatprep.subr.mxu0 %v4684
    %5074 = vmatpush1.msra.mxu0 %v4683
    %5075 = vmatprep.subr.mxu0 %v4691
    %5076 = vmatpush1.msra.mxu0 %v4690
    %5077 = vmatprep.subr.mxu0 %v4698
    %5078 = vmatpush1.msra.mxu0 %v4697
    %5079 = vmatprep.subr.mxu0 %v4705
    %5080 = vmatpush1.msra.mxu0 %v4704
    %5081 = vmatprep.subr.mxu0 %v4712
    %5082 = vmatpush1.msra.mxu0 %v4711
    %5083 = vmatprep.subr.mxu0 %v4719
    %5084 = vmatpush1.msra.mxu0 %v4718
    %5085 = vmatprep.subr.mxu0 %v4726
    %5086 = vmatpush1.msra.mxu0 %v4725
    %5087 = vmatprep.mubr.f32.mxu0 %v4058
    %5088 = vmatmul.mubr.f32.gmra.mrb[0].mxu0 %v4057
    %v5089 = vpop.f32.mrb[0].mxu0
    %v5090 = vadd.f32 %v5019, %v5089
    %v5091 = vpop.f32.mrb[0].mxu0
    %v5092 = vadd.f32 %v5021, %v5091
    %5093 = vdwg.mxu0
    %5094 = vmatprep.subr.mxu0 %v4733
    %5095 = vmatpush1.msra.mxu0 %v4732
    %5096 = vmatprep.subr.mxu0 %v4740
    %5097 = vmatpush1.msra.mxu0 %v4739
    %5098 = vmatprep.subr.mxu0 %v4747
    %5099 = vmatpush1.msra.mxu0 %v4746
    %5100 = vmatprep.subr.mxu0 %v4754
    %5101 = vmatpush1.msra.mxu0 %v4753
    %5102 = vmatprep.subr.mxu0 %v4761
    %5103 = vmatpush1.msra.mxu0 %v4760
    %5104 = vmatprep.subr.mxu0 %v4768
    %5105 = vmatpush1.msra.mxu0 %v4767
    %5106 = vmatprep.subr.mxu0 %v4775
    %5107 = vmatpush1.msra.mxu0 %v4774
    %5108 = vmatprep.subr.mxu0 %v4782
    %5109 = vmatpush1.msra.mxu0 %v4781
    %5110 = vmatprep.subr.mxu0 %v4789
    %5111 = vmatpush1.msra.mxu0 %v4788
    %5112 = vmatprep.subr.mxu0 %v4796
    %5113 = vmatpush1.msra.mxu0 %v4795
    %5114 = vmatprep.subr.mxu0 %v4803
    %5115 = vmatpush1.msra.mxu0 %v4802
    %5116 = vmatprep.subr.mxu0 %v4810
    %5117 = vmatpush1.msra.mxu0 %v4809
    %5118 = vmatprep.subr.mxu0 %v4817
    %5119 = vmatpush1.msra.mxu0 %v4816
    %5120 = vmatprep.subr.mxu0 %v4824
    %5121 = vmatpush1.msra.mxu0 %v4823
    %5122 = vmatprep.subr.mxu0 %v4831
    %5123 = vmatpush1.msra.mxu0 %v4830
    %5124 = vmatprep.subr.mxu0 %v4838
    %5125 = vmatpush1.msra.mxu0 %v4837
    %5126 = vmatprep.subr.mxu0 0.0
    %5127 = vmatpush1.msra.mxu0 0.0
    %5128 = vmatprep.subr.mxu0 0.0
    %5129 = vmatpush1.msra.mxu0 0.0
    %5130 = vmatprep.subr.mxu0 0.0
    %5131 = vmatpush1.msra.mxu0 0.0
    %5132 = vmatprep.subr.mxu0 0.0
    %5133 = vmatpush1.msra.mxu0 0.0
    %5134 = vmatprep.subr.mxu0 0.0
    %5135 = vmatpush1.msra.mxu0 0.0
    %5136 = vmatprep.subr.mxu0 0.0
    %5137 = vmatpush1.msra.mxu0 0.0
    %5138 = vmatprep.subr.mxu0 0.0
    %5139 = vmatpush1.msra.mxu0 0.0
    %5140 = vmatprep.subr.mxu0 0.0
    %5141 = vmatpush1.msra.mxu0 0.0
    %5142 = vmatprep.subr.mxu0 0.0
    %5143 = vmatpush1.msra.mxu0 0.0
    %5144 = vmatprep.subr.mxu0 0.0
    %5145 = vmatpush1.msra.mxu0 0.0
    %5146 = vmatprep.subr.mxu0 0.0
    %5147 = vmatpush1.msra.mxu0 0.0
    %5148 = vmatprep.subr.mxu0 0.0
    %5149 = vmatpush1.msra.mxu0 0.0
    %5150 = vmatprep.subr.mxu0 0.0
    %5151 = vmatpush1.msra.mxu0 0.0
    %5152 = vmatprep.subr.mxu0 0.0
    %5153 = vmatpush1.msra.mxu0 0.0
    %5154 = vmatprep.subr.mxu0 0.0
    %5155 = vmatpush1.msra.mxu0 0.0
    %5156 = vmatprep.subr.mxu0 0.0
    %5157 = vmatpush1.msra.mxu0 0.0
    %5158 = vmatprep.mubr.f32.mxu0 0.0
    %5159 = vmatmul.mubr.f32.gmra.mrb[0].mxu0 %v4059
    %v5160 = vpop.f32.mrb[0].mxu0
    %v5161 = vadd.f32 %v5090, %v5160
    %v5162 = vpop.f32.mrb[0].mxu0
    %v5163 = vadd.f32 %v5092, %v5162
    %5164 = vdwg.mxu0
    %5165 = vmatprep.subr.mxu0 %v4063
    %5166 = vmatpush1.msra.mxu0 %v4062
    %5167 = vmatprep.subr.mxu0 %v4070
    %5168 = vmatpush1.msra.mxu0 %v4069
    %5169 = vmatprep.subr.mxu0 %v4077
    %5170 = vmatpush1.msra.mxu0 %v4076
    %5171 = vmatprep.subr.mxu0 %v4084
    %5172 = vmatpush1.msra.mxu0 %v4083
    %5173 = vmatprep.subr.mxu0 %v4091
    %5174 = vmatpush1.msra.mxu0 %v4090
    %5175 = vmatprep.subr.mxu0 %v4098
    %5176 = vmatpush1.msra.mxu0 %v4097
    %5177 = vmatprep.subr.mxu0 %v4105
    %5178 = vmatpush1.msra.mxu0 %v4104
    %5179 = vmatprep.subr.mxu0 %v4112
    %5180 = vmatpush1.msra.mxu0 %v4111
    %5181 = vmatprep.subr.mxu0 %v4119
    %5182 = vmatpush1.msra.mxu0 %v4118
    %5183 = vmatprep.subr.mxu0 %v4126
    %5184 = vmatpush1.msra.mxu0 %v4125
    %5185 = vmatprep.subr.mxu0 %v4133
    %5186 = vmatpush1.msra.mxu0 %v4132
    %5187 = vmatprep.subr.mxu0 %v4140
    %5188 = vmatpush1.msra.mxu0 %v4139
    %5189 = vmatprep.subr.mxu0 %v4147
    %5190 = vmatpush1.msra.mxu0 %v4146
    %5191 = vmatprep.subr.mxu0 %v4154
    %5192 = vmatpush1.msra.mxu0 %v4153
    %5193 = vmatprep.subr.mxu0 %v4161
    %5194 = vmatpush1.msra.mxu0 %v4160
    %5195 = vmatprep.subr.mxu0 %v4168
    %5196 = vmatpush1.msra.mxu0 %v4167
    %5197 = vmatprep.subr.mxu0 %v4175
    %5198 = vmatpush1.msra.mxu0 %v4174
    %5199 = vmatprep.subr.mxu0 %v4182
    %5200 = vmatpush1.msra.mxu0 %v4181
    %5201 = vmatprep.subr.mxu0 %v4189
    %5202 = vmatpush1.msra.mxu0 %v4188
    %5203 = vmatprep.subr.mxu0 %v4196
    %5204 = vmatpush1.msra.mxu0 %v4195
    %5205 = vmatprep.subr.mxu0 %v4203
    %5206 = vmatpush1.msra.mxu0 %v4202
    %5207 = vmatprep.subr.mxu0 %v4210
    %5208 = vmatpush1.msra.mxu0 %v4209
    %5209 = vmatprep.subr.mxu0 %v4217
    %5210 = vmatpush1.msra.mxu0 %v4216
    %5211 = vmatprep.subr.mxu0 %v4224
    %5212 = vmatpush1.msra.mxu0 %v4223
    %5213 = vmatprep.subr.mxu0 %v4231
    %5214 = vmatpush1.msra.mxu0 %v4230
    %5215 = vmatprep.subr.mxu0 %v4238
    %5216 = vmatpush1.msra.mxu0 %v4237
    %5217 = vmatprep.subr.mxu0 %v4245
    %5218 = vmatpush1.msra.mxu0 %v4244
    %5219 = vmatprep.subr.mxu0 %v4252
    %5220 = vmatpush1.msra.mxu0 %v4251
    %5221 = vmatprep.subr.mxu0 %v4259
    %5222 = vmatpush1.msra.mxu0 %v4258
    %5223 = vmatprep.subr.mxu0 %v4266
    %5224 = vmatpush1.msra.mxu0 %v4265
    %5225 = vmatprep.subr.mxu0 %v4273
    %5226 = vmatpush1.msra.mxu0 %v4272
    %5227 = vmatprep.subr.mxu0 %v4280
    %5228 = vmatpush1.msra.mxu0 %v4279
    %5229 = vmatprep.mubr.f32.mxu0 %v4054
    %5230 = vmatmul.mubr.f32.gmra.mrb[0].mxu0 %v4053
    %v5231 = vpop.f32.mrb[0].mxu0
    %v5232 = vadd.f32 %v4857, %v5231
    %v5233 = vpop.f32.mrb[0].mxu0
    %v5234 = vadd.f32 %v4861, %v5233
    %5235 = vdwg.mxu0
    %5236 = vmatprep.subr.mxu0 %v4287
    %5237 = vmatpush1.msra.mxu0 %v4286
    %5238 = vmatprep.subr.mxu0 %v4294
    %5239 = vmatpush1.msra.mxu0 %v4293
    %5240 = vmatprep.subr.mxu0 %v4301
    %5241 = vmatpush1.msra.mxu0 %v4300
    %5242 = vmatprep.subr.mxu0 %v4308
    %5243 = vmatpush1.msra.mxu0 %v4307
    %5244 = vmatprep.subr.mxu0 %v4315
    %5245 = vmatpush1.msra.mxu0 %v4314
    %5246 = vmatprep.subr.mxu0 %v4322
    %5247 = vmatpush1.msra.mxu0 %v4321
    %5248 = vmatprep.subr.mxu0 %v4329
    %5249 = vmatpush1.msra.mxu0 %v4328
    %5250 = vmatprep.subr.mxu0 %v4336
    %5251 = vmatpush1.msra.mxu0 %v4335
    %5252 = vmatprep.subr.mxu0 %v4343
    %5253 = vmatpush1.msra.mxu0 %v4342
    %5254 = vmatprep.subr.mxu0 %v4350
    %5255 = vmatpush1.msra.mxu0 %v4349
    %5256 = vmatprep.subr.mxu0 %v4357
    %5257 = vmatpush1.msra.mxu0 %v4356
    %5258 = vmatprep.subr.mxu0 %v4364
    %5259 = vmatpush1.msra.mxu0 %v4363
    %5260 = vmatprep.subr.mxu0 %v4371
    %5261 = vmatpush1.msra.mxu0 %v4370
    %5262 = vmatprep.subr.mxu0 %v4378
    %5263 = vmatpush1.msra.mxu0 %v4377
    %5264 = vmatprep.subr.mxu0 %v4385
    %5265 = vmatpush1.msra.mxu0 %v4384
    %5266 = vmatprep.subr.mxu0 %v4392
    %5267 = vmatpush1.msra.mxu0 %v4391
    %5268 = vmatprep.subr.mxu0 %v4399
    %5269 = vmatpush1.msra.mxu0 %v4398
    %5270 = vmatprep.subr.mxu0 %v4406
    %5271 = vmatpush1.msra.mxu0 %v4405
    %5272 = vmatprep.subr.mxu0 %v4413
    %5273 = vmatpush1.msra.mxu0 %v4412
    %5274 = vmatprep.subr.mxu0 %v4420
    %5275 = vmatpush1.msra.mxu0 %v4419
    %5276 = vmatprep.subr.mxu0 %v4427
    %5277 = vmatpush1.msra.mxu0 %v4426
    %5278 = vmatprep.subr.mxu0 %v4434
    %5279 = vmatpush1.msra.mxu0 %v4433
    %5280 = vmatprep.subr.mxu0 %v4441
    %5281 = vmatpush1.msra.mxu0 %v4440
    %5282 = vmatprep.subr.mxu0 %v4448
    %5283 = vmatpush1.msra.mxu0 %v4447
    %5284 = vmatprep.subr.mxu0 %v4455
    %5285 = vmatpush1.msra.mxu0 %v4454
    %5286 = vmatprep.subr.mxu0 %v4462
    %5287 = vmatpush1.msra.mxu0 %v4461
    %5288 = vmatprep.subr.mxu0 %v4469
    %5289 = vmatpush1.msra.mxu0 %v4468
    %5290 = vmatprep.subr.mxu0 %v4476
    %5291 = vmatpush1.msra.mxu0 %v4475
    %5292 = vmatprep.subr.mxu0 %v4483
    %5293 = vmatpush1.msra.mxu0 %v4482
    %5294 = vmatprep.subr.mxu0 %v4490
    %5295 = vmatpush1.msra.mxu0 %v4489
    %5296 = vmatprep.subr.mxu0 %v4497
    %5297 = vmatpush1.msra.mxu0 %v4496
    %5298 = vmatprep.subr.mxu0 %v4504
    %5299 = vmatpush1.msra.mxu0 %v4503
    %5300 = vmatprep.mubr.f32.mxu0 %v4056
    %5301 = vmatmul.mubr.f32.gmra.mrb[0].mxu0 %v4055
    %v5302 = vpop.f32.mrb[0].mxu0
    %v5303 = vadd.f32 %v5232, %v5302
    %v5304 = vpop.f32.mrb[0].mxu0
    %v5305 = vadd.f32 %v5234, %v5304
    %5306 = vdwg.mxu0
    %5307 = vmatprep.subr.mxu0 %v4511
    %5308 = vmatpush1.msra.mxu0 %v4510
    %5309 = vmatprep.subr.mxu0 %v4518
    %5310 = vmatpush1.msra.mxu0 %v4517
    %5311 = vmatprep.subr.mxu0 %v4525
    %5312 = vmatpush1.msra.mxu0 %v4524
    %5313 = vmatprep.subr.mxu0 %v4532
    %5314 = vmatpush1.msra.mxu0 %v4531
    %5315 = vmatprep.subr.mxu0 %v4539
    %5316 = vmatpush1.msra.mxu0 %v4538
    %5317 = vmatprep.subr.mxu0 %v4546
    %5318 = vmatpush1.msra.mxu0 %v4545
    %5319 = vmatprep.subr.mxu0 %v4553
    %5320 = vmatpush1.msra.mxu0 %v4552
    %5321 = vmatprep.subr.mxu0 %v4560
    %5322 = vmatpush1.msra.mxu0 %v4559
    %5323 = vmatprep.subr.mxu0 %v4567
    %5324 = vmatpush1.msra.mxu0 %v4566
    %5325 = vmatprep.subr.mxu0 %v4574
    %5326 = vmatpush1.msra.mxu0 %v4573
    %5327 = vmatprep.subr.mxu0 %v4581
    %5328 = vmatpush1.msra.mxu0 %v4580
    %5329 = vmatprep.subr.mxu0 %v4588
    %5330 = vmatpush1.msra.mxu0 %v4587
    %5331 = vmatprep.subr.mxu0 %v4595
    %5332 = vmatpush1.msra.mxu0 %v4594
    %5333 = vmatprep.subr.mxu0 %v4602
    %5334 = vmatpush1.msra.mxu0 %v4601
    %5335 = vmatprep.subr.mxu0 %v4609
    %5336 = vmatpush1.msra.mxu0 %v4608
    %5337 = vmatprep.subr.mxu0 %v4616
    %5338 = vmatpush1.msra.mxu0 %v4615
    %5339 = vmatprep.subr.mxu0 %v4623
    %5340 = vmatpush1.msra.mxu0 %v4622
    %5341 = vmatprep.subr.mxu0 %v4630
    %5342 = vmatpush1.msra.mxu0 %v4629
    %5343 = vmatprep.subr.mxu0 %v4637
    %5344 = vmatpush1.msra.mxu0 %v4636
    %5345 = vmatprep.subr.mxu0 %v4644
    %5346 = vmatpush1.msra.mxu0 %v4643
    %5347 = vmatprep.subr.mxu0 %v4651
    %5348 = vmatpush1.msra.mxu0 %v4650
    %5349 = vmatprep.subr.mxu0 %v4658
    %5350 = vmatpush1.msra.mxu0 %v4657
    %5351 = vmatprep.subr.mxu0 %v4665
    %5352 = vmatpush1.msra.mxu0 %v4664
    %5353 = vmatprep.subr.mxu0 %v4672
    %5354 = vmatpush1.msra.mxu0 %v4671
    %5355 = vmatprep.subr.mxu0 %v4679
    %5356 = vmatpush1.msra.mxu0 %v4678
    %5357 = vmatprep.subr.mxu0 %v4686
    %5358 = vmatpush1.msra.mxu0 %v4685
    %5359 = vmatprep.subr.mxu0 %v4693
    %5360 = vmatpush1.msra.mxu0 %v4692
    %5361 = vmatprep.subr.mxu0 %v4700
    %5362 = vmatpush1.msra.mxu0 %v4699
    %5363 = vmatprep.subr.mxu0 %v4707
    %5364 = vmatpush1.msra.mxu0 %v4706
    %5365 = vmatprep.subr.mxu0 %v4714
    %5366 = vmatpush1.msra.mxu0 %v4713
    %5367 = vmatprep.subr.mxu0 %v4721
    %5368 = vmatpush1.msra.mxu0 %v4720
    %5369 = vmatprep.subr.mxu0 %v4728
    %5370 = vmatpush1.msra.mxu0 %v4727
    %5371 = vmatprep.mubr.f32.mxu0 %v4058
    %5372 = vmatmul.mubr.f32.gmra.mrb[0].mxu0 %v4057
    %v5373 = vpop.f32.mrb[0].mxu0
    %v5374 = vadd.f32 %v5303, %v5373
    %v5375 = vpop.f32.mrb[0].mxu0
    %v5376 = vadd.f32 %v5305, %v5375
    %5377 = vdwg.mxu0
    %5378 = vmatprep.subr.mxu0 %v4735
    %5379 = vmatpush1.msra.mxu0 %v4734
    %5380 = vmatprep.subr.mxu0 %v4742
    %5381 = vmatpush1.msra.mxu0 %v4741
    %5382 = vmatprep.subr.mxu0 %v4749
    %5383 = vmatpush1.msra.mxu0 %v4748
    %5384 = vmatprep.subr.mxu0 %v4756
    %5385 = vmatpush1.msra.mxu0 %v4755
    %5386 = vmatprep.subr.mxu0 %v4763
    %5387 = vmatpush1.msra.mxu0 %v4762
    %5388 = vmatprep.subr.mxu0 %v4770
    %5389 = vmatpush1.msra.mxu0 %v4769
    %5390 = vmatprep.subr.mxu0 %v4777
    %5391 = vmatpush1.msra.mxu0 %v4776
    %5392 = vmatprep.subr.mxu0 %v4784
    %5393 = vmatpush1.msra.mxu0 %v4783
    %5394 = vmatprep.subr.mxu0 %v4791
    %5395 = vmatpush1.msra.mxu0 %v4790
    %5396 = vmatprep.subr.mxu0 %v4798
    %5397 = vmatpush1.msra.mxu0 %v4797
    %5398 = vmatprep.subr.mxu0 %v4805
    %5399 = vmatpush1.msra.mxu0 %v4804
    %5400 = vmatprep.subr.mxu0 %v4812
    %5401 = vmatpush1.msra.mxu0 %v4811
    %5402 = vmatprep.subr.mxu0 %v4819
    %5403 = vmatpush1.msra.mxu0 %v4818
    %5404 = vmatprep.subr.mxu0 %v4826
    %5405 = vmatpush1.msra.mxu0 %v4825
    %5406 = vmatprep.subr.mxu0 %v4833
    %5407 = vmatpush1.msra.mxu0 %v4832
    %5408 = vmatprep.subr.mxu0 %v4840
    %5409 = vmatpush1.msra.mxu0 %v4839
    %5410 = vmatprep.subr.mxu0 0.0
    %5411 = vmatpush1.msra.mxu0 0.0
    %5412 = vmatprep.subr.mxu0 0.0
    %5413 = vmatpush1.msra.mxu0 0.0
    %5414 = vmatprep.subr.mxu0 0.0
    %5415 = vmatpush1.msra.mxu0 0.0
    %5416 = vmatprep.subr.mxu0 0.0
    %5417 = vmatpush1.msra.mxu0 0.0
    %5418 = vmatprep.subr.mxu0 0.0
    %5419 = vmatpush1.msra.mxu0 0.0
    %5420 = vmatprep.subr.mxu0 0.0
    %5421 = vmatpush1.msra.mxu0 0.0
    %5422 = vmatprep.subr.mxu0 0.0
    %5423 = vmatpush1.msra.mxu0 0.0
    %5424 = vmatprep.subr.mxu0 0.0
    %5425 = vmatpush1.msra.mxu0 0.0
    %5426 = vmatprep.subr.mxu0 0.0
    %5427 = vmatpush1.msra.mxu0 0.0
    %5428 = vmatprep.subr.mxu0 0.0
    %5429 = vmatpush1.msra.mxu0 0.0
    %5430 = vmatprep.subr.mxu0 0.0
    %5431 = vmatpush1.msra.mxu0 0.0
    %5432 = vmatprep.subr.mxu0 0.0
    %5433 = vmatpush1.msra.mxu0 0.0
    %5434 = vmatprep.subr.mxu0 0.0
    %5435 = vmatpush1.msra.mxu0 0.0
    %5436 = vmatprep.subr.mxu0 0.0
    %5437 = vmatpush1.msra.mxu0 0.0
    %5438 = vmatprep.subr.mxu0 0.0
    %5439 = vmatpush1.msra.mxu0 0.0
    %5440 = vmatprep.subr.mxu0 0.0
    %5441 = vmatpush1.msra.mxu0 0.0
    %5442 = vmatprep.mubr.f32.mxu0 0.0
    %5443 = vmatmul.mubr.f32.gmra.mrb[0].mxu0 %v4059
    %v5444 = vpop.f32.mrb[0].mxu0
    %v5445 = vadd.f32 %v5374, %v5444
    %v5446 = vpop.f32.mrb[0].mxu0
    %v5447 = vadd.f32 %v5376, %v5446
    %5448 = vdwg.mxu0
    %5449 = vmatprep.subr.mxu0 %v4065
    %5450 = vmatpush1.msra.mxu0 %v4064
    %5451 = vmatprep.subr.mxu0 %v4072
    %5452 = vmatpush1.msra.mxu0 %v4071
    %5453 = vmatprep.subr.mxu0 %v4079
    %5454 = vmatpush1.msra.mxu0 %v4078
    %5455 = vmatprep.subr.mxu0 %v4086
    %5456 = vmatpush1.msra.mxu0 %v4085
    %5457 = vmatprep.subr.mxu0 %v4093
    %5458 = vmatpush1.msra.mxu0 %v4092
    %5459 = vmatprep.subr.mxu0 %v4100
    %5460 = vmatpush1.msra.mxu0 %v4099
    %5461 = vmatprep.subr.mxu0 %v4107
    %5462 = vmatpush1.msra.mxu0 %v4106
    %5463 = vmatprep.subr.mxu0 %v4114
    %5464 = vmatpush1.msra.mxu0 %v4113
    %5465 = vmatprep.subr.mxu0 %v4121
    %5466 = vmatpush1.msra.mxu0 %v4120
    %5467 = vmatprep.subr.mxu0 %v4128
    %5468 = vmatpush1.msra.mxu0 %v4127
    %5469 = vmatprep.subr.mxu0 %v4135
    %5470 = vmatpush1.msra.mxu0 %v4134
    %5471 = vmatprep.subr.mxu0 %v4142
    %5472 = vmatpush1.msra.mxu0 %v4141
    %5473 = vmatprep.subr.mxu0 %v4149
    %5474 = vmatpush1.msra.mxu0 %v4148
    %5475 = vmatprep.subr.mxu0 %v4156
    %5476 = vmatpush1.msra.mxu0 %v4155
    %5477 = vmatprep.subr.mxu0 %v4163
    %5478 = vmatpush1.msra.mxu0 %v4162
    %5479 = vmatprep.subr.mxu0 %v4170
    %5480 = vmatpush1.msra.mxu0 %v4169
    %5481 = vmatprep.subr.mxu0 %v4177
    %5482 = vmatpush1.msra.mxu0 %v4176
    %5483 = vmatprep.subr.mxu0 %v4184
    %5484 = vmatpush1.msra.mxu0 %v4183
    %5485 = vmatprep.subr.mxu0 %v4191
    %5486 = vmatpush1.msra.mxu0 %v4190
    %5487 = vmatprep.subr.mxu0 %v4198
    %5488 = vmatpush1.msra.mxu0 %v4197
    %5489 = vmatprep.subr.mxu0 %v4205
    %5490 = vmatpush1.msra.mxu0 %v4204
    %5491 = vmatprep.subr.mxu0 %v4212
    %5492 = vmatpush1.msra.mxu0 %v4211
    %5493 = vmatprep.subr.mxu0 %v4219
    %5494 = vmatpush1.msra.mxu0 %v4218
    %5495 = vmatprep.subr.mxu0 %v4226
    %5496 = vmatpush1.msra.mxu0 %v4225
    %5497 = vmatprep.subr.mxu0 %v4233
    %5498 = vmatpush1.msra.mxu0 %v4232
    %5499 = vmatprep.subr.mxu0 %v4240
    %5500 = vmatpush1.msra.mxu0 %v4239
    %5501 = vmatprep.subr.mxu0 %v4247
    %5502 = vmatpush1.msra.mxu0 %v4246
    %5503 = vmatprep.subr.mxu0 %v4254
    %5504 = vmatpush1.msra.mxu0 %v4253
    %5505 = vmatprep.subr.mxu0 %v4261
    %5506 = vmatpush1.msra.mxu0 %v4260
    %5507 = vmatprep.subr.mxu0 %v4268
    %5508 = vmatpush1.msra.mxu0 %v4267
    %5509 = vmatprep.subr.mxu0 %v4275
    %5510 = vmatpush1.msra.mxu0 %v4274
    %5511 = vmatprep.subr.mxu0 %v4282
    %5512 = vmatpush1.msra.mxu0 %v4281
    %5513 = vmatprep.mubr.f32.mxu0 %v4054
    %5514 = vmatmul.mubr.f32.gmra.mrb[0].mxu0 %v4053
    %v5515 = vpop.f32.mrb[0].mxu0
    %v5516 = vadd.f32 %v4865, %v5515
    %v5517 = vpop.f32.mrb[0].mxu0
    %v5518 = vadd.f32 %v4869, %v5517
    %5519 = vdwg.mxu0
    %5520 = vmatprep.subr.mxu0 %v4289
    %5521 = vmatpush1.msra.mxu0 %v4288
    %5522 = vmatprep.subr.mxu0 %v4296
    %5523 = vmatpush1.msra.mxu0 %v4295
    %5524 = vmatprep.subr.mxu0 %v4303
    %5525 = vmatpush1.msra.mxu0 %v4302
    %5526 = vmatprep.subr.mxu0 %v4310
    %5527 = vmatpush1.msra.mxu0 %v4309
    %5528 = vmatprep.subr.mxu0 %v4317
    %5529 = vmatpush1.msra.mxu0 %v4316
    %5530 = vmatprep.subr.mxu0 %v4324
    %5531 = vmatpush1.msra.mxu0 %v4323
    %5532 = vmatprep.subr.mxu0 %v4331
    %5533 = vmatpush1.msra.mxu0 %v4330
    %5534 = vmatprep.subr.mxu0 %v4338
    %5535 = vmatpush1.msra.mxu0 %v4337
    %5536 = vmatprep.subr.mxu0 %v4345
    %5537 = vmatpush1.msra.mxu0 %v4344
    %5538 = vmatprep.subr.mxu0 %v4352
    %5539 = vmatpush1.msra.mxu0 %v4351
    %5540 = vmatprep.subr.mxu0 %v4359
    %5541 = vmatpush1.msra.mxu0 %v4358
    %5542 = vmatprep.subr.mxu0 %v4366
    %5543 = vmatpush1.msra.mxu0 %v4365
    %5544 = vmatprep.subr.mxu0 %v4373
    %5545 = vmatpush1.msra.mxu0 %v4372
    %5546 = vmatprep.subr.mxu0 %v4380
    %5547 = vmatpush1.msra.mxu0 %v4379
    %5548 = vmatprep.subr.mxu0 %v4387
    %5549 = vmatpush1.msra.mxu0 %v4386
    %5550 = vmatprep.subr.mxu0 %v4394
    %5551 = vmatpush1.msra.mxu0 %v4393
    %5552 = vmatprep.subr.mxu0 %v4401
    %5553 = vmatpush1.msra.mxu0 %v4400
    %5554 = vmatprep.subr.mxu0 %v4408
    %5555 = vmatpush1.msra.mxu0 %v4407
    %5556 = vmatprep.subr.mxu0 %v4415
    %5557 = vmatpush1.msra.mxu0 %v4414
    %5558 = vmatprep.subr.mxu0 %v4422
    %5559 = vmatpush1.msra.mxu0 %v4421
    %5560 = vmatprep.subr.mxu0 %v4429
    %5561 = vmatpush1.msra.mxu0 %v4428
    %5562 = vmatprep.subr.mxu0 %v4436
    %5563 = vmatpush1.msra.mxu0 %v4435
    %5564 = vmatprep.subr.mxu0 %v4443
    %5565 = vmatpush1.msra.mxu0 %v4442
    %5566 = vmatprep.subr.mxu0 %v4450
    %5567 = vmatpush1.msra.mxu0 %v4449
    %5568 = vmatprep.subr.mxu0 %v4457
    %5569 = vmatpush1.msra.mxu0 %v4456
    %5570 = vmatprep.subr.mxu0 %v4464
    %5571 = vmatpush1.msra.mxu0 %v4463
    %5572 = vmatprep.subr.mxu0 %v4471
    %5573 = vmatpush1.msra.mxu0 %v4470
    %5574 = vmatprep.subr.mxu0 %v4478
    %5575 = vmatpush1.msra.mxu0 %v4477
    %5576 = vmatprep.subr.mxu0 %v4485
    %5577 = vmatpush1.msra.mxu0 %v4484
    %5578 = vmatprep.subr.mxu0 %v4492
    %5579 = vmatpush1.msra.mxu0 %v4491
    %5580 = vmatprep.subr.mxu0 %v4499
    %5581 = vmatpush1.msra.mxu0 %v4498
    %5582 = vmatprep.subr.mxu0 %v4506
    %5583 = vmatpush1.msra.mxu0 %v4505
    %5584 = vmatprep.mubr.f32.mxu0 %v4056
    %5585 = vmatmul.mubr.f32.gmra.mrb[0].mxu0 %v4055
    %v5586 = vpop.f32.mrb[0].mxu0
    %v5587 = vadd.f32 %v5516, %v5586
    %v5588 = vpop.f32.mrb[0].mxu0
    %v5589 = vadd.f32 %v5518, %v5588
    %5590 = vdwg.mxu0
    %5591 = vmatprep.subr.mxu0 %v4513
    %5592 = vmatpush1.msra.mxu0 %v4512
    %5593 = vmatprep.subr.mxu0 %v4520
    %5594 = vmatpush1.msra.mxu0 %v4519
    %5595 = vmatprep.subr.mxu0 %v4527
    %5596 = vmatpush1.msra.mxu0 %v4526
    %5597 = vmatprep.subr.mxu0 %v4534
    %5598 = vmatpush1.msra.mxu0 %v4533
    %5599 = vmatprep.subr.mxu0 %v4541
    %5600 = vmatpush1.msra.mxu0 %v4540
    %5601 = vmatprep.subr.mxu0 %v4548
    %5602 = vmatpush1.msra.mxu0 %v4547
    %5603 = vmatprep.subr.mxu0 %v4555
    %5604 = vmatpush1.msra.mxu0 %v4554
    %5605 = vmatprep.subr.mxu0 %v4562
    %5606 = vmatpush1.msra.mxu0 %v4561
    %5607 = vmatprep.subr.mxu0 %v4569
    %5608 = vmatpush1.msra.mxu0 %v4568
    %5609 = vmatprep.subr.mxu0 %v4576
    %5610 = vmatpush1.msra.mxu0 %v4575
    %5611 = vmatprep.subr.mxu0 %v4583
    %5612 = vmatpush1.msra.mxu0 %v4582
    %5613 = vmatprep.subr.mxu0 %v4590
    %5614 = vmatpush1.msra.mxu0 %v4589
    %5615 = vmatprep.subr.mxu0 %v4597
    %5616 = vmatpush1.msra.mxu0 %v4596
    %5617 = vmatprep.subr.mxu0 %v4604
    %5618 = vmatpush1.msra.mxu0 %v4603
    %5619 = vmatprep.subr.mxu0 %v4611
    %5620 = vmatpush1.msra.mxu0 %v4610
    %5621 = vmatprep.subr.mxu0 %v4618
    %5622 = vmatpush1.msra.mxu0 %v4617
    %5623 = vmatprep.subr.mxu0 %v4625
    %5624 = vmatpush1.msra.mxu0 %v4624
    %5625 = vmatprep.subr.mxu0 %v4632
    %5626 = vmatpush1.msra.mxu0 %v4631
    %5627 = vmatprep.subr.mxu0 %v4639
    %5628 = vmatpush1.msra.mxu0 %v4638
    %5629 = vmatprep.subr.mxu0 %v4646
    %5630 = vmatpush1.msra.mxu0 %v4645
    %5631 = vmatprep.subr.mxu0 %v4653
    %5632 = vmatpush1.msra.mxu0 %v4652
    %5633 = vmatprep.subr.mxu0 %v4660
    %5634 = vmatpush1.msra.mxu0 %v4659
    %5635 = vmatprep.subr.mxu0 %v4667
    %5636 = vmatpush1.msra.mxu0 %v4666
    %5637 = vmatprep.subr.mxu0 %v4674
    %5638 = vmatpush1.msra.mxu0 %v4673
    %5639 = vmatprep.subr.mxu0 %v4681
    %5640 = vmatpush1.msra.mxu0 %v4680
    %5641 = vmatprep.subr.mxu0 %v4688
    %5642 = vmatpush1.msra.mxu0 %v4687
    %5643 = vmatprep.subr.mxu0 %v4695
    %5644 = vmatpush1.msra.mxu0 %v4694
    %5645 = vmatprep.subr.mxu0 %v4702
    %5646 = vmatpush1.msra.mxu0 %v4701
    %5647 = vmatprep.subr.mxu0 %v4709
    %5648 = vmatpush1.msra.mxu0 %v4708
    %5649 = vmatprep.subr.mxu0 %v4716
    %5650 = vmatpush1.msra.mxu0 %v4715
    %5651 = vmatprep.subr.mxu0 %v4723
    %5652 = vmatpush1.msra.mxu0 %v4722
    %5653 = vmatprep.subr.mxu0 %v4730
    %5654 = vmatpush1.msra.mxu0 %v4729
    %5655 = vmatprep.mubr.f32.mxu0 %v4058
    %5656 = vmatmul.mubr.f32.gmra.mrb[0].mxu0 %v4057
    %v5657 = vpop.f32.mrb[0].mxu0
    %v5658 = vadd.f32 %v5587, %v5657
    %v5659 = vpop.f32.mrb[0].mxu0
    %v5660 = vadd.f32 %v5589, %v5659
    %5661 = vdwg.mxu0
    %5662 = vmatprep.subr.mxu0 %v4737
    %5663 = vmatpush1.msra.mxu0 %v4736
    %5664 = vmatprep.subr.mxu0 %v4744
    %5665 = vmatpush1.msra.mxu0 %v4743
    %5666 = vmatprep.subr.mxu0 %v4751
    %5667 = vmatpush1.msra.mxu0 %v4750
    %5668 = vmatprep.subr.mxu0 %v4758
    %5669 = vmatpush1.msra.mxu0 %v4757
    %5670 = vmatprep.subr.mxu0 %v4765
    %5671 = vmatpush1.msra.mxu0 %v4764
    %5672 = vmatprep.subr.mxu0 %v4772
    %5673 = vmatpush1.msra.mxu0 %v4771
    %5674 = vmatprep.subr.mxu0 %v4779
    %5675 = vmatpush1.msra.mxu0 %v4778
    %5676 = vmatprep.subr.mxu0 %v4786
    %5677 = vmatpush1.msra.mxu0 %v4785
    %5678 = vmatprep.subr.mxu0 %v4793
    %5679 = vmatpush1.msra.mxu0 %v4792
    %5680 = vmatprep.subr.mxu0 %v4800
    %5681 = vmatpush1.msra.mxu0 %v4799
    %5682 = vmatprep.subr.mxu0 %v4807
    %5683 = vmatpush1.msra.mxu0 %v4806
    %5684 = vmatprep.subr.mxu0 %v4814
    %5685 = vmatpush1.msra.mxu0 %v4813
    %5686 = vmatprep.subr.mxu0 %v4821
    %5687 = vmatpush1.msra.mxu0 %v4820
    %5688 = vmatprep.subr.mxu0 %v4828
    %5689 = vmatpush1.msra.mxu0 %v4827
    %5690 = vmatprep.subr.mxu0 %v4835
    %5691 = vmatpush1.msra.mxu0 %v4834
    %5692 = vmatprep.subr.mxu0 %v4842
    %5693 = vmatpush1.msra.mxu0 %v4841
    %5694 = vmatprep.subr.mxu0 0.0
    %5695 = vmatpush1.msra.mxu0 0.0
    %5696 = vmatprep.subr.mxu0 0.0
    %5697 = vmatpush1.msra.mxu0 0.0
    %5698 = vmatprep.subr.mxu0 0.0
    %5699 = vmatpush1.msra.mxu0 0.0
    %5700 = vmatprep.subr.mxu0 0.0
    %5701 = vmatpush1.msra.mxu0 0.0
    %5702 = vmatprep.subr.mxu0 0.0
    %5703 = vmatpush1.msra.mxu0 0.0
    %5704 = vmatprep.subr.mxu0 0.0
    %5705 = vmatpush1.msra.mxu0 0.0
    %5706 = vmatprep.subr.mxu0 0.0
    %5707 = vmatpush1.msra.mxu0 0.0
    %5708 = vmatprep.subr.mxu0 0.0
    %5709 = vmatpush1.msra.mxu0 0.0
    %5710 = vmatprep.subr.mxu0 0.0
    %5711 = vmatpush1.msra.mxu0 0.0
    %5712 = vmatprep.subr.mxu0 0.0
    %5713 = vmatpush1.msra.mxu0 0.0
    %5714 = vmatprep.subr.mxu0 0.0
    %5715 = vmatpush1.msra.mxu0 0.0
    %5716 = vmatprep.subr.mxu0 0.0
    %5717 = vmatpush1.msra.mxu0 0.0
    %5718 = vmatprep.subr.mxu0 0.0
    %5719 = vmatpush1.msra.mxu0 0.0
    %5720 = vmatprep.subr.mxu0 0.0
    %5721 = vmatpush1.msra.mxu0 0.0
    %5722 = vmatprep.subr.mxu0 0.0
    %5723 = vmatpush1.msra.mxu0 0.0
    %5724 = vmatprep.subr.mxu0 0.0
    %5725 = vmatpush1.msra.mxu0 0.0
    %5726 = vmatprep.mubr.f32.mxu0 0.0
    %5727 = vmatmul.mubr.f32.gmra.mrb[0].mxu0 %v4059
    %v5728 = vpop.f32.mrb[0].mxu0
    %v5729 = vadd.f32 %v5658, %v5728
    %v5730 = vpop.f32.mrb[0].mxu0
    %v5731 = vadd.f32 %v5660, %v5730
    %5732 = vdwg.mxu0
    %5733 = vmatprep.subr.mxu0 0.0
    %5734 = vmatpush1.msra.mxu0 %v4066
    %5735 = vmatprep.subr.mxu0 0.0
    %5736 = vmatpush1.msra.mxu0 %v4073
    %5737 = vmatprep.subr.mxu0 0.0
    %5738 = vmatpush1.msra.mxu0 %v4080
    %5739 = vmatprep.subr.mxu0 0.0
    %5740 = vmatpush1.msra.mxu0 %v4087
    %5741 = vmatprep.subr.mxu0 0.0
    %5742 = vmatpush1.msra.mxu0 %v4094
    %5743 = vmatprep.subr.mxu0 0.0
    %5744 = vmatpush1.msra.mxu0 %v4101
    %5745 = vmatprep.subr.mxu0 0.0
    %5746 = vmatpush1.msra.mxu0 %v4108
    %5747 = vmatprep.subr.mxu0 0.0
    %5748 = vmatpush1.msra.mxu0 %v4115
    %5749 = vmatprep.subr.mxu0 0.0
    %5750 = vmatpush1.msra.mxu0 %v4122
    %5751 = vmatprep.subr.mxu0 0.0
    %5752 = vmatpush1.msra.mxu0 %v4129
    %5753 = vmatprep.subr.mxu0 0.0
    %5754 = vmatpush1.msra.mxu0 %v4136
    %5755 = vmatprep.subr.mxu0 0.0
    %5756 = vmatpush1.msra.mxu0 %v4143
    %5757 = vmatprep.subr.mxu0 0.0
    %5758 = vmatpush1.msra.mxu0 %v4150
    %5759 = vmatprep.subr.mxu0 0.0
    %5760 = vmatpush1.msra.mxu0 %v4157
    %5761 = vmatprep.subr.mxu0 0.0
    %5762 = vmatpush1.msra.mxu0 %v4164
    %5763 = vmatprep.subr.mxu0 0.0
    %5764 = vmatpush1.msra.mxu0 %v4171
    %5765 = vmatprep.subr.mxu0 0.0
    %5766 = vmatpush1.msra.mxu0 %v4178
    %5767 = vmatprep.subr.mxu0 0.0
    %5768 = vmatpush1.msra.mxu0 %v4185
    %5769 = vmatprep.subr.mxu0 0.0
    %5770 = vmatpush1.msra.mxu0 %v4192
    %5771 = vmatprep.subr.mxu0 0.0
    %5772 = vmatpush1.msra.mxu0 %v4199
    %5773 = vmatprep.subr.mxu0 0.0
    %5774 = vmatpush1.msra.mxu0 %v4206
    %5775 = vmatprep.subr.mxu0 0.0
    %5776 = vmatpush1.msra.mxu0 %v4213
    %5777 = vmatprep.subr.mxu0 0.0
    %5778 = vmatpush1.msra.mxu0 %v4220
    %5779 = vmatprep.subr.mxu0 0.0
    %5780 = vmatpush1.msra.mxu0 %v4227
    %5781 = vmatprep.subr.mxu0 0.0
    %5782 = vmatpush1.msra.mxu0 %v4234
    %5783 = vmatprep.subr.mxu0 0.0
    %5784 = vmatpush1.msra.mxu0 %v4241
    %5785 = vmatprep.subr.mxu0 0.0
    %5786 = vmatpush1.msra.mxu0 %v4248
    %5787 = vmatprep.subr.mxu0 0.0
    %5788 = vmatpush1.msra.mxu0 %v4255
    %5789 = vmatprep.subr.mxu0 0.0
    %5790 = vmatpush1.msra.mxu0 %v4262
    %5791 = vmatprep.subr.mxu0 0.0
    %5792 = vmatpush1.msra.mxu0 %v4269
    %5793 = vmatprep.subr.mxu0 0.0
    %5794 = vmatpush1.msra.mxu0 %v4276
    %5795 = vmatprep.subr.mxu0 0.0
    %5796 = vmatpush1.msra.mxu0 %v4283
    %5797 = vmatprep.mubr.f32.mxu0 %v4054
    %5798 = vmatmul.mubr.f32.gmra.mrb[0].mxu0 %v4053
    %v5799 = vpop.f32.mrb[0].mxu0
    %v5800 = vadd.f32 %v4873, %v5799
    %v5801 = vpop.f32.mrb[0].mxu0
    %5802 = vdwg.mxu0
    %5803 = vmatprep.subr.mxu0 0.0
    %5804 = vmatpush1.msra.mxu0 %v4290
    %5805 = vmatprep.subr.mxu0 0.0
    %5806 = vmatpush1.msra.mxu0 %v4297
    %5807 = vmatprep.subr.mxu0 0.0
    %5808 = vmatpush1.msra.mxu0 %v4304
    %5809 = vmatprep.subr.mxu0 0.0
    %5810 = vmatpush1.msra.mxu0 %v4311
    %5811 = vmatprep.subr.mxu0 0.0
    %5812 = vmatpush1.msra.mxu0 %v4318
    %5813 = vmatprep.subr.mxu0 0.0
    %5814 = vmatpush1.msra.mxu0 %v4325
    %5815 = vmatprep.subr.mxu0 0.0
    %5816 = vmatpush1.msra.mxu0 %v4332
    %5817 = vmatprep.subr.mxu0 0.0
    %5818 = vmatpush1.msra.mxu0 %v4339
    %5819 = vmatprep.subr.mxu0 0.0
    %5820 = vmatpush1.msra.mxu0 %v4346
    %5821 = vmatprep.subr.mxu0 0.0
    %5822 = vmatpush1.msra.mxu0 %v4353
    %5823 = vmatprep.subr.mxu0 0.0
    %5824 = vmatpush1.msra.mxu0 %v4360
    %5825 = vmatprep.subr.mxu0 0.0
    %5826 = vmatpush1.msra.mxu0 %v4367
    %5827 = vmatprep.subr.mxu0 0.0
    %5828 = vmatpush1.msra.mxu0 %v4374
    %5829 = vmatprep.subr.mxu0 0.0
    %5830 = vmatpush1.msra.mxu0 %v4381
    %5831 = vmatprep.subr.mxu0 0.0
    %5832 = vmatpush1.msra.mxu0 %v4388
    %5833 = vmatprep.subr.mxu0 0.0
    %5834 = vmatpush1.msra.mxu0 %v4395
    %5835 = vmatprep.subr.mxu0 0.0
    %5836 = vmatpush1.msra.mxu0 %v4402
    %5837 = vmatprep.subr.mxu0 0.0
    %5838 = vmatpush1.msra.mxu0 %v4409
    %5839 = vmatprep.subr.mxu0 0.0
    %5840 = vmatpush1.msra.mxu0 %v4416
    %5841 = vmatprep.subr.mxu0 0.0
    %5842 = vmatpush1.msra.mxu0 %v4423
    %5843 = vmatprep.subr.mxu0 0.0
    %5844 = vmatpush1.msra.mxu0 %v4430
    %5845 = vmatprep.subr.mxu0 0.0
    %5846 = vmatpush1.msra.mxu0 %v4437
    %5847 = vmatprep.subr.mxu0 0.0
    %5848 = vmatpush1.msra.mxu0 %v4444
    %5849 = vmatprep.subr.mxu0 0.0
    %5850 = vmatpush1.msra.mxu0 %v4451
    %5851 = vmatprep.subr.mxu0 0.0
    %5852 = vmatpush1.msra.mxu0 %v4458
    %5853 = vmatprep.subr.mxu0 0.0
    %5854 = vmatpush1.msra.mxu0 %v4465
    %5855 = vmatprep.subr.mxu0 0.0
    %5856 = vmatpush1.msra.mxu0 %v4472
    %5857 = vmatprep.subr.mxu0 0.0
    %5858 = vmatpush1.msra.mxu0 %v4479
    %5859 = vmatprep.subr.mxu0 0.0
    %5860 = vmatpush1.msra.mxu0 %v4486
    %5861 = vmatprep.subr.mxu0 0.0
    %5862 = vmatpush1.msra.mxu0 %v4493
    %5863 = vmatprep.subr.mxu0 0.0
    %5864 = vmatpush1.msra.mxu0 %v4500
    %5865 = vmatprep.subr.mxu0 0.0
    %5866 = vmatpush1.msra.mxu0 %v4507
    %5867 = vmatprep.mubr.f32.mxu0 %v4056
    %5868 = vmatmul.mubr.f32.gmra.mrb[0].mxu0 %v4055
    %v5869 = vpop.f32.mrb[0].mxu0
    %v5870 = vadd.f32 %v5800, %v5869
    %v5871 = vpop.f32.mrb[0].mxu0
    %5872 = vdwg.mxu0
    %5873 = vmatprep.subr.mxu0 0.0
    %5874 = vmatpush1.msra.mxu0 %v4514
    %5875 = vmatprep.subr.mxu0 0.0
    %5876 = vmatpush1.msra.mxu0 %v4521
    %5877 = vmatprep.subr.mxu0 0.0
    %5878 = vmatpush1.msra.mxu0 %v4528
    %5879 = vmatprep.subr.mxu0 0.0
    %5880 = vmatpush1.msra.mxu0 %v4535
    %5881 = vmatprep.subr.mxu0 0.0
    %5882 = vmatpush1.msra.mxu0 %v4542
    %5883 = vmatprep.subr.mxu0 0.0
    %5884 = vmatpush1.msra.mxu0 %v4549
    %5885 = vmatprep.subr.mxu0 0.0
    %5886 = vmatpush1.msra.mxu0 %v4556
    %5887 = vmatprep.subr.mxu0 0.0
    %5888 = vmatpush1.msra.mxu0 %v4563
    %5889 = vmatprep.subr.mxu0 0.0
    %5890 = vmatpush1.msra.mxu0 %v4570
    %5891 = vmatprep.subr.mxu0 0.0
    %5892 = vmatpush1.msra.mxu0 %v4577
    %5893 = vmatprep.subr.mxu0 0.0
    %5894 = vmatpush1.msra.mxu0 %v4584
    %5895 = vmatprep.subr.mxu0 0.0
    %5896 = vmatpush1.msra.mxu0 %v4591
    %5897 = vmatprep.subr.mxu0 0.0
    %5898 = vmatpush1.msra.mxu0 %v4598
    %5899 = vmatprep.subr.mxu0 0.0
    %5900 = vmatpush1.msra.mxu0 %v4605
    %5901 = vmatprep.subr.mxu0 0.0
    %5902 = vmatpush1.msra.mxu0 %v4612
    %5903 = vmatprep.subr.mxu0 0.0
    %5904 = vmatpush1.msra.mxu0 %v4619
    %5905 = vmatprep.subr.mxu0 0.0
    %5906 = vmatpush1.msra.mxu0 %v4626
    %5907 = vmatprep.subr.mxu0 0.0
    %5908 = vmatpush1.msra.mxu0 %v4633
    %5909 = vmatprep.subr.mxu0 0.0
    %5910 = vmatpush1.msra.mxu0 %v4640
    %5911 = vmatprep.subr.mxu0 0.0
    %5912 = vmatpush1.msra.mxu0 %v4647
    %5913 = vmatprep.subr.mxu0 0.0
    %5914 = vmatpush1.msra.mxu0 %v4654
    %5915 = vmatprep.subr.mxu0 0.0
    %5916 = vmatpush1.msra.mxu0 %v4661
    %5917 = vmatprep.subr.mxu0 0.0
    %5918 = vmatpush1.msra.mxu0 %v4668
    %5919 = vmatprep.subr.mxu0 0.0
    %5920 = vmatpush1.msra.mxu0 %v4675
    %5921 = vmatprep.subr.mxu0 0.0
    %5922 = vmatpush1.msra.mxu0 %v4682
    %5923 = vmatprep.subr.mxu0 0.0
    %5924 = vmatpush1.msra.mxu0 %v4689
    %5925 = vmatprep.subr.mxu0 0.0
    %5926 = vmatpush1.msra.mxu0 %v4696
    %5927 = vmatprep.subr.mxu0 0.0
    %5928 = vmatpush1.msra.mxu0 %v4703
    %5929 = vmatprep.subr.mxu0 0.0
    %5930 = vmatpush1.msra.mxu0 %v4710
    %5931 = vmatprep.subr.mxu0 0.0
    %5932 = vmatpush1.msra.mxu0 %v4717
    %5933 = vmatprep.subr.mxu0 0.0
    %5934 = vmatpush1.msra.mxu0 %v4724
    %5935 = vmatprep.subr.mxu0 0.0
    %5936 = vmatpush1.msra.mxu0 %v4731
    %5937 = vmatprep.mubr.f32.mxu0 %v4058
    %5938 = vmatmul.mubr.f32.gmra.mrb[0].mxu0 %v4057
    %v5939 = vpop.f32.mrb[0].mxu0
    %v5940 = vadd.f32 %v5870, %v5939
    %v5941 = vpop.f32.mrb[0].mxu0
    %5942 = vdwg.mxu0
    %5943 = vmatprep.subr.mxu0 0.0
    %5944 = vmatpush1.msra.mxu0 %v4738
    %5945 = vmatprep.subr.mxu0 0.0
    %5946 = vmatpush1.msra.mxu0 %v4745
    %5947 = vmatprep.subr.mxu0 0.0
    %5948 = vmatpush1.msra.mxu0 %v4752
    %5949 = vmatprep.subr.mxu0 0.0
    %5950 = vmatpush1.msra.mxu0 %v4759
    %5951 = vmatprep.subr.mxu0 0.0
    %5952 = vmatpush1.msra.mxu0 %v4766
    %5953 = vmatprep.subr.mxu0 0.0
    %5954 = vmatpush1.msra.mxu0 %v4773
    %5955 = vmatprep.subr.mxu0 0.0
    %5956 = vmatpush1.msra.mxu0 %v4780
    %5957 = vmatprep.subr.mxu0 0.0
    %5958 = vmatpush1.msra.mxu0 %v4787
    %5959 = vmatprep.subr.mxu0 0.0
    %5960 = vmatpush1.msra.mxu0 %v4794
    %5961 = vmatprep.subr.mxu0 0.0
    %5962 = vmatpush1.msra.mxu0 %v4801
    %5963 = vmatprep.subr.mxu0 0.0
    %5964 = vmatpush1.msra.mxu0 %v4808
    %5965 = vmatprep.subr.mxu0 0.0
    %5966 = vmatpush1.msra.mxu0 %v4815
    %5967 = vmatprep.subr.mxu0 0.0
    %5968 = vmatpush1.msra.mxu0 %v4822
    %5969 = vmatprep.subr.mxu0 0.0
    %5970 = vmatpush1.msra.mxu0 %v4829
    %5971 = vmatprep.subr.mxu0 0.0
    %5972 = vmatpush1.msra.mxu0 %v4836
    %5973 = vmatprep.subr.mxu0 0.0
    %5974 = vmatpush1.msra.mxu0 %v4843
    %5975 = vmatprep.subr.mxu0 0.0
    %5976 = vmatpush1.msra.mxu0 0.0
    %5977 = vmatprep.subr.mxu0 0.0
    %5978 = vmatpush1.msra.mxu0 0.0
    %5979 = vmatprep.subr.mxu0 0.0
    %5980 = vmatpush1.msra.mxu0 0.0
    %5981 = vmatprep.subr.mxu0 0.0
    %5982 = vmatpush1.msra.mxu0 0.0
    %5983 = vmatprep.subr.mxu0 0.0
    %5984 = vmatpush1.msra.mxu0 0.0
    %5985 = vmatprep.subr.mxu0 0.0
    %5986 = vmatpush1.msra.mxu0 0.0
    %5987 = vmatprep.subr.mxu0 0.0
    %5988 = vmatpush1.msra.mxu0 0.0
    %5989 = vmatprep.subr.mxu0 0.0
    %5990 = vmatpush1.msra.mxu0 0.0
    %5991 = vmatprep.subr.mxu0 0.0
    %5992 = vmatpush1.msra.mxu0 0.0
    %5993 = vmatprep.subr.mxu0 0.0
    %5994 = vmatpush1.msra.mxu0 0.0
    %5995 = vmatprep.subr.mxu0 0.0
    %5996 = vmatpush1.msra.mxu0 0.0
    %5997 = vmatprep.subr.mxu0 0.0
    %5998 = vmatpush1.msra.mxu0 0.0
    %5999 = vmatprep.subr.mxu0 0.0
    %6000 = vmatpush1.msra.mxu0 0.0
    %6001 = vmatprep.subr.mxu0 0.0
    %6002 = vmatpush1.msra.mxu0 0.0
    %6003 = vmatprep.subr.mxu0 0.0
    %6004 = vmatpush1.msra.mxu0 0.0
    %6005 = vmatprep.subr.mxu0 0.0
    %6006 = vmatpush1.msra.mxu0 0.0
    %6007 = vmatprep.mubr.f32.mxu0 0.0
    %6008 = vmatmul.mubr.f32.gmra.mrb[0].mxu0 %v4059
    %v6009 = vpop.f32.mrb[0].mxu0
    %v6010 = vadd.f32 %v5940, %v6009
    %v6011 = vpop.f32.mrb[0].mxu0
    %6012 = vdwg.mxu0
    %v6013 = vmax.f32 %v5161, 0.0
    %v6014 = vmax.f32 %v5163, 0.0
    %v6015 = vmax.f32 %v5445, 0.0
    %v6016 = vmax.f32 %v5447, 0.0
    %v6017 = vmax.f32 %v5729, 0.0
    %v6018 = vmax.f32 %v5731, 0.0
    %v6019 = vmax.f32 %v6010, 0.0
    %v6020 = vld [vmem:[#allocation12] sm:$0xff]
    %v6021 = vld [vmem:[#allocation12 + $0x8] sm:$0xff]
    %v6022 = vld [vmem:[#allocation12 + $0x10] sm:$0xff]
    %v6023 = vld [vmem:[#allocation12 + $0x18] sm:$0xff]
    %v6024 = vld [vmem:[#allocation12 + $0x20] sm:$0xff]
    %v6025 = vld [vmem:[#allocation12 + $0x28] sm:$0xff]
    %v6026 = vld [vmem:[#allocation12 + $0x30] sm:$0xff]
    %v6027 = vld [vmem:[#allocation12 + $0x38] sm:$0xff]
    %v6028 = vld [vmem:[#allocation12 + $0x40] sm:$0xff]
    %v6029 = vld [vmem:[#allocation12 + $0x48] sm:$0xff]
    %v6030 = vld [vmem:[#allocation12 + $0x50] sm:$0xff]
    %v6031 = vld [vmem:[#allocation12 + $0x58] sm:$0xff]
    %v6032 = vld [vmem:[#allocation12 + $0x60] sm:$0xff]
    %v6033 = vld [vmem:[#allocation12 + $0x68] sm:$0xff]
    %v6034 = vld [vmem:[#allocation12 + $0x70] sm:$0xff]
    %v6035 = vld [vmem:[#allocation12 + $0x78] sm:$0xff]
    %v6036 = vld [vmem:[#allocation12 + $0x80] sm:$0xff]
    %v6037 = vld [vmem:[#allocation12 + $0x88] sm:$0xff]
    %v6038 = vld [vmem:[#allocation12 + $0x90] sm:$0xff]
    %v6039 = vld [vmem:[#allocation12 + $0x98] sm:$0xff]
    %v6040 = vld [vmem:[#allocation12 + $0xa0] sm:$0xff]
    %v6041 = vld [vmem:[#allocation12 + $0xa8] sm:$0xff]
    %v6042 = vld [vmem:[#allocation12 + $0xb0] sm:$0xff]
    %v6043 = vld [vmem:[#allocation12 + $0xb8] sm:$0xff]
    %v6044 = vld [vmem:[#allocation12 + $0xc0] sm:$0xff]
    %v6045 = vld [vmem:[#allocation12 + $0xc8] sm:$0xff]
    %v6046 = vld [vmem:[#allocation12 + $0xd0] sm:$0xff]
    %v6047 = vld [vmem:[#allocation12 + $0xd8] sm:$0xff]
    %v6048 = vld [vmem:[#allocation12 + $0xe0] sm:$0xff]
    %v6049 = vld [vmem:[#allocation12 + $0xe8] sm:$0xff]
    %v6050 = vld [vmem:[#allocation12 + $0xf0] sm:$0xff]
    %v6051 = vld [vmem:[#allocation12 + $0xf8] sm:$0xff]
    %v6052 = vld [vmem:[#allocation12 + $0x100] sm:$0xff]
    %v6053 = vld [vmem:[#allocation12 + $0x108] sm:$0xff]
    %v6054 = vld [vmem:[#allocation12 + $0x110] sm:$0xff]
    %v6055 = vld [vmem:[#allocation12 + $0x118] sm:$0xff]
    %v6056 = vld [vmem:[#allocation12 + $0x120] sm:$0xff]
    %v6057 = vld [vmem:[#allocation12 + $0x128] sm:$0xff]
    %v6058 = vld [vmem:[#allocation12 + $0x130] sm:$0xff]
    %v6059 = vld [vmem:[#allocation12 + $0x138] sm:$0xff]
    %v6060 = vld [vmem:[#allocation12 + $0x140] sm:$0xff]
    %v6061 = vld [vmem:[#allocation12 + $0x148] sm:$0xff]
    %v6062 = vld [vmem:[#allocation12 + $0x150] sm:$0xff]
    %v6063 = vld [vmem:[#allocation12 + $0x158] sm:$0xff]
    %v6064 = vld [vmem:[#allocation12 + $0x160] sm:$0xff]
    %v6065 = vld [vmem:[#allocation12 + $0x168] sm:$0xff]
    %v6066 = vld [vmem:[#allocation12 + $0x170] sm:$0xff]
    %v6067 = vld [vmem:[#allocation12 + $0x178] sm:$0xff]
    %v6068 = vld [vmem:[#allocation12 + $0x180] sm:$0xff]
    %v6069 = vld [vmem:[#allocation12 + $0x188] sm:$0xff]
    %v6070 = vld [vmem:[#allocation12 + $0x190] sm:$0xff]
    %v6071 = vld [vmem:[#allocation12 + $0x198] sm:$0xff]
    %v6072 = vld [vmem:[#allocation12 + $0x1a0] sm:$0xff]
    %v6073 = vld [vmem:[#allocation12 + $0x1a8] sm:$0xff]
    %v6074 = vld [vmem:[#allocation12 + $0x1b0] sm:$0xff]
    %v6075 = vld [vmem:[#allocation12 + $0x1b8] sm:$0xff]
    %v6076 = vld [vmem:[#allocation12 + $0x1c0] sm:$0xff]
    %v6077 = vld [vmem:[#allocation12 + $0x1c8] sm:$0xff]
    %v6078 = vld [vmem:[#allocation12 + $0x1d0] sm:$0xff]
    %v6079 = vld [vmem:[#allocation12 + $0x1d8] sm:$0xff]
    %v6080 = vld [vmem:[#allocation12 + $0x1e0] sm:$0xff]
    %v6081 = vld [vmem:[#allocation12 + $0x1e8] sm:$0xff]
    %v6082 = vld [vmem:[#allocation12 + $0x1f0] sm:$0xff]
    %v6083 = vld [vmem:[#allocation12 + $0x1f8] sm:$0xff]
    %v6084 = vld [vmem:[#allocation12 + $0x200] sm:$0xff]
    %v6085 = vld [vmem:[#allocation12 + $0x208] sm:$0xff]
    %v6086 = vld [vmem:[#allocation12 + $0x210] sm:$0xff]
    %v6087 = vld [vmem:[#allocation12 + $0x218] sm:$0xff]
    %v6088 = vld [vmem:[#allocation12 + $0x220] sm:$0xff]
    %v6089 = vld [vmem:[#allocation12 + $0x228] sm:$0xff]
    %v6090 = vld [vmem:[#allocation12 + $0x230] sm:$0xff]
    %v6091 = vld [vmem:[#allocation12 + $0x238] sm:$0xff]
    %v6092 = vld [vmem:[#allocation12 + $0x240] sm:$0xff]
    %v6093 = vld [vmem:[#allocation12 + $0x248] sm:$0xff]
    %v6094 = vld [vmem:[#allocation12 + $0x250] sm:$0xff]
    %v6095 = vld [vmem:[#allocation12 + $0x258] sm:$0xff]
    %v6096 = vld [vmem:[#allocation12 + $0x260] sm:$0xff]
    %v6097 = vld [vmem:[#allocation12 + $0x268] sm:$0xff]
    %v6098 = vld [vmem:[#allocation12 + $0x270] sm:$0xff]
    %v6099 = vld [vmem:[#allocation12 + $0x278] sm:$0xff]
    %v6100 = vld [vmem:[#allocation12 + $0x280] sm:$0xff]
    %v6101 = vld [vmem:[#allocation12 + $0x288] sm:$0xff]
    %v6102 = vld [vmem:[#allocation12 + $0x290] sm:$0xff]
    %v6103 = vld [vmem:[#allocation12 + $0x298] sm:$0xff]
    %v6104 = vld [vmem:[#allocation12 + $0x2a0] sm:$0xff]
    %v6105 = vld [vmem:[#allocation12 + $0x2a8] sm:$0xff]
    %v6106 = vld [vmem:[#allocation12 + $0x2b0] sm:$0xff]
    %v6107 = vld [vmem:[#allocation12 + $0x2b8] sm:$0xff]
    %v6108 = vld [vmem:[#allocation12 + $0x2c0] sm:$0xff]
    %v6109 = vld [vmem:[#allocation12 + $0x2c8] sm:$0xff]
    %v6110 = vld [vmem:[#allocation12 + $0x2d0] sm:$0xff]
    %v6111 = vld [vmem:[#allocation12 + $0x2d8] sm:$0xff]
    %v6112 = vld [vmem:[#allocation12 + $0x2e0] sm:$0xff]
    %v6113 = vld [vmem:[#allocation12 + $0x2e8] sm:$0xff]
    %v6114 = vld [vmem:[#allocation12 + $0x2f0] sm:$0xff]
    %v6115 = vld [vmem:[#allocation12 + $0x2f8] sm:$0xff]
    %v6116 = vld [vmem:[#allocation12 + $0x300] sm:$0xff]
    %v6117 = vld [vmem:[#allocation12 + $0x308] sm:$0xff]
    %v6118 = vld [vmem:[#allocation12 + $0x310] sm:$0xff]
    %v6119 = vld [vmem:[#allocation12 + $0x318] sm:$0xff]
    %v6120 = vld [vmem:[#allocation12 + $0x320] sm:$0xff]
    %v6121 = vld [vmem:[#allocation12 + $0x328] sm:$0xff]
    %v6122 = vld [vmem:[#allocation12 + $0x330] sm:$0xff]
    %v6123 = vld [vmem:[#allocation12 + $0x338] sm:$0xff]
    %v6124 = vld [vmem:[#allocation12 + $0x340] sm:$0xff]
    %v6125 = vld [vmem:[#allocation12 + $0x348] sm:$0xff]
    %v6126 = vld [vmem:[#allocation12 + $0x350] sm:$0xff]
    %v6127 = vld [vmem:[#allocation12 + $0x358] sm:$0xff]
    %v6128 = vld [vmem:[#allocation12 + $0x360] sm:$0xff]
    %v6129 = vld [vmem:[#allocation12 + $0x368] sm:$0xff]
    %v6130 = vld [vmem:[#allocation12 + $0x370] sm:$0xff]
    %v6131 = vld [vmem:[#allocation12 + $0x378] sm:$0xff]
    %v6132 = vld [vmem:[#allocation12 + $0x380] sm:$0xff]
    %v6133 = vld [vmem:[#allocation12 + $0x388] sm:$0xff]
    %v6134 = vld [vmem:[#allocation12 + $0x390] sm:$0xff]
    %v6135 = vld [vmem:[#allocation12 + $0x398] sm:$0xff]
    %v6136 = vld [vmem:[#allocation12 + $0x3a0] sm:$0xff]
    %v6137 = vld [vmem:[#allocation12 + $0x3a8] sm:$0xff]
    %v6138 = vld [vmem:[#allocation12 + $0x3b0] sm:$0xff]
    %v6139 = vld [vmem:[#allocation12 + $0x3b8] sm:$0xff]
    %v6140 = vld [vmem:[#allocation12 + $0x3c0] sm:$0xff]
    %v6141 = vld [vmem:[#allocation12 + $0x3c8] sm:$0xff]
    %v6142 = vld [vmem:[#allocation12 + $0x3d0] sm:$0xff]
    %v6143 = vld [vmem:[#allocation12 + $0x3d8] sm:$0xff]
    %v6144 = vld [vmem:[#allocation12 + $0x3e0] sm:$0xff]
    %v6145 = vld [vmem:[#allocation12 + $0x3e8] sm:$0xff]
    %v6146 = vld [vmem:[#allocation12 + $0x3f0] sm:$0xff]
    %v6147 = vld [vmem:[#allocation12 + $0x3f8] sm:$0xff]
    %v6148 = vld [vmem:[#allocation12 + $0x400] sm:$0xff]
    %v6149 = vld [vmem:[#allocation12 + $0x408] sm:$0xff]
    %v6150 = vld [vmem:[#allocation12 + $0x410] sm:$0xff]
    %v6151 = vld [vmem:[#allocation12 + $0x418] sm:$0xff]
    %v6152 = vld [vmem:[#allocation12 + $0x420] sm:$0xff]
    %v6153 = vld [vmem:[#allocation12 + $0x428] sm:$0xff]
    %v6154 = vld [vmem:[#allocation12 + $0x430] sm:$0xff]
    %v6155 = vld [vmem:[#allocation12 + $0x438] sm:$0xff]
    %v6156 = vld [vmem:[#allocation12 + $0x440] sm:$0xff]
    %v6157 = vld [vmem:[#allocation12 + $0x448] sm:$0xff]
    %v6158 = vld [vmem:[#allocation12 + $0x450] sm:$0xff]
    %v6159 = vld [vmem:[#allocation12 + $0x458] sm:$0xff]
    %v6160 = vld [vmem:[#allocation12 + $0x460] sm:$0xff]
    %v6161 = vld [vmem:[#allocation12 + $0x468] sm:$0xff]
    %v6162 = vld [vmem:[#allocation12 + $0x470] sm:$0xff]
    %v6163 = vld [vmem:[#allocation12 + $0x478] sm:$0xff]
    %v6164 = vld [vmem:[#allocation12 + $0x480] sm:$0xff]
    %v6165 = vld [vmem:[#allocation12 + $0x488] sm:$0xff]
    %v6166 = vld [vmem:[#allocation12 + $0x490] sm:$0xff]
    %v6167 = vld [vmem:[#allocation12 + $0x498] sm:$0xff]
    %v6168 = vld [vmem:[#allocation12 + $0x4a0] sm:$0xff]
    %v6169 = vld [vmem:[#allocation12 + $0x4a8] sm:$0xff]
    %v6170 = vld [vmem:[#allocation12 + $0x4b0] sm:$0xff]
    %v6171 = vld [vmem:[#allocation12 + $0x4b8] sm:$0xff]
    %v6172 = vld [vmem:[#allocation12 + $0x4c0] sm:$0xff]
    %v6173 = vld [vmem:[#allocation12 + $0x4c8] sm:$0xff]
    %v6174 = vld [vmem:[#allocation12 + $0x4d0] sm:$0xff]
    %v6175 = vld [vmem:[#allocation12 + $0x4d8] sm:$0xff]
    %v6176 = vld [vmem:[#allocation12 + $0x4e0] sm:$0xff]
    %v6177 = vld [vmem:[#allocation12 + $0x4e8] sm:$0xff]
    %v6178 = vld [vmem:[#allocation12 + $0x4f0] sm:$0xff]
    %v6179 = vld [vmem:[#allocation12 + $0x4f8] sm:$0xff]
    %v6180 = vld [vmem:[#allocation12 + $0x500] sm:$0xff]
    %v6181 = vld [vmem:[#allocation12 + $0x508] sm:$0xff]
    %v6182 = vld [vmem:[#allocation12 + $0x510] sm:$0xff]
    %v6183 = vld [vmem:[#allocation12 + $0x518] sm:$0xff]
    %v6184 = vld [vmem:[#allocation12 + $0x520] sm:$0xff]
    %v6185 = vld [vmem:[#allocation12 + $0x528] sm:$0xff]
    %v6186 = vld [vmem:[#allocation12 + $0x530] sm:$0xff]
    %v6187 = vld [vmem:[#allocation12 + $0x538] sm:$0xff]
    %v6188 = vld [vmem:[#allocation12 + $0x540] sm:$0xff]
    %v6189 = vld [vmem:[#allocation12 + $0x548] sm:$0xff]
    %v6190 = vld [vmem:[#allocation12 + $0x550] sm:$0xff]
    %v6191 = vld [vmem:[#allocation12 + $0x558] sm:$0xff]
    %v6192 = vld [vmem:[#allocation12 + $0x560] sm:$0xff]
    %v6193 = vld [vmem:[#allocation12 + $0x568] sm:$0xff]
    %v6194 = vld [vmem:[#allocation12 + $0x570] sm:$0xff]
    %v6195 = vld [vmem:[#allocation12 + $0x578] sm:$0xff]
    %v6196 = vld [vmem:[#allocation12 + $0x580] sm:$0xff]
    %v6197 = vld [vmem:[#allocation12 + $0x588] sm:$0xff]
    %v6198 = vld [vmem:[#allocation12 + $0x590] sm:$0xff]
    %v6199 = vld [vmem:[#allocation12 + $0x598] sm:$0xff]
    %v6200 = vld [vmem:[#allocation12 + $0x5a0] sm:$0xff]
    %v6201 = vld [vmem:[#allocation12 + $0x5a8] sm:$0xff]
    %v6202 = vld [vmem:[#allocation12 + $0x5b0] sm:$0xff]
    %v6203 = vld [vmem:[#allocation12 + $0x5b8] sm:$0xff]
    %v6204 = vld [vmem:[#allocation12 + $0x5c0] sm:$0xff]
    %v6205 = vld [vmem:[#allocation12 + $0x5c8] sm:$0xff]
    %v6206 = vld [vmem:[#allocation12 + $0x5d0] sm:$0xff]
    %v6207 = vld [vmem:[#allocation12 + $0x5d8] sm:$0xff]
    %v6208 = vld [vmem:[#allocation12 + $0x5e0] sm:$0xff]
    %v6209 = vld [vmem:[#allocation12 + $0x5e8] sm:$0xff]
    %v6210 = vld [vmem:[#allocation12 + $0x5f0] sm:$0xff]
    %v6211 = vld [vmem:[#allocation12 + $0x5f8] sm:$0xff]
    %v6212 = vld [vmem:[#allocation12 + $0x600] sm:$0xff]
    %v6213 = vld [vmem:[#allocation12 + $0x608] sm:$0xff]
    %v6214 = vld [vmem:[#allocation12 + $0x610] sm:$0xff]
    %v6215 = vld [vmem:[#allocation12 + $0x618] sm:$0xff]
    %v6216 = vld [vmem:[#allocation12 + $0x620] sm:$0xff]
    %v6217 = vld [vmem:[#allocation12 + $0x628] sm:$0xff]
    %v6218 = vld [vmem:[#allocation12 + $0x630] sm:$0xff]
    %v6219 = vld [vmem:[#allocation12 + $0x638] sm:$0xff]
    %v6220 = vld [vmem:[#allocation12 + $0x640] sm:$0xff]
    %v6221 = vld [vmem:[#allocation12 + $0x648] sm:$0xff]
    %v6222 = vld [vmem:[#allocation12 + $0x650] sm:$0xff]
    %v6223 = vld [vmem:[#allocation12 + $0x658] sm:$0xff]
    %v6224 = vld [vmem:[#allocation12 + $0x660] sm:$0xff]
    %v6225 = vld [vmem:[#allocation12 + $0x668] sm:$0xff]
    %v6226 = vld [vmem:[#allocation12 + $0x670] sm:$0xff]
    %v6227 = vld [vmem:[#allocation12 + $0x678] sm:$0xff]
    %v6228 = vld [vmem:[#allocation12 + $0x680] sm:$0xff]
    %v6229 = vld [vmem:[#allocation12 + $0x688] sm:$0xff]
    %v6230 = vld [vmem:[#allocation12 + $0x690] sm:$0xff]
    %v6231 = vld [vmem:[#allocation12 + $0x698] sm:$0xff]
    %v6232 = vld [vmem:[#allocation12 + $0x6a0] sm:$0xff]
    %v6233 = vld [vmem:[#allocation12 + $0x6a8] sm:$0xff]
    %v6234 = vld [vmem:[#allocation12 + $0x6b0] sm:$0xff]
    %v6235 = vld [vmem:[#allocation12 + $0x6b8] sm:$0xff]
    %v6236 = vld [vmem:[#allocation12 + $0x6c0] sm:$0xff]
    %v6237 = vld [vmem:[#allocation12 + $0x6c8] sm:$0xff]
    %v6238 = vld [vmem:[#allocation12 + $0x6d0] sm:$0xff]
    %v6239 = vld [vmem:[#allocation12 + $0x6d8] sm:$0xff]
    %v6240 = vld [vmem:[#allocation12 + $0x6e0] sm:$0xff]
    %v6241 = vld [vmem:[#allocation12 + $0x6e8] sm:$0xff]
    %v6242 = vld [vmem:[#allocation12 + $0x6f0] sm:$0xff]
    %v6243 = vld [vmem:[#allocation12 + $0x6f8] sm:$0xff]
    %v6244 = vld [vmem:[#allocation12 + $0x700] sm:$0xff]
    %v6245 = vld [vmem:[#allocation12 + $0x708] sm:$0xff]
    %v6246 = vld [vmem:[#allocation12 + $0x710] sm:$0xff]
    %v6247 = vld [vmem:[#allocation12 + $0x718] sm:$0xff]
    %v6248 = vld [vmem:[#allocation12 + $0x720] sm:$0xff]
    %v6249 = vld [vmem:[#allocation12 + $0x728] sm:$0xff]
    %v6250 = vld [vmem:[#allocation12 + $0x730] sm:$0xff]
    %v6251 = vld [vmem:[#allocation12 + $0x738] sm:$0xff]
    %v6252 = vld [vmem:[#allocation12 + $0x740] sm:$0xff]
    %v6253 = vld [vmem:[#allocation12 + $0x748] sm:$0xff]
    %v6254 = vld [vmem:[#allocation12 + $0x750] sm:$0xff]
    %v6255 = vld [vmem:[#allocation12 + $0x758] sm:$0xff]
    %v6256 = vld [vmem:[#allocation12 + $0x760] sm:$0xff]
    %v6257 = vld [vmem:[#allocation12 + $0x768] sm:$0xff]
    %v6258 = vld [vmem:[#allocation12 + $0x770] sm:$0xff]
    %v6259 = vld [vmem:[#allocation12 + $0x778] sm:$0xff]
    %v6260 = vld [vmem:[#allocation12 + $0x780] sm:$0xff]
    %v6261 = vld [vmem:[#allocation12 + $0x788] sm:$0xff]
    %v6262 = vld [vmem:[#allocation12 + $0x790] sm:$0xff]
    %v6263 = vld [vmem:[#allocation12 + $0x798] sm:$0xff]
    %v6264 = vld [vmem:[#allocation12 + $0x7a0] sm:$0xff]
    %v6265 = vld [vmem:[#allocation12 + $0x7a8] sm:$0xff]
    %v6266 = vld [vmem:[#allocation12 + $0x7b0] sm:$0xff]
    %v6267 = vld [vmem:[#allocation12 + $0x7b8] sm:$0xff]
    %v6268 = vld [vmem:[#allocation12 + $0x7c0] sm:$0xff]
    %v6269 = vld [vmem:[#allocation12 + $0x7c8] sm:$0xff]
    %v6270 = vld [vmem:[#allocation12 + $0x7d0] sm:$0xff]
    %v6271 = vld [vmem:[#allocation12 + $0x7d8] sm:$0xff]
    %v6272 = vld [vmem:[#allocation12 + $0x7e0] sm:$0xff]
    %v6273 = vld [vmem:[#allocation12 + $0x7e8] sm:$0xff]
    %v6274 = vld [vmem:[#allocation12 + $0x7f0] sm:$0xff]
    %v6275 = vld [vmem:[#allocation12 + $0x7f8] sm:$0xff]
    %v6276 = vld [vmem:[#allocation12 + $0x800] sm:$0xff]
    %v6277 = vld [vmem:[#allocation12 + $0x808] sm:$0xff]
    %v6278 = vld [vmem:[#allocation12 + $0x810] sm:$0xff]
    %v6279 = vld [vmem:[#allocation12 + $0x818] sm:$0xff]
    %v6280 = vld [vmem:[#allocation12 + $0x820] sm:$0xff]
    %v6281 = vld [vmem:[#allocation12 + $0x828] sm:$0xff]
    %v6282 = vld [vmem:[#allocation12 + $0x830] sm:$0xff]
    %v6283 = vld [vmem:[#allocation12 + $0x838] sm:$0xff]
    %v6284 = vld [vmem:[#allocation12 + $0x840] sm:$0xff]
    %v6285 = vld [vmem:[#allocation12 + $0x848] sm:$0xff]
    %v6286 = vld [vmem:[#allocation12 + $0x850] sm:$0xff]
    %v6287 = vld [vmem:[#allocation12 + $0x858] sm:$0xff]
    %v6288 = vld [vmem:[#allocation12 + $0x860] sm:$0xff]
    %v6289 = vld [vmem:[#allocation12 + $0x868] sm:$0xff]
    %v6290 = vld [vmem:[#allocation12 + $0x870] sm:$0xff]
    %v6291 = vld [vmem:[#allocation12 + $0x878] sm:$0xff]
    %v6292 = vld [vmem:[#allocation12 + $0x880] sm:$0xff]
    %v6293 = vld [vmem:[#allocation12 + $0x888] sm:$0xff]
    %v6294 = vld [vmem:[#allocation12 + $0x890] sm:$0xff]
    %v6295 = vld [vmem:[#allocation12 + $0x898] sm:$0xff]
    %v6296 = vld [vmem:[#allocation12 + $0x8a0] sm:$0xff]
    %v6297 = vld [vmem:[#allocation12 + $0x8a8] sm:$0xff]
    %v6298 = vld [vmem:[#allocation12 + $0x8b0] sm:$0xff]
    %v6299 = vld [vmem:[#allocation12 + $0x8b8] sm:$0xff]
    %v6300 = vld [vmem:[#allocation12 + $0x8c0] sm:$0xff]
    %v6301 = vld [vmem:[#allocation12 + $0x8c8] sm:$0xff]
    %v6302 = vld [vmem:[#allocation12 + $0x8d0] sm:$0xff]
    %v6303 = vld [vmem:[#allocation12 + $0x8d8] sm:$0xff]
    %v6304 = vld [vmem:[#allocation12 + $0x8e0] sm:$0xff]
    %v6305 = vld [vmem:[#allocation12 + $0x8e8] sm:$0xff]
    %v6306 = vld [vmem:[#allocation12 + $0x8f0] sm:$0xff]
    %v6307 = vld [vmem:[#allocation12 + $0x8f8] sm:$0xff]
    %v6308 = vld [vmem:[#allocation12 + $0x900] sm:$0xff]
    %v6309 = vld [vmem:[#allocation12 + $0x908] sm:$0xff]
    %v6310 = vld [vmem:[#allocation12 + $0x910] sm:$0xff]
    %v6311 = vld [vmem:[#allocation12 + $0x918] sm:$0xff]
    %v6312 = vld [vmem:[#allocation12 + $0x920] sm:$0xff]
    %v6313 = vld [vmem:[#allocation12 + $0x928] sm:$0xff]
    %v6314 = vld [vmem:[#allocation12 + $0x930] sm:$0xff]
    %v6315 = vld [vmem:[#allocation12 + $0x938] sm:$0xff]
    %v6316 = vld [vmem:[#allocation12 + $0x940] sm:$0xff]
    %v6317 = vld [vmem:[#allocation12 + $0x948] sm:$0xff]
    %v6318 = vld [vmem:[#allocation12 + $0x950] sm:$0xff]
    %v6319 = vld [vmem:[#allocation12 + $0x958] sm:$0xff]
    %v6320 = vld [vmem:[#allocation12 + $0x960] sm:$0xff]
    %v6321 = vld [vmem:[#allocation12 + $0x968] sm:$0xff]
    %v6322 = vld [vmem:[#allocation12 + $0x970] sm:$0xff]
    %v6323 = vld [vmem:[#allocation12 + $0x978] sm:$0xff]
    %v6324 = vld [vmem:[#allocation12 + $0x980] sm:$0xff]
    %v6325 = vld [vmem:[#allocation12 + $0x988] sm:$0xff]
    %v6326 = vld [vmem:[#allocation12 + $0x990] sm:$0xff]
    %v6327 = vld [vmem:[#allocation12 + $0x998] sm:$0xff]
    %v6328 = vld [vmem:[#allocation12 + $0x9a0] sm:$0xff]
    %v6329 = vld [vmem:[#allocation12 + $0x9a8] sm:$0xff]
    %v6330 = vld [vmem:[#allocation12 + $0x9b0] sm:$0xff]
    %v6331 = vld [vmem:[#allocation12 + $0x9b8] sm:$0xff]
    %v6332 = vld [vmem:[#allocation12 + $0x9c0] sm:$0xff]
    %v6333 = vld [vmem:[#allocation12 + $0x9c8] sm:$0xff]
    %v6334 = vld [vmem:[#allocation12 + $0x9d0] sm:$0xff]
    %v6335 = vld [vmem:[#allocation12 + $0x9d8] sm:$0xff]
    %v6336 = vld [vmem:[#allocation12 + $0x9e0] sm:$0xff]
    %v6337 = vld [vmem:[#allocation12 + $0x9e8] sm:$0xff]
    %v6338 = vld [vmem:[#allocation12 + $0x9f0] sm:$0xff]
    %v6339 = vld [vmem:[#allocation12 + $0x9f8] sm:$0xff]
    %v6340 = vld [vmem:[#allocation12 + $0xa00] sm:$0xff]
    %v6341 = vld [vmem:[#allocation12 + $0xa08] sm:$0xff]
    %v6342 = vld [vmem:[#allocation12 + $0xa10] sm:$0xff]
    %v6343 = vld [vmem:[#allocation12 + $0xa18] sm:$0xff]
    %v6344 = vld [vmem:[#allocation12 + $0xa20] sm:$0xff]
    %v6345 = vld [vmem:[#allocation12 + $0xa28] sm:$0xff]
    %v6346 = vld [vmem:[#allocation12 + $0xa30] sm:$0xff]
    %v6347 = vld [vmem:[#allocation12 + $0xa38] sm:$0xff]
    %v6348 = vld [vmem:[#allocation12 + $0xa40] sm:$0xff]
    %v6349 = vld [vmem:[#allocation12 + $0xa48] sm:$0xff]
    %v6350 = vld [vmem:[#allocation12 + $0xa50] sm:$0xff]
    %v6351 = vld [vmem:[#allocation12 + $0xa58] sm:$0xff]
    %v6352 = vld [vmem:[#allocation12 + $0xa60] sm:$0xff]
    %v6353 = vld [vmem:[#allocation12 + $0xa68] sm:$0xff]
    %v6354 = vld [vmem:[#allocation12 + $0xa70] sm:$0xff]
    %v6355 = vld [vmem:[#allocation12 + $0xa78] sm:$0xff]
    %v6356 = vld [vmem:[#allocation13] sm:$0x7]
    %v6358 = vlaneseq
    %v6359 = vshrl.u32 %v6358, 7
    %v6360 = vsub.s32 0, %v6359
    %v6361 = vrot.slane %v6356, %v6360
    %v6362 = vlaneseq
    %v6363 = vshrl.u32 %v6362, 7
    %v6364 = vsub.s32 1, %v6363
    %v6365 = vrot.slane %v6356, %v6364
    %v6366 = vlaneseq
    %v6367 = vshrl.u32 %v6366, 7
    %v6368 = vsub.s32 2, %v6367
    %v6369 = vrot.slane %v6356, %v6368
    %6373 = vmatprep.subr.mxu0 %v6021
    %6374 = vmatpush1.msra.mxu0 %v6020
    %6375 = vmatprep.subr.mxu0 %v6024
    %6376 = vmatpush1.msra.mxu0 %v6023
    %6377 = vmatprep.subr.mxu0 %v6027
    %6378 = vmatpush1.msra.mxu0 %v6026
    %6379 = vmatprep.subr.mxu0 %v6030
    %6380 = vmatpush1.msra.mxu0 %v6029
    %6381 = vmatprep.subr.mxu0 %v6033
    %6382 = vmatpush1.msra.mxu0 %v6032
    %6383 = vmatprep.subr.mxu0 %v6036
    %6384 = vmatpush1.msra.mxu0 %v6035
    %6385 = vmatprep.subr.mxu0 %v6039
    %6386 = vmatpush1.msra.mxu0 %v6038
    %6387 = vmatprep.subr.mxu0 %v6042
    %6388 = vmatpush1.msra.mxu0 %v6041
    %6389 = vmatprep.subr.mxu0 %v6045
    %6390 = vmatpush1.msra.mxu0 %v6044
    %6391 = vmatprep.subr.mxu0 %v6048
    %6392 = vmatpush1.msra.mxu0 %v6047
    %6393 = vmatprep.subr.mxu0 %v6051
    %6394 = vmatpush1.msra.mxu0 %v6050
    %6395 = vmatprep.subr.mxu0 %v6054
    %6396 = vmatpush1.msra.mxu0 %v6053
    %6397 = vmatprep.subr.mxu0 %v6057
    %6398 = vmatpush1.msra.mxu0 %v6056
    %6399 = vmatprep.subr.mxu0 %v6060
    %6400 = vmatpush1.msra.mxu0 %v6059
    %6401 = vmatprep.subr.mxu0 %v6063
    %6402 = vmatpush1.msra.mxu0 %v6062
    %6403 = vmatprep.subr.mxu0 %v6066
    %6404 = vmatpush1.msra.mxu0 %v6065
    %6405 = vmatprep.subr.mxu0 %v6069
    %6406 = vmatpush1.msra.mxu0 %v6068
    %6407 = vmatprep.subr.mxu0 %v6072
    %6408 = vmatpush1.msra.mxu0 %v6071
    %6409 = vmatprep.subr.mxu0 %v6075
    %6410 = vmatpush1.msra.mxu0 %v6074
    %6411 = vmatprep.subr.mxu0 %v6078
    %6412 = vmatpush1.msra.mxu0 %v6077
    %6413 = vmatprep.subr.mxu0 %v6081
    %6414 = vmatpush1.msra.mxu0 %v6080
    %6415 = vmatprep.subr.mxu0 %v6084
    %6416 = vmatpush1.msra.mxu0 %v6083
    %6417 = vmatprep.subr.mxu0 %v6087
    %6418 = vmatpush1.msra.mxu0 %v6086
    %6419 = vmatprep.subr.mxu0 %v6090
    %6420 = vmatpush1.msra.mxu0 %v6089
    %6421 = vmatprep.subr.mxu0 %v6093
    %6422 = vmatpush1.msra.mxu0 %v6092
    %6423 = vmatprep.subr.mxu0 %v6096
    %6424 = vmatpush1.msra.mxu0 %v6095
    %6425 = vmatprep.subr.mxu0 %v6099
    %6426 = vmatpush1.msra.mxu0 %v6098
    %6427 = vmatprep.subr.mxu0 %v6102
    %6428 = vmatpush1.msra.mxu0 %v6101
    %6429 = vmatprep.subr.mxu0 %v6105
    %6430 = vmatpush1.msra.mxu0 %v6104
    %6431 = vmatprep.subr.mxu0 %v6108
    %6432 = vmatpush1.msra.mxu0 %v6107
    %6433 = vmatprep.subr.mxu0 %v6111
    %6434 = vmatpush1.msra.mxu0 %v6110
    %6435 = vmatprep.subr.mxu0 %v6114
    %6436 = vmatpush1.msra.mxu0 %v6113
    %6437 = vmatprep.mubr.f32.mxu0 %v6014
    %6438 = vmatmul.mubr.f32.gmra.mrb[0].mxu0 %v6013
    %v6439 = vpop.f32.mrb[0].mxu0
    %v6440 = vadd.f32 %v6361, %v6439
    %v6441 = vpop.f32.mrb[0].mxu0
    %v6442 = vadd.f32 %v6365, %v6441
    %6443 = vdwg.mxu0
    %6444 = vmatprep.subr.mxu0 %v6117
    %6445 = vmatpush1.msra.mxu0 %v6116
    %6446 = vmatprep.subr.mxu0 %v6120
    %6447 = vmatpush1.msra.mxu0 %v6119
    %6448 = vmatprep.subr.mxu0 %v6123
    %6449 = vmatpush1.msra.mxu0 %v6122
    %6450 = vmatprep.subr.mxu0 %v6126
    %6451 = vmatpush1.msra.mxu0 %v6125
    %6452 = vmatprep.subr.mxu0 %v6129
    %6453 = vmatpush1.msra.mxu0 %v6128
    %6454 = vmatprep.subr.mxu0 %v6132
    %6455 = vmatpush1.msra.mxu0 %v6131
    %6456 = vmatprep.subr.mxu0 %v6135
    %6457 = vmatpush1.msra.mxu0 %v6134
    %6458 = vmatprep.subr.mxu0 %v6138
    %6459 = vmatpush1.msra.mxu0 %v6137
    %6460 = vmatprep.subr.mxu0 %v6141
    %6461 = vmatpush1.msra.mxu0 %v6140
    %6462 = vmatprep.subr.mxu0 %v6144
    %6463 = vmatpush1.msra.mxu0 %v6143
    %6464 = vmatprep.subr.mxu0 %v6147
    %6465 = vmatpush1.msra.mxu0 %v6146
    %6466 = vmatprep.subr.mxu0 %v6150
    %6467 = vmatpush1.msra.mxu0 %v6149
    %6468 = vmatprep.subr.mxu0 %v6153
    %6469 = vmatpush1.msra.mxu0 %v6152
    %6470 = vmatprep.subr.mxu0 %v6156
    %6471 = vmatpush1.msra.mxu0 %v6155
    %6472 = vmatprep.subr.mxu0 %v6159
    %6473 = vmatpush1.msra.mxu0 %v6158
    %6474 = vmatprep.subr.mxu0 %v6162
    %6475 = vmatpush1.msra.mxu0 %v6161
    %6476 = vmatprep.subr.mxu0 %v6165
    %6477 = vmatpush1.msra.mxu0 %v6164
    %6478 = vmatprep.subr.mxu0 %v6168
    %6479 = vmatpush1.msra.mxu0 %v6167
    %6480 = vmatprep.subr.mxu0 %v6171
    %6481 = vmatpush1.msra.mxu0 %v6170
    %6482 = vmatprep.subr.mxu0 %v6174
    %6483 = vmatpush1.msra.mxu0 %v6173
    %6484 = vmatprep.subr.mxu0 %v6177
    %6485 = vmatpush1.msra.mxu0 %v6176
    %6486 = vmatprep.subr.mxu0 %v6180
    %6487 = vmatpush1.msra.mxu0 %v6179
    %6488 = vmatprep.subr.mxu0 %v6183
    %6489 = vmatpush1.msra.mxu0 %v6182
    %6490 = vmatprep.subr.mxu0 %v6186
    %6491 = vmatpush1.msra.mxu0 %v6185
    %6492 = vmatprep.subr.mxu0 %v6189
    %6493 = vmatpush1.msra.mxu0 %v6188
    %6494 = vmatprep.subr.mxu0 %v6192
    %6495 = vmatpush1.msra.mxu0 %v6191
    %6496 = vmatprep.subr.mxu0 %v6195
    %6497 = vmatpush1.msra.mxu0 %v6194
    %6498 = vmatprep.subr.mxu0 %v6198
    %6499 = vmatpush1.msra.mxu0 %v6197
    %6500 = vmatprep.subr.mxu0 %v6201
    %6501 = vmatpush1.msra.mxu0 %v6200
    %6502 = vmatprep.subr.mxu0 %v6204
    %6503 = vmatpush1.msra.mxu0 %v6203
    %6504 = vmatprep.subr.mxu0 %v6207
    %6505 = vmatpush1.msra.mxu0 %v6206
    %6506 = vmatprep.subr.mxu0 %v6210
    %6507 = vmatpush1.msra.mxu0 %v6209
    %6508 = vmatprep.mubr.f32.mxu0 %v6016
    %6509 = vmatmul.mubr.f32.gmra.mrb[0].mxu0 %v6015
    %v6510 = vpop.f32.mrb[0].mxu0
    %v6511 = vadd.f32 %v6440, %v6510
    %v6512 = vpop.f32.mrb[0].mxu0
    %v6513 = vadd.f32 %v6442, %v6512
    %6514 = vdwg.mxu0
    %6515 = vmatprep.subr.mxu0 %v6213
    %6516 = vmatpush1.msra.mxu0 %v6212
    %6517 = vmatprep.subr.mxu0 %v6216
    %6518 = vmatpush1.msra.mxu0 %v6215
    %6519 = vmatprep.subr.mxu0 %v6219
    %6520 = vmatpush1.msra.mxu0 %v6218
    %6521 = vmatprep.subr.mxu0 %v6222
    %6522 = vmatpush1.msra.mxu0 %v6221
    %6523 = vmatprep.subr.mxu0 %v6225
    %6524 = vmatpush1.msra.mxu0 %v6224
    %6525 = vmatprep.subr.mxu0 %v6228
    %6526 = vmatpush1.msra.mxu0 %v6227
    %6527 = vmatprep.subr.mxu0 %v6231
    %6528 = vmatpush1.msra.mxu0 %v6230
    %6529 = vmatprep.subr.mxu0 %v6234
    %6530 = vmatpush1.msra.mxu0 %v6233
    %6531 = vmatprep.subr.mxu0 %v6237
    %6532 = vmatpush1.msra.mxu0 %v6236
    %6533 = vmatprep.subr.mxu0 %v6240
    %6534 = vmatpush1.msra.mxu0 %v6239
    %6535 = vmatprep.subr.mxu0 %v6243
    %6536 = vmatpush1.msra.mxu0 %v6242
    %6537 = vmatprep.subr.mxu0 %v6246
    %6538 = vmatpush1.msra.mxu0 %v6245
    %6539 = vmatprep.subr.mxu0 %v6249
    %6540 = vmatpush1.msra.mxu0 %v6248
    %6541 = vmatprep.subr.mxu0 %v6252
    %6542 = vmatpush1.msra.mxu0 %v6251
    %6543 = vmatprep.subr.mxu0 %v6255
    %6544 = vmatpush1.msra.mxu0 %v6254
    %6545 = vmatprep.subr.mxu0 %v6258
    %6546 = vmatpush1.msra.mxu0 %v6257
    %6547 = vmatprep.subr.mxu0 %v6261
    %6548 = vmatpush1.msra.mxu0 %v6260
    %6549 = vmatprep.subr.mxu0 %v6264
    %6550 = vmatpush1.msra.mxu0 %v6263
    %6551 = vmatprep.subr.mxu0 %v6267
    %6552 = vmatpush1.msra.mxu0 %v6266
    %6553 = vmatprep.subr.mxu0 %v6270
    %6554 = vmatpush1.msra.mxu0 %v6269
    %6555 = vmatprep.subr.mxu0 %v6273
    %6556 = vmatpush1.msra.mxu0 %v6272
    %6557 = vmatprep.subr.mxu0 %v6276
    %6558 = vmatpush1.msra.mxu0 %v6275
    %6559 = vmatprep.subr.mxu0 %v6279
    %6560 = vmatpush1.msra.mxu0 %v6278
    %6561 = vmatprep.subr.mxu0 %v6282
    %6562 = vmatpush1.msra.mxu0 %v6281
    %6563 = vmatprep.subr.mxu0 %v6285
    %6564 = vmatpush1.msra.mxu0 %v6284
    %6565 = vmatprep.subr.mxu0 %v6288
    %6566 = vmatpush1.msra.mxu0 %v6287
    %6567 = vmatprep.subr.mxu0 %v6291
    %6568 = vmatpush1.msra.mxu0 %v6290
    %6569 = vmatprep.subr.mxu0 %v6294
    %6570 = vmatpush1.msra.mxu0 %v6293
    %6571 = vmatprep.subr.mxu0 %v6297
    %6572 = vmatpush1.msra.mxu0 %v6296
    %6573 = vmatprep.subr.mxu0 %v6300
    %6574 = vmatpush1.msra.mxu0 %v6299
    %6575 = vmatprep.subr.mxu0 %v6303
    %6576 = vmatpush1.msra.mxu0 %v6302
    %6577 = vmatprep.subr.mxu0 %v6306
    %6578 = vmatpush1.msra.mxu0 %v6305
    %6579 = vmatprep.mubr.f32.mxu0 %v6018
    %6580 = vmatmul.mubr.f32.gmra.mrb[0].mxu0 %v6017
    %v6581 = vpop.f32.mrb[0].mxu0
    %v6582 = vadd.f32 %v6511, %v6581
    %v6583 = vpop.f32.mrb[0].mxu0
    %v6584 = vadd.f32 %v6513, %v6583
    %6585 = vdwg.mxu0
    %6586 = vmatprep.subr.mxu0 %v6309
    %6587 = vmatpush1.msra.mxu0 %v6308
    %6588 = vmatprep.subr.mxu0 %v6312
    %6589 = vmatpush1.msra.mxu0 %v6311
    %6590 = vmatprep.subr.mxu0 %v6315
    %6591 = vmatpush1.msra.mxu0 %v6314
    %6592 = vmatprep.subr.mxu0 %v6318
    %6593 = vmatpush1.msra.mxu0 %v6317
    %6594 = vmatprep.subr.mxu0 %v6321
    %6595 = vmatpush1.msra.mxu0 %v6320
    %6596 = vmatprep.subr.mxu0 %v6324
    %6597 = vmatpush1.msra.mxu0 %v6323
    %6598 = vmatprep.subr.mxu0 %v6327
    %6599 = vmatpush1.msra.mxu0 %v6326
    %6600 = vmatprep.subr.mxu0 %v6330
    %6601 = vmatpush1.msra.mxu0 %v6329
    %6602 = vmatprep.subr.mxu0 %v6333
    %6603 = vmatpush1.msra.mxu0 %v6332
    %6604 = vmatprep.subr.mxu0 %v6336
    %6605 = vmatpush1.msra.mxu0 %v6335
    %6606 = vmatprep.subr.mxu0 %v6339
    %6607 = vmatpush1.msra.mxu0 %v6338
    %6608 = vmatprep.subr.mxu0 %v6342
    %6609 = vmatpush1.msra.mxu0 %v6341
    %6610 = vmatprep.subr.mxu0 %v6345
    %6611 = vmatpush1.msra.mxu0 %v6344
    %6612 = vmatprep.subr.mxu0 %v6348
    %6613 = vmatpush1.msra.mxu0 %v6347
    %6614 = vmatprep.subr.mxu0 %v6351
    %6615 = vmatpush1.msra.mxu0 %v6350
    %6616 = vmatprep.subr.mxu0 %v6354
    %6617 = vmatpush1.msra.mxu0 %v6353
    %6618 = vmatprep.subr.mxu0 0.0
    %6619 = vmatpush1.msra.mxu0 0.0
    %6620 = vmatprep.subr.mxu0 0.0
    %6621 = vmatpush1.msra.mxu0 0.0
    %6622 = vmatprep.subr.mxu0 0.0
    %6623 = vmatpush1.msra.mxu0 0.0
    %6624 = vmatprep.subr.mxu0 0.0
    %6625 = vmatpush1.msra.mxu0 0.0
    %6626 = vmatprep.subr.mxu0 0.0
    %6627 = vmatpush1.msra.mxu0 0.0
    %6628 = vmatprep.subr.mxu0 0.0
    %6629 = vmatpush1.msra.mxu0 0.0
    %6630 = vmatprep.subr.mxu0 0.0
    %6631 = vmatpush1.msra.mxu0 0.0
    %6632 = vmatprep.subr.mxu0 0.0
    %6633 = vmatpush1.msra.mxu0 0.0
    %6634 = vmatprep.subr.mxu0 0.0
    %6635 = vmatpush1.msra.mxu0 0.0
    %6636 = vmatprep.subr.mxu0 0.0
    %6637 = vmatpush1.msra.mxu0 0.0
    %6638 = vmatprep.subr.mxu0 0.0
    %6639 = vmatpush1.msra.mxu0 0.0
    %6640 = vmatprep.subr.mxu0 0.0
    %6641 = vmatpush1.msra.mxu0 0.0
    %6642 = vmatprep.subr.mxu0 0.0
    %6643 = vmatpush1.msra.mxu0 0.0
    %6644 = vmatprep.subr.mxu0 0.0
    %6645 = vmatpush1.msra.mxu0 0.0
    %6646 = vmatprep.subr.mxu0 0.0
    %6647 = vmatpush1.msra.mxu0 0.0
    %6648 = vmatprep.subr.mxu0 0.0
    %6649 = vmatpush1.msra.mxu0 0.0
    %6650 = vmatprep.mubr.f32.mxu0 0.0
    %6651 = vmatmul.mubr.f32.gmra.mrb[0].mxu0 %v6019
    %v6652 = vpop.f32.mrb[0].mxu0
    %v6653 = vadd.f32 %v6582, %v6652
    %v6654 = vpop.f32.mrb[0].mxu0
    %v6655 = vadd.f32 %v6584, %v6654
    %6656 = vdwg.mxu0
    %6657 = vmatprep.subr.mxu0 0.0
    %6658 = vmatpush1.msra.mxu0 %v6022
    %6659 = vmatprep.subr.mxu0 0.0
    %6660 = vmatpush1.msra.mxu0 %v6025
    %6661 = vmatprep.subr.mxu0 0.0
    %6662 = vmatpush1.msra.mxu0 %v6028
    %6663 = vmatprep.subr.mxu0 0.0
    %6664 = vmatpush1.msra.mxu0 %v6031
    %6665 = vmatprep.subr.mxu0 0.0
    %6666 = vmatpush1.msra.mxu0 %v6034
    %6667 = vmatprep.subr.mxu0 0.0
    %6668 = vmatpush1.msra.mxu0 %v6037
    %6669 = vmatprep.subr.mxu0 0.0
    %6670 = vmatpush1.msra.mxu0 %v6040
    %6671 = vmatprep.subr.mxu0 0.0
    %6672 = vmatpush1.msra.mxu0 %v6043
    %6673 = vmatprep.subr.mxu0 0.0
    %6674 = vmatpush1.msra.mxu0 %v6046
    %6675 = vmatprep.subr.mxu0 0.0
    %6676 = vmatpush1.msra.mxu0 %v6049
    %6677 = vmatprep.subr.mxu0 0.0
    %6678 = vmatpush1.msra.mxu0 %v6052
    %6679 = vmatprep.subr.mxu0 0.0
    %6680 = vmatpush1.msra.mxu0 %v6055
    %6681 = vmatprep.subr.mxu0 0.0
    %6682 = vmatpush1.msra.mxu0 %v6058
    %6683 = vmatprep.subr.mxu0 0.0
    %6684 = vmatpush1.msra.mxu0 %v6061
    %6685 = vmatprep.subr.mxu0 0.0
    %6686 = vmatpush1.msra.mxu0 %v6064
    %6687 = vmatprep.subr.mxu0 0.0
    %6688 = vmatpush1.msra.mxu0 %v6067
    %6689 = vmatprep.subr.mxu0 0.0
    %6690 = vmatpush1.msra.mxu0 %v6070
    %6691 = vmatprep.subr.mxu0 0.0
    %6692 = vmatpush1.msra.mxu0 %v6073
    %6693 = vmatprep.subr.mxu0 0.0
    %6694 = vmatpush1.msra.mxu0 %v6076
    %6695 = vmatprep.subr.mxu0 0.0
    %6696 = vmatpush1.msra.mxu0 %v6079
    %6697 = vmatprep.subr.mxu0 0.0
    %6698 = vmatpush1.msra.mxu0 %v6082
    %6699 = vmatprep.subr.mxu0 0.0
    %6700 = vmatpush1.msra.mxu0 %v6085
    %6701 = vmatprep.subr.mxu0 0.0
    %6702 = vmatpush1.msra.mxu0 %v6088
    %6703 = vmatprep.subr.mxu0 0.0
    %6704 = vmatpush1.msra.mxu0 %v6091
    %6705 = vmatprep.subr.mxu0 0.0
    %6706 = vmatpush1.msra.mxu0 %v6094
    %6707 = vmatprep.subr.mxu0 0.0
    %6708 = vmatpush1.msra.mxu0 %v6097
    %6709 = vmatprep.subr.mxu0 0.0
    %6710 = vmatpush1.msra.mxu0 %v6100
    %6711 = vmatprep.subr.mxu0 0.0
    %6712 = vmatpush1.msra.mxu0 %v6103
    %6713 = vmatprep.subr.mxu0 0.0
    %6714 = vmatpush1.msra.mxu0 %v6106
    %6715 = vmatprep.subr.mxu0 0.0
    %6716 = vmatpush1.msra.mxu0 %v6109
    %6717 = vmatprep.subr.mxu0 0.0
    %6718 = vmatpush1.msra.mxu0 %v6112
    %6719 = vmatprep.subr.mxu0 0.0
    %6720 = vmatpush1.msra.mxu0 %v6115
    %6721 = vmatprep.mubr.f32.mxu0 %v6014
    %6722 = vmatmul.mubr.f32.gmra.mrb[0].mxu0 %v6013
    %v6723 = vpop.f32.mrb[0].mxu0
    %v6724 = vadd.f32 %v6369, %v6723
    %v6725 = vpop.f32.mrb[0].mxu0
    %6726 = vdwg.mxu0
    %6727 = vmatprep.subr.mxu0 0.0
    %6728 = vmatpush1.msra.mxu0 %v6118
    %6729 = vmatprep.subr.mxu0 0.0
    %6730 = vmatpush1.msra.mxu0 %v6121
    %6731 = vmatprep.subr.mxu0 0.0
    %6732 = vmatpush1.msra.mxu0 %v6124
    %6733 = vmatprep.subr.mxu0 0.0
    %6734 = vmatpush1.msra.mxu0 %v6127
    %6735 = vmatprep.subr.mxu0 0.0
    %6736 = vmatpush1.msra.mxu0 %v6130
    %6737 = vmatprep.subr.mxu0 0.0
    %6738 = vmatpush1.msra.mxu0 %v6133
    %6739 = vmatprep.subr.mxu0 0.0
    %6740 = vmatpush1.msra.mxu0 %v6136
    %6741 = vmatprep.subr.mxu0 0.0
    %6742 = vmatpush1.msra.mxu0 %v6139
    %6743 = vmatprep.subr.mxu0 0.0
    %6744 = vmatpush1.msra.mxu0 %v6142
    %6745 = vmatprep.subr.mxu0 0.0
    %6746 = vmatpush1.msra.mxu0 %v6145
    %6747 = vmatprep.subr.mxu0 0.0
    %6748 = vmatpush1.msra.mxu0 %v6148
    %6749 = vmatprep.subr.mxu0 0.0
    %6750 = vmatpush1.msra.mxu0 %v6151
    %6751 = vmatprep.subr.mxu0 0.0
    %6752 = vmatpush1.msra.mxu0 %v6154
    %6753 = vmatprep.subr.mxu0 0.0
    %6754 = vmatpush1.msra.mxu0 %v6157
    %6755 = vmatprep.subr.mxu0 0.0
    %6756 = vmatpush1.msra.mxu0 %v6160
    %6757 = vmatprep.subr.mxu0 0.0
    %6758 = vmatpush1.msra.mxu0 %v6163
    %6759 = vmatprep.subr.mxu0 0.0
    %6760 = vmatpush1.msra.mxu0 %v6166
    %6761 = vmatprep.subr.mxu0 0.0
    %6762 = vmatpush1.msra.mxu0 %v6169
    %6763 = vmatprep.subr.mxu0 0.0
    %6764 = vmatpush1.msra.mxu0 %v6172
    %6765 = vmatprep.subr.mxu0 0.0
    %6766 = vmatpush1.msra.mxu0 %v6175
    %6767 = vmatprep.subr.mxu0 0.0
    %6768 = vmatpush1.msra.mxu0 %v6178
    %6769 = vmatprep.subr.mxu0 0.0
    %6770 = vmatpush1.msra.mxu0 %v6181
    %6771 = vmatprep.subr.mxu0 0.0
    %6772 = vmatpush1.msra.mxu0 %v6184
    %6773 = vmatprep.subr.mxu0 0.0
    %6774 = vmatpush1.msra.mxu0 %v6187
    %6775 = vmatprep.subr.mxu0 0.0
    %6776 = vmatpush1.msra.mxu0 %v6190
    %6777 = vmatprep.subr.mxu0 0.0
    %6778 = vmatpush1.msra.mxu0 %v6193
    %6779 = vmatprep.subr.mxu0 0.0
    %6780 = vmatpush1.msra.mxu0 %v6196
    %6781 = vmatprep.subr.mxu0 0.0
    %6782 = vmatpush1.msra.mxu0 %v6199
    %6783 = vmatprep.subr.mxu0 0.0
    %6784 = vmatpush1.msra.mxu0 %v6202
    %6785 = vmatprep.subr.mxu0 0.0
    %6786 = vmatpush1.msra.mxu0 %v6205
    %6787 = vmatprep.subr.mxu0 0.0
    %6788 = vmatpush1.msra.mxu0 %v6208
    %6789 = vmatprep.subr.mxu0 0.0
    %6790 = vmatpush1.msra.mxu0 %v6211
    %6791 = vmatprep.mubr.f32.mxu0 %v6016
    %6792 = vmatmul.mubr.f32.gmra.mrb[0].mxu0 %v6015
    %v6793 = vpop.f32.mrb[0].mxu0
    %v6794 = vadd.f32 %v6724, %v6793
    %v6795 = vpop.f32.mrb[0].mxu0
    %6796 = vdwg.mxu0
    %6797 = vmatprep.subr.mxu0 0.0
    %6798 = vmatpush1.msra.mxu0 %v6214
    %6799 = vmatprep.subr.mxu0 0.0
    %6800 = vmatpush1.msra.mxu0 %v6217
    %6801 = vmatprep.subr.mxu0 0.0
    %6802 = vmatpush1.msra.mxu0 %v6220
    %6803 = vmatprep.subr.mxu0 0.0
    %6804 = vmatpush1.msra.mxu0 %v6223
    %6805 = vmatprep.subr.mxu0 0.0
    %6806 = vmatpush1.msra.mxu0 %v6226
    %6807 = vmatprep.subr.mxu0 0.0
    %6808 = vmatpush1.msra.mxu0 %v6229
    %6809 = vmatprep.subr.mxu0 0.0
    %6810 = vmatpush1.msra.mxu0 %v6232
    %6811 = vmatprep.subr.mxu0 0.0
    %6812 = vmatpush1.msra.mxu0 %v6235
    %6813 = vmatprep.subr.mxu0 0.0
    %6814 = vmatpush1.msra.mxu0 %v6238
    %6815 = vmatprep.subr.mxu0 0.0
    %6816 = vmatpush1.msra.mxu0 %v6241
    %6817 = vmatprep.subr.mxu0 0.0
    %6818 = vmatpush1.msra.mxu0 %v6244
    %6819 = vmatprep.subr.mxu0 0.0
    %6820 = vmatpush1.msra.mxu0 %v6247
    %6821 = vmatprep.subr.mxu0 0.0
    %6822 = vmatpush1.msra.mxu0 %v6250
    %6823 = vmatprep.subr.mxu0 0.0
    %6824 = vmatpush1.msra.mxu0 %v6253
    %6825 = vmatprep.subr.mxu0 0.0
    %6826 = vmatpush1.msra.mxu0 %v6256
    %6827 = vmatprep.subr.mxu0 0.0
    %6828 = vmatpush1.msra.mxu0 %v6259
    %6829 = vmatprep.subr.mxu0 0.0
    %6830 = vmatpush1.msra.mxu0 %v6262
    %6831 = vmatprep.subr.mxu0 0.0
    %6832 = vmatpush1.msra.mxu0 %v6265
    %6833 = vmatprep.subr.mxu0 0.0
    %6834 = vmatpush1.msra.mxu0 %v6268
    %6835 = vmatprep.subr.mxu0 0.0
    %6836 = vmatpush1.msra.mxu0 %v6271
    %6837 = vmatprep.subr.mxu0 0.0
    %6838 = vmatpush1.msra.mxu0 %v6274
    %6839 = vmatprep.subr.mxu0 0.0
    %6840 = vmatpush1.msra.mxu0 %v6277
    %6841 = vmatprep.subr.mxu0 0.0
    %6842 = vmatpush1.msra.mxu0 %v6280
    %6843 = vmatprep.subr.mxu0 0.0
    %6844 = vmatpush1.msra.mxu0 %v6283
    %6845 = vmatprep.subr.mxu0 0.0
    %6846 = vmatpush1.msra.mxu0 %v6286
    %6847 = vmatprep.subr.mxu0 0.0
    %6848 = vmatpush1.msra.mxu0 %v6289
    %6849 = vmatprep.subr.mxu0 0.0
    %6850 = vmatpush1.msra.mxu0 %v6292
    %6851 = vmatprep.subr.mxu0 0.0
    %6852 = vmatpush1.msra.mxu0 %v6295
    %6853 = vmatprep.subr.mxu0 0.0
    %6854 = vmatpush1.msra.mxu0 %v6298
    %6855 = vmatprep.subr.mxu0 0.0
    %6856 = vmatpush1.msra.mxu0 %v6301
    %6857 = vmatprep.subr.mxu0 0.0
    %6858 = vmatpush1.msra.mxu0 %v6304
    %6859 = vmatprep.subr.mxu0 0.0
    %6860 = vmatpush1.msra.mxu0 %v6307
    %6861 = vmatprep.mubr.f32.mxu0 %v6018
    %6862 = vmatmul.mubr.f32.gmra.mrb[0].mxu0 %v6017
    %v6863 = vpop.f32.mrb[0].mxu0
    %v6864 = vadd.f32 %v6794, %v6863
    %v6865 = vpop.f32.mrb[0].mxu0
    %6866 = vdwg.mxu0
    %6867 = vmatprep.subr.mxu0 0.0
    %6868 = vmatpush1.msra.mxu0 %v6310
    %6869 = vmatprep.subr.mxu0 0.0
    %6870 = vmatpush1.msra.mxu0 %v6313
    %6871 = vmatprep.subr.mxu0 0.0
    %6872 = vmatpush1.msra.mxu0 %v6316
    %6873 = vmatprep.subr.mxu0 0.0
    %6874 = vmatpush1.msra.mxu0 %v6319
    %6875 = vmatprep.subr.mxu0 0.0
    %6876 = vmatpush1.msra.mxu0 %v6322
    %6877 = vmatprep.subr.mxu0 0.0
    %6878 = vmatpush1.msra.mxu0 %v6325
    %6879 = vmatprep.subr.mxu0 0.0
    %6880 = vmatpush1.msra.mxu0 %v6328
    %6881 = vmatprep.subr.mxu0 0.0
    %6882 = vmatpush1.msra.mxu0 %v6331
    %6883 = vmatprep.subr.mxu0 0.0
    %6884 = vmatpush1.msra.mxu0 %v6334
    %6885 = vmatprep.subr.mxu0 0.0
    %6886 = vmatpush1.msra.mxu0 %v6337
    %6887 = vmatprep.subr.mxu0 0.0
    %6888 = vmatpush1.msra.mxu0 %v6340
    %6889 = vmatprep.subr.mxu0 0.0
    %6890 = vmatpush1.msra.mxu0 %v6343
    %6891 = vmatprep.subr.mxu0 0.0
    %6892 = vmatpush1.msra.mxu0 %v6346
    %6893 = vmatprep.subr.mxu0 0.0
    %6894 = vmatpush1.msra.mxu0 %v6349
    %6895 = vmatprep.subr.mxu0 0.0
    %6896 = vmatpush1.msra.mxu0 %v6352
    %6897 = vmatprep.subr.mxu0 0.0
    %6898 = vmatpush1.msra.mxu0 %v6355
    %6899 = vmatprep.subr.mxu0 0.0
    %6900 = vmatpush1.msra.mxu0 0.0
    %6901 = vmatprep.subr.mxu0 0.0
    %6902 = vmatpush1.msra.mxu0 0.0
    %6903 = vmatprep.subr.mxu0 0.0
    %6904 = vmatpush1.msra.mxu0 0.0
    %6905 = vmatprep.subr.mxu0 0.0
    %6906 = vmatpush1.msra.mxu0 0.0
    %6907 = vmatprep.subr.mxu0 0.0
    %6908 = vmatpush1.msra.mxu0 0.0
    %6909 = vmatprep.subr.mxu0 0.0
    %6910 = vmatpush1.msra.mxu0 0.0
    %6911 = vmatprep.subr.mxu0 0.0
    %6912 = vmatpush1.msra.mxu0 0.0
    %6913 = vmatprep.subr.mxu0 0.0
    %6914 = vmatpush1.msra.mxu0 0.0
    %6915 = vmatprep.subr.mxu0 0.0
    %6916 = vmatpush1.msra.mxu0 0.0
    %6917 = vmatprep.subr.mxu0 0.0
    %6918 = vmatpush1.msra.mxu0 0.0
    %6919 = vmatprep.subr.mxu0 0.0
    %6920 = vmatpush1.msra.mxu0 0.0
    %6921 = vmatprep.subr.mxu0 0.0
    %6922 = vmatpush1.msra.mxu0 0.0
    %6923 = vmatprep.subr.mxu0 0.0
    %6924 = vmatpush1.msra.mxu0 0.0
    %6925 = vmatprep.subr.mxu0 0.0
    %6926 = vmatpush1.msra.mxu0 0.0
    %6927 = vmatprep.subr.mxu0 0.0
    %6928 = vmatpush1.msra.mxu0 0.0
    %6929 = vmatprep.subr.mxu0 0.0
    %6930 = vmatpush1.msra.mxu0 0.0
    %6931 = vmatprep.mubr.f32.mxu0 0.0
    %6932 = vmatmul.mubr.f32.gmra.mrb[0].mxu0 %v6019
    %v6933 = vpop.f32.mrb[0].mxu0
    %v6934 = vadd.f32 %v6864, %v6933
    %v6935 = vpop.f32.mrb[0].mxu0
    %6936 = vdwg.mxu0
    %v6937 = vmax.f32 %v6653, 0.0
    %v6938 = vmax.f32 %v6655, 0.0
    %v6939 = vmax.f32 %v6934, 0.0
    %6940 = vst [vmem:[%s9] sm:$0xff] %v6937
    %6941 = vst [vmem:[%s9 + $0x8] sm:$0xff] %v6938
    %6942 = vst [vmem:[%s9 + $0x10] sm:$0xff] %v6939
    // Predicated region
    $region70: #{tnn_forward.1} parent=1 // pred_check
      _
    $region71: #{tnn_forward.1} parent=1 // pred_check_branch
      %6944 = sbr.rel (0) target = $region73
    $region72: #{tnn_forward.1} parent=1 // pred_region
      _
    $region73: #{tnn_forward.1} parent=1 // pred_fallthru
      _
    // Predicated region
    $region74: #{tnn_forward.1} parent=1 // pred_check
      _
    $region75: #{tnn_forward.1} parent=1 // pred_check_branch
      %6946 = sbr.rel (0) target = $region77
    $region76: #{tnn_forward.1} parent=1 // pred_region
      _
    $region77: #{tnn_forward.1} parent=1 // pred_fallthru
      _
    %6947 = vsyncpa [#allocation3], 1
    %6948 = vsyncpa [#allocation5], 1
    %6949 = vsyncpa [#allocation8], 1
    %6950 = vsyncpa [#allocation11], 1
    %6951 = vsyncpa [#allocation14], 1

</llo_original>
